<compile_context>
chip_gen: v7x
topology: tpu7x:2x2x1
jax: 0.10.0
libtpu: 0.0.40
codegen_flags: <defaults>
</compile_context>

<pallas_src>
import math

import jax
import jax.numpy as jnp
from jax.experimental import pallas as pl
from jax.experimental.pallas import tpu as pltpu

# ------------------------- small synthetic hyper-params ----------------------
SEQ = 16            # question + columns + tables tokens
HIDDEN = 128        # stands in for 768 of bert-base (kept 128-lane dense)
NUM_HEADS = 4
D_K = HIDDEN // NUM_HEADS
FF = 2 * HIDDEN
NUM_LAYERS = 2
NUM_RELATIONS = 10
LN_EPS = 1e-5       # torch.nn.LayerNorm default


def _layer_norm(x, g, b):
    mu = jnp.mean(x, axis=-1, keepdims=True)
    var = jnp.mean((x - mu) ** 2, axis=-1, keepdims=True)
    return (x - mu) * jax.lax.rsqrt(var + LN_EPS) * g + b


# ------------------------------ fused Pallas kernel ---------------------------
def rat_encoder_kernel(x_ref, onehot_ref,
                       relk_ref, relv_ref,
                       ln1g_ref, ln1b_ref,
                       wqkv_ref, bqkv_ref,
                       wo_ref, bo_ref,
                       ln2g_ref, ln2b_ref,
                       w1_ref, b1_ref, w2_ref, b2_ref,
                       fing_ref, finb_ref,
                       out_ref,
                       h_ref):
    """One grid step == one RAT encoder layer; h stays resident in VMEM."""
    l = pl.program_id(0)

    @pl.when(l == 0)
    def _():
        h_ref[...] = x_ref[...]

    x = h_ref[...]                                    # (S, H) f32
    onehot = onehot_ref[...]                          # (S, S, R) f32

    # ---- relation-aware multi-head self attention (pre-LN sublayer) ----
    xn = _layer_norm(x, ln1g_ref[...], ln1b_ref[...])
    qkv = jnp.dot(xn, wqkv_ref[...],
                  preferred_element_type=jnp.float32) + bqkv_ref[...]   # (S, 3H)
    q = qkv[:, 0:HIDDEN] * (1.0 / math.sqrt(D_K))      # fold 1/sqrt(d_k) into q
    k = qkv[:, HIDDEN:2 * HIDDEN]
    v = qkv[:, 2 * HIDDEN:3 * HIDDEN]
    qh = q.reshape(SEQ, NUM_HEADS, D_K)
    kh = k.reshape(SEQ, NUM_HEADS, D_K)
    vh = v.reshape(SEQ, NUM_HEADS, D_K)

    # content scores for all heads: one batched matmul
    qk = jnp.einsum('shd,thd->hst', qh, kh,
                    preferred_element_type=jnp.float32)                 # (Hh,S,S)
    # relation scores (factorized): project q onto the relation-key table,
    # then select per (i,j) by relation id via the one-hot contraction.
    q_rel = jnp.einsum('shd,rd->shr', qh, relk_ref[...],
                       preferred_element_type=jnp.float32)              # (S,Hh,R)
    qr = jnp.einsum('shr,str->hst', q_rel, onehot,
                    preferred_element_type=jnp.float32)                 # (Hh,S,S)
    scores = qk + qr

    m = jnp.max(scores, axis=-1, keepdims=True)
    e = jnp.exp(scores - m)
    attn = e * pl.reciprocal(jnp.sum(e, axis=-1, keepdims=True), approx=True)

    # attention over values (all heads batched)
    ctx = jnp.einsum('hst,thd->shd', attn, vh,
                     preferred_element_type=jnp.float32)                # (S,Hh,Dk)
    # relation values (factorized): bucket attention mass per relation id,
    # then one small matmul against the relation-value table.
    bucket = jnp.einsum('hst,str->shr', attn, onehot,
                        preferred_element_type=jnp.float32)             # (S,Hh,R)
    ctx_r = jnp.einsum('shr,rd->shd', bucket, relv_ref[...],
                       preferred_element_type=jnp.float32)              # (S,Hh,Dk)

    ctx_all = (ctx + ctx_r).reshape(SEQ, HIDDEN)       # == concat over heads
    attn_out = jnp.dot(ctx_all, wo_ref[...],
                       preferred_element_type=jnp.float32) + bo_ref[...]
    x1 = x + attn_out

    # ---- position-wise feed-forward (pre-LN sublayer) ----
    xn2 = _layer_norm(x1, ln2g_ref[...], ln2b_ref[...])
    h1 = jnp.maximum(
        jnp.dot(xn2, w1_ref[...], preferred_element_type=jnp.float32) + b1_ref[...],
        0.0)
    ff = jnp.dot(h1, w2_ref[...], preferred_element_type=jnp.float32) + b2_ref[...]
    x2 = x1 + ff

    h_ref[...] = x2

    @pl.when(l == pl.num_programs(0) - 1)
    def _():
        out_ref[...] = _layer_norm(x2, fing_ref[...], finb_ref[...])


def _layer_spec(shape):
    """Per-layer stacked parameter: leading layer dim selected by grid index."""
    n = len(shape)
    return pl.BlockSpec((None,) + shape, lambda l: (l,) + (0,) * n)


def _const_spec(shape):
    """Layer-invariant input: same block every grid step (fetched once)."""
    n = len(shape)
    return pl.BlockSpec(shape, lambda l: (0,) * n)


def rat_encoder(x_slab, onehot, stacked, final_g, final_b):
    in_specs = [
        _const_spec((SEQ, HIDDEN)),                      # x
        _const_spec((SEQ, SEQ, NUM_RELATIONS)),          # relation one-hot
        _layer_spec((NUM_RELATIONS, D_K)),               # rel_k_emb
        _layer_spec((NUM_RELATIONS, D_K)),               # rel_v_emb
        _layer_spec((1, HIDDEN)), _layer_spec((1, HIDDEN)),           # ln1 g,b
        _layer_spec((HIDDEN, 3 * HIDDEN)), _layer_spec((1, 3 * HIDDEN)),  # wqkv,bqkv
        _layer_spec((HIDDEN, HIDDEN)), _layer_spec((1, HIDDEN)),      # wo,bo
        _layer_spec((1, HIDDEN)), _layer_spec((1, HIDDEN)),           # ln2 g,b
        _layer_spec((HIDDEN, FF)), _layer_spec((1, FF)),              # w1,b1
        _layer_spec((FF, HIDDEN)), _layer_spec((1, HIDDEN)),          # w2,b2
        _const_spec((1, HIDDEN)), _const_spec((1, HIDDEN)),           # final LN g,b
    ]
    args = (x_slab, onehot,
            stacked["relk"], stacked["relv"],
            stacked["ln1_g"], stacked["ln1_b"],
            stacked["wqkv"], stacked["bqkv"],
            stacked["wo"], stacked["bo"],
            stacked["ln2_g"], stacked["ln2_b"],
            stacked["w1"], stacked["b1"],
            stacked["w2"], stacked["b2"],
            final_g, final_b)
    return pl.pallas_call(
        rat_encoder_kernel,
        out_shape=jax.ShapeDtypeStruct((SEQ, HIDDEN), jnp.float32),
        grid_spec=pltpu.PrefetchScalarGridSpec(
            num_scalar_prefetch=0,
            grid=(NUM_LAYERS,),
            in_specs=in_specs,
            out_specs=pl.BlockSpec((SEQ, HIDDEN), lambda l: (0, 0)),
            scratch_shapes=[pltpu.VMEM((SEQ, HIDDEN), jnp.float32)]),
        compiler_params=pltpu.CompilerParams(
            dimension_semantics=("arbitrary",)),
        input_output_aliases={0: 0},       # write the encoding over x's buffer
    )(*args)


# ------------------------------ parameters ------------------------------------
def init_params(key):
    def w(k, shape):
        return jax.random.normal(k, shape, jnp.float32) * 0.02

    layers = []
    for layer_id in range(NUM_LAYERS):
        ks = jax.random.split(jax.random.fold_in(key, layer_id), 8)
        layers.append(dict(
            relk=w(ks[0], (NUM_RELATIONS, D_K)),
            relv=w(ks[1], (NUM_RELATIONS, D_K)),
            ln1_g=jnp.ones((1, HIDDEN), jnp.float32),
            ln1_b=jnp.zeros((1, HIDDEN), jnp.float32),
            # fused Q/K/V projection: concat along the output axis
            wqkv=jnp.concatenate([w(ks[2], (HIDDEN, HIDDEN)),
                                  w(ks[3], (HIDDEN, HIDDEN)),
                                  w(ks[4], (HIDDEN, HIDDEN))], axis=1),
            bqkv=jnp.zeros((1, 3 * HIDDEN), jnp.float32),
            wo=w(ks[5], (HIDDEN, HIDDEN)),
            bo=jnp.zeros((1, HIDDEN), jnp.float32),
            ln2_g=jnp.ones((1, HIDDEN), jnp.float32),
            ln2_b=jnp.zeros((1, HIDDEN), jnp.float32),
            w1=w(ks[6], (HIDDEN, FF)),
            b1=jnp.zeros((1, FF), jnp.float32),
            w2=w(ks[7], (FF, HIDDEN)),
            b2=jnp.zeros((1, HIDDEN), jnp.float32),
        ))
    stacked = {name: jnp.stack([lyr[name] for lyr in layers], axis=0)
               for name in layers[0]}
    return {"stacked": stacked,
            "final_ln_g": jnp.ones((1, HIDDEN), jnp.float32),
            "final_ln_b": jnp.zeros((1, HIDDEN), jnp.float32)}


# ------------------------------ module forward --------------------------------
def spider_encoder_bert_after_forward(x, relation, c_base, t_base, params):
    """Mirrors SpiderEncoderBertAfter.forward -> AfterRAT.forward_unbatched.

    x:        (1, SEQ, HIDDEN) float32  BERT-encoded q|cols|tables sequence
    relation: (SEQ, SEQ)       int32    relation ids between sequence items
    returns:  (q_enc, c_enc, t_enc) slices of the updated encoding.
    """
    h = x[0]                                            # (S, H) slab, lane-dense
    # relation one-hot is the only host-side glue; shared by all layers
    onehot = jax.nn.one_hot(relation, NUM_RELATIONS, dtype=jnp.float32)
    h = rat_encoder(h, onehot, params["stacked"],
                    params["final_ln_g"], params["final_ln_b"])
    enc_new = h[None]                                   # (1, S, H)
    q_enc_new_item = enc_new[:, :c_base]
    c_enc_new_item = enc_new[:, c_base:t_base]
    t_enc_new_item = enc_new[:, t_base:]
    return q_enc_new_item, c_enc_new_item, t_enc_new_item


# TODO(synk): the Preproc / tokenizer / schema-linking machinery of the module
# is host-side python (strings, dicts) with no tensor compute; not translated.

if __name__ == "__main__":
    key = jax.random.PRNGKey(0)
    kx, kr, kp = jax.random.split(key, 3)

    x = jax.random.normal(kx, (1, SEQ, HIDDEN), jnp.float32)
    relation = jax.random.randint(kr, (SEQ, SEQ), 0, NUM_RELATIONS, jnp.int32)
    c_base, t_base = 6, 12   # question tokens [0:6), columns [6:12), tables [12:16)

    params = init_params(kp)

    q_enc, c_enc, t_enc = spider_encoder_bert_after_forward(
        x, relation, c_base, t_base, params)
    (q_enc, c_enc, t_enc) = jax.block_until_ready((q_enc, c_enc, t_enc))

    assert q_enc.shape == (1, c_base, HIDDEN)
    assert c_enc.shape == (1, t_base - c_base, HIDDEN)
    assert t_enc.shape == (1, SEQ - t_base, HIDDEN)
    assert all(bool(jnp.all(jnp.isfinite(a))) for a in (q_enc, c_enc, t_enc))
    print("KERNEL_OK")
</pallas_src>

<mosaic_0001>
module attributes {stable_mosaic.version = 11 : i64} {
  func.func @rat_encoder_kernel(%arg0: i32, %arg1: memref<16x128xf32, #tpu.memory_space<vmem>>, %arg2: memref<16x16x10xf32, #tpu.memory_space<vmem>>, %arg3: memref<1x10x32xf32, #tpu.memory_space<vmem>>, %arg4: memref<1x10x32xf32, #tpu.memory_space<vmem>>, %arg5: memref<1x1x128xf32, #tpu.memory_space<vmem>>, %arg6: memref<1x1x128xf32, #tpu.memory_space<vmem>>, %arg7: memref<1x128x384xf32, #tpu.memory_space<vmem>>, %arg8: memref<1x1x384xf32, #tpu.memory_space<vmem>>, %arg9: memref<1x128x128xf32, #tpu.memory_space<vmem>>, %arg10: memref<1x1x128xf32, #tpu.memory_space<vmem>>, %arg11: memref<1x1x128xf32, #tpu.memory_space<vmem>>, %arg12: memref<1x1x128xf32, #tpu.memory_space<vmem>>, %arg13: memref<1x128x256xf32, #tpu.memory_space<vmem>>, %arg14: memref<1x1x256xf32, #tpu.memory_space<vmem>>, %arg15: memref<1x256x128xf32, #tpu.memory_space<vmem>>, %arg16: memref<1x1x128xf32, #tpu.memory_space<vmem>>, %arg17: memref<1x128xf32, #tpu.memory_space<vmem>>, %arg18: memref<1x128xf32, #tpu.memory_space<vmem>>, %arg19: memref<16x128xf32, #tpu.memory_space<vmem>>, %arg20: memref<16x128xf32, #tpu.memory_space<vmem>>) attributes {dimension_semantics = [#tpu.dimension_semantics<arbitrary>], iteration_bounds = array<i64: 2>, scalar_prefetch = 0 : i64, scratch_operands = 1 : i64, tpu.core_type = #tpu.core_type<tc>, window_params = [{pipeline_mode = #tpu.pipeline_mode<synchronous>, transform_indices = @transform_0, window_bounds = array<i64: 16, 128>}, {pipeline_mode = #tpu.pipeline_mode<synchronous>, transform_indices = @transform_1, window_bounds = array<i64: 16, 16, 10>}, {transform_indices = @transform_2, window_bounds = array<i64: 1, 10, 32>}, {transform_indices = @transform_3, window_bounds = array<i64: 1, 10, 32>}, {transform_indices = @transform_4, window_bounds = array<i64: 1, 1, 128>}, {transform_indices = @transform_5, window_bounds = array<i64: 1, 1, 128>}, {transform_indices = @transform_6, window_bounds = array<i64: 1, 128, 384>}, {transform_indices = @transform_7, window_bounds = array<i64: 1, 1, 384>}, {transform_indices = @transform_8, window_bounds = array<i64: 1, 128, 128>}, {transform_indices = @transform_9, window_bounds = array<i64: 1, 1, 128>}, {transform_indices = @transform_10, window_bounds = array<i64: 1, 1, 128>}, {transform_indices = @transform_11, window_bounds = array<i64: 1, 1, 128>}, {transform_indices = @transform_12, window_bounds = array<i64: 1, 128, 256>}, {transform_indices = @transform_13, window_bounds = array<i64: 1, 1, 256>}, {transform_indices = @transform_14, window_bounds = array<i64: 1, 256, 128>}, {transform_indices = @transform_15, window_bounds = array<i64: 1, 1, 128>}, {pipeline_mode = #tpu.pipeline_mode<synchronous>, transform_indices = @transform_16, window_bounds = array<i64: 1, 128>}, {pipeline_mode = #tpu.pipeline_mode<synchronous>, transform_indices = @transform_17, window_bounds = array<i64: 1, 128>}, {pipeline_mode = #tpu.pipeline_mode<synchronous>, transform_indices = @transform_18, window_bounds = array<i64: 16, 128>}]} {
    %c0_i32 = arith.constant 0 : i32
    %0 = arith.cmpi eq, %arg0, %c0_i32 : i32
    %1 = arith.extui %0 : i1 to i32
    %c0_i32_0 = arith.constant 0 : i32
    %2 = arith.cmpi ne, %1, %c0_i32_0 : i32
    scf.if %2 {
      %c0_73 = arith.constant 0 : index
      %c0_74 = arith.constant 0 : index
      %126 = vector.load %arg1[%c0_73, %c0_74] : memref<16x128xf32, #tpu.memory_space<vmem>>, vector<16x128xf32>
      %c0_75 = arith.constant 0 : index
      %c0_76 = arith.constant 0 : index
      %127 = vector.load %arg20[%c0_75, %c0_76] : memref<16x128xf32, #tpu.memory_space<vmem>>, vector<16x128xf32>
      tpu.vector_store %arg20[%c0_75, %c0_76], %126 {strides = array<i32>} : memref<16x128xf32, #tpu.memory_space<vmem>>, vector<16x128xf32>,
    } else {
    }
    %c0 = arith.constant 0 : index
    %c0_1 = arith.constant 0 : index
    %3 = vector.load %arg20[%c0, %c0_1] : memref<16x128xf32, #tpu.memory_space<vmem>>, vector<16x128xf32>
    %c0_2 = arith.constant 0 : index
    %c0_3 = arith.constant 0 : index
    %c0_4 = arith.constant 0 : index
    %4 = vector.load %arg2[%c0_2, %c0_3, %c0_4] : memref<16x16x10xf32, #tpu.memory_space<vmem>>, vector<16x16x10xf32>
    %c0_5 = arith.constant 0 : index
    %c0_6 = arith.constant 0 : index
    %c0_7 = arith.constant 0 : index
    %5 = vector.load %arg5[%c0_5, %c0_6, %c0_7] : memref<1x1x128xf32, #tpu.memory_space<vmem>>, vector<1x1x128xf32>
    %6 = vector.shape_cast %5 : vector<1x1x128xf32> to vector<1x128xf32>
    %c0_8 = arith.constant 0 : index
    %c0_9 = arith.constant 0 : index
    %c0_10 = arith.constant 0 : index
    %7 = vector.load %arg6[%c0_8, %c0_9, %c0_10] : memref<1x1x128xf32, #tpu.memory_space<vmem>>, vector<1x1x128xf32>
    %8 = vector.shape_cast %7 : vector<1x1x128xf32> to vector<1x128xf32>
    %cst = arith.constant dense<0.000000e+00> : vector<16xf32>
    %9 = vector.multi_reduction <add>, %3, %cst [1] : vector<16x128xf32> to vector<16xf32>
    %10 = vector.shape_cast %9 : vector<16xf32> to vector<16x1xf32>
    %cst_11 = arith.constant 1.280000e+02 : f32
    %11 = vector.broadcast %cst_11 : f32 to vector<16x1xf32>
    %12 = arith.divf %10, %11 : vector<16x1xf32>
    %13 = vector.broadcast %12 : vector<16x1xf32> to vector<16x128xf32>
    %14 = arith.subf %3, %13 : vector<16x128xf32>
    %15 = arith.mulf %14, %14 : vector<16x128xf32>
    %cst_12 = arith.constant dense<0.000000e+00> : vector<16xf32>
    %16 = vector.multi_reduction <add>, %15, %cst_12 [1] : vector<16x128xf32> to vector<16xf32>
    %17 = vector.shape_cast %16 : vector<16xf32> to vector<16x1xf32>
    %cst_13 = arith.constant 1.280000e+02 : f32
    %18 = vector.broadcast %cst_13 : f32 to vector<16x1xf32>
    %19 = arith.divf %17, %18 : vector<16x1xf32>
    %20 = vector.broadcast %12 : vector<16x1xf32> to vector<16x128xf32>
    %21 = arith.subf %3, %20 : vector<16x128xf32>
    %cst_14 = arith.constant 9.99999974E-6 : f32
    %22 = vector.broadcast %cst_14 : f32 to vector<16x1xf32>
    %23 = arith.addf %19, %22 : vector<16x1xf32>
    %24 = math.rsqrt %23 : vector<16x1xf32>
    %25 = vector.broadcast %24 : vector<16x1xf32> to vector<16x128xf32>
    %26 = arith.mulf %21, %25 : vector<16x128xf32>
    %27 = vector.broadcast %6 : vector<1x128xf32> to vector<16x128xf32>
    %28 = arith.mulf %26, %27 : vector<16x128xf32>
    %29 = vector.broadcast %8 : vector<1x128xf32> to vector<16x128xf32>
    %30 = arith.addf %28, %29 : vector<16x128xf32>
    %c0_15 = arith.constant 0 : index
    %c0_16 = arith.constant 0 : index
    %c0_17 = arith.constant 0 : index
    %31 = vector.load %arg7[%c0_15, %c0_16, %c0_17] : memref<1x128x384xf32, #tpu.memory_space<vmem>>, vector<1x128x384xf32>
    %32 = vector.shape_cast %31 : vector<1x128x384xf32> to vector<128x384xf32>
    %cst_18 = arith.constant dense<0.000000e+00> : vector<16x384xf32>
    %33 = tpu.matmul %30, %32, %cst_18 {dimension_numbers = #tpu.dot_dimension_numbers<[1], [0], [0], [1], [0, 0, 1, 1], [], []>} : vector<16x128xf32>, vector<128x384xf32>, vector<16x384xf32> -> vector<16x384xf32>
    %c0_19 = arith.constant 0 : index
    %c0_20 = arith.constant 0 : index
    %c0_21 = arith.constant 0 : index
    %34 = vector.load %arg8[%c0_19, %c0_20, %c0_21] : memref<1x1x384xf32, #tpu.memory_space<vmem>>, vector<1x1x384xf32>
    %35 = vector.shape_cast %34 : vector<1x1x384xf32> to vector<1x384xf32>
    %36 = vector.broadcast %35 : vector<1x384xf32> to vector<16x384xf32>
    %37 = arith.addf %33, %36 : vector<16x384xf32>
    %38 = vector.extract_strided_slice %37 {offsets = [0, 0], sizes = [16, 128], strides = [1, 1]} : vector<16x384xf32> to vector<16x128xf32>
    %cst_22 = arith.constant 0.176776692 : f32
    %39 = vector.broadcast %cst_22 : f32 to vector<16x128xf32>
    %40 = arith.mulf %38, %39 : vector<16x128xf32>
    %41 = vector.extract_strided_slice %37 {offsets = [0, 128], sizes = [16, 128], strides = [1, 1]} : vector<16x384xf32> to vector<16x128xf32>
    %42 = vector.extract_strided_slice %37 {offsets = [0, 256], sizes = [16, 128], strides = [1, 1]} : vector<16x384xf32> to vector<16x128xf32>
    %43 = vector.shape_cast %40 : vector<16x128xf32> to vector<16x4x32xf32>
    %44 = vector.shape_cast %41 : vector<16x128xf32> to vector<16x4x32xf32>
    %45 = vector.shape_cast %42 : vector<16x128xf32> to vector<16x4x32xf32>
    "tpu.trace_start"() <{level = 10 : i32, message = "shd,thd->hst"}> : () -> ()
    %cst_23 = arith.constant dense<0.000000e+00> : vector<4x16x16xf32>
    %46 = tpu.matmul %43, %44, %cst_23 {dimension_numbers = #tpu.dot_dimension_numbers<[2], [2], [0], [0], [0, 1, 0, 0, 1, 0], [1], [1]>} : vector<16x4x32xf32>, vector<16x4x32xf32>, vector<4x16x16xf32> -> vector<4x16x16xf32>
    "tpu.trace_stop"() : () -> ()
    %c0_24 = arith.constant 0 : index
    %c0_25 = arith.constant 0 : index
    %c0_26 = arith.constant 0 : index
    %47 = vector.load %arg3[%c0_24, %c0_25, %c0_26] : memref<1x10x32xf32, #tpu.memory_space<vmem>>, vector<1x10x32xf32>
    %48 = vector.shape_cast %47 : vector<1x10x32xf32> to vector<10x32xf32>
    "tpu.trace_start"() <{level = 10 : i32, message = "shd,rd->shr"}> : () -> ()
    %cst_27 = arith.constant dense<0.000000e+00> : vector<16x4x10xf32>
    %49 = tpu.matmul %43, %48, %cst_27 {dimension_numbers = #tpu.dot_dimension_numbers<[2], [1], [0, 1], [0], [0, 0, 0, 1, 1, 0], [], []>} : vector<16x4x32xf32>, vector<10x32xf32>, vector<16x4x10xf32> -> vector<16x4x10xf32>
    "tpu.trace_stop"() : () -> ()
    "tpu.trace_start"() <{level = 10 : i32, message = "shr,str->hst"}> : () -> ()
    %cst_28 = arith.constant dense<0.000000e+00> : vector<16x16x4xf32>
    %50 = tpu.matmul %4, %49, %cst_28 {dimension_numbers = #tpu.dot_dimension_numbers<[2], [2], [1], [1], [0, 0, 0, 1, 1, 1], [0], [0]>} : vector<16x16x10xf32>, vector<16x4x10xf32>, vector<16x16x4xf32> -> vector<16x16x4xf32>
    %51 = tpu.transpose %50, [2, 0, 1] : vector<16x16x4xf32> -> vector<4x16x16xf32>
    "tpu.trace_stop"() : () -> ()
    %52 = arith.addf %46, %51 : vector<4x16x16xf32>
    %cst_29 = arith.constant dense<0xFF800000> : vector<4x16xf32>
    %53 = vector.multi_reduction <maximumf>, %52, %cst_29 [2] : vector<4x16x16xf32> to vector<4x16xf32>
    %54 = vector.shape_cast %53 : vector<4x16xf32> to vector<4x16x1xf32>
    %55 = vector.broadcast %54 : vector<4x16x1xf32> to vector<4x16x16xf32>
    %56 = arith.subf %52, %55 : vector<4x16x16xf32>
    %57 = math.exp %56 : vector<4x16x16xf32>
    %cst_30 = arith.constant dense<0.000000e+00> : vector<4x16xf32>
    %58 = vector.multi_reduction <add>, %57, %cst_30 [2] : vector<4x16x16xf32> to vector<4x16xf32>
    %59 = vector.shape_cast %58 : vector<4x16xf32> to vector<4x16x1xf32>
    %60 = tpu.reciprocal %59 {approx = true} : vector<4x16x1xf32> -> vector<4x16x1xf32>
    %61 = vector.broadcast %60 : vector<4x16x1xf32> to vector<4x16x16xf32>
    %62 = arith.mulf %57, %61 : vector<4x16x16xf32>
    "tpu.trace_start"() <{level = 10 : i32, message = "hst,thd->shd"}> : () -> ()
    %cst_31 = arith.constant dense<0.000000e+00> : vector<4x32x16xf32>
    %63 = tpu.matmul %45, %62, %cst_31 {dimension_numbers = #tpu.dot_dimension_numbers<[0], [2], [2], [1], [0, 1, 0, 2, 1, 1], [1], [0]>} : vector<16x4x32xf32>, vector<4x16x16xf32>, vector<4x32x16xf32> -> vector<4x32x16xf32>
    %64 = tpu.transpose %63, [2, 0, 1] : vector<4x32x16xf32> -> vector<16x4x32xf32>
    "tpu.trace_stop"() : () -> ()
    "tpu.trace_start"() <{level = 10 : i32, message = "hst,str->shr"}> : () -> ()
    %cst_32 = arith.constant dense<0.000000e+00> : vector<16x4x10xf32>
    %65 = tpu.matmul %62, %4, %cst_32 {dimension_numbers = #tpu.dot_dimension_numbers<[2], [1], [0], [2], [0, 1, 0, 0, 1, 2], [1], [0]>} : vector<4x16x16xf32>, vector<16x16x10xf32>, vector<16x4x10xf32> -> vector<16x4x10xf32>
    "tpu.trace_stop"() : () -> ()
    %c0_33 = arith.constant 0 : index
    %c0_34 = arith.constant 0 : index
    %c0_35 = arith.constant 0 : index
    %66 = vector.load %arg4[%c0_33, %c0_34, %c0_35] : memref<1x10x32xf32, #tpu.memory_space<vmem>>, vector<1x10x32xf32>
    %67 = vector.shape_cast %66 : vector<1x10x32xf32> to vector<10x32xf32>
    "tpu.trace_start"() <{level = 10 : i32, message = "shr,rd->shd"}> : () -> ()
    %cst_36 = arith.constant dense<0.000000e+00> : vector<16x4x32xf32>
    %68 = tpu.matmul %65, %67, %cst_36 {dimension_numbers = #tpu.dot_dimension_numbers<[2], [0], [0, 1], [1], [0, 0, 0, 1, 1, 1], [], []>} : vector<16x4x10xf32>, vector<10x32xf32>, vector<16x4x32xf32> -> vector<16x4x32xf32>
    "tpu.trace_stop"() : () -> ()
    %69 = arith.addf %64, %68 : vector<16x4x32xf32>
    %70 = vector.shape_cast %69 : vector<16x4x32xf32> to vector<16x128xf32>
    %c0_37 = arith.constant 0 : index
    %c0_38 = arith.constant 0 : index
    %c0_39 = arith.constant 0 : index
    %71 = vector.load %arg9[%c0_37, %c0_38, %c0_39] : memref<1x128x128xf32, #tpu.memory_space<vmem>>, vector<1x128x128xf32>
    %72 = vector.shape_cast %71 : vector<1x128x128xf32> to vector<128x128xf32>
    %cst_40 = arith.constant dense<0.000000e+00> : vector<16x128xf32>
    %73 = tpu.matmul %70, %72, %cst_40 {dimension_numbers = #tpu.dot_dimension_numbers<[1], [0], [0], [1], [0, 0, 1, 1], [], []>} : vector<16x128xf32>, vector<128x128xf32>, vector<16x128xf32> -> vector<16x128xf32>
    %c0_41 = arith.constant 0 : index
    %c0_42 = arith.constant 0 : index
    %c0_43 = arith.constant 0 : index
    %74 = vector.load %arg10[%c0_41, %c0_42, %c0_43] : memref<1x1x128xf32, #tpu.memory_space<vmem>>, vector<1x1x128xf32>
    %75 = vector.shape_cast %74 : vector<1x1x128xf32> to vector<1x128xf32>
    %76 = vector.broadcast %75 : vector<1x128xf32> to vector<16x128xf32>
    %77 = arith.addf %73, %76 : vector<16x128xf32>
    %78 = arith.addf %3, %77 : vector<16x128xf32>
    %c0_44 = arith.constant 0 : index
    %c0_45 = arith.constant 0 : index
    %c0_46 = arith.constant 0 : index
    %79 = vector.load %arg11[%c0_44, %c0_45, %c0_46] : memref<1x1x128xf32, #tpu.memory_space<vmem>>, vector<1x1x128xf32>
    %80 = vector.shape_cast %79 : vector<1x1x128xf32> to vector<1x128xf32>
    %c0_47 = arith.constant 0 : index
    %c0_48 = arith.constant 0 : index
    %c0_49 = arith.constant 0 : index
    %81 = vector.load %arg12[%c0_47, %c0_48, %c0_49] : memref<1x1x128xf32, #tpu.memory_space<vmem>>, vector<1x1x128xf32>
    %82 = vector.shape_cast %81 : vector<1x1x128xf32> to vector<1x128xf32>
    %cst_50 = arith.constant dense<0.000000e+00> : vector<16xf32>
    %83 = vector.multi_reduction <add>, %78, %cst_50 [1] : vector<16x128xf32> to vector<16xf32>
    %84 = vector.shape_cast %83 : vector<16xf32> to vector<16x1xf32>
    %cst_51 = arith.constant 1.280000e+02 : f32
    %85 = vector.broadcast %cst_51 : f32 to vector<16x1xf32>
    %86 = arith.divf %84, %85 : vector<16x1xf32>
    %87 = vector.broadcast %86 : vector<16x1xf32> to vector<16x128xf32>
    %88 = arith.subf %78, %87 : vector<16x128xf32>
    %89 = arith.mulf %88, %88 : vector<16x128xf32>
    %cst_52 = arith.constant dense<0.000000e+00> : vector<16xf32>
    %90 = vector.multi_reduction <add>, %89, %cst_52 [1] : vector<16x128xf32> to vector<16xf32>
    %91 = vector.shape_cast %90 : vector<16xf32> to vector<16x1xf32>
    %cst_53 = arith.constant 1.280000e+02 : f32
    %92 = vector.broadcast %cst_53 : f32 to vector<16x1xf32>
    %93 = arith.divf %91, %92 : vector<16x1xf32>
    %94 = vector.broadcast %86 : vector<16x1xf32> to vector<16x128xf32>
    %95 = arith.subf %78, %94 : vector<16x128xf32>
    %cst_54 = arith.constant 9.99999974E-6 : f32
    %96 = vector.broadcast %cst_54 : f32 to vector<16x1xf32>
    %97 = arith.addf %93, %96 : vector<16x1xf32>
    %98 = math.rsqrt %97 : vector<16x1xf32>
    %99 = vector.broadcast %98 : vector<16x1xf32> to vector<16x128xf32>
    %100 = arith.mulf %95, %99 : vector<16x128xf32>
    %101 = vector.broadcast %80 : vector<1x128xf32> to vector<16x128xf32>
    %102 = arith.mulf %100, %101 : vector<16x128xf32>
    %103 = vector.broadcast %82 : vector<1x128xf32> to vector<16x128xf32>
    %104 = arith.addf %102, %103 : vector<16x128xf32>
    %c0_55 = arith.constant 0 : index
    %c0_56 = arith.constant 0 : index
    %c0_57 = arith.constant 0 : index
    %105 = vector.load %arg13[%c0_55, %c0_56, %c0_57] : memref<1x128x256xf32, #tpu.memory_space<vmem>>, vector<1x128x256xf32>
    %106 = vector.shape_cast %105 : vector<1x128x256xf32> to vector<128x256xf32>
    %cst_58 = arith.constant dense<0.000000e+00> : vector<16x256xf32>
    %107 = tpu.matmul %104, %106, %cst_58 {dimension_numbers = #tpu.dot_dimension_numbers<[1], [0], [0], [1], [0, 0, 1, 1], [], []>} : vector<16x128xf32>, vector<128x256xf32>, vector<16x256xf32> -> vector<16x256xf32>
    %c0_59 = arith.constant 0 : index
    %c0_60 = arith.constant 0 : index
    %c0_61 = arith.constant 0 : index
    %108 = vector.load %arg14[%c0_59, %c0_60, %c0_61] : memref<1x1x256xf32, #tpu.memory_space<vmem>>, vector<1x1x256xf32>
    %109 = vector.shape_cast %108 : vector<1x1x256xf32> to vector<1x256xf32>
    %110 = vector.broadcast %109 : vector<1x256xf32> to vector<16x256xf32>
    %111 = arith.addf %107, %110 : vector<16x256xf32>
    %cst_62 = arith.constant 0.000000e+00 : f32
    %112 = vector.broadcast %cst_62 : f32 to vector<16x256xf32>
    %113 = arith.maximumf %111, %112 : vector<16x256xf32>
    %c0_63 = arith.constant 0 : index
    %c0_64 = arith.constant 0 : index
    %c0_65 = arith.constant 0 : index
    %114 = vector.load %arg15[%c0_63, %c0_64, %c0_65] : memref<1x256x128xf32, #tpu.memory_space<vmem>>, vector<1x256x128xf32>
    %115 = vector.shape_cast %114 : vector<1x256x128xf32> to vector<256x128xf32>
    %cst_66 = arith.constant dense<0.000000e+00> : vector<16x128xf32>
    %116 = tpu.matmul %113, %115, %cst_66 {dimension_numbers = #tpu.dot_dimension_numbers<[1], [0], [0], [1], [0, 0, 1, 1], [], []>} : vector<16x256xf32>, vector<256x128xf32>, vector<16x128xf32> -> vector<16x128xf32>
    %c0_67 = arith.constant 0 : index
    %c0_68 = arith.constant 0 : index
    %c0_69 = arith.constant 0 : index
    %117 = vector.load %arg16[%c0_67, %c0_68, %c0_69] : memref<1x1x128xf32, #tpu.memory_space<vmem>>, vector<1x1x128xf32>
    %118 = vector.shape_cast %117 : vector<1x1x128xf32> to vector<1x128xf32>
    %119 = vector.broadcast %118 : vector<1x128xf32> to vector<16x128xf32>
    %120 = arith.addf %116, %119 : vector<16x128xf32>
    %121 = arith.addf %78, %120 : vector<16x128xf32>
    %c0_70 = arith.constant 0 : index
    %c0_71 = arith.constant 0 : index
    %122 = vector.load %arg20[%c0_70, %c0_71] : memref<16x128xf32, #tpu.memory_space<vmem>>, vector<16x128xf32>
    tpu.vector_store %arg20[%c0_70, %c0_71], %121 {strides = array<i32>} : memref<16x128xf32, #tpu.memory_space<vmem>>, vector<16x128xf32>,
    %c1_i32 = arith.constant 1 : i32
    %123 = arith.cmpi eq, %arg0, %c1_i32 : i32
    %124 = arith.extui %123 : i1 to i32
    %c0_i32_72 = arith.constant 0 : i32
    %125 = arith.cmpi ne, %124, %c0_i32_72 : i32
    scf.if %125 {
      %c0_73 = arith.constant 0 : index
      %c0_74 = arith.constant 0 : index
      %126 = vector.load %arg17[%c0_73, %c0_74] : memref<1x128xf32, #tpu.memory_space<vmem>>, vector<1x128xf32>
      %c0_75 = arith.constant 0 : index
      %c0_76 = arith.constant 0 : index
      %127 = vector.load %arg18[%c0_75, %c0_76] : memref<1x128xf32, #tpu.memory_space<vmem>>, vector<1x128xf32>
      %cst_77 = arith.constant dense<0.000000e+00> : vector<16xf32>
      %128 = vector.multi_reduction <add>, %121, %cst_77 [1] : vector<16x128xf32> to vector<16xf32>
      %129 = vector.shape_cast %128 : vector<16xf32> to vector<16x1xf32>
      %cst_78 = arith.constant 1.280000e+02 : f32
      %130 = vector.broadcast %cst_78 : f32 to vector<16x1xf32>
      %131 = arith.divf %129, %130 : vector<16x1xf32>
      %132 = vector.broadcast %131 : vector<16x1xf32> to vector<16x128xf32>
      %133 = arith.subf %121, %132 : vector<16x128xf32>
      %134 = arith.mulf %133, %133 : vector<16x128xf32>
      %cst_79 = arith.constant dense<0.000000e+00> : vector<16xf32>
      %135 = vector.multi_reduction <add>, %134, %cst_79 [1] : vector<16x128xf32> to vector<16xf32>
      %136 = vector.shape_cast %135 : vector<16xf32> to vector<16x1xf32>
      %cst_80 = arith.constant 1.280000e+02 : f32
      %137 = vector.broadcast %cst_80 : f32 to vector<16x1xf32>
      %138 = arith.divf %136, %137 : vector<16x1xf32>
      %139 = vector.broadcast %131 : vector<16x1xf32> to vector<16x128xf32>
      %140 = arith.subf %121, %139 : vector<16x128xf32>
      %cst_81 = arith.constant 9.99999974E-6 : f32
      %141 = vector.broadcast %cst_81 : f32 to vector<16x1xf32>
      %142 = arith.addf %138, %141 : vector<16x1xf32>
      %143 = math.rsqrt %142 : vector<16x1xf32>
      %144 = vector.broadcast %143 : vector<16x1xf32> to vector<16x128xf32>
      %145 = arith.mulf %140, %144 : vector<16x128xf32>
      %146 = vector.broadcast %126 : vector<1x128xf32> to vector<16x128xf32>
      %147 = arith.mulf %145, %146 : vector<16x128xf32>
      %148 = vector.broadcast %127 : vector<1x128xf32> to vector<16x128xf32>
      %149 = arith.addf %147, %148 : vector<16x128xf32>
      %c0_82 = arith.constant 0 : index
      %c0_83 = arith.constant 0 : index
      %150 = vector.load %arg19[%c0_82, %c0_83] : memref<16x128xf32, #tpu.memory_space<vmem>>, vector<16x128xf32>
      tpu.vector_store %arg19[%c0_82, %c0_83], %149 {strides = array<i32>} : memref<16x128xf32, #tpu.memory_space<vmem>>, vector<16x128xf32>,
    } else {
    }
    return
  }
  func.func @transform_0(%arg0: i32) -> (i32, i32) {
    %c0_i32 = arith.constant 0 : i32
    %c0_i32_0 = arith.constant 0 : i32
    %c0_i32_1 = arith.constant 0 : i32
    return %c0_i32, %c0_i32_0 : i32, i32
  }
  func.func @transform_1(%arg0: i32) -> (i32, i32, i32) {
    %c0_i32 = arith.constant 0 : i32
    %c0_i32_0 = arith.constant 0 : i32
    %c0_i32_1 = arith.constant 0 : i32
    %c0_i32_2 = arith.constant 0 : i32
    return %c0_i32, %c0_i32_0, %c0_i32_1 : i32, i32, i32
  }
  func.func @transform_2(%arg0: i32) -> (i32, i32, i32) {
    %c0_i32 = arith.constant 0 : i32
    %c0_i32_0 = arith.constant 0 : i32
    %c0_i32_1 = arith.constant 0 : i32
    return %arg0, %c0_i32, %c0_i32_0 : i32, i32, i32
  }
  func.func @transform_3(%arg0: i32) -> (i32, i32, i32) {
    %c0_i32 = arith.constant 0 : i32
    %c0_i32_0 = arith.constant 0 : i32
    %c0_i32_1 = arith.constant 0 : i32
    return %arg0, %c0_i32, %c0_i32_0 : i32, i32, i32
  }
  func.func @transform_4(%arg0: i32) -> (i32, i32, i32) {
    %c0_i32 = arith.constant 0 : i32
    %c0_i32_0 = arith.constant 0 : i32
    %c0_i32_1 = arith.constant 0 : i32
    return %arg0, %c0_i32, %c0_i32_0 : i32, i32, i32
  }
  func.func @transform_5(%arg0: i32) -> (i32, i32, i32) {
    %c0_i32 = arith.constant 0 : i32
    %c0_i32_0 = arith.constant 0 : i32
    %c0_i32_1 = arith.constant 0 : i32
    return %arg0, %c0_i32, %c0_i32_0 : i32, i32, i32
  }
  func.func @transform_6(%arg0: i32) -> (i32, i32, i32) {
    %c0_i32 = arith.constant 0 : i32
    %c0_i32_0 = arith.constant 0 : i32
    %c0_i32_1 = arith.constant 0 : i32
    return %arg0, %c0_i32, %c0_i32_0 : i32, i32, i32
  }
  func.func @transform_7(%arg0: i32) -> (i32, i32, i32) {
    %c0_i32 = arith.constant 0 : i32
    %c0_i32_0 = arith.constant 0 : i32
    %c0_i32_1 = arith.constant 0 : i32
    return %arg0, %c0_i32, %c0_i32_0 : i32, i32, i32
  }
  func.func @transform_8(%arg0: i32) -> (i32, i32, i32) {
    %c0_i32 = arith.constant 0 : i32
    %c0_i32_0 = arith.constant 0 : i32
    %c0_i32_1 = arith.constant 0 : i32
    return %arg0, %c0_i32, %c0_i32_0 : i32, i32, i32
  }
  func.func @transform_9(%arg0: i32) -> (i32, i32, i32) {
    %c0_i32 = arith.constant 0 : i32
    %c0_i32_0 = arith.constant 0 : i32
    %c0_i32_1 = arith.constant 0 : i32
    return %arg0, %c0_i32, %c0_i32_0 : i32, i32, i32
  }
  func.func @transform_10(%arg0: i32) -> (i32, i32, i32) {
    %c0_i32 = arith.constant 0 : i32
    %c0_i32_0 = arith.constant 0 : i32
    %c0_i32_1 = arith.constant 0 : i32
    return %arg0, %c0_i32, %c0_i32_0 : i32, i32, i32
  }
  func.func @transform_11(%arg0: i32) -> (i32, i32, i32) {
    %c0_i32 = arith.constant 0 : i32
    %c0_i32_0 = arith.constant 0 : i32
    %c0_i32_1 = arith.constant 0 : i32
    return %arg0, %c0_i32, %c0_i32_0 : i32, i32, i32
  }
  func.func @transform_12(%arg0: i32) -> (i32, i32, i32) {
    %c0_i32 = arith.constant 0 : i32
    %c0_i32_0 = arith.constant 0 : i32
    %c0_i32_1 = arith.constant 0 : i32
    return %arg0, %c0_i32, %c0_i32_0 : i32, i32, i32
  }
  func.func @transform_13(%arg0: i32) -> (i32, i32, i32) {
    %c0_i32 = arith.constant 0 : i32
    %c0_i32_0 = arith.constant 0 : i32
    %c0_i32_1 = arith.constant 0 : i32
    return %arg0, %c0_i32, %c0_i32_0 : i32, i32, i32
  }
  func.func @transform_14(%arg0: i32) -> (i32, i32, i32) {
    %c0_i32 = arith.constant 0 : i32
    %c0_i32_0 = arith.constant 0 : i32
    %c0_i32_1 = arith.constant 0 : i32
    return %arg0, %c0_i32, %c0_i32_0 : i32, i32, i32
  }
  func.func @transform_15(%arg0: i32) -> (i32, i32, i32) {
    %c0_i32 = arith.constant 0 : i32
    %c0_i32_0 = arith.constant 0 : i32
    %c0_i32_1 = arith.constant 0 : i32
    return %arg0, %c0_i32, %c0_i32_0 : i32, i32, i32
  }
  func.func @transform_16(%arg0: i32) -> (i32, i32) {
    %c0_i32 = arith.constant 0 : i32
    %c0_i32_0 = arith.constant 0 : i32
    %c0_i32_1 = arith.constant 0 : i32
    return %c0_i32, %c0_i32_0 : i32, i32
  }
  func.func @transform_17(%arg0: i32) -> (i32, i32) {
    %c0_i32 = arith.constant 0 : i32
    %c0_i32_0 = arith.constant 0 : i32
    %c0_i32_1 = arith.constant 0 : i32
    return %c0_i32, %c0_i32_0 : i32, i32
  }
  func.func @transform_18(%arg0: i32) -> (i32, i32) {
    %c0_i32 = arith.constant 0 : i32
    %c0_i32_0 = arith.constant 0 : i32
    %c0_i32_1 = arith.constant 0 : i32
    return %c0_i32, %c0_i32_0 : i32, i32
  }
}

</mosaic_0001>

<llo_original>
// kernel: tpu_custom_call.1
$region0: #{tpu_custom_call.1}
  #allocation0 [shape = 'u32[]', space=smem, size = 0x4, offset = 0x4, fixed_abs, tag = 'smem constant byte address 0x4 - core index']
  #allocation1 [shape = 'u32[144,128]{1,0:T(1,128)}', space=vmem, size = 0x12000, scoped, tag = 'internal scratch']
  #allocation2 [shape = 'f32[16,128]{1,0:T(8,128)}', space=vmem, size = 0x2000, scoped, tag = 'scratch operand']
  %s0 = inlined_call_operand.hbm [shape: f32[16,128], index: 0, kind: input, shape index: {}, may-alias: {0,18}]
  %s1 = inlined_call_operand.vmem [shape: f32[16,16,10], index: 1, kind: input, shape index: {}]
  %s2 = inlined_call_operand.vmem [shape: f32[2,10,32], index: 2, kind: input, shape index: {}]
  %s3 = inlined_call_operand.vmem [shape: f32[2,10,32], index: 3, kind: input, shape index: {}]
  %s4 = inlined_call_operand.vmem [shape: f32[2,1,128], index: 4, kind: input, shape index: {}]
  %s5 = inlined_call_operand.vmem [shape: f32[2,1,128], index: 5, kind: input, shape index: {}]
  %s6 = inlined_call_operand.hbm [shape: f32[2,128,384], index: 6, kind: input, shape index: {}]
  %s7 = inlined_call_operand.vmem [shape: f32[2,1,384], index: 7, kind: input, shape index: {}]
  %s8 = inlined_call_operand.hbm [shape: f32[2,128,128], index: 8, kind: input, shape index: {}]
  %s9 = inlined_call_operand.vmem [shape: f32[2,1,128], index: 9, kind: input, shape index: {}]
  %s10 = inlined_call_operand.vmem [shape: f32[2,1,128], index: 10, kind: input, shape index: {}]
  %s11 = inlined_call_operand.vmem [shape: f32[2,1,128], index: 11, kind: input, shape index: {}]
  %s12 = inlined_call_operand.vmem [shape: f32[2,128,256], index: 12, kind: input, shape index: {}]
  %s13 = inlined_call_operand.vmem [shape: f32[2,1,256], index: 13, kind: input, shape index: {}]
  %s14 = inlined_call_operand.hbm [shape: f32[2,256,128], index: 14, kind: input, shape index: {}]
  %s15 = inlined_call_operand.vmem [shape: f32[2,1,128], index: 15, kind: input, shape index: {}]
  %s16 = inlined_call_operand.vmem [shape: f32[1,128], index: 16, kind: input, shape index: {}]
  %s17 = inlined_call_operand.vmem [shape: f32[1,128], index: 17, kind: input, shape index: {}]
  %s18 = inlined_call_operand.hbm [shape: f32[16,128], index: 18, kind: output, shape index: {}, may-alias: {0,18}]
  %s19 = sld [smem:[#allocation0]]
  $region129: #{tpu_custom_call.1} parent=0
    _
  %s21 = ssub.s32 1, %s19
  %s22 = scalar_select 0, %s21, %s19
  $region1: #{tpu_custom_call.1} parent=0
    #allocation3 [shape = 'u8[8192]{0}', space=vmem, size = 0x2000, scoped, tag = 'input window, operand 0, single buffered']
    #allocation4 [shape = 's32[2]{0}', space=sflag, size = 0x8, scoped, tag = 'scoped memory for tpu_custom_call.1']
    #allocation5 [shape = 's32[2]{0}', space=sflag, size = 0x8, scoped, tag = 'scoped memory for tpu_custom_call.1']
    #allocation6 [shape = 'u8[393216]{0}', space=vmem, size = 0x60000, scoped, tag = 'input window, operand 6']
    #allocation7 [shape = 's32[2]{0}', space=sflag, size = 0x8, scoped, tag = 'scoped memory for tpu_custom_call.1']
    #allocation8 [shape = 'u8[131072]{0}', space=vmem, size = 0x20000, scoped, tag = 'input window, operand 8']
    #allocation9 [shape = 'u8[262144]{0}', space=vmem, size = 0x40000, scoped, tag = 'input window, operand 14']
    #allocation10 [shape = 's32[2]{0}', space=sflag, size = 0x8, scoped, tag = 'scoped memory for tpu_custom_call.1']
    #allocation11 [shape = 'u8[8192]{0}', space=vmem, size = 0x2000, scoped, tag = 'output window, operand 0, single buffered']
    %23 = vsyncpa [#allocation4], 0
    %24 = vsyncpa [#allocation7], 0
    %s25 = scalar_lea.sflag [#allocation7], 1
    %26 = vsyncpa %s25, 0
    %27 = vsyncpa [#allocation10], 0
    %s28 = scalar_lea.sflag [#allocation10], 1
    %29 = vsyncpa %s28, 0
    %30 = vsyncpa [#allocation5], 0
    loop: start=0, step=1, limit=4
    $region2: #{tpu_custom_call.1} parent=1 // loop_pre_header
      _
    $region3: #{tpu_custom_call.1} parent=1 // loop_header
      %s32 = sphi 0, %s36
      %p33 = scmp.ge.s32.totalorder %s32, 4
      %s40 = sphi 0, %s40
      %s42 = sphi 0, %s40
      %s43 = sphi 0, %s42
      %s57 = sphi 0, %s43
      %s61 = sphi 0, %s61
      %s63 = sphi 0, %s61
      %s64 = sphi 0, %s63
      %s78 = sphi 0, %s64
      %s84 = sphi 0, %s86
      %s87 = sphi 0, %s84
      %s88 = sphi 0, %s87
      %s104 = sphi 0, %s88
      %s110 = sphi 0, %s112
      %s113 = sphi 0, %s110
      %s114 = sphi 0, %s113
      %s130 = sphi 0, %s114
      %s136 = sphi 0, %s138
      %s139 = sphi 0, %s136
      %s140 = sphi 0, %s139
      %s156 = sphi 0, %s140
      %s162 = sphi 0, %s164
      %s165 = sphi 0, %s162
      %s166 = sphi 0, %s165
      %s182 = sphi 0, %s166
      %s188 = sphi 0, %s190
      %s191 = sphi 0, %s188
      %s192 = sphi 0, %s191
      %s208 = sphi 0, %s192
      %s214 = sphi 0, %s216
      %s217 = sphi 0, %s214
      %s218 = sphi 0, %s217
      %s234 = sphi 0, %s218
      %s240 = sphi 0, %s242
      %s243 = sphi 0, %s240
      %s244 = sphi 0, %s243
      %s260 = sphi 0, %s244
      %s266 = sphi 0, %s268
      %s269 = sphi 0, %s266
      %s270 = sphi 0, %s269
      %s286 = sphi 0, %s270
      %s292 = sphi 0, %s294
      %s295 = sphi 0, %s292
      %s296 = sphi 0, %s295
      %s312 = sphi 0, %s296
      %s318 = sphi 0, %s320
      %s321 = sphi 0, %s318
      %s322 = sphi 0, %s321
      %s338 = sphi 0, %s322
      %s344 = sphi 0, %s346
      %s347 = sphi 0, %s344
      %s348 = sphi 0, %s347
      %s364 = sphi 0, %s348
      %s370 = sphi 0, %s372
      %s373 = sphi 0, %s370
      %s374 = sphi 0, %s373
      %s390 = sphi 0, %s374
      %s396 = sphi 0, %s398
      %s399 = sphi 0, %s396
      %s400 = sphi 0, %s399
      %s416 = sphi 0, %s400
      %s422 = sphi 0, %s424
      %s425 = sphi 0, %s422
      %s426 = sphi 0, %s425
      %s442 = sphi 0, %s426
      %s446 = sphi 0, %s446
      %s448 = sphi 0, %s446
      %s449 = sphi 0, %s448
      %s463 = sphi 0, %s449
      %s467 = sphi 0, %s467
      %s469 = sphi 0, %s467
      %s470 = sphi 0, %s469
      %s484 = sphi 0, %s470
      %s488 = sphi 0, %s488
      %s490 = sphi 0, %s488
      %s491 = sphi 0, %s490
      %s505 = sphi 0, %s491
    $region4: #{tpu_custom_call.1} parent=1 // loop_header_branch
      %35 = sbr.rel (%p33) target = $region8
    $region5: #{tpu_custom_call.1} parent=1 // loop_body
      %s37 = ssub.s32 %s32, 1
      %s38 = ssub.s32 %s32, 2
      %s39 = sadd.s32 %s32, 1
      %s41 = sadd.s32 %s40, 1
      %p44 = scmp.eq.s32.totalorder %s32, 1
      %p45 = scmp.ne.s32.totalorder %s40, %s42
      %p46 = scmp.eq.s32.totalorder %s32, 0
      %p47 = por %p45, %p46
      %p48 = scmp.ne.s32.totalorder %s40, %s42
      %p49 = scmp.eq.s32.totalorder %s37, 1
      %p50 = por %p48, %p49
      %p51 = scmp.ne.s32.totalorder %s42, %s43
      %p52 = scmp.eq.s32.totalorder %s37, 0
      %p53 = por %p51, %p52
      %p54 = scmp.ne.s32.totalorder %s42, %s43
      %p55 = scmp.eq.s32.totalorder %s38, 1
      %p56 = por %p54, %p55
      %p58 = scmp.ne.s32.totalorder %s43, %s57
      %p59 = scmp.eq.s32.totalorder %s38, 0
      %p60 = por %p58, %p59
      %s62 = sadd.s32 %s61, 1
      %p65 = scmp.eq.s32.totalorder %s32, 1
      %p66 = scmp.ne.s32.totalorder %s61, %s63
      %p67 = scmp.eq.s32.totalorder %s32, 0
      %p68 = por %p66, %p67
      %p69 = scmp.ne.s32.totalorder %s61, %s63
      %p70 = scmp.eq.s32.totalorder %s37, 1
      %p71 = por %p69, %p70
      %p72 = scmp.ne.s32.totalorder %s63, %s64
      %p73 = scmp.eq.s32.totalorder %s37, 0
      %p74 = por %p72, %p73
      %p75 = scmp.ne.s32.totalorder %s63, %s64
      %p76 = scmp.eq.s32.totalorder %s38, 1
      %p77 = por %p75, %p76
      %p79 = scmp.ne.s32.totalorder %s64, %s78
      %p80 = scmp.eq.s32.totalorder %s38, 0
      %p81 = por %p79, %p80
      %s82 = ssub.s32 %s32, %s39
      %p83 = scmp.eq.s32.totalorder %s82, 0
      %s85 = sadd.s32 %s84, 1
      %s86 = scalar_select %p83, %s84, %s85
      %p89 = pneg %p83
      %p90 = scmp.eq.s32.totalorder %s32, 1
      %p91 = por %p89, %p90
      %p92 = scmp.ne.s32.totalorder %s84, %s87
      %p93 = scmp.eq.s32.totalorder %s32, 0
      %p94 = por %p92, %p93
      %p95 = scmp.ne.s32.totalorder %s84, %s87
      %p96 = scmp.eq.s32.totalorder %s37, 1
      %p97 = por %p95, %p96
      %p98 = scmp.ne.s32.totalorder %s87, %s88
      %p99 = scmp.eq.s32.totalorder %s37, 0
      %p100 = por %p98, %p99
      %p101 = scmp.ne.s32.totalorder %s87, %s88
      %p102 = scmp.eq.s32.totalorder %s38, 1
      %p103 = por %p101, %p102
      %p105 = scmp.ne.s32.totalorder %s88, %s104
      %p106 = scmp.eq.s32.totalorder %s38, 0
      %p107 = por %p105, %p106
      %s108 = ssub.s32 %s32, %s39
      %p109 = scmp.eq.s32.totalorder %s108, 0
      %s111 = sadd.s32 %s110, 1
      %s112 = scalar_select %p109, %s110, %s111
      %p115 = pneg %p109
      %p116 = scmp.eq.s32.totalorder %s32, 1
      %p117 = por %p115, %p116
      %p118 = scmp.ne.s32.totalorder %s110, %s113
      %p119 = scmp.eq.s32.totalorder %s32, 0
      %p120 = por %p118, %p119
      %p121 = scmp.ne.s32.totalorder %s110, %s113
      %p122 = scmp.eq.s32.totalorder %s37, 1
      %p123 = por %p121, %p122
      %p124 = scmp.ne.s32.totalorder %s113, %s114
      %p125 = scmp.eq.s32.totalorder %s37, 0
      %p126 = por %p124, %p125
      %p127 = scmp.ne.s32.totalorder %s113, %s114
      %p128 = scmp.eq.s32.totalorder %s38, 1
      %p129 = por %p127, %p128
      %p131 = scmp.ne.s32.totalorder %s114, %s130
      %p132 = scmp.eq.s32.totalorder %s38, 0
      %p133 = por %p131, %p132
      %s134 = ssub.s32 %s32, %s39
      %p135 = scmp.eq.s32.totalorder %s134, 0
      %s137 = sadd.s32 %s136, 1
      %s138 = scalar_select %p135, %s136, %s137
      %p141 = pneg %p135
      %p142 = scmp.eq.s32.totalorder %s32, 1
      %p143 = por %p141, %p142
      %p144 = scmp.ne.s32.totalorder %s136, %s139
      %p145 = scmp.eq.s32.totalorder %s32, 0
      %p146 = por %p144, %p145
      %p147 = scmp.ne.s32.totalorder %s136, %s139
      %p148 = scmp.eq.s32.totalorder %s37, 1
      %p149 = por %p147, %p148
      %p150 = scmp.ne.s32.totalorder %s139, %s140
      %p151 = scmp.eq.s32.totalorder %s37, 0
      %p152 = por %p150, %p151
      %p153 = scmp.ne.s32.totalorder %s139, %s140
      %p154 = scmp.eq.s32.totalorder %s38, 1
      %p155 = por %p153, %p154
      %p157 = scmp.ne.s32.totalorder %s140, %s156
      %p158 = scmp.eq.s32.totalorder %s38, 0
      %p159 = por %p157, %p158
      %s160 = ssub.s32 %s32, %s39
      %p161 = scmp.eq.s32.totalorder %s160, 0
      %s163 = sadd.s32 %s162, 1
      %s164 = scalar_select %p161, %s162, %s163
      %p167 = pneg %p161
      %p168 = scmp.eq.s32.totalorder %s32, 1
      %p169 = por %p167, %p168
      %p170 = scmp.ne.s32.totalorder %s162, %s165
      %p171 = scmp.eq.s32.totalorder %s32, 0
      %p172 = por %p170, %p171
      %p173 = scmp.ne.s32.totalorder %s162, %s165
      %p174 = scmp.eq.s32.totalorder %s37, 1
      %p175 = por %p173, %p174
      %p176 = scmp.ne.s32.totalorder %s165, %s166
      %p177 = scmp.eq.s32.totalorder %s37, 0
      %p178 = por %p176, %p177
      %p179 = scmp.ne.s32.totalorder %s165, %s166
      %p180 = scmp.eq.s32.totalorder %s38, 1
      %p181 = por %p179, %p180
      %p183 = scmp.ne.s32.totalorder %s166, %s182
      %p184 = scmp.eq.s32.totalorder %s38, 0
      %p185 = por %p183, %p184
      %s186 = ssub.s32 %s32, %s39
      %p187 = scmp.eq.s32.totalorder %s186, 0
      %s189 = sadd.s32 %s188, 1
      %s190 = scalar_select %p187, %s188, %s189
      %p193 = pneg %p187
      %p194 = scmp.eq.s32.totalorder %s32, 1
      %p195 = por %p193, %p194
      %p196 = scmp.ne.s32.totalorder %s188, %s191
      %p197 = scmp.eq.s32.totalorder %s32, 0
      %p198 = por %p196, %p197
      %p199 = scmp.ne.s32.totalorder %s188, %s191
      %p200 = scmp.eq.s32.totalorder %s37, 1
      %p201 = por %p199, %p200
      %p202 = scmp.ne.s32.totalorder %s191, %s192
      %p203 = scmp.eq.s32.totalorder %s37, 0
      %p204 = por %p202, %p203
      %p205 = scmp.ne.s32.totalorder %s191, %s192
      %p206 = scmp.eq.s32.totalorder %s38, 1
      %p207 = por %p205, %p206
      %p209 = scmp.ne.s32.totalorder %s192, %s208
      %p210 = scmp.eq.s32.totalorder %s38, 0
      %p211 = por %p209, %p210
      %s212 = ssub.s32 %s32, %s39
      %p213 = scmp.eq.s32.totalorder %s212, 0
      %s215 = sadd.s32 %s214, 1
      %s216 = scalar_select %p213, %s214, %s215
      %p219 = pneg %p213
      %p220 = scmp.eq.s32.totalorder %s32, 1
      %p221 = por %p219, %p220
      %p222 = scmp.ne.s32.totalorder %s214, %s217
      %p223 = scmp.eq.s32.totalorder %s32, 0
      %p224 = por %p222, %p223
      %p225 = scmp.ne.s32.totalorder %s214, %s217
      %p226 = scmp.eq.s32.totalorder %s37, 1
      %p227 = por %p225, %p226
      %p228 = scmp.ne.s32.totalorder %s217, %s218
      %p229 = scmp.eq.s32.totalorder %s37, 0
      %p230 = por %p228, %p229
      %p231 = scmp.ne.s32.totalorder %s217, %s218
      %p232 = scmp.eq.s32.totalorder %s38, 1
      %p233 = por %p231, %p232
      %p235 = scmp.ne.s32.totalorder %s218, %s234
      %p236 = scmp.eq.s32.totalorder %s38, 0
      %p237 = por %p235, %p236
      %s238 = ssub.s32 %s32, %s39
      %p239 = scmp.eq.s32.totalorder %s238, 0
      %s241 = sadd.s32 %s240, 1
      %s242 = scalar_select %p239, %s240, %s241
      %p245 = pneg %p239
      %p246 = scmp.eq.s32.totalorder %s32, 1
      %p247 = por %p245, %p246
      %p248 = scmp.ne.s32.totalorder %s240, %s243
      %p249 = scmp.eq.s32.totalorder %s32, 0
      %p250 = por %p248, %p249
      %p251 = scmp.ne.s32.totalorder %s240, %s243
      %p252 = scmp.eq.s32.totalorder %s37, 1
      %p253 = por %p251, %p252
      %p254 = scmp.ne.s32.totalorder %s243, %s244
      %p255 = scmp.eq.s32.totalorder %s37, 0
      %p256 = por %p254, %p255
      %p257 = scmp.ne.s32.totalorder %s243, %s244
      %p258 = scmp.eq.s32.totalorder %s38, 1
      %p259 = por %p257, %p258
      %p261 = scmp.ne.s32.totalorder %s244, %s260
      %p262 = scmp.eq.s32.totalorder %s38, 0
      %p263 = por %p261, %p262
      %s264 = ssub.s32 %s32, %s39
      %p265 = scmp.eq.s32.totalorder %s264, 0
      %s267 = sadd.s32 %s266, 1
      %s268 = scalar_select %p265, %s266, %s267
      %p271 = pneg %p265
      %p272 = scmp.eq.s32.totalorder %s32, 1
      %p273 = por %p271, %p272
      %p274 = scmp.ne.s32.totalorder %s266, %s269
      %p275 = scmp.eq.s32.totalorder %s32, 0
      %p276 = por %p274, %p275
      %p277 = scmp.ne.s32.totalorder %s266, %s269
      %p278 = scmp.eq.s32.totalorder %s37, 1
      %p279 = por %p277, %p278
      %p280 = scmp.ne.s32.totalorder %s269, %s270
      %p281 = scmp.eq.s32.totalorder %s37, 0
      %p282 = por %p280, %p281
      %p283 = scmp.ne.s32.totalorder %s269, %s270
      %p284 = scmp.eq.s32.totalorder %s38, 1
      %p285 = por %p283, %p284
      %p287 = scmp.ne.s32.totalorder %s270, %s286
      %p288 = scmp.eq.s32.totalorder %s38, 0
      %p289 = por %p287, %p288
      %s290 = ssub.s32 %s32, %s39
      %p291 = scmp.eq.s32.totalorder %s290, 0
      %s293 = sadd.s32 %s292, 1
      %s294 = scalar_select %p291, %s292, %s293
      %p297 = pneg %p291
      %p298 = scmp.eq.s32.totalorder %s32, 1
      %p299 = por %p297, %p298
      %p300 = scmp.ne.s32.totalorder %s292, %s295
      %p301 = scmp.eq.s32.totalorder %s32, 0
      %p302 = por %p300, %p301
      %p303 = scmp.ne.s32.totalorder %s292, %s295
      %p304 = scmp.eq.s32.totalorder %s37, 1
      %p305 = por %p303, %p304
      %p306 = scmp.ne.s32.totalorder %s295, %s296
      %p307 = scmp.eq.s32.totalorder %s37, 0
      %p308 = por %p306, %p307
      %p309 = scmp.ne.s32.totalorder %s295, %s296
      %p310 = scmp.eq.s32.totalorder %s38, 1
      %p311 = por %p309, %p310
      %p313 = scmp.ne.s32.totalorder %s296, %s312
      %p314 = scmp.eq.s32.totalorder %s38, 0
      %p315 = por %p313, %p314
      %s316 = ssub.s32 %s32, %s39
      %p317 = scmp.eq.s32.totalorder %s316, 0
      %s319 = sadd.s32 %s318, 1
      %s320 = scalar_select %p317, %s318, %s319
      %p323 = pneg %p317
      %p324 = scmp.eq.s32.totalorder %s32, 1
      %p325 = por %p323, %p324
      %p326 = scmp.ne.s32.totalorder %s318, %s321
      %p327 = scmp.eq.s32.totalorder %s32, 0
      %p328 = por %p326, %p327
      %p329 = scmp.ne.s32.totalorder %s318, %s321
      %p330 = scmp.eq.s32.totalorder %s37, 1
      %p331 = por %p329, %p330
      %p332 = scmp.ne.s32.totalorder %s321, %s322
      %p333 = scmp.eq.s32.totalorder %s37, 0
      %p334 = por %p332, %p333
      %p335 = scmp.ne.s32.totalorder %s321, %s322
      %p336 = scmp.eq.s32.totalorder %s38, 1
      %p337 = por %p335, %p336
      %p339 = scmp.ne.s32.totalorder %s322, %s338
      %p340 = scmp.eq.s32.totalorder %s38, 0
      %p341 = por %p339, %p340
      %s342 = ssub.s32 %s32, %s39
      %p343 = scmp.eq.s32.totalorder %s342, 0
      %s345 = sadd.s32 %s344, 1
      %s346 = scalar_select %p343, %s344, %s345
      %p349 = pneg %p343
      %p350 = scmp.eq.s32.totalorder %s32, 1
      %p351 = por %p349, %p350
      %p352 = scmp.ne.s32.totalorder %s344, %s347
      %p353 = scmp.eq.s32.totalorder %s32, 0
      %p354 = por %p352, %p353
      %p355 = scmp.ne.s32.totalorder %s344, %s347
      %p356 = scmp.eq.s32.totalorder %s37, 1
      %p357 = por %p355, %p356
      %p358 = scmp.ne.s32.totalorder %s347, %s348
      %p359 = scmp.eq.s32.totalorder %s37, 0
      %p360 = por %p358, %p359
      %p361 = scmp.ne.s32.totalorder %s347, %s348
      %p362 = scmp.eq.s32.totalorder %s38, 1
      %p363 = por %p361, %p362
      %p365 = scmp.ne.s32.totalorder %s348, %s364
      %p366 = scmp.eq.s32.totalorder %s38, 0
      %p367 = por %p365, %p366
      %s368 = ssub.s32 %s32, %s39
      %p369 = scmp.eq.s32.totalorder %s368, 0
      %s371 = sadd.s32 %s370, 1
      %s372 = scalar_select %p369, %s370, %s371
      %p375 = pneg %p369
      %p376 = scmp.eq.s32.totalorder %s32, 1
      %p377 = por %p375, %p376
      %p378 = scmp.ne.s32.totalorder %s370, %s373
      %p379 = scmp.eq.s32.totalorder %s32, 0
      %p380 = por %p378, %p379
      %p381 = scmp.ne.s32.totalorder %s370, %s373
      %p382 = scmp.eq.s32.totalorder %s37, 1
      %p383 = por %p381, %p382
      %p384 = scmp.ne.s32.totalorder %s373, %s374
      %p385 = scmp.eq.s32.totalorder %s37, 0
      %p386 = por %p384, %p385
      %p387 = scmp.ne.s32.totalorder %s373, %s374
      %p388 = scmp.eq.s32.totalorder %s38, 1
      %p389 = por %p387, %p388
      %p391 = scmp.ne.s32.totalorder %s374, %s390
      %p392 = scmp.eq.s32.totalorder %s38, 0
      %p393 = por %p391, %p392
      %s394 = ssub.s32 %s32, %s39
      %p395 = scmp.eq.s32.totalorder %s394, 0
      %s397 = sadd.s32 %s396, 1
      %s398 = scalar_select %p395, %s396, %s397
      %p401 = pneg %p395
      %p402 = scmp.eq.s32.totalorder %s32, 1
      %p403 = por %p401, %p402
      %p404 = scmp.ne.s32.totalorder %s396, %s399
      %p405 = scmp.eq.s32.totalorder %s32, 0
      %p406 = por %p404, %p405
      %p407 = scmp.ne.s32.totalorder %s396, %s399
      %p408 = scmp.eq.s32.totalorder %s37, 1
      %p409 = por %p407, %p408
      %p410 = scmp.ne.s32.totalorder %s399, %s400
      %p411 = scmp.eq.s32.totalorder %s37, 0
      %p412 = por %p410, %p411
      %p413 = scmp.ne.s32.totalorder %s399, %s400
      %p414 = scmp.eq.s32.totalorder %s38, 1
      %p415 = por %p413, %p414
      %p417 = scmp.ne.s32.totalorder %s400, %s416
      %p418 = scmp.eq.s32.totalorder %s38, 0
      %p419 = por %p417, %p418
      %s420 = ssub.s32 %s32, %s39
      %p421 = scmp.eq.s32.totalorder %s420, 0
      %s423 = sadd.s32 %s422, 1
      %s424 = scalar_select %p421, %s422, %s423
      %p427 = pneg %p421
      %p428 = scmp.eq.s32.totalorder %s32, 1
      %p429 = por %p427, %p428
      %p430 = scmp.ne.s32.totalorder %s422, %s425
      %p431 = scmp.eq.s32.totalorder %s32, 0
      %p432 = por %p430, %p431
      %p433 = scmp.ne.s32.totalorder %s422, %s425
      %p434 = scmp.eq.s32.totalorder %s37, 1
      %p435 = por %p433, %p434
      %p436 = scmp.ne.s32.totalorder %s425, %s426
      %p437 = scmp.eq.s32.totalorder %s37, 0
      %p438 = por %p436, %p437
      %p439 = scmp.ne.s32.totalorder %s425, %s426
      %p440 = scmp.eq.s32.totalorder %s38, 1
      %p441 = por %p439, %p440
      %p443 = scmp.ne.s32.totalorder %s426, %s442
      %p444 = scmp.eq.s32.totalorder %s38, 0
      %p445 = por %p443, %p444
      %s447 = sadd.s32 %s446, 1
      %p450 = scmp.eq.s32.totalorder %s32, 1
      %p451 = scmp.ne.s32.totalorder %s446, %s448
      %p452 = scmp.eq.s32.totalorder %s32, 0
      %p453 = por %p451, %p452
      %p454 = scmp.ne.s32.totalorder %s446, %s448
      %p455 = scmp.eq.s32.totalorder %s37, 1
      %p456 = por %p454, %p455
      %p457 = scmp.ne.s32.totalorder %s448, %s449
      %p458 = scmp.eq.s32.totalorder %s37, 0
      %p459 = por %p457, %p458
      %p460 = scmp.ne.s32.totalorder %s448, %s449
      %p461 = scmp.eq.s32.totalorder %s38, 1
      %p462 = por %p460, %p461
      %p464 = scmp.ne.s32.totalorder %s449, %s463
      %p465 = scmp.eq.s32.totalorder %s38, 0
      %p466 = por %p464, %p465
      %s468 = sadd.s32 %s467, 1
      %p471 = scmp.eq.s32.totalorder %s32, 1
      %p472 = scmp.ne.s32.totalorder %s467, %s469
      %p473 = scmp.eq.s32.totalorder %s32, 0
      %p474 = por %p472, %p473
      %p475 = scmp.ne.s32.totalorder %s467, %s469
      %p476 = scmp.eq.s32.totalorder %s37, 1
      %p477 = por %p475, %p476
      %p478 = scmp.ne.s32.totalorder %s469, %s470
      %p479 = scmp.eq.s32.totalorder %s37, 0
      %p480 = por %p478, %p479
      %p481 = scmp.ne.s32.totalorder %s469, %s470
      %p482 = scmp.eq.s32.totalorder %s38, 1
      %p483 = por %p481, %p482
      %p485 = scmp.ne.s32.totalorder %s470, %s484
      %p486 = scmp.eq.s32.totalorder %s38, 0
      %p487 = por %p485, %p486
      %s489 = sadd.s32 %s488, 1
      %p492 = scmp.eq.s32.totalorder %s32, 1
      %p493 = scmp.ne.s32.totalorder %s488, %s490
      %p494 = scmp.eq.s32.totalorder %s32, 0
      %p495 = por %p493, %p494
      %p496 = scmp.ne.s32.totalorder %s488, %s490
      %p497 = scmp.eq.s32.totalorder %s37, 1
      %p498 = por %p496, %p497
      %p499 = scmp.ne.s32.totalorder %s490, %s491
      %p500 = scmp.eq.s32.totalorder %s37, 0
      %p501 = por %p499, %p500
      %p502 = scmp.ne.s32.totalorder %s490, %s491
      %p503 = scmp.eq.s32.totalorder %s38, 1
      %p504 = por %p502, %p503
      %p506 = scmp.ne.s32.totalorder %s491, %s505
      %p507 = scmp.eq.s32.totalorder %s38, 0
      %p508 = por %p506, %p507
      %p509 = scmp.le.s32.totalorder 1, %s32
      %p510 = scmp.lt.s32.totalorder %s32, 3
      %p511 = pnand %p509, %p510
      %p512 = pneg %p511
      // Predicated region
      $region9: #{tpu_custom_call.1} parent=5 // pred_check
        _
      $region10: #{tpu_custom_call.1} parent=5 // pred_check_branch
        %514 = sbr.rel (%p511) target = $region12
      $region11: #{tpu_custom_call.1} parent=5 // pred_region
        %s515 = ssub.s32 %s32, 1
        // Predicated region
        $region13: #{tpu_custom_call.1} parent=11 // pred_check
          %p516 = pneg %p53
        $region14: #{tpu_custom_call.1} parent=11 // pred_check_branch
          %518 = sbr.rel (%p516) target = $region16
        $region15: #{tpu_custom_call.1} parent=11 // pred_region
          %s520 = ssub.s32 256, 256
          %521 = vsyncadd [#allocation4], %s520
          %s522 = sshll.u32 [#allocation3], 4
          %s523 = int_to_ptr.vmem [resolvable:$true] %s522
          %528 = dma.hbm_to_vmem [thread:$0]  %s0, 256, %s523, [#allocation4], 128, 128, 8
        $region16: #{tpu_custom_call.1} parent=11 // pred_fallthru
          _
        // Predicated region
        $region17: #{tpu_custom_call.1} parent=11 // pred_check
          %p529 = pneg %p74
        $region18: #{tpu_custom_call.1} parent=11 // pred_check_branch
          %531 = sbr.rel (%p529) target = $region20
        $region19: #{tpu_custom_call.1} parent=11 // pred_region
          _
        $region20: #{tpu_custom_call.1} parent=11 // pred_fallthru
          _
        // Predicated region
        $region21: #{tpu_custom_call.1} parent=11 // pred_check
          %p532 = pneg %p459
        $region22: #{tpu_custom_call.1} parent=11 // pred_check_branch
          %534 = sbr.rel (%p532) target = $region24
        $region23: #{tpu_custom_call.1} parent=11 // pred_region
          _
        $region24: #{tpu_custom_call.1} parent=11 // pred_fallthru
          _
        // Predicated region
        $region25: #{tpu_custom_call.1} parent=11 // pred_check
          %p535 = pneg %p480
        $region26: #{tpu_custom_call.1} parent=11 // pred_check_branch
          %537 = sbr.rel (%p535) target = $region28
        $region27: #{tpu_custom_call.1} parent=11 // pred_region
          _
        $region28: #{tpu_custom_call.1} parent=11 // pred_fallthru
          _
      $region12: #{tpu_custom_call.1} parent=5 // pred_fallthru
        _
      %p538 = scmp.lt.s32.totalorder %s32, 2
      // Predicated region
      $region29: #{tpu_custom_call.1} parent=5 // pred_check
        %p539 = pneg %p538
      $region30: #{tpu_custom_call.1} parent=5 // pred_check_branch
        %541 = sbr.rel (%p539) target = $region32
      $region31: #{tpu_custom_call.1} parent=5 // pred_region
        // Predicated region
        $region33: #{tpu_custom_call.1} parent=31 // pred_check
          %p542 = pneg %p94
        $region34: #{tpu_custom_call.1} parent=31 // pred_check_branch
          %544 = sbr.rel (%p542) target = $region36
        $region35: #{tpu_custom_call.1} parent=31 // pred_region
          %p545 = scmp.lt.s32.totalorder %s32, 1
          %s546 = scalar_select %p545, %s32, 1
          %s547 = smul.addr %s546, 2
          %s548 = smul.addr %s547, 8
          %s549 = scalar_lea.vmem %s2, %s548
        $region36: #{tpu_custom_call.1} parent=31 // pred_fallthru
          _
        // Predicated region
        $region37: #{tpu_custom_call.1} parent=31 // pred_check
          %p550 = pneg %p120
        $region38: #{tpu_custom_call.1} parent=31 // pred_check_branch
          %552 = sbr.rel (%p550) target = $region40
        $region39: #{tpu_custom_call.1} parent=31 // pred_region
          %p553 = scmp.lt.s32.totalorder %s32, 1
          %s554 = scalar_select %p553, %s32, 1
          %s555 = smul.addr %s554, 2
          %s556 = smul.addr %s555, 8
          %s557 = scalar_lea.vmem %s3, %s556
        $region40: #{tpu_custom_call.1} parent=31 // pred_fallthru
          _
        // Predicated region
        $region41: #{tpu_custom_call.1} parent=31 // pred_check
          %p558 = pneg %p146
        $region42: #{tpu_custom_call.1} parent=31 // pred_check_branch
          %560 = sbr.rel (%p558) target = $region44
        $region43: #{tpu_custom_call.1} parent=31 // pred_region
          %p561 = scmp.lt.s32.totalorder %s32, 1
          %s562 = scalar_select %p561, %s32, 1
          %s563 = scalar_lea.vmem %s4, %s562
        $region44: #{tpu_custom_call.1} parent=31 // pred_fallthru
          _
        // Predicated region
        $region45: #{tpu_custom_call.1} parent=31 // pred_check
          %p564 = pneg %p172
        $region46: #{tpu_custom_call.1} parent=31 // pred_check_branch
          %566 = sbr.rel (%p564) target = $region48
        $region47: #{tpu_custom_call.1} parent=31 // pred_region
          %p567 = scmp.lt.s32.totalorder %s32, 1
          %s568 = scalar_select %p567, %s32, 1
          %s569 = scalar_lea.vmem %s5, %s568
        $region48: #{tpu_custom_call.1} parent=31 // pred_fallthru
          _
        // Predicated region
        $region49: #{tpu_custom_call.1} parent=31 // pred_check
          %p570 = pneg %p198
        $region50: #{tpu_custom_call.1} parent=31 // pred_check_branch
          %572 = sbr.rel (%p570) target = $region52
        $region51: #{tpu_custom_call.1} parent=31 // pred_region
          %s573 = sand.u32 %s32, 1
          %s574 = scalar_lea.sflag [#allocation7], %s573
          %s575 = sand.u32 %s188, 1
          %s576 = smul.addr %s575, 384
          %s577 = scalar_lea.vmem [#allocation6], %s576
          %s579 = ssub.s32 6144, 6144
          %580 = vsyncadd %s574, %s579
          %s581 = smul.addr %s32, 48
          %s582 = smul.addr %s581, 128
          %s583 = scalar_lea.hbm %s6, %s582
          %s584 = sshll.u32 %s577, 4
          %s585 = int_to_ptr.vmem [resolvable:$true] %s584
          %590 = dma.hbm_to_vmem [thread:$0]  %s583, 6144, %s585, %s574, 384, 384, 24
        $region52: #{tpu_custom_call.1} parent=31 // pred_fallthru
          _
        // Predicated region
        $region53: #{tpu_custom_call.1} parent=31 // pred_check
          %p591 = pneg %p224
        $region54: #{tpu_custom_call.1} parent=31 // pred_check_branch
          %593 = sbr.rel (%p591) target = $region56
        $region55: #{tpu_custom_call.1} parent=31 // pred_region
          %p594 = scmp.lt.s32.totalorder %s32, 1
          %s595 = scalar_select %p594, %s32, 1
          %s596 = smul.addr %s595, 3
          %s597 = scalar_lea.vmem %s7, %s596
        $region56: #{tpu_custom_call.1} parent=31 // pred_fallthru
          _
        // Predicated region
        $region57: #{tpu_custom_call.1} parent=31 // pred_check
          %p598 = pneg %p250
        $region58: #{tpu_custom_call.1} parent=31 // pred_check_branch
          %600 = sbr.rel (%p598) target = $region60
        $region59: #{tpu_custom_call.1} parent=31 // pred_region
          %s601 = sand.u32 %s32, 1
          %s602 = scalar_lea.sflag [#allocation7], %s601
          %s603 = sand.u32 %s240, 1
          %s604 = smul.addr %s603, 128
          %s605 = scalar_lea.vmem [#allocation8], %s604
          %s607 = ssub.s32 2048, 2048
          %608 = vsyncadd %s602, %s607
          %s609 = smul.addr %s32, 16
          %s610 = smul.addr %s609, 128
          %s611 = scalar_lea.hbm %s8, %s610
          %s612 = sshll.u32 %s605, 4
          %s613 = int_to_ptr.vmem [resolvable:$true] %s612
          %618 = dma.hbm_to_vmem [thread:$0]  %s611, 2048, %s613, %s602, 128, 128, 8
        $region60: #{tpu_custom_call.1} parent=31 // pred_fallthru
          _
        // Predicated region
        $region61: #{tpu_custom_call.1} parent=31 // pred_check
          %p619 = pneg %p276
        $region62: #{tpu_custom_call.1} parent=31 // pred_check_branch
          %621 = sbr.rel (%p619) target = $region64
        $region63: #{tpu_custom_call.1} parent=31 // pred_region
          %p622 = scmp.lt.s32.totalorder %s32, 1
          %s623 = scalar_select %p622, %s32, 1
          %s624 = scalar_lea.vmem %s9, %s623
        $region64: #{tpu_custom_call.1} parent=31 // pred_fallthru
          _
        // Predicated region
        $region65: #{tpu_custom_call.1} parent=31 // pred_check
          %p625 = pneg %p302
        $region66: #{tpu_custom_call.1} parent=31 // pred_check_branch
          %627 = sbr.rel (%p625) target = $region68
        $region67: #{tpu_custom_call.1} parent=31 // pred_region
          %p628 = scmp.lt.s32.totalorder %s32, 1
          %s629 = scalar_select %p628, %s32, 1
          %s630 = scalar_lea.vmem %s10, %s629
        $region68: #{tpu_custom_call.1} parent=31 // pred_fallthru
          _
        // Predicated region
        $region69: #{tpu_custom_call.1} parent=31 // pred_check
          %p631 = pneg %p328
        $region70: #{tpu_custom_call.1} parent=31 // pred_check_branch
          %633 = sbr.rel (%p631) target = $region72
        $region71: #{tpu_custom_call.1} parent=31 // pred_region
          %p634 = scmp.lt.s32.totalorder %s32, 1
          %s635 = scalar_select %p634, %s32, 1
          %s636 = scalar_lea.vmem %s11, %s635
        $region72: #{tpu_custom_call.1} parent=31 // pred_fallthru
          _
        // Predicated region
        $region73: #{tpu_custom_call.1} parent=31 // pred_check
          %p637 = pneg %p354
        $region74: #{tpu_custom_call.1} parent=31 // pred_check_branch
          %639 = sbr.rel (%p637) target = $region76
        $region75: #{tpu_custom_call.1} parent=31 // pred_region
          %p640 = scmp.lt.s32.totalorder %s32, 1
          %s641 = scalar_select %p640, %s32, 1
          %s642 = smul.addr %s641, 32
          %s643 = smul.addr %s642, 8
          %s644 = scalar_lea.vmem %s12, %s643
        $region76: #{tpu_custom_call.1} parent=31 // pred_fallthru
          _
        // Predicated region
        $region77: #{tpu_custom_call.1} parent=31 // pred_check
          %p645 = pneg %p380
        $region78: #{tpu_custom_call.1} parent=31 // pred_check_branch
          %647 = sbr.rel (%p645) target = $region80
        $region79: #{tpu_custom_call.1} parent=31 // pred_region
          %p648 = scmp.lt.s32.totalorder %s32, 1
          %s649 = scalar_select %p648, %s32, 1
          %s650 = smul.addr %s649, 2
          %s651 = scalar_lea.vmem %s13, %s650
        $region80: #{tpu_custom_call.1} parent=31 // pred_fallthru
          _
        // Predicated region
        $region81: #{tpu_custom_call.1} parent=31 // pred_check
          %p652 = pneg %p406
        $region82: #{tpu_custom_call.1} parent=31 // pred_check_branch
          %654 = sbr.rel (%p652) target = $region84
        $region83: #{tpu_custom_call.1} parent=31 // pred_region
          %s655 = sand.u32 %s396, 1
          %s656 = scalar_lea.sflag [#allocation10], %s655
          %s657 = sand.u32 %s396, 1
          %s658 = smul.addr %s657, 256
          %s659 = scalar_lea.vmem [#allocation9], %s658
          %s661 = ssub.s32 4096, 4096
          %662 = vsyncadd %s656, %s661
          %s663 = smul.addr %s32, 32
          %s664 = smul.addr %s663, 128
          %s665 = scalar_lea.hbm %s14, %s664
          %s666 = sshll.u32 %s659, 4
          %s667 = int_to_ptr.vmem [resolvable:$true] %s666
          %672 = dma.hbm_to_vmem [thread:$0]  %s665, 4096, %s667, %s656, 128, 128, 8
        $region84: #{tpu_custom_call.1} parent=31 // pred_fallthru
          _
        // Predicated region
        $region85: #{tpu_custom_call.1} parent=31 // pred_check
          %p673 = pneg %p432
        $region86: #{tpu_custom_call.1} parent=31 // pred_check_branch
          %675 = sbr.rel (%p673) target = $region88
        $region87: #{tpu_custom_call.1} parent=31 // pred_region
          %p676 = scmp.lt.s32.totalorder %s32, 1
          %s677 = scalar_select %p676, %s32, 1
          %s678 = scalar_lea.vmem %s15, %s677
        $region88: #{tpu_custom_call.1} parent=31 // pred_fallthru
          _
      $region32: #{tpu_custom_call.1} parent=5 // pred_fallthru
        _
      %p679 = scmp.le.s32.totalorder 1, %s32
      %p680 = scmp.lt.s32.totalorder %s32, 3
      %p681 = pnand %p679, %p680
      %p682 = pneg %p681
      // Predicated region
      $region89: #{tpu_custom_call.1} parent=5 // pred_check
        _
      $region90: #{tpu_custom_call.1} parent=5 // pred_check_branch
        %684 = sbr.rel (%p681) target = $region92
      $region91: #{tpu_custom_call.1} parent=5 // pred_region
        %s685 = ssub.s32 %s32, 1
        // Predicated region
        $region93: #{tpu_custom_call.1} parent=91 // pred_check
          %p686 = pneg %p53
        $region94: #{tpu_custom_call.1} parent=91 // pred_check_branch
          %688 = sbr.rel (%p686) target = $region96
        $region95: #{tpu_custom_call.1} parent=91 // pred_region
          %689 = dma.done [#allocation4], 256
        $region96: #{tpu_custom_call.1} parent=91 // pred_fallthru
          _
        %s690 = sand.u32 %s37, 1
        %s691 = scalar_lea.sflag [#allocation7], %s690
        %s692 = sand.u32 %s191, 1
        %s693 = smul.addr %s692, 384
        %s694 = scalar_lea.vmem [#allocation6], %s693
        // Predicated region
        $region97: #{tpu_custom_call.1} parent=91 // pred_check
          %p695 = pneg %p204
        $region98: #{tpu_custom_call.1} parent=91 // pred_check_branch
          %697 = sbr.rel (%p695) target = $region100
        $region99: #{tpu_custom_call.1} parent=91 // pred_region
          %698 = dma.done %s691, 6144
        $region100: #{tpu_custom_call.1} parent=91 // pred_fallthru
          _
        %s699 = sand.u32 %s37, 1
        %s700 = scalar_lea.sflag [#allocation7], %s699
        %s701 = sand.u32 %s243, 1
        %s702 = smul.addr %s701, 128
        %s703 = scalar_lea.vmem [#allocation8], %s702
        // Predicated region
        $region101: #{tpu_custom_call.1} parent=91 // pred_check
          %p704 = pneg %p256
        $region102: #{tpu_custom_call.1} parent=91 // pred_check_branch
          %706 = sbr.rel (%p704) target = $region104
        $region103: #{tpu_custom_call.1} parent=91 // pred_region
          %707 = dma.done %s700, 2048
        $region104: #{tpu_custom_call.1} parent=91 // pred_fallthru
          _
        %s708 = sand.u32 %s399, 1
        %s709 = scalar_lea.sflag [#allocation10], %s708
        %s710 = sand.u32 %s399, 1
        %s711 = smul.addr %s710, 256
        %s712 = scalar_lea.vmem [#allocation9], %s711
        // Predicated region
        $region105: #{tpu_custom_call.1} parent=91 // pred_check
          %p713 = pneg %p412
        $region106: #{tpu_custom_call.1} parent=91 // pred_check_branch
          %715 = sbr.rel (%p713) target = $region108
        $region107: #{tpu_custom_call.1} parent=91 // pred_region
          %716 = dma.done %s709, 4096
        $region108: #{tpu_custom_call.1} parent=91 // pred_fallthru
          _
        %p717 = pneg %p53
        %p718 = pneg %p50
        %p719 = pneg %p74
        %p720 = pneg %p71
        %p721 = scmp.lt.s32.totalorder %s37, 1
        %s722 = scalar_select %p721, %s37, 1
        %s723 = smul.addr %s722, 2
        %s724 = smul.addr %s723, 8
        %s725 = scalar_lea.vmem %s2, %s724
        %p726 = pneg %p100
        %p727 = pneg %p97
        %p728 = scmp.lt.s32.totalorder %s37, 1
        %s729 = scalar_select %p728, %s37, 1
        %s730 = smul.addr %s729, 2
        %s731 = smul.addr %s730, 8
        %s732 = scalar_lea.vmem %s3, %s731
        %p733 = pneg %p126
        %p734 = pneg %p123
        %p735 = scmp.lt.s32.totalorder %s37, 1
        %s736 = scalar_select %p735, %s37, 1
        %s737 = scalar_lea.vmem %s4, %s736
        %p738 = pneg %p152
        %p739 = pneg %p149
        %p740 = scmp.lt.s32.totalorder %s37, 1
        %s741 = scalar_select %p740, %s37, 1
        %s742 = scalar_lea.vmem %s5, %s741
        %p743 = pneg %p178
        %p744 = pneg %p175
        %s745 = sand.u32 %s37, 1
        %s746 = scalar_lea.sflag [#allocation7], %s745
        %s747 = sand.u32 %s191, 1
        %s748 = smul.addr %s747, 384
        %s749 = scalar_lea.vmem [#allocation6], %s748
        %p750 = pneg %p204
        %p751 = pneg %p201
        %p752 = scmp.lt.s32.totalorder %s37, 1
        %s753 = scalar_select %p752, %s37, 1
        %s754 = smul.addr %s753, 3
        %s755 = scalar_lea.vmem %s7, %s754
        %p756 = pneg %p230
        %p757 = pneg %p227
        %s758 = sand.u32 %s37, 1
        %s759 = scalar_lea.sflag [#allocation7], %s758
        %s760 = sand.u32 %s243, 1
        %s761 = smul.addr %s760, 128
        %s762 = scalar_lea.vmem [#allocation8], %s761
        %p763 = pneg %p256
        %p764 = pneg %p253
        %p765 = scmp.lt.s32.totalorder %s37, 1
        %s766 = scalar_select %p765, %s37, 1
        %s767 = scalar_lea.vmem %s9, %s766
        %p768 = pneg %p282
        %p769 = pneg %p279
        %p770 = scmp.lt.s32.totalorder %s37, 1
        %s771 = scalar_select %p770, %s37, 1
        %s772 = scalar_lea.vmem %s10, %s771
        %p773 = pneg %p308
        %p774 = pneg %p305
        %p775 = scmp.lt.s32.totalorder %s37, 1
        %s776 = scalar_select %p775, %s37, 1
        %s777 = scalar_lea.vmem %s11, %s776
        %p778 = pneg %p334
        %p779 = pneg %p331
        %p780 = scmp.lt.s32.totalorder %s37, 1
        %s781 = scalar_select %p780, %s37, 1
        %s782 = smul.addr %s781, 32
        %s783 = smul.addr %s782, 8
        %s784 = scalar_lea.vmem %s12, %s783
        %p785 = pneg %p360
        %p786 = pneg %p357
        %p787 = scmp.lt.s32.totalorder %s37, 1
        %s788 = scalar_select %p787, %s37, 1
        %s789 = smul.addr %s788, 2
        %s790 = scalar_lea.vmem %s13, %s789
        %p791 = pneg %p386
        %p792 = pneg %p383
        %s793 = sand.u32 %s399, 1
        %s794 = scalar_lea.sflag [#allocation10], %s793
        %s795 = sand.u32 %s399, 1
        %s796 = smul.addr %s795, 256
        %s797 = scalar_lea.vmem [#allocation9], %s796
        %p798 = pneg %p412
        %p799 = pneg %p409
        %p800 = scmp.lt.s32.totalorder %s37, 1
        %s801 = scalar_select %p800, %s37, 1
        %s802 = scalar_lea.vmem %s15, %s801
        %p803 = pneg %p438
        %p804 = pneg %p435
        %p805 = pneg %p459
        %p806 = pneg %p456
        %p807 = pneg %p480
        %p808 = pneg %p477
        %p809 = pneg %p501
        %p810 = pneg %p498
        %p811 = scmp.lt.s32.totalorder %s37, 1
        %s812 = scalar_select %p811, %s37, 1
        %s813 = smul.addr %s812, 2
        %s814 = smul.addr %s813, 8
        %s815 = scalar_lea.vmem %s2, %s814
        %p816 = scmp.lt.s32.totalorder %s37, 1
        %s817 = scalar_select %p816, %s37, 1
        %s818 = smul.addr %s817, 2
        %s819 = smul.addr %s818, 8
        %s820 = scalar_lea.vmem %s3, %s819
        %p821 = scmp.lt.s32.totalorder %s37, 1
        %s822 = scalar_select %p821, %s37, 1
        %s823 = scalar_lea.vmem %s4, %s822
        %p824 = scmp.lt.s32.totalorder %s37, 1
        %s825 = scalar_select %p824, %s37, 1
        %s826 = scalar_lea.vmem %s5, %s825
        %p827 = scmp.lt.s32.totalorder %s37, 1
        %s828 = scalar_select %p827, %s37, 1
        %s829 = smul.addr %s828, 3
        %s830 = scalar_lea.vmem %s7, %s829
        %p831 = scmp.lt.s32.totalorder %s37, 1
        %s832 = scalar_select %p831, %s37, 1
        %s833 = scalar_lea.vmem %s9, %s832
        %p834 = scmp.lt.s32.totalorder %s37, 1
        %s835 = scalar_select %p834, %s37, 1
        %s836 = scalar_lea.vmem %s10, %s835
        %p837 = scmp.lt.s32.totalorder %s37, 1
        %s838 = scalar_select %p837, %s37, 1
        %s839 = scalar_lea.vmem %s11, %s838
        %p840 = scmp.lt.s32.totalorder %s37, 1
        %s841 = scalar_select %p840, %s37, 1
        %s842 = smul.addr %s841, 32
        %s843 = smul.addr %s842, 8
        %s844 = scalar_lea.vmem %s12, %s843
        %p845 = scmp.lt.s32.totalorder %s37, 1
        %s846 = scalar_select %p845, %s37, 1
        %s847 = smul.addr %s846, 2
        %s848 = scalar_lea.vmem %s13, %s847
        %p849 = scmp.lt.s32.totalorder %s37, 1
        %s850 = scalar_select %p849, %s37, 1
        %s851 = scalar_lea.vmem %s15, %s850
        %p852 = scmp.eq.s32.totalorder %s37, 0
        // Predicated region
        $region109: #{tpu_custom_call.1} parent=91 // pred_check
          %p853 = pneg %p852
        $region110: #{tpu_custom_call.1} parent=91 // pred_check_branch
          %855 = sbr.rel (%p853) target = $region112
        $region111: #{tpu_custom_call.1} parent=91 // pred_region
          %v856 = vld [vmem:[#allocation3] sm:$0xff]
          %v857 = vld [vmem:[#allocation3 + $0x8] sm:$0xff]
          %858 = vst [vmem:[#allocation2] sm:$0xff] %v856
          %859 = vst [vmem:[#allocation2 + $0x8] sm:$0xff] %v857
        $region112: #{tpu_custom_call.1} parent=91 // pred_fallthru
          _
        %v860 = vld [vmem:[#allocation2] sm:$0xff]
        %v861 = vld [vmem:[#allocation2 + $0x8] sm:$0xff]
        %v862 = vld [vmem:[%s1] sm:$0xff]
        %v863 = vld [vmem:[%s1 + $0x8] sm:$0xff]
        %v864 = vld [vmem:[%s1 + $0x10] sm:$0xff]
        %v865 = vld [vmem:[%s1 + $0x18] sm:$0xff]
        %v866 = vld [vmem:[%s1 + $0x20] sm:$0xff]
        %v867 = vld [vmem:[%s1 + $0x28] sm:$0xff]
        %v868 = vld [vmem:[%s1 + $0x30] sm:$0xff]
        %v869 = vld [vmem:[%s1 + $0x38] sm:$0xff]
        %v870 = vld [vmem:[%s1 + $0x40] sm:$0xff]
        %v871 = vld [vmem:[%s1 + $0x48] sm:$0xff]
        %v872 = vld [vmem:[%s1 + $0x50] sm:$0xff]
        %v873 = vld [vmem:[%s1 + $0x58] sm:$0xff]
        %v874 = vld [vmem:[%s1 + $0x60] sm:$0xff]
        %v875 = vld [vmem:[%s1 + $0x68] sm:$0xff]
        %v876 = vld [vmem:[%s1 + $0x70] sm:$0xff]
        %v877 = vld [vmem:[%s1 + $0x78] sm:$0xff]
        %v878 = vld [vmem:[%s1 + $0x80] sm:$0xff]
        %v879 = vld [vmem:[%s1 + $0x88] sm:$0xff]
        %v880 = vld [vmem:[%s1 + $0x90] sm:$0xff]
        %v881 = vld [vmem:[%s1 + $0x98] sm:$0xff]
        %v882 = vld [vmem:[%s1 + $0xa0] sm:$0xff]
        %v883 = vld [vmem:[%s1 + $0xa8] sm:$0xff]
        %v884 = vld [vmem:[%s1 + $0xb0] sm:$0xff]
        %v885 = vld [vmem:[%s1 + $0xb8] sm:$0xff]
        %v886 = vld [vmem:[%s1 + $0xc0] sm:$0xff]
        %v887 = vld [vmem:[%s1 + $0xc8] sm:$0xff]
        %v888 = vld [vmem:[%s1 + $0xd0] sm:$0xff]
        %v889 = vld [vmem:[%s1 + $0xd8] sm:$0xff]
        %v890 = vld [vmem:[%s1 + $0xe0] sm:$0xff]
        %v891 = vld [vmem:[%s1 + $0xe8] sm:$0xff]
        %v892 = vld [vmem:[%s1 + $0xf0] sm:$0xff]
        %v893 = vld [vmem:[%s1 + $0xf8] sm:$0xff]
        %v894 = vld [vmem:[%s823] sm:$0x1]
        %v895 = vld [vmem:[%s826] sm:$0x1]
        %896 = vadd.xlane.f32.xlu0 %v860
        %v897 = vpop.xlane.xlu0 %896
        %898 = vadd.xlane.f32.xlu0 %v861
        %v899 = vpop.xlane.xlu0 %898
        %v900 = vrcp.pop 128.0
        %v901 = vmul.f32 %v897, %v900
        %v902 = vmul.f32 %v899, %v900
        %v903 = vsub.f32 %v860, %v901
        %v904 = vsub.f32 %v861, %v902
        %v905 = vmul.f32 %v903, %v903
        %v906 = vmul.f32 %v904, %v904
        %907 = vadd.xlane.f32.xlu0 %v905
        %v908 = vpop.xlane.xlu0 %907
        %909 = vadd.xlane.f32.xlu0 %v906
        %v910 = vpop.xlane.xlu0 %909
        %v911 = vmul.f32 %v908, %v900
        %v912 = vmul.f32 %v910, %v900
        %v913 = vadd.f32 %v911, 1e-05
        %v914 = vadd.f32 %v912, 1e-05
        %v915 = vrsqrt.pop %v913
        %v916 = vrsqrt.pop %v914
        %v917 = vmul.f32 %v903, %v915
        %v918 = vmul.f32 %v904, %v916
        %v920 = vlaneseq
        %v921 = vshrl.u32 %v920, 7
        %v922 = vsub.s32 0, %v921
        %v923 = vrot.slane %v894, %v922
        %v925 = vmul.f32 %v917, %v923
        %v926 = vmul.f32 %v918, %v923
        %v928 = vlaneseq
        %v929 = vshrl.u32 %v928, 7
        %v930 = vsub.s32 0, %v929
        %v931 = vrot.slane %v895, %v930
        %v933 = vadd.f32 %v925, %v931
        %v934 = vadd.f32 %v926, %v931
        %v935 = vld [vmem:[%s694] sm:$0xff]
        %v936 = vld [vmem:[%s694 + $0x8] sm:$0xff]
        %v937 = vld [vmem:[%s694 + $0x10] sm:$0xff]
        %v938 = vld [vmem:[%s694 + $0x18] sm:$0xff]
        %v939 = vld [vmem:[%s694 + $0x20] sm:$0xff]
        %v940 = vld [vmem:[%s694 + $0x28] sm:$0xff]
        %v941 = vld [vmem:[%s694 + $0x30] sm:$0xff]
        %v942 = vld [vmem:[%s694 + $0x38] sm:$0xff]
        %v943 = vld [vmem:[%s694 + $0x40] sm:$0xff]
        %v944 = vld [vmem:[%s694 + $0x48] sm:$0xff]
        %v945 = vld [vmem:[%s694 + $0x50] sm:$0xff]
        %v946 = vld [vmem:[%s694 + $0x58] sm:$0xff]
        %v947 = vld [vmem:[%s694 + $0x60] sm:$0xff]
        %v948 = vld [vmem:[%s694 + $0x68] sm:$0xff]
        %v949 = vld [vmem:[%s694 + $0x70] sm:$0xff]
        %v950 = vld [vmem:[%s694 + $0x78] sm:$0xff]
        %v951 = vld [vmem:[%s694 + $0x80] sm:$0xff]
        %v952 = vld [vmem:[%s694 + $0x88] sm:$0xff]
        %v953 = vld [vmem:[%s694 + $0x90] sm:$0xff]
        %v954 = vld [vmem:[%s694 + $0x98] sm:$0xff]
        %v955 = vld [vmem:[%s694 + $0xa0] sm:$0xff]
        %v956 = vld [vmem:[%s694 + $0xa8] sm:$0xff]
        %v957 = vld [vmem:[%s694 + $0xb0] sm:$0xff]
        %v958 = vld [vmem:[%s694 + $0xb8] sm:$0xff]
        %v959 = vld [vmem:[%s694 + $0xc0] sm:$0xff]
        %v960 = vld [vmem:[%s694 + $0xc8] sm:$0xff]
        %v961 = vld [vmem:[%s694 + $0xd0] sm:$0xff]
        %v962 = vld [vmem:[%s694 + $0xd8] sm:$0xff]
        %v963 = vld [vmem:[%s694 + $0xe0] sm:$0xff]
        %v964 = vld [vmem:[%s694 + $0xe8] sm:$0xff]
        %v965 = vld [vmem:[%s694 + $0xf0] sm:$0xff]
        %v966 = vld [vmem:[%s694 + $0xf8] sm:$0xff]
        %v967 = vld [vmem:[%s694 + $0x100] sm:$0xff]
        %v968 = vld [vmem:[%s694 + $0x108] sm:$0xff]
        %v969 = vld [vmem:[%s694 + $0x110] sm:$0xff]
        %v970 = vld [vmem:[%s694 + $0x118] sm:$0xff]
        %v971 = vld [vmem:[%s694 + $0x120] sm:$0xff]
        %v972 = vld [vmem:[%s694 + $0x128] sm:$0xff]
        %v973 = vld [vmem:[%s694 + $0x130] sm:$0xff]
        %v974 = vld [vmem:[%s694 + $0x138] sm:$0xff]
        %v975 = vld [vmem:[%s694 + $0x140] sm:$0xff]
        %v976 = vld [vmem:[%s694 + $0x148] sm:$0xff]
        %v977 = vld [vmem:[%s694 + $0x150] sm:$0xff]
        %v978 = vld [vmem:[%s694 + $0x158] sm:$0xff]
        %v979 = vld [vmem:[%s694 + $0x160] sm:$0xff]
        %v980 = vld [vmem:[%s694 + $0x168] sm:$0xff]
        %v981 = vld [vmem:[%s694 + $0x170] sm:$0xff]
        %v982 = vld [vmem:[%s694 + $0x178] sm:$0xff]
        %v983 = vld [vmem:[%s830] sm:$0x7]
        %v985 = vlaneseq
        %v986 = vshrl.u32 %v985, 7
        %v987 = vsub.s32 0, %v986
        %v988 = vrot.slane %v983, %v987
        %v989 = vlaneseq
        %v990 = vshrl.u32 %v989, 7
        %v991 = vsub.s32 1, %v990
        %v992 = vrot.slane %v983, %v991
        %v993 = vlaneseq
        %v994 = vshrl.u32 %v993, 7
        %v995 = vsub.s32 2, %v994
        %v996 = vrot.slane %v983, %v995
        %1000 = vmatprep.subr.mxu0 %v936
        %1001 = vmatpush1.msra.mxu0 %v935
        %1002 = vmatprep.subr.mxu0 %v939
        %1003 = vmatpush1.msra.mxu0 %v938
        %1004 = vmatprep.subr.mxu0 %v942
        %1005 = vmatpush1.msra.mxu0 %v941
        %1006 = vmatprep.subr.mxu0 %v945
        %1007 = vmatpush1.msra.mxu0 %v944
        %1008 = vmatprep.subr.mxu0 %v948
        %1009 = vmatpush1.msra.mxu0 %v947
        %1010 = vmatprep.subr.mxu0 %v951
        %1011 = vmatpush1.msra.mxu0 %v950
        %1012 = vmatprep.subr.mxu0 %v954
        %1013 = vmatpush1.msra.mxu0 %v953
        %1014 = vmatprep.subr.mxu0 %v957
        %1015 = vmatpush1.msra.mxu0 %v956
        %1016 = vmatprep.subr.mxu0 %v960
        %1017 = vmatpush1.msra.mxu0 %v959
        %1018 = vmatprep.subr.mxu0 %v963
        %1019 = vmatpush1.msra.mxu0 %v962
        %1020 = vmatprep.subr.mxu0 %v966
        %1021 = vmatpush1.msra.mxu0 %v965
        %1022 = vmatprep.subr.mxu0 %v969
        %1023 = vmatpush1.msra.mxu0 %v968
        %1024 = vmatprep.subr.mxu0 %v972
        %1025 = vmatpush1.msra.mxu0 %v971
        %1026 = vmatprep.subr.mxu0 %v975
        %1027 = vmatpush1.msra.mxu0 %v974
        %1028 = vmatprep.subr.mxu0 %v978
        %1029 = vmatpush1.msra.mxu0 %v977
        %1030 = vmatprep.subr.mxu0 %v981
        %1031 = vmatpush1.msra.mxu0 %v980
        %1032 = vmatprep.subr.mxu0 0.0
        %1033 = vmatpush1.msra.mxu0 0.0
        %1034 = vmatprep.subr.mxu0 0.0
        %1035 = vmatpush1.msra.mxu0 0.0
        %1036 = vmatprep.subr.mxu0 0.0
        %1037 = vmatpush1.msra.mxu0 0.0
        %1038 = vmatprep.subr.mxu0 0.0
        %1039 = vmatpush1.msra.mxu0 0.0
        %1040 = vmatprep.subr.mxu0 0.0
        %1041 = vmatpush1.msra.mxu0 0.0
        %1042 = vmatprep.subr.mxu0 0.0
        %1043 = vmatpush1.msra.mxu0 0.0
        %1044 = vmatprep.subr.mxu0 0.0
        %1045 = vmatpush1.msra.mxu0 0.0
        %1046 = vmatprep.subr.mxu0 0.0
        %1047 = vmatpush1.msra.mxu0 0.0
        %1048 = vmatprep.subr.mxu0 0.0
        %1049 = vmatpush1.msra.mxu0 0.0
        %1050 = vmatprep.subr.mxu0 0.0
        %1051 = vmatpush1.msra.mxu0 0.0
        %1052 = vmatprep.subr.mxu0 0.0
        %1053 = vmatpush1.msra.mxu0 0.0
        %1054 = vmatprep.subr.mxu0 0.0
        %1055 = vmatpush1.msra.mxu0 0.0
        %1056 = vmatprep.subr.mxu0 0.0
        %1057 = vmatpush1.msra.mxu0 0.0
        %1058 = vmatprep.subr.mxu0 0.0
        %1059 = vmatpush1.msra.mxu0 0.0
        %1060 = vmatprep.subr.mxu0 0.0
        %1061 = vmatpush1.msra.mxu0 0.0
        %1062 = vmatprep.subr.mxu0 0.0
        %1063 = vmatpush1.msra.mxu0 0.0
        %1064 = vmatprep.mubr.f32.mxu0 0.0
        %1065 = vmatmul.mubr.f32.gmra.mrb[0].mxu0 %v933
        %v1066 = vpop.f32.mrb[0].mxu0
        %v1067 = vadd.f32 %v988, %v1066
        %v1068 = vpop.f32.mrb[0].mxu0
        %v1069 = vadd.f32 %v992, %v1068
        %1070 = vmatprep.mubr.f32.mxu0 0.0
        %1071 = vmatmul.mubr.f32.gmra.mrb[0].mxu0 %v934
        %v1072 = vpop.f32.mrb[0].mxu0
        %v1073 = vadd.f32 %v988, %v1072
        %v1074 = vpop.f32.mrb[0].mxu0
        %v1075 = vadd.f32 %v992, %v1074
        %1076 = vdwg.mxu0
        %1077 = vmatprep.subr.mxu0 0.0
        %1078 = vmatpush1.msra.mxu0 %v937
        %1079 = vmatprep.subr.mxu0 0.0
        %1080 = vmatpush1.msra.mxu0 %v940
        %1081 = vmatprep.subr.mxu0 0.0
        %1082 = vmatpush1.msra.mxu0 %v943
        %1083 = vmatprep.subr.mxu0 0.0
        %1084 = vmatpush1.msra.mxu0 %v946
        %1085 = vmatprep.subr.mxu0 0.0
        %1086 = vmatpush1.msra.mxu0 %v949
        %1087 = vmatprep.subr.mxu0 0.0
        %1088 = vmatpush1.msra.mxu0 %v952
        %1089 = vmatprep.subr.mxu0 0.0
        %1090 = vmatpush1.msra.mxu0 %v955
        %1091 = vmatprep.subr.mxu0 0.0
        %1092 = vmatpush1.msra.mxu0 %v958
        %1093 = vmatprep.subr.mxu0 0.0
        %1094 = vmatpush1.msra.mxu0 %v961
        %1095 = vmatprep.subr.mxu0 0.0
        %1096 = vmatpush1.msra.mxu0 %v964
        %1097 = vmatprep.subr.mxu0 0.0
        %1098 = vmatpush1.msra.mxu0 %v967
        %1099 = vmatprep.subr.mxu0 0.0
        %1100 = vmatpush1.msra.mxu0 %v970
        %1101 = vmatprep.subr.mxu0 0.0
        %1102 = vmatpush1.msra.mxu0 %v973
        %1103 = vmatprep.subr.mxu0 0.0
        %1104 = vmatpush1.msra.mxu0 %v976
        %1105 = vmatprep.subr.mxu0 0.0
        %1106 = vmatpush1.msra.mxu0 %v979
        %1107 = vmatprep.subr.mxu0 0.0
        %1108 = vmatpush1.msra.mxu0 %v982
        %1109 = vmatprep.subr.mxu0 0.0
        %1110 = vmatpush1.msra.mxu0 0.0
        %1111 = vmatprep.subr.mxu0 0.0
        %1112 = vmatpush1.msra.mxu0 0.0
        %1113 = vmatprep.subr.mxu0 0.0
        %1114 = vmatpush1.msra.mxu0 0.0
        %1115 = vmatprep.subr.mxu0 0.0
        %1116 = vmatpush1.msra.mxu0 0.0
        %1117 = vmatprep.subr.mxu0 0.0
        %1118 = vmatpush1.msra.mxu0 0.0
        %1119 = vmatprep.subr.mxu0 0.0
        %1120 = vmatpush1.msra.mxu0 0.0
        %1121 = vmatprep.subr.mxu0 0.0
        %1122 = vmatpush1.msra.mxu0 0.0
        %1123 = vmatprep.subr.mxu0 0.0
        %1124 = vmatpush1.msra.mxu0 0.0
        %1125 = vmatprep.subr.mxu0 0.0
        %1126 = vmatpush1.msra.mxu0 0.0
        %1127 = vmatprep.subr.mxu0 0.0
        %1128 = vmatpush1.msra.mxu0 0.0
        %1129 = vmatprep.subr.mxu0 0.0
        %1130 = vmatpush1.msra.mxu0 0.0
        %1131 = vmatprep.subr.mxu0 0.0
        %1132 = vmatpush1.msra.mxu0 0.0
        %1133 = vmatprep.subr.mxu0 0.0
        %1134 = vmatpush1.msra.mxu0 0.0
        %1135 = vmatprep.subr.mxu0 0.0
        %1136 = vmatpush1.msra.mxu0 0.0
        %1137 = vmatprep.subr.mxu0 0.0
        %1138 = vmatpush1.msra.mxu0 0.0
        %1139 = vmatprep.subr.mxu0 0.0
        %1140 = vmatpush1.msra.mxu0 0.0
        %1141 = vmatprep.mubr.f32.mxu0 0.0
        %1142 = vmatmul.mubr.f32.gmra.mrb[0].mxu0 %v933
        %v1143 = vpop.f32.mrb[0].mxu0
        %v1144 = vadd.f32 %v996, %v1143
        %v1145 = vpop.f32.mrb[0].mxu0
        %1146 = vmatprep.mubr.f32.mxu0 0.0
        %1147 = vmatmul.mubr.f32.gmra.mrb[0].mxu0 %v934
        %v1148 = vpop.f32.mrb[0].mxu0
        %v1149 = vadd.f32 %v996, %v1148
        %v1150 = vpop.f32.mrb[0].mxu0
        %1151 = vdwg.mxu0
        %v1152 = vmul.f32 %v1067, 0.17677669
        %v1153 = vmul.f32 %v1073, 0.17677669
        %1156 = vrot.lane.b32.xlu0 %v1152, 96
        %v1157 = vpop.permute.xlu0 %1156
        %1158 = vrot.lane.b32.xlu0 %v1153, 96
        %v1159 = vpop.permute.xlu0 %1158
        %1162 = vrot.lane.b32.xlu0 %v1152, 64
        %v1163 = vpop.permute.xlu0 %1162
        %1164 = vrot.lane.b32.xlu0 %v1153, 64
        %v1165 = vpop.permute.xlu0 %1164
        %1168 = vrot.lane.b32.xlu0 %v1152, 32
        %v1169 = vpop.permute.xlu0 %1168
        %1170 = vrot.lane.b32.xlu0 %v1153, 32
        %v1171 = vpop.permute.xlu0 %1170
        %v1174 = vcombine.low %v1152, %v1163
        %v1175 = vcombine.high %v1152, %v1163
        %v1177 = vunpack.c.l.s4 1983009808
        %v1178 = vunpack.c.0.s8 %v1177
        %v1179 = vlaneseq
        %v1180 = vshrl.u32 %v1179, 7
        %v1181 = vsub.s32 %v1178, %v1180
        %v1182 = vrot.slane %v1174, %v1181
        %v1184 = vunpack.c.l.s4 1983009808
        %v1185 = vunpack.c.0.s8 %v1184
        %v1186 = vlaneseq
        %v1187 = vshrl.u32 %v1186, 7
        %v1188 = vsub.s32 %v1185, %v1187
        %v1189 = vrot.slane %v1175, %v1188
        %v1190 = vcombine.low %v1157, %v1169
        %v1191 = vcombine.high %v1157, %v1169
        %v1193 = vunpack.c.l.s4 1983009808
        %v1194 = vunpack.c.0.s8 %v1193
        %v1195 = vlaneseq
        %v1196 = vshrl.u32 %v1195, 7
        %v1197 = vsub.s32 %v1194, %v1196
        %v1198 = vrot.slane %v1190, %v1197
        %v1200 = vunpack.c.l.s4 1983009808
        %v1201 = vunpack.c.0.s8 %v1200
        %v1202 = vlaneseq
        %v1203 = vshrl.u32 %v1202, 7
        %v1204 = vsub.s32 %v1201, %v1203
        %v1205 = vrot.slane %v1191, %v1204
        %v1206 = vcombine.low %v1182, %v1198
        %v1207 = vcombine.high %v1182, %v1198
        %v1209 = vunpack.c.l.s4 1934713408
        %v1210 = vunpack.c.0.s8 %v1209
        %v1211 = vlaneseq
        %v1212 = vshrl.u32 %v1211, 7
        %v1213 = vsub.s32 %v1210, %v1212
        %v1214 = vrot.slane %v1206, %v1213
        %v1216 = vunpack.c.l.s4 1934713408
        %v1217 = vunpack.c.0.s8 %v1216
        %v1218 = vlaneseq
        %v1219 = vshrl.u32 %v1218, 7
        %v1220 = vsub.s32 %v1217, %v1219
        %v1221 = vrot.slane %v1207, %v1220
        %v1222 = vcombine.low %v1189, %v1205
        %v1223 = vcombine.high %v1189, %v1205
        %v1225 = vunpack.c.l.s4 1934713408
        %v1226 = vunpack.c.0.s8 %v1225
        %v1227 = vlaneseq
        %v1228 = vshrl.u32 %v1227, 7
        %v1229 = vsub.s32 %v1226, %v1228
        %v1230 = vrot.slane %v1222, %v1229
        %v1232 = vunpack.c.l.s4 1934713408
        %v1233 = vunpack.c.0.s8 %v1232
        %v1234 = vlaneseq
        %v1235 = vshrl.u32 %v1234, 7
        %v1236 = vsub.s32 %v1233, %v1235
        %v1237 = vrot.slane %v1223, %v1236
        %v1238 = vcombine.high %v1214, 0.0
        %v1239 = vcombine.high %v1221, 0.0
        %v1240 = vcombine.high %v1230, 0.0
        %v1241 = vcombine.high %v1237, 0.0
        %v1242 = vcombine.low %v1153, %v1165
        %v1243 = vcombine.high %v1153, %v1165
        %v1245 = vunpack.c.l.s4 1983009808
        %v1246 = vunpack.c.0.s8 %v1245
        %v1247 = vlaneseq
        %v1248 = vshrl.u32 %v1247, 7
        %v1249 = vsub.s32 %v1246, %v1248
        %v1250 = vrot.slane %v1242, %v1249
        %v1252 = vunpack.c.l.s4 1983009808
        %v1253 = vunpack.c.0.s8 %v1252
        %v1254 = vlaneseq
        %v1255 = vshrl.u32 %v1254, 7
        %v1256 = vsub.s32 %v1253, %v1255
        %v1257 = vrot.slane %v1243, %v1256
        %v1258 = vcombine.low %v1159, %v1171
        %v1259 = vcombine.high %v1159, %v1171
        %v1261 = vunpack.c.l.s4 1983009808
        %v1262 = vunpack.c.0.s8 %v1261
        %v1263 = vlaneseq
        %v1264 = vshrl.u32 %v1263, 7
        %v1265 = vsub.s32 %v1262, %v1264
        %v1266 = vrot.slane %v1258, %v1265
        %v1268 = vunpack.c.l.s4 1983009808
        %v1269 = vunpack.c.0.s8 %v1268
        %v1270 = vlaneseq
        %v1271 = vshrl.u32 %v1270, 7
        %v1272 = vsub.s32 %v1269, %v1271
        %v1273 = vrot.slane %v1259, %v1272
        %v1274 = vcombine.low %v1250, %v1266
        %v1275 = vcombine.high %v1250, %v1266
        %v1277 = vunpack.c.l.s4 1934713408
        %v1278 = vunpack.c.0.s8 %v1277
        %v1279 = vlaneseq
        %v1280 = vshrl.u32 %v1279, 7
        %v1281 = vsub.s32 %v1278, %v1280
        %v1282 = vrot.slane %v1274, %v1281
        %v1284 = vunpack.c.l.s4 1934713408
        %v1285 = vunpack.c.0.s8 %v1284
        %v1286 = vlaneseq
        %v1287 = vshrl.u32 %v1286, 7
        %v1288 = vsub.s32 %v1285, %v1287
        %v1289 = vrot.slane %v1275, %v1288
        %v1290 = vcombine.low %v1257, %v1273
        %v1291 = vcombine.high %v1257, %v1273
        %v1293 = vunpack.c.l.s4 1934713408
        %v1294 = vunpack.c.0.s8 %v1293
        %v1295 = vlaneseq
        %v1296 = vshrl.u32 %v1295, 7
        %v1297 = vsub.s32 %v1294, %v1296
        %v1298 = vrot.slane %v1290, %v1297
        %v1300 = vunpack.c.l.s4 1934713408
        %v1301 = vunpack.c.0.s8 %v1300
        %v1302 = vlaneseq
        %v1303 = vshrl.u32 %v1302, 7
        %v1304 = vsub.s32 %v1301, %v1303
        %v1305 = vrot.slane %v1291, %v1304
        %v1306 = vcombine.high %v1282, 0.0
        %v1307 = vcombine.high %v1289, 0.0
        %v1308 = vcombine.high %v1298, 0.0
        %v1309 = vcombine.high %v1305, 0.0
        %1312 = vrot.lane.b32.xlu0 %v1069, 96
        %v1313 = vpop.permute.xlu0 %1312
        %1314 = vrot.lane.b32.xlu0 %v1075, 96
        %v1315 = vpop.permute.xlu0 %1314
        %1318 = vrot.lane.b32.xlu0 %v1069, 64
        %v1319 = vpop.permute.xlu0 %1318
        %1320 = vrot.lane.b32.xlu0 %v1075, 64
        %v1321 = vpop.permute.xlu0 %1320
        %1324 = vrot.lane.b32.xlu0 %v1069, 32
        %v1325 = vpop.permute.xlu0 %1324
        %1326 = vrot.lane.b32.xlu0 %v1075, 32
        %v1327 = vpop.permute.xlu0 %1326
        %1332 = vrot.lane.b32.xlu0 %v1144, 96
        %v1333 = vpop.permute.xlu0 %1332
        %1334 = vrot.lane.b32.xlu0 %v1149, 96
        %v1335 = vpop.permute.xlu0 %1334
        %1338 = vrot.lane.b32.xlu0 %v1144, 64
        %v1339 = vpop.permute.xlu0 %1338
        %1340 = vrot.lane.b32.xlu0 %v1149, 64
        %v1341 = vpop.permute.xlu0 %1340
        %1344 = vrot.lane.b32.xlu0 %v1144, 32
        %v1345 = vpop.permute.xlu0 %1344
        %1346 = vrot.lane.b32.xlu0 %v1149, 32
        %v1347 = vpop.permute.xlu0 %1346
        %v1350 = vld [vmem:[%s815] sm:$0xff]
        %v1351 = vld [vmem:[%s815 + $0x8] sm:$0x3]
        %v1368 = vcombine.low %v1214, %v1238
        %v1369 = vcombine.low %v1221, %v1239
        %v1370 = vcombine.low %v1230, %v1240
        %v1371 = vcombine.low %v1237, %v1241
        %v1372 = vcombine.low %v1282, %v1306
        %v1373 = vcombine.low %v1289, %v1307
        %v1374 = vcombine.low %v1298, %v1308
        %v1375 = vcombine.low %v1305, %v1309
        %vm1376 = vcmask 261120
        %v1377 = vsel %vm1376, %v1368, 0
        %v1379 = vsel %vm1376, %v1369, 0
        %v1381 = vsel %vm1376, %v1370, 0
        %v1383 = vsel %vm1376, %v1371, 0
        %v1385 = vsel %vm1376, %v1372, 0
        %v1387 = vsel %vm1376, %v1373, 0
        %v1389 = vsel %vm1376, %v1374, 0
        %v1391 = vsel %vm1376, %v1375, 0
        %v1394 = vsel %vm1376, %v1350, 0
        %v1397 = vsel %vm1376, %v1351, 0
        %1399 = vmatprep.subr.mxu0 0.0
        %1400 = vmatpush1.xpose.msra.mxu0 %v1394
        %1401 = vmatprep.subr.mxu0 0.0
        %1402 = vmatpush1.xpose.msra.mxu0 %v1397
        %1403 = vmatprep.subr.mxu0 0.0
        %1404 = vmatpush1.xpose.msra.mxu0 0.0
        %1405 = vmatprep.subr.mxu0 0.0
        %1406 = vmatpush1.xpose.msra.mxu0 0.0
        %1407 = vmatprep.subr.mxu0 0.0
        %1408 = vmatpush1.xpose.msra.mxu0 0.0
        %1409 = vmatprep.subr.mxu0 0.0
        %1410 = vmatpush1.xpose.msra.mxu0 0.0
        %1411 = vmatprep.subr.mxu0 0.0
        %1412 = vmatpush1.xpose.msra.mxu0 0.0
        %1413 = vmatprep.subr.mxu0 0.0
        %1414 = vmatpush1.xpose.msra.mxu0 0.0
        %1415 = vmatprep.subr.mxu0 0.0
        %1416 = vmatpush1.xpose.msra.mxu0 0.0
        %1417 = vmatprep.subr.mxu0 0.0
        %1418 = vmatpush1.xpose.msra.mxu0 0.0
        %1419 = vmatprep.subr.mxu0 0.0
        %1420 = vmatpush1.xpose.msra.mxu0 0.0
        %1421 = vmatprep.subr.mxu0 0.0
        %1422 = vmatpush1.xpose.msra.mxu0 0.0
        %1423 = vmatprep.subr.mxu0 0.0
        %1424 = vmatpush1.xpose.msra.mxu0 0.0
        %1425 = vmatprep.subr.mxu0 0.0
        %1426 = vmatpush1.xpose.msra.mxu0 0.0
        %1427 = vmatprep.subr.mxu0 0.0
        %1428 = vmatpush1.xpose.msra.mxu0 0.0
        %1429 = vmatprep.subr.mxu0 0.0
        %1430 = vmatpush1.xpose.msra.mxu0 0.0
        %1431 = vmatprep.subr.mxu0 0.0
        %1432 = vmatpush1.xpose.msra.mxu0 0.0
        %1433 = vmatprep.subr.mxu0 0.0
        %1434 = vmatpush1.xpose.msra.mxu0 0.0
        %1435 = vmatprep.subr.mxu0 0.0
        %1436 = vmatpush1.xpose.msra.mxu0 0.0
        %1437 = vmatprep.subr.mxu0 0.0
        %1438 = vmatpush1.xpose.msra.mxu0 0.0
        %1439 = vmatprep.subr.mxu0 0.0
        %1440 = vmatpush1.xpose.msra.mxu0 0.0
        %1441 = vmatprep.subr.mxu0 0.0
        %1442 = vmatpush1.xpose.msra.mxu0 0.0
        %1443 = vmatprep.subr.mxu0 0.0
        %1444 = vmatpush1.xpose.msra.mxu0 0.0
        %1445 = vmatprep.subr.mxu0 0.0
        %1446 = vmatpush1.xpose.msra.mxu0 0.0
        %1447 = vmatprep.subr.mxu0 0.0
        %1448 = vmatpush1.xpose.msra.mxu0 0.0
        %1449 = vmatprep.subr.mxu0 0.0
        %1450 = vmatpush1.xpose.msra.mxu0 0.0
        %1451 = vmatprep.subr.mxu0 0.0
        %1452 = vmatpush1.xpose.msra.mxu0 0.0
        %1453 = vmatprep.subr.mxu0 0.0
        %1454 = vmatpush1.xpose.msra.mxu0 0.0
        %1455 = vmatprep.subr.mxu0 0.0
        %1456 = vmatpush1.xpose.msra.mxu0 0.0
        %1457 = vmatprep.subr.mxu0 0.0
        %1458 = vmatpush1.xpose.msra.mxu0 0.0
        %1459 = vmatprep.subr.mxu0 0.0
        %1460 = vmatpush1.xpose.msra.mxu0 0.0
        %1461 = vmatprep.subr.mxu0 0.0
        %1462 = vmatpush1.xpose.msra.mxu0 0.0
        %1463 = vmatprep.mubr.f32.mxu0 0.0
        %1464 = vmatmul.mubr.f32.gmra.mrb[0].mxu0 %v1377
        %v1465 = vpop.f32.mrb[0].mxu0
        %v1466 = vadd.f32 0.0, %v1465
        %v1467 = vpop.f32.mrb[0].mxu0
        %1468 = vmatprep.mubr.f32.mxu0 0.0
        %1469 = vmatmul.mubr.f32.gmra.mrb[0].mxu0 %v1379
        %v1470 = vpop.f32.mrb[0].mxu0
        %v1471 = vadd.f32 0.0, %v1470
        %v1472 = vpop.f32.mrb[0].mxu0
        %1473 = vmatprep.mubr.f32.mxu0 0.0
        %1474 = vmatmul.mubr.f32.gmra.mrb[0].mxu0 %v1381
        %v1475 = vpop.f32.mrb[0].mxu0
        %v1476 = vadd.f32 0.0, %v1475
        %v1477 = vpop.f32.mrb[0].mxu0
        %1478 = vmatprep.mubr.f32.mxu0 0.0
        %1479 = vmatmul.mubr.f32.gmra.mrb[0].mxu0 %v1383
        %v1480 = vpop.f32.mrb[0].mxu0
        %v1481 = vadd.f32 0.0, %v1480
        %v1482 = vpop.f32.mrb[0].mxu0
        %1483 = vmatprep.mubr.f32.mxu0 0.0
        %1484 = vmatmul.mubr.f32.gmra.mrb[0].mxu0 %v1385
        %v1485 = vpop.f32.mrb[0].mxu0
        %v1486 = vadd.f32 0.0, %v1485
        %v1487 = vpop.f32.mrb[0].mxu0
        %1488 = vmatprep.mubr.f32.mxu0 0.0
        %1489 = vmatmul.mubr.f32.gmra.mrb[0].mxu0 %v1387
        %v1490 = vpop.f32.mrb[0].mxu0
        %v1491 = vadd.f32 0.0, %v1490
        %v1492 = vpop.f32.mrb[0].mxu0
        %1493 = vmatprep.mubr.f32.mxu0 0.0
        %1494 = vmatmul.mubr.f32.gmra.mrb[0].mxu0 %v1389
        %v1495 = vpop.f32.mrb[0].mxu0
        %v1496 = vadd.f32 0.0, %v1495
        %v1497 = vpop.f32.mrb[0].mxu0
        %1498 = vmatprep.mubr.f32.mxu0 0.0
        %1499 = vmatmul.mubr.f32.gmra.mrb[0].mxu0 %v1391
        %v1500 = vpop.f32.mrb[0].mxu0
        %v1501 = vadd.f32 0.0, %v1500
        %v1502 = vpop.f32.mrb[0].mxu0
        %1503 = vdwg.mxu0
        %v1512 = vcombine.high %v1466, %v1466
        %v1513 = vcombine.high %v1471, %v1471
        %v1514 = vcombine.high %v1476, %v1476
        %v1515 = vcombine.high %v1481, %v1481
        %v1516 = vcombine.high %v1486, %v1486
        %v1517 = vcombine.high %v1491, %v1491
        %v1518 = vcombine.high %v1496, %v1496
        %v1519 = vcombine.high %v1501, %v1501
        %vm1520 = vcmask 80896
        %v1522 = vsel %vm1520, %v862, 0
        %v1525 = vsel %vm1520, %v863, 0
        %v1527 = vsel %vm1520, %v1466, 0
        %1529 = vmatprep.subr.mxu0 0.0
        %1530 = vmatpush1.xpose.msra.mxu0 %v1527
        %1531 = vmatprep.subr.mxu0 0.0
        %1532 = vmatpush1.xpose.msra.mxu0 0.0
        %1533 = vmatprep.subr.mxu0 0.0
        %1534 = vmatpush1.xpose.msra.mxu0 0.0
        %1535 = vmatprep.subr.mxu0 0.0
        %1536 = vmatpush1.xpose.msra.mxu0 0.0
        %1537 = vmatprep.subr.mxu0 0.0
        %1538 = vmatpush1.xpose.msra.mxu0 0.0
        %1539 = vmatprep.subr.mxu0 0.0
        %1540 = vmatpush1.xpose.msra.mxu0 0.0
        %1541 = vmatprep.subr.mxu0 0.0
        %1542 = vmatpush1.xpose.msra.mxu0 0.0
        %1543 = vmatprep.subr.mxu0 0.0
        %1544 = vmatpush1.xpose.msra.mxu0 0.0
        %1545 = vmatprep.subr.mxu0 0.0
        %1546 = vmatpush1.xpose.msra.mxu0 0.0
        %1547 = vmatprep.subr.mxu0 0.0
        %1548 = vmatpush1.xpose.msra.mxu0 0.0
        %1549 = vmatprep.subr.mxu0 0.0
        %1550 = vmatpush1.xpose.msra.mxu0 0.0
        %1551 = vmatprep.subr.mxu0 0.0
        %1552 = vmatpush1.xpose.msra.mxu0 0.0
        %1553 = vmatprep.subr.mxu0 0.0
        %1554 = vmatpush1.xpose.msra.mxu0 0.0
        %1555 = vmatprep.subr.mxu0 0.0
        %1556 = vmatpush1.xpose.msra.mxu0 0.0
        %1557 = vmatprep.subr.mxu0 0.0
        %1558 = vmatpush1.xpose.msra.mxu0 0.0
        %1559 = vmatprep.subr.mxu0 0.0
        %1560 = vmatpush1.xpose.msra.mxu0 0.0
        %1561 = vmatprep.subr.mxu0 0.0
        %1562 = vmatpush1.xpose.msra.mxu0 0.0
        %1563 = vmatprep.subr.mxu0 0.0
        %1564 = vmatpush1.xpose.msra.mxu0 0.0
        %1565 = vmatprep.subr.mxu0 0.0
        %1566 = vmatpush1.xpose.msra.mxu0 0.0
        %1567 = vmatprep.subr.mxu0 0.0
        %1568 = vmatpush1.xpose.msra.mxu0 0.0
        %1569 = vmatprep.subr.mxu0 0.0
        %1570 = vmatpush1.xpose.msra.mxu0 0.0
        %1571 = vmatprep.subr.mxu0 0.0
        %1572 = vmatpush1.xpose.msra.mxu0 0.0
        %1573 = vmatprep.subr.mxu0 0.0
        %1574 = vmatpush1.xpose.msra.mxu0 0.0
        %1575 = vmatprep.subr.mxu0 0.0
        %1576 = vmatpush1.xpose.msra.mxu0 0.0
        %1577 = vmatprep.subr.mxu0 0.0
        %1578 = vmatpush1.xpose.msra.mxu0 0.0
        %1579 = vmatprep.subr.mxu0 0.0
        %1580 = vmatpush1.xpose.msra.mxu0 0.0
        %1581 = vmatprep.subr.mxu0 0.0
        %1582 = vmatpush1.xpose.msra.mxu0 0.0
        %1583 = vmatprep.subr.mxu0 0.0
        %1584 = vmatpush1.xpose.msra.mxu0 0.0
        %1585 = vmatprep.subr.mxu0 0.0
        %1586 = vmatpush1.xpose.msra.mxu0 0.0
        %1587 = vmatprep.subr.mxu0 0.0
        %1588 = vmatpush1.xpose.msra.mxu0 0.0
        %1589 = vmatprep.subr.mxu0 0.0
        %1590 = vmatpush1.xpose.msra.mxu0 0.0
        %1591 = vmatprep.subr.mxu0 0.0
        %1592 = vmatpush1.xpose.msra.mxu0 0.0
        %1593 = vmatprep.mubr.f32.mxu0 0.0
        %1594 = vmatmul.mubr.f32.gmra.mrb[0].mxu0 %v1522
        %v1595 = vpop.f32.mrb[0].mxu0
        %v1596 = vadd.f32 0.0, %v1595
        %v1597 = vpop.f32.mrb[0].mxu0
        %1598 = vmatprep.mubr.f32.mxu0 0.0
        %1599 = vmatmul.mubr.f32.gmra.mrb[0].mxu0 %v1525
        %v1600 = vpop.f32.mrb[0].mxu0
        %v1601 = vadd.f32 0.0, %v1600
        %v1602 = vpop.f32.mrb[0].mxu0
        %1603 = vdwg.mxu0
        %v1605 = vsel %vm1520, %v864, 0
        %v1608 = vsel %vm1520, %v865, 0
        %v1610 = vsel %vm1520, %v1512, 0
        %1612 = vmatprep.subr.mxu0 0.0
        %1613 = vmatpush1.xpose.msra.mxu0 %v1610
        %1614 = vmatprep.subr.mxu0 0.0
        %1615 = vmatpush1.xpose.msra.mxu0 0.0
        %1616 = vmatprep.subr.mxu0 0.0
        %1617 = vmatpush1.xpose.msra.mxu0 0.0
        %1618 = vmatprep.subr.mxu0 0.0
        %1619 = vmatpush1.xpose.msra.mxu0 0.0
        %1620 = vmatprep.subr.mxu0 0.0
        %1621 = vmatpush1.xpose.msra.mxu0 0.0
        %1622 = vmatprep.subr.mxu0 0.0
        %1623 = vmatpush1.xpose.msra.mxu0 0.0
        %1624 = vmatprep.subr.mxu0 0.0
        %1625 = vmatpush1.xpose.msra.mxu0 0.0
        %1626 = vmatprep.subr.mxu0 0.0
        %1627 = vmatpush1.xpose.msra.mxu0 0.0
        %1628 = vmatprep.subr.mxu0 0.0
        %1629 = vmatpush1.xpose.msra.mxu0 0.0
        %1630 = vmatprep.subr.mxu0 0.0
        %1631 = vmatpush1.xpose.msra.mxu0 0.0
        %1632 = vmatprep.subr.mxu0 0.0
        %1633 = vmatpush1.xpose.msra.mxu0 0.0
        %1634 = vmatprep.subr.mxu0 0.0
        %1635 = vmatpush1.xpose.msra.mxu0 0.0
        %1636 = vmatprep.subr.mxu0 0.0
        %1637 = vmatpush1.xpose.msra.mxu0 0.0
        %1638 = vmatprep.subr.mxu0 0.0
        %1639 = vmatpush1.xpose.msra.mxu0 0.0
        %1640 = vmatprep.subr.mxu0 0.0
        %1641 = vmatpush1.xpose.msra.mxu0 0.0
        %1642 = vmatprep.subr.mxu0 0.0
        %1643 = vmatpush1.xpose.msra.mxu0 0.0
        %1644 = vmatprep.subr.mxu0 0.0
        %1645 = vmatpush1.xpose.msra.mxu0 0.0
        %1646 = vmatprep.subr.mxu0 0.0
        %1647 = vmatpush1.xpose.msra.mxu0 0.0
        %1648 = vmatprep.subr.mxu0 0.0
        %1649 = vmatpush1.xpose.msra.mxu0 0.0
        %1650 = vmatprep.subr.mxu0 0.0
        %1651 = vmatpush1.xpose.msra.mxu0 0.0
        %1652 = vmatprep.subr.mxu0 0.0
        %1653 = vmatpush1.xpose.msra.mxu0 0.0
        %1654 = vmatprep.subr.mxu0 0.0
        %1655 = vmatpush1.xpose.msra.mxu0 0.0
        %1656 = vmatprep.subr.mxu0 0.0
        %1657 = vmatpush1.xpose.msra.mxu0 0.0
        %1658 = vmatprep.subr.mxu0 0.0
        %1659 = vmatpush1.xpose.msra.mxu0 0.0
        %1660 = vmatprep.subr.mxu0 0.0
        %1661 = vmatpush1.xpose.msra.mxu0 0.0
        %1662 = vmatprep.subr.mxu0 0.0
        %1663 = vmatpush1.xpose.msra.mxu0 0.0
        %1664 = vmatprep.subr.mxu0 0.0
        %1665 = vmatpush1.xpose.msra.mxu0 0.0
        %1666 = vmatprep.subr.mxu0 0.0
        %1667 = vmatpush1.xpose.msra.mxu0 0.0
        %1668 = vmatprep.subr.mxu0 0.0
        %1669 = vmatpush1.xpose.msra.mxu0 0.0
        %1670 = vmatprep.subr.mxu0 0.0
        %1671 = vmatpush1.xpose.msra.mxu0 0.0
        %1672 = vmatprep.subr.mxu0 0.0
        %1673 = vmatpush1.xpose.msra.mxu0 0.0
        %1674 = vmatprep.subr.mxu0 0.0
        %1675 = vmatpush1.xpose.msra.mxu0 0.0
        %1676 = vmatprep.mubr.f32.mxu0 0.0
        %1677 = vmatmul.mubr.f32.gmra.mrb[0].mxu0 %v1605
        %v1678 = vpop.f32.mrb[0].mxu0
        %v1679 = vadd.f32 0.0, %v1678
        %v1680 = vpop.f32.mrb[0].mxu0
        %1681 = vmatprep.mubr.f32.mxu0 0.0
        %1682 = vmatmul.mubr.f32.gmra.mrb[0].mxu0 %v1608
        %v1683 = vpop.f32.mrb[0].mxu0
        %v1684 = vadd.f32 0.0, %v1683
        %v1685 = vpop.f32.mrb[0].mxu0
        %1686 = vdwg.mxu0
        %v1688 = vsel %vm1520, %v866, 0
        %v1691 = vsel %vm1520, %v867, 0
        %v1693 = vsel %vm1520, %v1471, 0
        %1695 = vmatprep.subr.mxu0 0.0
        %1696 = vmatpush1.xpose.msra.mxu0 %v1693
        %1697 = vmatprep.subr.mxu0 0.0
        %1698 = vmatpush1.xpose.msra.mxu0 0.0
        %1699 = vmatprep.subr.mxu0 0.0
        %1700 = vmatpush1.xpose.msra.mxu0 0.0
        %1701 = vmatprep.subr.mxu0 0.0
        %1702 = vmatpush1.xpose.msra.mxu0 0.0
        %1703 = vmatprep.subr.mxu0 0.0
        %1704 = vmatpush1.xpose.msra.mxu0 0.0
        %1705 = vmatprep.subr.mxu0 0.0
        %1706 = vmatpush1.xpose.msra.mxu0 0.0
        %1707 = vmatprep.subr.mxu0 0.0
        %1708 = vmatpush1.xpose.msra.mxu0 0.0
        %1709 = vmatprep.subr.mxu0 0.0
        %1710 = vmatpush1.xpose.msra.mxu0 0.0
        %1711 = vmatprep.subr.mxu0 0.0
        %1712 = vmatpush1.xpose.msra.mxu0 0.0
        %1713 = vmatprep.subr.mxu0 0.0
        %1714 = vmatpush1.xpose.msra.mxu0 0.0
        %1715 = vmatprep.subr.mxu0 0.0
        %1716 = vmatpush1.xpose.msra.mxu0 0.0
        %1717 = vmatprep.subr.mxu0 0.0
        %1718 = vmatpush1.xpose.msra.mxu0 0.0
        %1719 = vmatprep.subr.mxu0 0.0
        %1720 = vmatpush1.xpose.msra.mxu0 0.0
        %1721 = vmatprep.subr.mxu0 0.0
        %1722 = vmatpush1.xpose.msra.mxu0 0.0
        %1723 = vmatprep.subr.mxu0 0.0
        %1724 = vmatpush1.xpose.msra.mxu0 0.0
        %1725 = vmatprep.subr.mxu0 0.0
        %1726 = vmatpush1.xpose.msra.mxu0 0.0
        %1727 = vmatprep.subr.mxu0 0.0
        %1728 = vmatpush1.xpose.msra.mxu0 0.0
        %1729 = vmatprep.subr.mxu0 0.0
        %1730 = vmatpush1.xpose.msra.mxu0 0.0
        %1731 = vmatprep.subr.mxu0 0.0
        %1732 = vmatpush1.xpose.msra.mxu0 0.0
        %1733 = vmatprep.subr.mxu0 0.0
        %1734 = vmatpush1.xpose.msra.mxu0 0.0
        %1735 = vmatprep.subr.mxu0 0.0
        %1736 = vmatpush1.xpose.msra.mxu0 0.0
        %1737 = vmatprep.subr.mxu0 0.0
        %1738 = vmatpush1.xpose.msra.mxu0 0.0
        %1739 = vmatprep.subr.mxu0 0.0
        %1740 = vmatpush1.xpose.msra.mxu0 0.0
        %1741 = vmatprep.subr.mxu0 0.0
        %1742 = vmatpush1.xpose.msra.mxu0 0.0
        %1743 = vmatprep.subr.mxu0 0.0
        %1744 = vmatpush1.xpose.msra.mxu0 0.0
        %1745 = vmatprep.subr.mxu0 0.0
        %1746 = vmatpush1.xpose.msra.mxu0 0.0
        %1747 = vmatprep.subr.mxu0 0.0
        %1748 = vmatpush1.xpose.msra.mxu0 0.0
        %1749 = vmatprep.subr.mxu0 0.0
        %1750 = vmatpush1.xpose.msra.mxu0 0.0
        %1751 = vmatprep.subr.mxu0 0.0
        %1752 = vmatpush1.xpose.msra.mxu0 0.0
        %1753 = vmatprep.subr.mxu0 0.0
        %1754 = vmatpush1.xpose.msra.mxu0 0.0
        %1755 = vmatprep.subr.mxu0 0.0
        %1756 = vmatpush1.xpose.msra.mxu0 0.0
        %1757 = vmatprep.subr.mxu0 0.0
        %1758 = vmatpush1.xpose.msra.mxu0 0.0
        %1759 = vmatprep.mubr.f32.mxu0 0.0
        %1760 = vmatmul.mubr.f32.gmra.mrb[0].mxu0 %v1688
        %v1761 = vpop.f32.mrb[0].mxu0
        %v1762 = vadd.f32 0.0, %v1761
        %v1763 = vpop.f32.mrb[0].mxu0
        %1764 = vmatprep.mubr.f32.mxu0 0.0
        %1765 = vmatmul.mubr.f32.gmra.mrb[0].mxu0 %v1691
        %v1766 = vpop.f32.mrb[0].mxu0
        %v1767 = vadd.f32 0.0, %v1766
        %v1768 = vpop.f32.mrb[0].mxu0
        %1769 = vdwg.mxu0
        %v1771 = vsel %vm1520, %v868, 0
        %v1774 = vsel %vm1520, %v869, 0
        %v1776 = vsel %vm1520, %v1513, 0
        %1778 = vmatprep.subr.mxu0 0.0
        %1779 = vmatpush1.xpose.msra.mxu0 %v1776
        %1780 = vmatprep.subr.mxu0 0.0
        %1781 = vmatpush1.xpose.msra.mxu0 0.0
        %1782 = vmatprep.subr.mxu0 0.0
        %1783 = vmatpush1.xpose.msra.mxu0 0.0
        %1784 = vmatprep.subr.mxu0 0.0
        %1785 = vmatpush1.xpose.msra.mxu0 0.0
        %1786 = vmatprep.subr.mxu0 0.0
        %1787 = vmatpush1.xpose.msra.mxu0 0.0
        %1788 = vmatprep.subr.mxu0 0.0
        %1789 = vmatpush1.xpose.msra.mxu0 0.0
        %1790 = vmatprep.subr.mxu0 0.0
        %1791 = vmatpush1.xpose.msra.mxu0 0.0
        %1792 = vmatprep.subr.mxu0 0.0
        %1793 = vmatpush1.xpose.msra.mxu0 0.0
        %1794 = vmatprep.subr.mxu0 0.0
        %1795 = vmatpush1.xpose.msra.mxu0 0.0
        %1796 = vmatprep.subr.mxu0 0.0
        %1797 = vmatpush1.xpose.msra.mxu0 0.0
        %1798 = vmatprep.subr.mxu0 0.0
        %1799 = vmatpush1.xpose.msra.mxu0 0.0
        %1800 = vmatprep.subr.mxu0 0.0
        %1801 = vmatpush1.xpose.msra.mxu0 0.0
        %1802 = vmatprep.subr.mxu0 0.0
        %1803 = vmatpush1.xpose.msra.mxu0 0.0
        %1804 = vmatprep.subr.mxu0 0.0
        %1805 = vmatpush1.xpose.msra.mxu0 0.0
        %1806 = vmatprep.subr.mxu0 0.0
        %1807 = vmatpush1.xpose.msra.mxu0 0.0
        %1808 = vmatprep.subr.mxu0 0.0
        %1809 = vmatpush1.xpose.msra.mxu0 0.0
        %1810 = vmatprep.subr.mxu0 0.0
        %1811 = vmatpush1.xpose.msra.mxu0 0.0
        %1812 = vmatprep.subr.mxu0 0.0
        %1813 = vmatpush1.xpose.msra.mxu0 0.0
        %1814 = vmatprep.subr.mxu0 0.0
        %1815 = vmatpush1.xpose.msra.mxu0 0.0
        %1816 = vmatprep.subr.mxu0 0.0
        %1817 = vmatpush1.xpose.msra.mxu0 0.0
        %1818 = vmatprep.subr.mxu0 0.0
        %1819 = vmatpush1.xpose.msra.mxu0 0.0
        %1820 = vmatprep.subr.mxu0 0.0
        %1821 = vmatpush1.xpose.msra.mxu0 0.0
        %1822 = vmatprep.subr.mxu0 0.0
        %1823 = vmatpush1.xpose.msra.mxu0 0.0
        %1824 = vmatprep.subr.mxu0 0.0
        %1825 = vmatpush1.xpose.msra.mxu0 0.0
        %1826 = vmatprep.subr.mxu0 0.0
        %1827 = vmatpush1.xpose.msra.mxu0 0.0
        %1828 = vmatprep.subr.mxu0 0.0
        %1829 = vmatpush1.xpose.msra.mxu0 0.0
        %1830 = vmatprep.subr.mxu0 0.0
        %1831 = vmatpush1.xpose.msra.mxu0 0.0
        %1832 = vmatprep.subr.mxu0 0.0
        %1833 = vmatpush1.xpose.msra.mxu0 0.0
        %1834 = vmatprep.subr.mxu0 0.0
        %1835 = vmatpush1.xpose.msra.mxu0 0.0
        %1836 = vmatprep.subr.mxu0 0.0
        %1837 = vmatpush1.xpose.msra.mxu0 0.0
        %1838 = vmatprep.subr.mxu0 0.0
        %1839 = vmatpush1.xpose.msra.mxu0 0.0
        %1840 = vmatprep.subr.mxu0 0.0
        %1841 = vmatpush1.xpose.msra.mxu0 0.0
        %1842 = vmatprep.mubr.f32.mxu0 0.0
        %1843 = vmatmul.mubr.f32.gmra.mrb[0].mxu0 %v1771
        %v1844 = vpop.f32.mrb[0].mxu0
        %v1845 = vadd.f32 0.0, %v1844
        %v1846 = vpop.f32.mrb[0].mxu0
        %1847 = vmatprep.mubr.f32.mxu0 0.0
        %1848 = vmatmul.mubr.f32.gmra.mrb[0].mxu0 %v1774
        %v1849 = vpop.f32.mrb[0].mxu0
        %v1850 = vadd.f32 0.0, %v1849
        %v1851 = vpop.f32.mrb[0].mxu0
        %1852 = vdwg.mxu0
        %v1854 = vsel %vm1520, %v870, 0
        %v1857 = vsel %vm1520, %v871, 0
        %v1859 = vsel %vm1520, %v1476, 0
        %1861 = vmatprep.subr.mxu0 0.0
        %1862 = vmatpush1.xpose.msra.mxu0 %v1859
        %1863 = vmatprep.subr.mxu0 0.0
        %1864 = vmatpush1.xpose.msra.mxu0 0.0
        %1865 = vmatprep.subr.mxu0 0.0
        %1866 = vmatpush1.xpose.msra.mxu0 0.0
        %1867 = vmatprep.subr.mxu0 0.0
        %1868 = vmatpush1.xpose.msra.mxu0 0.0
        %1869 = vmatprep.subr.mxu0 0.0
        %1870 = vmatpush1.xpose.msra.mxu0 0.0
        %1871 = vmatprep.subr.mxu0 0.0
        %1872 = vmatpush1.xpose.msra.mxu0 0.0
        %1873 = vmatprep.subr.mxu0 0.0
        %1874 = vmatpush1.xpose.msra.mxu0 0.0
        %1875 = vmatprep.subr.mxu0 0.0
        %1876 = vmatpush1.xpose.msra.mxu0 0.0
        %1877 = vmatprep.subr.mxu0 0.0
        %1878 = vmatpush1.xpose.msra.mxu0 0.0
        %1879 = vmatprep.subr.mxu0 0.0
        %1880 = vmatpush1.xpose.msra.mxu0 0.0
        %1881 = vmatprep.subr.mxu0 0.0
        %1882 = vmatpush1.xpose.msra.mxu0 0.0
        %1883 = vmatprep.subr.mxu0 0.0
        %1884 = vmatpush1.xpose.msra.mxu0 0.0
        %1885 = vmatprep.subr.mxu0 0.0
        %1886 = vmatpush1.xpose.msra.mxu0 0.0
        %1887 = vmatprep.subr.mxu0 0.0
        %1888 = vmatpush1.xpose.msra.mxu0 0.0
        %1889 = vmatprep.subr.mxu0 0.0
        %1890 = vmatpush1.xpose.msra.mxu0 0.0
        %1891 = vmatprep.subr.mxu0 0.0
        %1892 = vmatpush1.xpose.msra.mxu0 0.0
        %1893 = vmatprep.subr.mxu0 0.0
        %1894 = vmatpush1.xpose.msra.mxu0 0.0
        %1895 = vmatprep.subr.mxu0 0.0
        %1896 = vmatpush1.xpose.msra.mxu0 0.0
        %1897 = vmatprep.subr.mxu0 0.0
        %1898 = vmatpush1.xpose.msra.mxu0 0.0
        %1899 = vmatprep.subr.mxu0 0.0
        %1900 = vmatpush1.xpose.msra.mxu0 0.0
        %1901 = vmatprep.subr.mxu0 0.0
        %1902 = vmatpush1.xpose.msra.mxu0 0.0
        %1903 = vmatprep.subr.mxu0 0.0
        %1904 = vmatpush1.xpose.msra.mxu0 0.0
        %1905 = vmatprep.subr.mxu0 0.0
        %1906 = vmatpush1.xpose.msra.mxu0 0.0
        %1907 = vmatprep.subr.mxu0 0.0
        %1908 = vmatpush1.xpose.msra.mxu0 0.0
        %1909 = vmatprep.subr.mxu0 0.0
        %1910 = vmatpush1.xpose.msra.mxu0 0.0
        %1911 = vmatprep.subr.mxu0 0.0
        %1912 = vmatpush1.xpose.msra.mxu0 0.0
        %1913 = vmatprep.subr.mxu0 0.0
        %1914 = vmatpush1.xpose.msra.mxu0 0.0
        %1915 = vmatprep.subr.mxu0 0.0
        %1916 = vmatpush1.xpose.msra.mxu0 0.0
        %1917 = vmatprep.subr.mxu0 0.0
        %1918 = vmatpush1.xpose.msra.mxu0 0.0
        %1919 = vmatprep.subr.mxu0 0.0
        %1920 = vmatpush1.xpose.msra.mxu0 0.0
        %1921 = vmatprep.subr.mxu0 0.0
        %1922 = vmatpush1.xpose.msra.mxu0 0.0
        %1923 = vmatprep.subr.mxu0 0.0
        %1924 = vmatpush1.xpose.msra.mxu0 0.0
        %1925 = vmatprep.mubr.f32.mxu0 0.0
        %1926 = vmatmul.mubr.f32.gmra.mrb[0].mxu0 %v1854
        %v1927 = vpop.f32.mrb[0].mxu0
        %v1928 = vadd.f32 0.0, %v1927
        %v1929 = vpop.f32.mrb[0].mxu0
        %1930 = vmatprep.mubr.f32.mxu0 0.0
        %1931 = vmatmul.mubr.f32.gmra.mrb[0].mxu0 %v1857
        %v1932 = vpop.f32.mrb[0].mxu0
        %v1933 = vadd.f32 0.0, %v1932
        %v1934 = vpop.f32.mrb[0].mxu0
        %1935 = vdwg.mxu0
        %v1937 = vsel %vm1520, %v872, 0
        %v1940 = vsel %vm1520, %v873, 0
        %v1942 = vsel %vm1520, %v1514, 0
        %1944 = vmatprep.subr.mxu0 0.0
        %1945 = vmatpush1.xpose.msra.mxu0 %v1942
        %1946 = vmatprep.subr.mxu0 0.0
        %1947 = vmatpush1.xpose.msra.mxu0 0.0
        %1948 = vmatprep.subr.mxu0 0.0
        %1949 = vmatpush1.xpose.msra.mxu0 0.0
        %1950 = vmatprep.subr.mxu0 0.0
        %1951 = vmatpush1.xpose.msra.mxu0 0.0
        %1952 = vmatprep.subr.mxu0 0.0
        %1953 = vmatpush1.xpose.msra.mxu0 0.0
        %1954 = vmatprep.subr.mxu0 0.0
        %1955 = vmatpush1.xpose.msra.mxu0 0.0
        %1956 = vmatprep.subr.mxu0 0.0
        %1957 = vmatpush1.xpose.msra.mxu0 0.0
        %1958 = vmatprep.subr.mxu0 0.0
        %1959 = vmatpush1.xpose.msra.mxu0 0.0
        %1960 = vmatprep.subr.mxu0 0.0
        %1961 = vmatpush1.xpose.msra.mxu0 0.0
        %1962 = vmatprep.subr.mxu0 0.0
        %1963 = vmatpush1.xpose.msra.mxu0 0.0
        %1964 = vmatprep.subr.mxu0 0.0
        %1965 = vmatpush1.xpose.msra.mxu0 0.0
        %1966 = vmatprep.subr.mxu0 0.0
        %1967 = vmatpush1.xpose.msra.mxu0 0.0
        %1968 = vmatprep.subr.mxu0 0.0
        %1969 = vmatpush1.xpose.msra.mxu0 0.0
        %1970 = vmatprep.subr.mxu0 0.0
        %1971 = vmatpush1.xpose.msra.mxu0 0.0
        %1972 = vmatprep.subr.mxu0 0.0
        %1973 = vmatpush1.xpose.msra.mxu0 0.0
        %1974 = vmatprep.subr.mxu0 0.0
        %1975 = vmatpush1.xpose.msra.mxu0 0.0
        %1976 = vmatprep.subr.mxu0 0.0
        %1977 = vmatpush1.xpose.msra.mxu0 0.0
        %1978 = vmatprep.subr.mxu0 0.0
        %1979 = vmatpush1.xpose.msra.mxu0 0.0
        %1980 = vmatprep.subr.mxu0 0.0
        %1981 = vmatpush1.xpose.msra.mxu0 0.0
        %1982 = vmatprep.subr.mxu0 0.0
        %1983 = vmatpush1.xpose.msra.mxu0 0.0
        %1984 = vmatprep.subr.mxu0 0.0
        %1985 = vmatpush1.xpose.msra.mxu0 0.0
        %1986 = vmatprep.subr.mxu0 0.0
        %1987 = vmatpush1.xpose.msra.mxu0 0.0
        %1988 = vmatprep.subr.mxu0 0.0
        %1989 = vmatpush1.xpose.msra.mxu0 0.0
        %1990 = vmatprep.subr.mxu0 0.0
        %1991 = vmatpush1.xpose.msra.mxu0 0.0
        %1992 = vmatprep.subr.mxu0 0.0
        %1993 = vmatpush1.xpose.msra.mxu0 0.0
        %1994 = vmatprep.subr.mxu0 0.0
        %1995 = vmatpush1.xpose.msra.mxu0 0.0
        %1996 = vmatprep.subr.mxu0 0.0
        %1997 = vmatpush1.xpose.msra.mxu0 0.0
        %1998 = vmatprep.subr.mxu0 0.0
        %1999 = vmatpush1.xpose.msra.mxu0 0.0
        %2000 = vmatprep.subr.mxu0 0.0
        %2001 = vmatpush1.xpose.msra.mxu0 0.0
        %2002 = vmatprep.subr.mxu0 0.0
        %2003 = vmatpush1.xpose.msra.mxu0 0.0
        %2004 = vmatprep.subr.mxu0 0.0
        %2005 = vmatpush1.xpose.msra.mxu0 0.0
        %2006 = vmatprep.subr.mxu0 0.0
        %2007 = vmatpush1.xpose.msra.mxu0 0.0
        %2008 = vmatprep.mubr.f32.mxu0 0.0
        %2009 = vmatmul.mubr.f32.gmra.mrb[0].mxu0 %v1937
        %v2010 = vpop.f32.mrb[0].mxu0
        %v2011 = vadd.f32 0.0, %v2010
        %v2012 = vpop.f32.mrb[0].mxu0
        %2013 = vmatprep.mubr.f32.mxu0 0.0
        %2014 = vmatmul.mubr.f32.gmra.mrb[0].mxu0 %v1940
        %v2015 = vpop.f32.mrb[0].mxu0
        %v2016 = vadd.f32 0.0, %v2015
        %v2017 = vpop.f32.mrb[0].mxu0
        %2018 = vdwg.mxu0
        %v2020 = vsel %vm1520, %v874, 0
        %v2023 = vsel %vm1520, %v875, 0
        %v2025 = vsel %vm1520, %v1481, 0
        %2027 = vmatprep.subr.mxu0 0.0
        %2028 = vmatpush1.xpose.msra.mxu0 %v2025
        %2029 = vmatprep.subr.mxu0 0.0
        %2030 = vmatpush1.xpose.msra.mxu0 0.0
        %2031 = vmatprep.subr.mxu0 0.0
        %2032 = vmatpush1.xpose.msra.mxu0 0.0
        %2033 = vmatprep.subr.mxu0 0.0
        %2034 = vmatpush1.xpose.msra.mxu0 0.0
        %2035 = vmatprep.subr.mxu0 0.0
        %2036 = vmatpush1.xpose.msra.mxu0 0.0
        %2037 = vmatprep.subr.mxu0 0.0
        %2038 = vmatpush1.xpose.msra.mxu0 0.0
        %2039 = vmatprep.subr.mxu0 0.0
        %2040 = vmatpush1.xpose.msra.mxu0 0.0
        %2041 = vmatprep.subr.mxu0 0.0
        %2042 = vmatpush1.xpose.msra.mxu0 0.0
        %2043 = vmatprep.subr.mxu0 0.0
        %2044 = vmatpush1.xpose.msra.mxu0 0.0
        %2045 = vmatprep.subr.mxu0 0.0
        %2046 = vmatpush1.xpose.msra.mxu0 0.0
        %2047 = vmatprep.subr.mxu0 0.0
        %2048 = vmatpush1.xpose.msra.mxu0 0.0
        %2049 = vmatprep.subr.mxu0 0.0
        %2050 = vmatpush1.xpose.msra.mxu0 0.0
        %2051 = vmatprep.subr.mxu0 0.0
        %2052 = vmatpush1.xpose.msra.mxu0 0.0
        %2053 = vmatprep.subr.mxu0 0.0
        %2054 = vmatpush1.xpose.msra.mxu0 0.0
        %2055 = vmatprep.subr.mxu0 0.0
        %2056 = vmatpush1.xpose.msra.mxu0 0.0
        %2057 = vmatprep.subr.mxu0 0.0
        %2058 = vmatpush1.xpose.msra.mxu0 0.0
        %2059 = vmatprep.subr.mxu0 0.0
        %2060 = vmatpush1.xpose.msra.mxu0 0.0
        %2061 = vmatprep.subr.mxu0 0.0
        %2062 = vmatpush1.xpose.msra.mxu0 0.0
        %2063 = vmatprep.subr.mxu0 0.0
        %2064 = vmatpush1.xpose.msra.mxu0 0.0
        %2065 = vmatprep.subr.mxu0 0.0
        %2066 = vmatpush1.xpose.msra.mxu0 0.0
        %2067 = vmatprep.subr.mxu0 0.0
        %2068 = vmatpush1.xpose.msra.mxu0 0.0
        %2069 = vmatprep.subr.mxu0 0.0
        %2070 = vmatpush1.xpose.msra.mxu0 0.0
        %2071 = vmatprep.subr.mxu0 0.0
        %2072 = vmatpush1.xpose.msra.mxu0 0.0
        %2073 = vmatprep.subr.mxu0 0.0
        %2074 = vmatpush1.xpose.msra.mxu0 0.0
        %2075 = vmatprep.subr.mxu0 0.0
        %2076 = vmatpush1.xpose.msra.mxu0 0.0
        %2077 = vmatprep.subr.mxu0 0.0
        %2078 = vmatpush1.xpose.msra.mxu0 0.0
        %2079 = vmatprep.subr.mxu0 0.0
        %2080 = vmatpush1.xpose.msra.mxu0 0.0
        %2081 = vmatprep.subr.mxu0 0.0
        %2082 = vmatpush1.xpose.msra.mxu0 0.0
        %2083 = vmatprep.subr.mxu0 0.0
        %2084 = vmatpush1.xpose.msra.mxu0 0.0
        %2085 = vmatprep.subr.mxu0 0.0
        %2086 = vmatpush1.xpose.msra.mxu0 0.0
        %2087 = vmatprep.subr.mxu0 0.0
        %2088 = vmatpush1.xpose.msra.mxu0 0.0
        %2089 = vmatprep.subr.mxu0 0.0
        %2090 = vmatpush1.xpose.msra.mxu0 0.0
        %2091 = vmatprep.mubr.f32.mxu0 0.0
        %2092 = vmatmul.mubr.f32.gmra.mrb[0].mxu0 %v2020
        %v2093 = vpop.f32.mrb[0].mxu0
        %v2094 = vadd.f32 0.0, %v2093
        %v2095 = vpop.f32.mrb[0].mxu0
        %2096 = vmatprep.mubr.f32.mxu0 0.0
        %2097 = vmatmul.mubr.f32.gmra.mrb[0].mxu0 %v2023
        %v2098 = vpop.f32.mrb[0].mxu0
        %v2099 = vadd.f32 0.0, %v2098
        %v2100 = vpop.f32.mrb[0].mxu0
        %2101 = vdwg.mxu0
        %v2103 = vsel %vm1520, %v876, 0
        %v2106 = vsel %vm1520, %v877, 0
        %v2108 = vsel %vm1520, %v1515, 0
        %2110 = vmatprep.subr.mxu0 0.0
        %2111 = vmatpush1.xpose.msra.mxu0 %v2108
        %2112 = vmatprep.subr.mxu0 0.0
        %2113 = vmatpush1.xpose.msra.mxu0 0.0
        %2114 = vmatprep.subr.mxu0 0.0
        %2115 = vmatpush1.xpose.msra.mxu0 0.0
        %2116 = vmatprep.subr.mxu0 0.0
        %2117 = vmatpush1.xpose.msra.mxu0 0.0
        %2118 = vmatprep.subr.mxu0 0.0
        %2119 = vmatpush1.xpose.msra.mxu0 0.0
        %2120 = vmatprep.subr.mxu0 0.0
        %2121 = vmatpush1.xpose.msra.mxu0 0.0
        %2122 = vmatprep.subr.mxu0 0.0
        %2123 = vmatpush1.xpose.msra.mxu0 0.0
        %2124 = vmatprep.subr.mxu0 0.0
        %2125 = vmatpush1.xpose.msra.mxu0 0.0
        %2126 = vmatprep.subr.mxu0 0.0
        %2127 = vmatpush1.xpose.msra.mxu0 0.0
        %2128 = vmatprep.subr.mxu0 0.0
        %2129 = vmatpush1.xpose.msra.mxu0 0.0
        %2130 = vmatprep.subr.mxu0 0.0
        %2131 = vmatpush1.xpose.msra.mxu0 0.0
        %2132 = vmatprep.subr.mxu0 0.0
        %2133 = vmatpush1.xpose.msra.mxu0 0.0
        %2134 = vmatprep.subr.mxu0 0.0
        %2135 = vmatpush1.xpose.msra.mxu0 0.0
        %2136 = vmatprep.subr.mxu0 0.0
        %2137 = vmatpush1.xpose.msra.mxu0 0.0
        %2138 = vmatprep.subr.mxu0 0.0
        %2139 = vmatpush1.xpose.msra.mxu0 0.0
        %2140 = vmatprep.subr.mxu0 0.0
        %2141 = vmatpush1.xpose.msra.mxu0 0.0
        %2142 = vmatprep.subr.mxu0 0.0
        %2143 = vmatpush1.xpose.msra.mxu0 0.0
        %2144 = vmatprep.subr.mxu0 0.0
        %2145 = vmatpush1.xpose.msra.mxu0 0.0
        %2146 = vmatprep.subr.mxu0 0.0
        %2147 = vmatpush1.xpose.msra.mxu0 0.0
        %2148 = vmatprep.subr.mxu0 0.0
        %2149 = vmatpush1.xpose.msra.mxu0 0.0
        %2150 = vmatprep.subr.mxu0 0.0
        %2151 = vmatpush1.xpose.msra.mxu0 0.0
        %2152 = vmatprep.subr.mxu0 0.0
        %2153 = vmatpush1.xpose.msra.mxu0 0.0
        %2154 = vmatprep.subr.mxu0 0.0
        %2155 = vmatpush1.xpose.msra.mxu0 0.0
        %2156 = vmatprep.subr.mxu0 0.0
        %2157 = vmatpush1.xpose.msra.mxu0 0.0
        %2158 = vmatprep.subr.mxu0 0.0
        %2159 = vmatpush1.xpose.msra.mxu0 0.0
        %2160 = vmatprep.subr.mxu0 0.0
        %2161 = vmatpush1.xpose.msra.mxu0 0.0
        %2162 = vmatprep.subr.mxu0 0.0
        %2163 = vmatpush1.xpose.msra.mxu0 0.0
        %2164 = vmatprep.subr.mxu0 0.0
        %2165 = vmatpush1.xpose.msra.mxu0 0.0
        %2166 = vmatprep.subr.mxu0 0.0
        %2167 = vmatpush1.xpose.msra.mxu0 0.0
        %2168 = vmatprep.subr.mxu0 0.0
        %2169 = vmatpush1.xpose.msra.mxu0 0.0
        %2170 = vmatprep.subr.mxu0 0.0
        %2171 = vmatpush1.xpose.msra.mxu0 0.0
        %2172 = vmatprep.subr.mxu0 0.0
        %2173 = vmatpush1.xpose.msra.mxu0 0.0
        %2174 = vmatprep.mubr.f32.mxu0 0.0
        %2175 = vmatmul.mubr.f32.gmra.mrb[0].mxu0 %v2103
        %v2176 = vpop.f32.mrb[0].mxu0
        %v2177 = vadd.f32 0.0, %v2176
        %v2178 = vpop.f32.mrb[0].mxu0
        %2179 = vmatprep.mubr.f32.mxu0 0.0
        %2180 = vmatmul.mubr.f32.gmra.mrb[0].mxu0 %v2106
        %v2181 = vpop.f32.mrb[0].mxu0
        %v2182 = vadd.f32 0.0, %v2181
        %v2183 = vpop.f32.mrb[0].mxu0
        %2184 = vdwg.mxu0
        %v2186 = vsel %vm1520, %v878, 0
        %v2189 = vsel %vm1520, %v879, 0
        %v2191 = vsel %vm1520, %v1486, 0
        %2193 = vmatprep.subr.mxu0 0.0
        %2194 = vmatpush1.xpose.msra.mxu0 %v2191
        %2195 = vmatprep.subr.mxu0 0.0
        %2196 = vmatpush1.xpose.msra.mxu0 0.0
        %2197 = vmatprep.subr.mxu0 0.0
        %2198 = vmatpush1.xpose.msra.mxu0 0.0
        %2199 = vmatprep.subr.mxu0 0.0
        %2200 = vmatpush1.xpose.msra.mxu0 0.0
        %2201 = vmatprep.subr.mxu0 0.0
        %2202 = vmatpush1.xpose.msra.mxu0 0.0
        %2203 = vmatprep.subr.mxu0 0.0
        %2204 = vmatpush1.xpose.msra.mxu0 0.0
        %2205 = vmatprep.subr.mxu0 0.0
        %2206 = vmatpush1.xpose.msra.mxu0 0.0
        %2207 = vmatprep.subr.mxu0 0.0
        %2208 = vmatpush1.xpose.msra.mxu0 0.0
        %2209 = vmatprep.subr.mxu0 0.0
        %2210 = vmatpush1.xpose.msra.mxu0 0.0
        %2211 = vmatprep.subr.mxu0 0.0
        %2212 = vmatpush1.xpose.msra.mxu0 0.0
        %2213 = vmatprep.subr.mxu0 0.0
        %2214 = vmatpush1.xpose.msra.mxu0 0.0
        %2215 = vmatprep.subr.mxu0 0.0
        %2216 = vmatpush1.xpose.msra.mxu0 0.0
        %2217 = vmatprep.subr.mxu0 0.0
        %2218 = vmatpush1.xpose.msra.mxu0 0.0
        %2219 = vmatprep.subr.mxu0 0.0
        %2220 = vmatpush1.xpose.msra.mxu0 0.0
        %2221 = vmatprep.subr.mxu0 0.0
        %2222 = vmatpush1.xpose.msra.mxu0 0.0
        %2223 = vmatprep.subr.mxu0 0.0
        %2224 = vmatpush1.xpose.msra.mxu0 0.0
        %2225 = vmatprep.subr.mxu0 0.0
        %2226 = vmatpush1.xpose.msra.mxu0 0.0
        %2227 = vmatprep.subr.mxu0 0.0
        %2228 = vmatpush1.xpose.msra.mxu0 0.0
        %2229 = vmatprep.subr.mxu0 0.0
        %2230 = vmatpush1.xpose.msra.mxu0 0.0
        %2231 = vmatprep.subr.mxu0 0.0
        %2232 = vmatpush1.xpose.msra.mxu0 0.0
        %2233 = vmatprep.subr.mxu0 0.0
        %2234 = vmatpush1.xpose.msra.mxu0 0.0
        %2235 = vmatprep.subr.mxu0 0.0
        %2236 = vmatpush1.xpose.msra.mxu0 0.0
        %2237 = vmatprep.subr.mxu0 0.0
        %2238 = vmatpush1.xpose.msra.mxu0 0.0
        %2239 = vmatprep.subr.mxu0 0.0
        %2240 = vmatpush1.xpose.msra.mxu0 0.0
        %2241 = vmatprep.subr.mxu0 0.0
        %2242 = vmatpush1.xpose.msra.mxu0 0.0
        %2243 = vmatprep.subr.mxu0 0.0
        %2244 = vmatpush1.xpose.msra.mxu0 0.0
        %2245 = vmatprep.subr.mxu0 0.0
        %2246 = vmatpush1.xpose.msra.mxu0 0.0
        %2247 = vmatprep.subr.mxu0 0.0
        %2248 = vmatpush1.xpose.msra.mxu0 0.0
        %2249 = vmatprep.subr.mxu0 0.0
        %2250 = vmatpush1.xpose.msra.mxu0 0.0
        %2251 = vmatprep.subr.mxu0 0.0
        %2252 = vmatpush1.xpose.msra.mxu0 0.0
        %2253 = vmatprep.subr.mxu0 0.0
        %2254 = vmatpush1.xpose.msra.mxu0 0.0
        %2255 = vmatprep.subr.mxu0 0.0
        %2256 = vmatpush1.xpose.msra.mxu0 0.0
        %2257 = vmatprep.mubr.f32.mxu0 0.0
        %2258 = vmatmul.mubr.f32.gmra.mrb[0].mxu0 %v2186
        %v2259 = vpop.f32.mrb[0].mxu0
        %v2260 = vadd.f32 0.0, %v2259
        %v2261 = vpop.f32.mrb[0].mxu0
        %2262 = vmatprep.mubr.f32.mxu0 0.0
        %2263 = vmatmul.mubr.f32.gmra.mrb[0].mxu0 %v2189
        %v2264 = vpop.f32.mrb[0].mxu0
        %v2265 = vadd.f32 0.0, %v2264
        %v2266 = vpop.f32.mrb[0].mxu0
        %2267 = vdwg.mxu0
        %v2269 = vsel %vm1520, %v880, 0
        %v2272 = vsel %vm1520, %v881, 0
        %v2274 = vsel %vm1520, %v1516, 0
        %2276 = vmatprep.subr.mxu0 0.0
        %2277 = vmatpush1.xpose.msra.mxu0 %v2274
        %2278 = vmatprep.subr.mxu0 0.0
        %2279 = vmatpush1.xpose.msra.mxu0 0.0
        %2280 = vmatprep.subr.mxu0 0.0
        %2281 = vmatpush1.xpose.msra.mxu0 0.0
        %2282 = vmatprep.subr.mxu0 0.0
        %2283 = vmatpush1.xpose.msra.mxu0 0.0
        %2284 = vmatprep.subr.mxu0 0.0
        %2285 = vmatpush1.xpose.msra.mxu0 0.0
        %2286 = vmatprep.subr.mxu0 0.0
        %2287 = vmatpush1.xpose.msra.mxu0 0.0
        %2288 = vmatprep.subr.mxu0 0.0
        %2289 = vmatpush1.xpose.msra.mxu0 0.0
        %2290 = vmatprep.subr.mxu0 0.0
        %2291 = vmatpush1.xpose.msra.mxu0 0.0
        %2292 = vmatprep.subr.mxu0 0.0
        %2293 = vmatpush1.xpose.msra.mxu0 0.0
        %2294 = vmatprep.subr.mxu0 0.0
        %2295 = vmatpush1.xpose.msra.mxu0 0.0
        %2296 = vmatprep.subr.mxu0 0.0
        %2297 = vmatpush1.xpose.msra.mxu0 0.0
        %2298 = vmatprep.subr.mxu0 0.0
        %2299 = vmatpush1.xpose.msra.mxu0 0.0
        %2300 = vmatprep.subr.mxu0 0.0
        %2301 = vmatpush1.xpose.msra.mxu0 0.0
        %2302 = vmatprep.subr.mxu0 0.0
        %2303 = vmatpush1.xpose.msra.mxu0 0.0
        %2304 = vmatprep.subr.mxu0 0.0
        %2305 = vmatpush1.xpose.msra.mxu0 0.0
        %2306 = vmatprep.subr.mxu0 0.0
        %2307 = vmatpush1.xpose.msra.mxu0 0.0
        %2308 = vmatprep.subr.mxu0 0.0
        %2309 = vmatpush1.xpose.msra.mxu0 0.0
        %2310 = vmatprep.subr.mxu0 0.0
        %2311 = vmatpush1.xpose.msra.mxu0 0.0
        %2312 = vmatprep.subr.mxu0 0.0
        %2313 = vmatpush1.xpose.msra.mxu0 0.0
        %2314 = vmatprep.subr.mxu0 0.0
        %2315 = vmatpush1.xpose.msra.mxu0 0.0
        %2316 = vmatprep.subr.mxu0 0.0
        %2317 = vmatpush1.xpose.msra.mxu0 0.0
        %2318 = vmatprep.subr.mxu0 0.0
        %2319 = vmatpush1.xpose.msra.mxu0 0.0
        %2320 = vmatprep.subr.mxu0 0.0
        %2321 = vmatpush1.xpose.msra.mxu0 0.0
        %2322 = vmatprep.subr.mxu0 0.0
        %2323 = vmatpush1.xpose.msra.mxu0 0.0
        %2324 = vmatprep.subr.mxu0 0.0
        %2325 = vmatpush1.xpose.msra.mxu0 0.0
        %2326 = vmatprep.subr.mxu0 0.0
        %2327 = vmatpush1.xpose.msra.mxu0 0.0
        %2328 = vmatprep.subr.mxu0 0.0
        %2329 = vmatpush1.xpose.msra.mxu0 0.0
        %2330 = vmatprep.subr.mxu0 0.0
        %2331 = vmatpush1.xpose.msra.mxu0 0.0
        %2332 = vmatprep.subr.mxu0 0.0
        %2333 = vmatpush1.xpose.msra.mxu0 0.0
        %2334 = vmatprep.subr.mxu0 0.0
        %2335 = vmatpush1.xpose.msra.mxu0 0.0
        %2336 = vmatprep.subr.mxu0 0.0
        %2337 = vmatpush1.xpose.msra.mxu0 0.0
        %2338 = vmatprep.subr.mxu0 0.0
        %2339 = vmatpush1.xpose.msra.mxu0 0.0
        %2340 = vmatprep.mubr.f32.mxu0 0.0
        %2341 = vmatmul.mubr.f32.gmra.mrb[0].mxu0 %v2269
        %v2342 = vpop.f32.mrb[0].mxu0
        %v2343 = vadd.f32 0.0, %v2342
        %v2344 = vpop.f32.mrb[0].mxu0
        %2345 = vmatprep.mubr.f32.mxu0 0.0
        %2346 = vmatmul.mubr.f32.gmra.mrb[0].mxu0 %v2272
        %v2347 = vpop.f32.mrb[0].mxu0
        %v2348 = vadd.f32 0.0, %v2347
        %v2349 = vpop.f32.mrb[0].mxu0
        %2350 = vdwg.mxu0
        %v2352 = vsel %vm1520, %v882, 0
        %v2355 = vsel %vm1520, %v883, 0
        %v2357 = vsel %vm1520, %v1491, 0
        %2359 = vmatprep.subr.mxu0 0.0
        %2360 = vmatpush1.xpose.msra.mxu0 %v2357
        %2361 = vmatprep.subr.mxu0 0.0
        %2362 = vmatpush1.xpose.msra.mxu0 0.0
        %2363 = vmatprep.subr.mxu0 0.0
        %2364 = vmatpush1.xpose.msra.mxu0 0.0
        %2365 = vmatprep.subr.mxu0 0.0
        %2366 = vmatpush1.xpose.msra.mxu0 0.0
        %2367 = vmatprep.subr.mxu0 0.0
        %2368 = vmatpush1.xpose.msra.mxu0 0.0
        %2369 = vmatprep.subr.mxu0 0.0
        %2370 = vmatpush1.xpose.msra.mxu0 0.0
        %2371 = vmatprep.subr.mxu0 0.0
        %2372 = vmatpush1.xpose.msra.mxu0 0.0
        %2373 = vmatprep.subr.mxu0 0.0
        %2374 = vmatpush1.xpose.msra.mxu0 0.0
        %2375 = vmatprep.subr.mxu0 0.0
        %2376 = vmatpush1.xpose.msra.mxu0 0.0
        %2377 = vmatprep.subr.mxu0 0.0
        %2378 = vmatpush1.xpose.msra.mxu0 0.0
        %2379 = vmatprep.subr.mxu0 0.0
        %2380 = vmatpush1.xpose.msra.mxu0 0.0
        %2381 = vmatprep.subr.mxu0 0.0
        %2382 = vmatpush1.xpose.msra.mxu0 0.0
        %2383 = vmatprep.subr.mxu0 0.0
        %2384 = vmatpush1.xpose.msra.mxu0 0.0
        %2385 = vmatprep.subr.mxu0 0.0
        %2386 = vmatpush1.xpose.msra.mxu0 0.0
        %2387 = vmatprep.subr.mxu0 0.0
        %2388 = vmatpush1.xpose.msra.mxu0 0.0
        %2389 = vmatprep.subr.mxu0 0.0
        %2390 = vmatpush1.xpose.msra.mxu0 0.0
        %2391 = vmatprep.subr.mxu0 0.0
        %2392 = vmatpush1.xpose.msra.mxu0 0.0
        %2393 = vmatprep.subr.mxu0 0.0
        %2394 = vmatpush1.xpose.msra.mxu0 0.0
        %2395 = vmatprep.subr.mxu0 0.0
        %2396 = vmatpush1.xpose.msra.mxu0 0.0
        %2397 = vmatprep.subr.mxu0 0.0
        %2398 = vmatpush1.xpose.msra.mxu0 0.0
        %2399 = vmatprep.subr.mxu0 0.0
        %2400 = vmatpush1.xpose.msra.mxu0 0.0
        %2401 = vmatprep.subr.mxu0 0.0
        %2402 = vmatpush1.xpose.msra.mxu0 0.0
        %2403 = vmatprep.subr.mxu0 0.0
        %2404 = vmatpush1.xpose.msra.mxu0 0.0
        %2405 = vmatprep.subr.mxu0 0.0
        %2406 = vmatpush1.xpose.msra.mxu0 0.0
        %2407 = vmatprep.subr.mxu0 0.0
        %2408 = vmatpush1.xpose.msra.mxu0 0.0
        %2409 = vmatprep.subr.mxu0 0.0
        %2410 = vmatpush1.xpose.msra.mxu0 0.0
        %2411 = vmatprep.subr.mxu0 0.0
        %2412 = vmatpush1.xpose.msra.mxu0 0.0
        %2413 = vmatprep.subr.mxu0 0.0
        %2414 = vmatpush1.xpose.msra.mxu0 0.0
        %2415 = vmatprep.subr.mxu0 0.0
        %2416 = vmatpush1.xpose.msra.mxu0 0.0
        %2417 = vmatprep.subr.mxu0 0.0
        %2418 = vmatpush1.xpose.msra.mxu0 0.0
        %2419 = vmatprep.subr.mxu0 0.0
        %2420 = vmatpush1.xpose.msra.mxu0 0.0
        %2421 = vmatprep.subr.mxu0 0.0
        %2422 = vmatpush1.xpose.msra.mxu0 0.0
        %2423 = vmatprep.mubr.f32.mxu0 0.0
        %2424 = vmatmul.mubr.f32.gmra.mrb[0].mxu0 %v2352
        %v2425 = vpop.f32.mrb[0].mxu0
        %v2426 = vadd.f32 0.0, %v2425
        %v2427 = vpop.f32.mrb[0].mxu0
        %2428 = vmatprep.mubr.f32.mxu0 0.0
        %2429 = vmatmul.mubr.f32.gmra.mrb[0].mxu0 %v2355
        %v2430 = vpop.f32.mrb[0].mxu0
        %v2431 = vadd.f32 0.0, %v2430
        %v2432 = vpop.f32.mrb[0].mxu0
        %2433 = vdwg.mxu0
        %v2435 = vsel %vm1520, %v884, 0
        %v2438 = vsel %vm1520, %v885, 0
        %v2440 = vsel %vm1520, %v1517, 0
        %2442 = vmatprep.subr.mxu0 0.0
        %2443 = vmatpush1.xpose.msra.mxu0 %v2440
        %2444 = vmatprep.subr.mxu0 0.0
        %2445 = vmatpush1.xpose.msra.mxu0 0.0
        %2446 = vmatprep.subr.mxu0 0.0
        %2447 = vmatpush1.xpose.msra.mxu0 0.0
        %2448 = vmatprep.subr.mxu0 0.0
        %2449 = vmatpush1.xpose.msra.mxu0 0.0
        %2450 = vmatprep.subr.mxu0 0.0
        %2451 = vmatpush1.xpose.msra.mxu0 0.0
        %2452 = vmatprep.subr.mxu0 0.0
        %2453 = vmatpush1.xpose.msra.mxu0 0.0
        %2454 = vmatprep.subr.mxu0 0.0
        %2455 = vmatpush1.xpose.msra.mxu0 0.0
        %2456 = vmatprep.subr.mxu0 0.0
        %2457 = vmatpush1.xpose.msra.mxu0 0.0
        %2458 = vmatprep.subr.mxu0 0.0
        %2459 = vmatpush1.xpose.msra.mxu0 0.0
        %2460 = vmatprep.subr.mxu0 0.0
        %2461 = vmatpush1.xpose.msra.mxu0 0.0
        %2462 = vmatprep.subr.mxu0 0.0
        %2463 = vmatpush1.xpose.msra.mxu0 0.0
        %2464 = vmatprep.subr.mxu0 0.0
        %2465 = vmatpush1.xpose.msra.mxu0 0.0
        %2466 = vmatprep.subr.mxu0 0.0
        %2467 = vmatpush1.xpose.msra.mxu0 0.0
        %2468 = vmatprep.subr.mxu0 0.0
        %2469 = vmatpush1.xpose.msra.mxu0 0.0
        %2470 = vmatprep.subr.mxu0 0.0
        %2471 = vmatpush1.xpose.msra.mxu0 0.0
        %2472 = vmatprep.subr.mxu0 0.0
        %2473 = vmatpush1.xpose.msra.mxu0 0.0
        %2474 = vmatprep.subr.mxu0 0.0
        %2475 = vmatpush1.xpose.msra.mxu0 0.0
        %2476 = vmatprep.subr.mxu0 0.0
        %2477 = vmatpush1.xpose.msra.mxu0 0.0
        %2478 = vmatprep.subr.mxu0 0.0
        %2479 = vmatpush1.xpose.msra.mxu0 0.0
        %2480 = vmatprep.subr.mxu0 0.0
        %2481 = vmatpush1.xpose.msra.mxu0 0.0
        %2482 = vmatprep.subr.mxu0 0.0
        %2483 = vmatpush1.xpose.msra.mxu0 0.0
        %2484 = vmatprep.subr.mxu0 0.0
        %2485 = vmatpush1.xpose.msra.mxu0 0.0
        %2486 = vmatprep.subr.mxu0 0.0
        %2487 = vmatpush1.xpose.msra.mxu0 0.0
        %2488 = vmatprep.subr.mxu0 0.0
        %2489 = vmatpush1.xpose.msra.mxu0 0.0
        %2490 = vmatprep.subr.mxu0 0.0
        %2491 = vmatpush1.xpose.msra.mxu0 0.0
        %2492 = vmatprep.subr.mxu0 0.0
        %2493 = vmatpush1.xpose.msra.mxu0 0.0
        %2494 = vmatprep.subr.mxu0 0.0
        %2495 = vmatpush1.xpose.msra.mxu0 0.0
        %2496 = vmatprep.subr.mxu0 0.0
        %2497 = vmatpush1.xpose.msra.mxu0 0.0
        %2498 = vmatprep.subr.mxu0 0.0
        %2499 = vmatpush1.xpose.msra.mxu0 0.0
        %2500 = vmatprep.subr.mxu0 0.0
        %2501 = vmatpush1.xpose.msra.mxu0 0.0
        %2502 = vmatprep.subr.mxu0 0.0
        %2503 = vmatpush1.xpose.msra.mxu0 0.0
        %2504 = vmatprep.subr.mxu0 0.0
        %2505 = vmatpush1.xpose.msra.mxu0 0.0
        %2506 = vmatprep.mubr.f32.mxu0 0.0
        %2507 = vmatmul.mubr.f32.gmra.mrb[0].mxu0 %v2435
        %v2508 = vpop.f32.mrb[0].mxu0
        %v2509 = vadd.f32 0.0, %v2508
        %v2510 = vpop.f32.mrb[0].mxu0
        %2511 = vmatprep.mubr.f32.mxu0 0.0
        %2512 = vmatmul.mubr.f32.gmra.mrb[0].mxu0 %v2438
        %v2513 = vpop.f32.mrb[0].mxu0
        %v2514 = vadd.f32 0.0, %v2513
        %v2515 = vpop.f32.mrb[0].mxu0
        %2516 = vdwg.mxu0
        %v2518 = vsel %vm1520, %v886, 0
        %v2521 = vsel %vm1520, %v887, 0
        %v2523 = vsel %vm1520, %v1496, 0
        %2525 = vmatprep.subr.mxu0 0.0
        %2526 = vmatpush1.xpose.msra.mxu0 %v2523
        %2527 = vmatprep.subr.mxu0 0.0
        %2528 = vmatpush1.xpose.msra.mxu0 0.0
        %2529 = vmatprep.subr.mxu0 0.0
        %2530 = vmatpush1.xpose.msra.mxu0 0.0
        %2531 = vmatprep.subr.mxu0 0.0
        %2532 = vmatpush1.xpose.msra.mxu0 0.0
        %2533 = vmatprep.subr.mxu0 0.0
        %2534 = vmatpush1.xpose.msra.mxu0 0.0
        %2535 = vmatprep.subr.mxu0 0.0
        %2536 = vmatpush1.xpose.msra.mxu0 0.0
        %2537 = vmatprep.subr.mxu0 0.0
        %2538 = vmatpush1.xpose.msra.mxu0 0.0
        %2539 = vmatprep.subr.mxu0 0.0
        %2540 = vmatpush1.xpose.msra.mxu0 0.0
        %2541 = vmatprep.subr.mxu0 0.0
        %2542 = vmatpush1.xpose.msra.mxu0 0.0
        %2543 = vmatprep.subr.mxu0 0.0
        %2544 = vmatpush1.xpose.msra.mxu0 0.0
        %2545 = vmatprep.subr.mxu0 0.0
        %2546 = vmatpush1.xpose.msra.mxu0 0.0
        %2547 = vmatprep.subr.mxu0 0.0
        %2548 = vmatpush1.xpose.msra.mxu0 0.0
        %2549 = vmatprep.subr.mxu0 0.0
        %2550 = vmatpush1.xpose.msra.mxu0 0.0
        %2551 = vmatprep.subr.mxu0 0.0
        %2552 = vmatpush1.xpose.msra.mxu0 0.0
        %2553 = vmatprep.subr.mxu0 0.0
        %2554 = vmatpush1.xpose.msra.mxu0 0.0
        %2555 = vmatprep.subr.mxu0 0.0
        %2556 = vmatpush1.xpose.msra.mxu0 0.0
        %2557 = vmatprep.subr.mxu0 0.0
        %2558 = vmatpush1.xpose.msra.mxu0 0.0
        %2559 = vmatprep.subr.mxu0 0.0
        %2560 = vmatpush1.xpose.msra.mxu0 0.0
        %2561 = vmatprep.subr.mxu0 0.0
        %2562 = vmatpush1.xpose.msra.mxu0 0.0
        %2563 = vmatprep.subr.mxu0 0.0
        %2564 = vmatpush1.xpose.msra.mxu0 0.0
        %2565 = vmatprep.subr.mxu0 0.0
        %2566 = vmatpush1.xpose.msra.mxu0 0.0
        %2567 = vmatprep.subr.mxu0 0.0
        %2568 = vmatpush1.xpose.msra.mxu0 0.0
        %2569 = vmatprep.subr.mxu0 0.0
        %2570 = vmatpush1.xpose.msra.mxu0 0.0
        %2571 = vmatprep.subr.mxu0 0.0
        %2572 = vmatpush1.xpose.msra.mxu0 0.0
        %2573 = vmatprep.subr.mxu0 0.0
        %2574 = vmatpush1.xpose.msra.mxu0 0.0
        %2575 = vmatprep.subr.mxu0 0.0
        %2576 = vmatpush1.xpose.msra.mxu0 0.0
        %2577 = vmatprep.subr.mxu0 0.0
        %2578 = vmatpush1.xpose.msra.mxu0 0.0
        %2579 = vmatprep.subr.mxu0 0.0
        %2580 = vmatpush1.xpose.msra.mxu0 0.0
        %2581 = vmatprep.subr.mxu0 0.0
        %2582 = vmatpush1.xpose.msra.mxu0 0.0
        %2583 = vmatprep.subr.mxu0 0.0
        %2584 = vmatpush1.xpose.msra.mxu0 0.0
        %2585 = vmatprep.subr.mxu0 0.0
        %2586 = vmatpush1.xpose.msra.mxu0 0.0
        %2587 = vmatprep.subr.mxu0 0.0
        %2588 = vmatpush1.xpose.msra.mxu0 0.0
        %2589 = vmatprep.mubr.f32.mxu0 0.0
        %2590 = vmatmul.mubr.f32.gmra.mrb[0].mxu0 %v2518
        %v2591 = vpop.f32.mrb[0].mxu0
        %v2592 = vadd.f32 0.0, %v2591
        %v2593 = vpop.f32.mrb[0].mxu0
        %2594 = vmatprep.mubr.f32.mxu0 0.0
        %2595 = vmatmul.mubr.f32.gmra.mrb[0].mxu0 %v2521
        %v2596 = vpop.f32.mrb[0].mxu0
        %v2597 = vadd.f32 0.0, %v2596
        %v2598 = vpop.f32.mrb[0].mxu0
        %2599 = vdwg.mxu0
        %v2601 = vsel %vm1520, %v888, 0
        %v2604 = vsel %vm1520, %v889, 0
        %v2606 = vsel %vm1520, %v1518, 0
        %2608 = vmatprep.subr.mxu0 0.0
        %2609 = vmatpush1.xpose.msra.mxu0 %v2606
        %2610 = vmatprep.subr.mxu0 0.0
        %2611 = vmatpush1.xpose.msra.mxu0 0.0
        %2612 = vmatprep.subr.mxu0 0.0
        %2613 = vmatpush1.xpose.msra.mxu0 0.0
        %2614 = vmatprep.subr.mxu0 0.0
        %2615 = vmatpush1.xpose.msra.mxu0 0.0
        %2616 = vmatprep.subr.mxu0 0.0
        %2617 = vmatpush1.xpose.msra.mxu0 0.0
        %2618 = vmatprep.subr.mxu0 0.0
        %2619 = vmatpush1.xpose.msra.mxu0 0.0
        %2620 = vmatprep.subr.mxu0 0.0
        %2621 = vmatpush1.xpose.msra.mxu0 0.0
        %2622 = vmatprep.subr.mxu0 0.0
        %2623 = vmatpush1.xpose.msra.mxu0 0.0
        %2624 = vmatprep.subr.mxu0 0.0
        %2625 = vmatpush1.xpose.msra.mxu0 0.0
        %2626 = vmatprep.subr.mxu0 0.0
        %2627 = vmatpush1.xpose.msra.mxu0 0.0
        %2628 = vmatprep.subr.mxu0 0.0
        %2629 = vmatpush1.xpose.msra.mxu0 0.0
        %2630 = vmatprep.subr.mxu0 0.0
        %2631 = vmatpush1.xpose.msra.mxu0 0.0
        %2632 = vmatprep.subr.mxu0 0.0
        %2633 = vmatpush1.xpose.msra.mxu0 0.0
        %2634 = vmatprep.subr.mxu0 0.0
        %2635 = vmatpush1.xpose.msra.mxu0 0.0
        %2636 = vmatprep.subr.mxu0 0.0
        %2637 = vmatpush1.xpose.msra.mxu0 0.0
        %2638 = vmatprep.subr.mxu0 0.0
        %2639 = vmatpush1.xpose.msra.mxu0 0.0
        %2640 = vmatprep.subr.mxu0 0.0
        %2641 = vmatpush1.xpose.msra.mxu0 0.0
        %2642 = vmatprep.subr.mxu0 0.0
        %2643 = vmatpush1.xpose.msra.mxu0 0.0
        %2644 = vmatprep.subr.mxu0 0.0
        %2645 = vmatpush1.xpose.msra.mxu0 0.0
        %2646 = vmatprep.subr.mxu0 0.0
        %2647 = vmatpush1.xpose.msra.mxu0 0.0
        %2648 = vmatprep.subr.mxu0 0.0
        %2649 = vmatpush1.xpose.msra.mxu0 0.0
        %2650 = vmatprep.subr.mxu0 0.0
        %2651 = vmatpush1.xpose.msra.mxu0 0.0
        %2652 = vmatprep.subr.mxu0 0.0
        %2653 = vmatpush1.xpose.msra.mxu0 0.0
        %2654 = vmatprep.subr.mxu0 0.0
        %2655 = vmatpush1.xpose.msra.mxu0 0.0
        %2656 = vmatprep.subr.mxu0 0.0
        %2657 = vmatpush1.xpose.msra.mxu0 0.0
        %2658 = vmatprep.subr.mxu0 0.0
        %2659 = vmatpush1.xpose.msra.mxu0 0.0
        %2660 = vmatprep.subr.mxu0 0.0
        %2661 = vmatpush1.xpose.msra.mxu0 0.0
        %2662 = vmatprep.subr.mxu0 0.0
        %2663 = vmatpush1.xpose.msra.mxu0 0.0
        %2664 = vmatprep.subr.mxu0 0.0
        %2665 = vmatpush1.xpose.msra.mxu0 0.0
        %2666 = vmatprep.subr.mxu0 0.0
        %2667 = vmatpush1.xpose.msra.mxu0 0.0
        %2668 = vmatprep.subr.mxu0 0.0
        %2669 = vmatpush1.xpose.msra.mxu0 0.0
        %2670 = vmatprep.subr.mxu0 0.0
        %2671 = vmatpush1.xpose.msra.mxu0 0.0
        %2672 = vmatprep.mubr.f32.mxu0 0.0
        %2673 = vmatmul.mubr.f32.gmra.mrb[0].mxu0 %v2601
        %v2674 = vpop.f32.mrb[0].mxu0
        %v2675 = vadd.f32 0.0, %v2674
        %v2676 = vpop.f32.mrb[0].mxu0
        %2677 = vmatprep.mubr.f32.mxu0 0.0
        %2678 = vmatmul.mubr.f32.gmra.mrb[0].mxu0 %v2604
        %v2679 = vpop.f32.mrb[0].mxu0
        %v2680 = vadd.f32 0.0, %v2679
        %v2681 = vpop.f32.mrb[0].mxu0
        %2682 = vdwg.mxu0
        %v2684 = vsel %vm1520, %v890, 0
        %v2687 = vsel %vm1520, %v891, 0
        %v2689 = vsel %vm1520, %v1501, 0
        %2691 = vmatprep.subr.mxu0 0.0
        %2692 = vmatpush1.xpose.msra.mxu0 %v2689
        %2693 = vmatprep.subr.mxu0 0.0
        %2694 = vmatpush1.xpose.msra.mxu0 0.0
        %2695 = vmatprep.subr.mxu0 0.0
        %2696 = vmatpush1.xpose.msra.mxu0 0.0
        %2697 = vmatprep.subr.mxu0 0.0
        %2698 = vmatpush1.xpose.msra.mxu0 0.0
        %2699 = vmatprep.subr.mxu0 0.0
        %2700 = vmatpush1.xpose.msra.mxu0 0.0
        %2701 = vmatprep.subr.mxu0 0.0
        %2702 = vmatpush1.xpose.msra.mxu0 0.0
        %2703 = vmatprep.subr.mxu0 0.0
        %2704 = vmatpush1.xpose.msra.mxu0 0.0
        %2705 = vmatprep.subr.mxu0 0.0
        %2706 = vmatpush1.xpose.msra.mxu0 0.0
        %2707 = vmatprep.subr.mxu0 0.0
        %2708 = vmatpush1.xpose.msra.mxu0 0.0
        %2709 = vmatprep.subr.mxu0 0.0
        %2710 = vmatpush1.xpose.msra.mxu0 0.0
        %2711 = vmatprep.subr.mxu0 0.0
        %2712 = vmatpush1.xpose.msra.mxu0 0.0
        %2713 = vmatprep.subr.mxu0 0.0
        %2714 = vmatpush1.xpose.msra.mxu0 0.0
        %2715 = vmatprep.subr.mxu0 0.0
        %2716 = vmatpush1.xpose.msra.mxu0 0.0
        %2717 = vmatprep.subr.mxu0 0.0
        %2718 = vmatpush1.xpose.msra.mxu0 0.0
        %2719 = vmatprep.subr.mxu0 0.0
        %2720 = vmatpush1.xpose.msra.mxu0 0.0
        %2721 = vmatprep.subr.mxu0 0.0
        %2722 = vmatpush1.xpose.msra.mxu0 0.0
        %2723 = vmatprep.subr.mxu0 0.0
        %2724 = vmatpush1.xpose.msra.mxu0 0.0
        %2725 = vmatprep.subr.mxu0 0.0
        %2726 = vmatpush1.xpose.msra.mxu0 0.0
        %2727 = vmatprep.subr.mxu0 0.0
        %2728 = vmatpush1.xpose.msra.mxu0 0.0
        %2729 = vmatprep.subr.mxu0 0.0
        %2730 = vmatpush1.xpose.msra.mxu0 0.0
        %2731 = vmatprep.subr.mxu0 0.0
        %2732 = vmatpush1.xpose.msra.mxu0 0.0
        %2733 = vmatprep.subr.mxu0 0.0
        %2734 = vmatpush1.xpose.msra.mxu0 0.0
        %2735 = vmatprep.subr.mxu0 0.0
        %2736 = vmatpush1.xpose.msra.mxu0 0.0
        %2737 = vmatprep.subr.mxu0 0.0
        %2738 = vmatpush1.xpose.msra.mxu0 0.0
        %2739 = vmatprep.subr.mxu0 0.0
        %2740 = vmatpush1.xpose.msra.mxu0 0.0
        %2741 = vmatprep.subr.mxu0 0.0
        %2742 = vmatpush1.xpose.msra.mxu0 0.0
        %2743 = vmatprep.subr.mxu0 0.0
        %2744 = vmatpush1.xpose.msra.mxu0 0.0
        %2745 = vmatprep.subr.mxu0 0.0
        %2746 = vmatpush1.xpose.msra.mxu0 0.0
        %2747 = vmatprep.subr.mxu0 0.0
        %2748 = vmatpush1.xpose.msra.mxu0 0.0
        %2749 = vmatprep.subr.mxu0 0.0
        %2750 = vmatpush1.xpose.msra.mxu0 0.0
        %2751 = vmatprep.subr.mxu0 0.0
        %2752 = vmatpush1.xpose.msra.mxu0 0.0
        %2753 = vmatprep.subr.mxu0 0.0
        %2754 = vmatpush1.xpose.msra.mxu0 0.0
        %2755 = vmatprep.mubr.f32.mxu0 0.0
        %2756 = vmatmul.mubr.f32.gmra.mrb[0].mxu0 %v2684
        %v2757 = vpop.f32.mrb[0].mxu0
        %v2758 = vadd.f32 0.0, %v2757
        %v2759 = vpop.f32.mrb[0].mxu0
        %2760 = vmatprep.mubr.f32.mxu0 0.0
        %2761 = vmatmul.mubr.f32.gmra.mrb[0].mxu0 %v2687
        %v2762 = vpop.f32.mrb[0].mxu0
        %v2763 = vadd.f32 0.0, %v2762
        %v2764 = vpop.f32.mrb[0].mxu0
        %2765 = vdwg.mxu0
        %v2767 = vsel %vm1520, %v892, 0
        %v2770 = vsel %vm1520, %v893, 0
        %v2772 = vsel %vm1520, %v1519, 0
        %2774 = vmatprep.subr.mxu0 0.0
        %2775 = vmatpush1.xpose.msra.mxu0 %v2772
        %2776 = vmatprep.subr.mxu0 0.0
        %2777 = vmatpush1.xpose.msra.mxu0 0.0
        %2778 = vmatprep.subr.mxu0 0.0
        %2779 = vmatpush1.xpose.msra.mxu0 0.0
        %2780 = vmatprep.subr.mxu0 0.0
        %2781 = vmatpush1.xpose.msra.mxu0 0.0
        %2782 = vmatprep.subr.mxu0 0.0
        %2783 = vmatpush1.xpose.msra.mxu0 0.0
        %2784 = vmatprep.subr.mxu0 0.0
        %2785 = vmatpush1.xpose.msra.mxu0 0.0
        %2786 = vmatprep.subr.mxu0 0.0
        %2787 = vmatpush1.xpose.msra.mxu0 0.0
        %2788 = vmatprep.subr.mxu0 0.0
        %2789 = vmatpush1.xpose.msra.mxu0 0.0
        %2790 = vmatprep.subr.mxu0 0.0
        %2791 = vmatpush1.xpose.msra.mxu0 0.0
        %2792 = vmatprep.subr.mxu0 0.0
        %2793 = vmatpush1.xpose.msra.mxu0 0.0
        %2794 = vmatprep.subr.mxu0 0.0
        %2795 = vmatpush1.xpose.msra.mxu0 0.0
        %2796 = vmatprep.subr.mxu0 0.0
        %2797 = vmatpush1.xpose.msra.mxu0 0.0
        %2798 = vmatprep.subr.mxu0 0.0
        %2799 = vmatpush1.xpose.msra.mxu0 0.0
        %2800 = vmatprep.subr.mxu0 0.0
        %2801 = vmatpush1.xpose.msra.mxu0 0.0
        %2802 = vmatprep.subr.mxu0 0.0
        %2803 = vmatpush1.xpose.msra.mxu0 0.0
        %2804 = vmatprep.subr.mxu0 0.0
        %2805 = vmatpush1.xpose.msra.mxu0 0.0
        %2806 = vmatprep.subr.mxu0 0.0
        %2807 = vmatpush1.xpose.msra.mxu0 0.0
        %2808 = vmatprep.subr.mxu0 0.0
        %2809 = vmatpush1.xpose.msra.mxu0 0.0
        %2810 = vmatprep.subr.mxu0 0.0
        %2811 = vmatpush1.xpose.msra.mxu0 0.0
        %2812 = vmatprep.subr.mxu0 0.0
        %2813 = vmatpush1.xpose.msra.mxu0 0.0
        %2814 = vmatprep.subr.mxu0 0.0
        %2815 = vmatpush1.xpose.msra.mxu0 0.0
        %2816 = vmatprep.subr.mxu0 0.0
        %2817 = vmatpush1.xpose.msra.mxu0 0.0
        %2818 = vmatprep.subr.mxu0 0.0
        %2819 = vmatpush1.xpose.msra.mxu0 0.0
        %2820 = vmatprep.subr.mxu0 0.0
        %2821 = vmatpush1.xpose.msra.mxu0 0.0
        %2822 = vmatprep.subr.mxu0 0.0
        %2823 = vmatpush1.xpose.msra.mxu0 0.0
        %2824 = vmatprep.subr.mxu0 0.0
        %2825 = vmatpush1.xpose.msra.mxu0 0.0
        %2826 = vmatprep.subr.mxu0 0.0
        %2827 = vmatpush1.xpose.msra.mxu0 0.0
        %2828 = vmatprep.subr.mxu0 0.0
        %2829 = vmatpush1.xpose.msra.mxu0 0.0
        %2830 = vmatprep.subr.mxu0 0.0
        %2831 = vmatpush1.xpose.msra.mxu0 0.0
        %2832 = vmatprep.subr.mxu0 0.0
        %2833 = vmatpush1.xpose.msra.mxu0 0.0
        %2834 = vmatprep.subr.mxu0 0.0
        %2835 = vmatpush1.xpose.msra.mxu0 0.0
        %2836 = vmatprep.subr.mxu0 0.0
        %2837 = vmatpush1.xpose.msra.mxu0 0.0
        %2838 = vmatprep.mubr.f32.mxu0 0.0
        %2839 = vmatmul.mubr.f32.gmra.mrb[0].mxu0 %v2767
        %v2840 = vpop.f32.mrb[0].mxu0
        %v2841 = vadd.f32 0.0, %v2840
        %v2842 = vpop.f32.mrb[0].mxu0
        %2843 = vmatprep.mubr.f32.mxu0 0.0
        %2844 = vmatmul.mubr.f32.gmra.mrb[0].mxu0 %v2770
        %v2845 = vpop.f32.mrb[0].mxu0
        %v2846 = vadd.f32 0.0, %v2845
        %v2847 = vpop.f32.mrb[0].mxu0
        %2848 = vdwg.mxu0
        %2849 = vxpose.xlu0.b32.start [1/16] %v1596, 128
        %2850 = vxpose.xlu0.b32.cont [2/16] %v1601, 128
        %2851 = vxpose.xlu0.b32.cont [3/16] 0.0, 128
        %2852 = vxpose.xlu0.b32.cont [4/16] 0.0, 128
        %2853 = vxpose.xlu0.b32.cont [5/16] 0.0, 128
        %2854 = vxpose.xlu0.b32.cont [6/16] 0.0, 128
        %2855 = vxpose.xlu0.b32.cont [7/16] 0.0, 128
        %2856 = vxpose.xlu0.b32.cont [8/16] 0.0, 128
        %2857 = vxpose.xlu0.b32.cont [9/16] 0.0, 128
        %2858 = vxpose.xlu0.b32.cont [10/16] 0.0, 128
        %2859 = vxpose.xlu0.b32.cont [11/16] 0.0, 128
        %2860 = vxpose.xlu0.b32.cont [12/16] 0.0, 128
        %2861 = vxpose.xlu0.b32.cont [13/16] 0.0, 128
        %2862 = vxpose.xlu0.b32.cont [14/16] 0.0, 128
        %2863 = vxpose.xlu0.b32.cont [15/16] 0.0, 128
        %2864 = vxpose.xlu0.b32.end [16/16] 0.0, 128
        %v2865 = vpop.trf.xlu0
        %v2866 = vpop.trf.xlu0
        %v2867 = vpop.trf.xlu0
        %v2868 = vpop.trf.xlu0
        %v2869 = vpop.trf.xlu0
        %v2870 = vpop.trf.xlu0
        %v2871 = vpop.trf.xlu0
        %v2872 = vpop.trf.xlu0
        %v2873 = vpop.trf.xlu0
        %v2874 = vpop.trf.xlu0
        %v2875 = vpop.trf.xlu0
        %v2876 = vpop.trf.xlu0
        %v2877 = vpop.trf.xlu0
        %v2878 = vpop.trf.xlu0
        %v2879 = vpop.trf.xlu0
        %v2880 = vpop.trf.xlu0
        %2881 = vxpose.xlu0.b32.start [1/16] %v1679, 128
        %2882 = vxpose.xlu0.b32.cont [2/16] %v1684, 128
        %2883 = vxpose.xlu0.b32.cont [3/16] 0.0, 128
        %2884 = vxpose.xlu0.b32.cont [4/16] 0.0, 128
        %2885 = vxpose.xlu0.b32.cont [5/16] 0.0, 128
        %2886 = vxpose.xlu0.b32.cont [6/16] 0.0, 128
        %2887 = vxpose.xlu0.b32.cont [7/16] 0.0, 128
        %2888 = vxpose.xlu0.b32.cont [8/16] 0.0, 128
        %2889 = vxpose.xlu0.b32.cont [9/16] 0.0, 128
        %2890 = vxpose.xlu0.b32.cont [10/16] 0.0, 128
        %2891 = vxpose.xlu0.b32.cont [11/16] 0.0, 128
        %2892 = vxpose.xlu0.b32.cont [12/16] 0.0, 128
        %2893 = vxpose.xlu0.b32.cont [13/16] 0.0, 128
        %2894 = vxpose.xlu0.b32.cont [14/16] 0.0, 128
        %2895 = vxpose.xlu0.b32.cont [15/16] 0.0, 128
        %2896 = vxpose.xlu0.b32.end [16/16] 0.0, 128
        %v2897 = vpop.trf.xlu0
        %v2898 = vpop.trf.xlu0
        %v2899 = vpop.trf.xlu0
        %v2900 = vpop.trf.xlu0
        %v2901 = vpop.trf.xlu0
        %v2902 = vpop.trf.xlu0
        %v2903 = vpop.trf.xlu0
        %v2904 = vpop.trf.xlu0
        %v2905 = vpop.trf.xlu0
        %v2906 = vpop.trf.xlu0
        %v2907 = vpop.trf.xlu0
        %v2908 = vpop.trf.xlu0
        %v2909 = vpop.trf.xlu0
        %v2910 = vpop.trf.xlu0
        %v2911 = vpop.trf.xlu0
        %v2912 = vpop.trf.xlu0
        %2913 = vxpose.xlu0.b32.start [1/16] %v1762, 128
        %2914 = vxpose.xlu0.b32.cont [2/16] %v1767, 128
        %2915 = vxpose.xlu0.b32.cont [3/16] 0.0, 128
        %2916 = vxpose.xlu0.b32.cont [4/16] 0.0, 128
        %2917 = vxpose.xlu0.b32.cont [5/16] 0.0, 128
        %2918 = vxpose.xlu0.b32.cont [6/16] 0.0, 128
        %2919 = vxpose.xlu0.b32.cont [7/16] 0.0, 128
        %2920 = vxpose.xlu0.b32.cont [8/16] 0.0, 128
        %2921 = vxpose.xlu0.b32.cont [9/16] 0.0, 128
        %2922 = vxpose.xlu0.b32.cont [10/16] 0.0, 128
        %2923 = vxpose.xlu0.b32.cont [11/16] 0.0, 128
        %2924 = vxpose.xlu0.b32.cont [12/16] 0.0, 128
        %2925 = vxpose.xlu0.b32.cont [13/16] 0.0, 128
        %2926 = vxpose.xlu0.b32.cont [14/16] 0.0, 128
        %2927 = vxpose.xlu0.b32.cont [15/16] 0.0, 128
        %2928 = vxpose.xlu0.b32.end [16/16] 0.0, 128
        %v2929 = vpop.trf.xlu0
        %v2930 = vpop.trf.xlu0
        %v2931 = vpop.trf.xlu0
        %v2932 = vpop.trf.xlu0
        %v2933 = vpop.trf.xlu0
        %v2934 = vpop.trf.xlu0
        %v2935 = vpop.trf.xlu0
        %v2936 = vpop.trf.xlu0
        %v2937 = vpop.trf.xlu0
        %v2938 = vpop.trf.xlu0
        %v2939 = vpop.trf.xlu0
        %v2940 = vpop.trf.xlu0
        %v2941 = vpop.trf.xlu0
        %v2942 = vpop.trf.xlu0
        %v2943 = vpop.trf.xlu0
        %v2944 = vpop.trf.xlu0
        %2945 = vxpose.xlu0.b32.start [1/16] %v1845, 128
        %2946 = vxpose.xlu0.b32.cont [2/16] %v1850, 128
        %2947 = vxpose.xlu0.b32.cont [3/16] 0.0, 128
        %2948 = vxpose.xlu0.b32.cont [4/16] 0.0, 128
        %2949 = vxpose.xlu0.b32.cont [5/16] 0.0, 128
        %2950 = vxpose.xlu0.b32.cont [6/16] 0.0, 128
        %2951 = vxpose.xlu0.b32.cont [7/16] 0.0, 128
        %2952 = vxpose.xlu0.b32.cont [8/16] 0.0, 128
        %2953 = vxpose.xlu0.b32.cont [9/16] 0.0, 128
        %2954 = vxpose.xlu0.b32.cont [10/16] 0.0, 128
        %2955 = vxpose.xlu0.b32.cont [11/16] 0.0, 128
        %2956 = vxpose.xlu0.b32.cont [12/16] 0.0, 128
        %2957 = vxpose.xlu0.b32.cont [13/16] 0.0, 128
        %2958 = vxpose.xlu0.b32.cont [14/16] 0.0, 128
        %2959 = vxpose.xlu0.b32.cont [15/16] 0.0, 128
        %2960 = vxpose.xlu0.b32.end [16/16] 0.0, 128
        %v2961 = vpop.trf.xlu0
        %v2962 = vpop.trf.xlu0
        %v2963 = vpop.trf.xlu0
        %v2964 = vpop.trf.xlu0
        %v2965 = vpop.trf.xlu0
        %v2966 = vpop.trf.xlu0
        %v2967 = vpop.trf.xlu0
        %v2968 = vpop.trf.xlu0
        %v2969 = vpop.trf.xlu0
        %v2970 = vpop.trf.xlu0
        %v2971 = vpop.trf.xlu0
        %v2972 = vpop.trf.xlu0
        %v2973 = vpop.trf.xlu0
        %v2974 = vpop.trf.xlu0
        %v2975 = vpop.trf.xlu0
        %v2976 = vpop.trf.xlu0
        %2977 = vxpose.xlu0.b32.start [1/16] %v1928, 128
        %2978 = vxpose.xlu0.b32.cont [2/16] %v1933, 128
        %2979 = vxpose.xlu0.b32.cont [3/16] 0.0, 128
        %2980 = vxpose.xlu0.b32.cont [4/16] 0.0, 128
        %2981 = vxpose.xlu0.b32.cont [5/16] 0.0, 128
        %2982 = vxpose.xlu0.b32.cont [6/16] 0.0, 128
        %2983 = vxpose.xlu0.b32.cont [7/16] 0.0, 128
        %2984 = vxpose.xlu0.b32.cont [8/16] 0.0, 128
        %2985 = vxpose.xlu0.b32.cont [9/16] 0.0, 128
        %2986 = vxpose.xlu0.b32.cont [10/16] 0.0, 128
        %2987 = vxpose.xlu0.b32.cont [11/16] 0.0, 128
        %2988 = vxpose.xlu0.b32.cont [12/16] 0.0, 128
        %2989 = vxpose.xlu0.b32.cont [13/16] 0.0, 128
        %2990 = vxpose.xlu0.b32.cont [14/16] 0.0, 128
        %2991 = vxpose.xlu0.b32.cont [15/16] 0.0, 128
        %2992 = vxpose.xlu0.b32.end [16/16] 0.0, 128
        %v2993 = vpop.trf.xlu0
        %v2994 = vpop.trf.xlu0
        %v2995 = vpop.trf.xlu0
        %v2996 = vpop.trf.xlu0
        %v2997 = vpop.trf.xlu0
        %v2998 = vpop.trf.xlu0
        %v2999 = vpop.trf.xlu0
        %v3000 = vpop.trf.xlu0
        %v3001 = vpop.trf.xlu0
        %v3002 = vpop.trf.xlu0
        %v3003 = vpop.trf.xlu0
        %v3004 = vpop.trf.xlu0
        %v3005 = vpop.trf.xlu0
        %v3006 = vpop.trf.xlu0
        %v3007 = vpop.trf.xlu0
        %v3008 = vpop.trf.xlu0
        %3009 = vxpose.xlu0.b32.start [1/16] %v2011, 128
        %3010 = vxpose.xlu0.b32.cont [2/16] %v2016, 128
        %3011 = vxpose.xlu0.b32.cont [3/16] 0.0, 128
        %3012 = vxpose.xlu0.b32.cont [4/16] 0.0, 128
        %3013 = vxpose.xlu0.b32.cont [5/16] 0.0, 128
        %3014 = vxpose.xlu0.b32.cont [6/16] 0.0, 128
        %3015 = vxpose.xlu0.b32.cont [7/16] 0.0, 128
        %3016 = vxpose.xlu0.b32.cont [8/16] 0.0, 128
        %3017 = vxpose.xlu0.b32.cont [9/16] 0.0, 128
        %3018 = vxpose.xlu0.b32.cont [10/16] 0.0, 128
        %3019 = vxpose.xlu0.b32.cont [11/16] 0.0, 128
        %3020 = vxpose.xlu0.b32.cont [12/16] 0.0, 128
        %3021 = vxpose.xlu0.b32.cont [13/16] 0.0, 128
        %3022 = vxpose.xlu0.b32.cont [14/16] 0.0, 128
        %3023 = vxpose.xlu0.b32.cont [15/16] 0.0, 128
        %3024 = vxpose.xlu0.b32.end [16/16] 0.0, 128
        %v3025 = vpop.trf.xlu0
        %v3026 = vpop.trf.xlu0
        %v3027 = vpop.trf.xlu0
        %v3028 = vpop.trf.xlu0
        %v3029 = vpop.trf.xlu0
        %v3030 = vpop.trf.xlu0
        %v3031 = vpop.trf.xlu0
        %v3032 = vpop.trf.xlu0
        %v3033 = vpop.trf.xlu0
        %v3034 = vpop.trf.xlu0
        %v3035 = vpop.trf.xlu0
        %v3036 = vpop.trf.xlu0
        %v3037 = vpop.trf.xlu0
        %v3038 = vpop.trf.xlu0
        %v3039 = vpop.trf.xlu0
        %v3040 = vpop.trf.xlu0
        %3041 = vxpose.xlu0.b32.start [1/16] %v2094, 128
        %3042 = vxpose.xlu0.b32.cont [2/16] %v2099, 128
        %3043 = vxpose.xlu0.b32.cont [3/16] 0.0, 128
        %3044 = vxpose.xlu0.b32.cont [4/16] 0.0, 128
        %3045 = vxpose.xlu0.b32.cont [5/16] 0.0, 128
        %3046 = vxpose.xlu0.b32.cont [6/16] 0.0, 128
        %3047 = vxpose.xlu0.b32.cont [7/16] 0.0, 128
        %3048 = vxpose.xlu0.b32.cont [8/16] 0.0, 128
        %3049 = vxpose.xlu0.b32.cont [9/16] 0.0, 128
        %3050 = vxpose.xlu0.b32.cont [10/16] 0.0, 128
        %3051 = vxpose.xlu0.b32.cont [11/16] 0.0, 128
        %3052 = vxpose.xlu0.b32.cont [12/16] 0.0, 128
        %3053 = vxpose.xlu0.b32.cont [13/16] 0.0, 128
        %3054 = vxpose.xlu0.b32.cont [14/16] 0.0, 128
        %3055 = vxpose.xlu0.b32.cont [15/16] 0.0, 128
        %3056 = vxpose.xlu0.b32.end [16/16] 0.0, 128
        %v3057 = vpop.trf.xlu0
        %v3058 = vpop.trf.xlu0
        %v3059 = vpop.trf.xlu0
        %v3060 = vpop.trf.xlu0
        %v3061 = vpop.trf.xlu0
        %v3062 = vpop.trf.xlu0
        %v3063 = vpop.trf.xlu0
        %v3064 = vpop.trf.xlu0
        %v3065 = vpop.trf.xlu0
        %v3066 = vpop.trf.xlu0
        %v3067 = vpop.trf.xlu0
        %v3068 = vpop.trf.xlu0
        %v3069 = vpop.trf.xlu0
        %v3070 = vpop.trf.xlu0
        %v3071 = vpop.trf.xlu0
        %v3072 = vpop.trf.xlu0
        %3073 = vxpose.xlu0.b32.start [1/16] %v2177, 128
        %3074 = vxpose.xlu0.b32.cont [2/16] %v2182, 128
        %3075 = vxpose.xlu0.b32.cont [3/16] 0.0, 128
        %3076 = vxpose.xlu0.b32.cont [4/16] 0.0, 128
        %3077 = vxpose.xlu0.b32.cont [5/16] 0.0, 128
        %3078 = vxpose.xlu0.b32.cont [6/16] 0.0, 128
        %3079 = vxpose.xlu0.b32.cont [7/16] 0.0, 128
        %3080 = vxpose.xlu0.b32.cont [8/16] 0.0, 128
        %3081 = vxpose.xlu0.b32.cont [9/16] 0.0, 128
        %3082 = vxpose.xlu0.b32.cont [10/16] 0.0, 128
        %3083 = vxpose.xlu0.b32.cont [11/16] 0.0, 128
        %3084 = vxpose.xlu0.b32.cont [12/16] 0.0, 128
        %3085 = vxpose.xlu0.b32.cont [13/16] 0.0, 128
        %3086 = vxpose.xlu0.b32.cont [14/16] 0.0, 128
        %3087 = vxpose.xlu0.b32.cont [15/16] 0.0, 128
        %3088 = vxpose.xlu0.b32.end [16/16] 0.0, 128
        %v3089 = vpop.trf.xlu0
        %v3090 = vpop.trf.xlu0
        %v3091 = vpop.trf.xlu0
        %v3092 = vpop.trf.xlu0
        %v3093 = vpop.trf.xlu0
        %v3094 = vpop.trf.xlu0
        %v3095 = vpop.trf.xlu0
        %v3096 = vpop.trf.xlu0
        %v3097 = vpop.trf.xlu0
        %v3098 = vpop.trf.xlu0
        %v3099 = vpop.trf.xlu0
        %v3100 = vpop.trf.xlu0
        %v3101 = vpop.trf.xlu0
        %v3102 = vpop.trf.xlu0
        %v3103 = vpop.trf.xlu0
        %v3104 = vpop.trf.xlu0
        %3105 = vxpose.xlu0.b32.start [1/16] %v2260, 128
        %3106 = vxpose.xlu0.b32.cont [2/16] %v2265, 128
        %3107 = vxpose.xlu0.b32.cont [3/16] 0.0, 128
        %3108 = vxpose.xlu0.b32.cont [4/16] 0.0, 128
        %3109 = vxpose.xlu0.b32.cont [5/16] 0.0, 128
        %3110 = vxpose.xlu0.b32.cont [6/16] 0.0, 128
        %3111 = vxpose.xlu0.b32.cont [7/16] 0.0, 128
        %3112 = vxpose.xlu0.b32.cont [8/16] 0.0, 128
        %3113 = vxpose.xlu0.b32.cont [9/16] 0.0, 128
        %3114 = vxpose.xlu0.b32.cont [10/16] 0.0, 128
        %3115 = vxpose.xlu0.b32.cont [11/16] 0.0, 128
        %3116 = vxpose.xlu0.b32.cont [12/16] 0.0, 128
        %3117 = vxpose.xlu0.b32.cont [13/16] 0.0, 128
        %3118 = vxpose.xlu0.b32.cont [14/16] 0.0, 128
        %3119 = vxpose.xlu0.b32.cont [15/16] 0.0, 128
        %3120 = vxpose.xlu0.b32.end [16/16] 0.0, 128
        %v3121 = vpop.trf.xlu0
        %v3122 = vpop.trf.xlu0
        %v3123 = vpop.trf.xlu0
        %v3124 = vpop.trf.xlu0
        %v3125 = vpop.trf.xlu0
        %v3126 = vpop.trf.xlu0
        %v3127 = vpop.trf.xlu0
        %v3128 = vpop.trf.xlu0
        %v3129 = vpop.trf.xlu0
        %v3130 = vpop.trf.xlu0
        %v3131 = vpop.trf.xlu0
        %v3132 = vpop.trf.xlu0
        %v3133 = vpop.trf.xlu0
        %v3134 = vpop.trf.xlu0
        %v3135 = vpop.trf.xlu0
        %v3136 = vpop.trf.xlu0
        %3137 = vxpose.xlu0.b32.start [1/16] %v2343, 128
        %3138 = vxpose.xlu0.b32.cont [2/16] %v2348, 128
        %3139 = vxpose.xlu0.b32.cont [3/16] 0.0, 128
        %3140 = vxpose.xlu0.b32.cont [4/16] 0.0, 128
        %3141 = vxpose.xlu0.b32.cont [5/16] 0.0, 128
        %3142 = vxpose.xlu0.b32.cont [6/16] 0.0, 128
        %3143 = vxpose.xlu0.b32.cont [7/16] 0.0, 128
        %3144 = vxpose.xlu0.b32.cont [8/16] 0.0, 128
        %3145 = vxpose.xlu0.b32.cont [9/16] 0.0, 128
        %3146 = vxpose.xlu0.b32.cont [10/16] 0.0, 128
        %3147 = vxpose.xlu0.b32.cont [11/16] 0.0, 128
        %3148 = vxpose.xlu0.b32.cont [12/16] 0.0, 128
        %3149 = vxpose.xlu0.b32.cont [13/16] 0.0, 128
        %3150 = vxpose.xlu0.b32.cont [14/16] 0.0, 128
        %3151 = vxpose.xlu0.b32.cont [15/16] 0.0, 128
        %3152 = vxpose.xlu0.b32.end [16/16] 0.0, 128
        %v3153 = vpop.trf.xlu0
        %v3154 = vpop.trf.xlu0
        %v3155 = vpop.trf.xlu0
        %v3156 = vpop.trf.xlu0
        %v3157 = vpop.trf.xlu0
        %v3158 = vpop.trf.xlu0
        %v3159 = vpop.trf.xlu0
        %v3160 = vpop.trf.xlu0
        %v3161 = vpop.trf.xlu0
        %v3162 = vpop.trf.xlu0
        %v3163 = vpop.trf.xlu0
        %v3164 = vpop.trf.xlu0
        %v3165 = vpop.trf.xlu0
        %v3166 = vpop.trf.xlu0
        %v3167 = vpop.trf.xlu0
        %v3168 = vpop.trf.xlu0
        %3169 = vxpose.xlu0.b32.start [1/16] %v2426, 128
        %3170 = vxpose.xlu0.b32.cont [2/16] %v2431, 128
        %3171 = vxpose.xlu0.b32.cont [3/16] 0.0, 128
        %3172 = vxpose.xlu0.b32.cont [4/16] 0.0, 128
        %3173 = vxpose.xlu0.b32.cont [5/16] 0.0, 128
        %3174 = vxpose.xlu0.b32.cont [6/16] 0.0, 128
        %3175 = vxpose.xlu0.b32.cont [7/16] 0.0, 128
        %3176 = vxpose.xlu0.b32.cont [8/16] 0.0, 128
        %3177 = vxpose.xlu0.b32.cont [9/16] 0.0, 128
        %3178 = vxpose.xlu0.b32.cont [10/16] 0.0, 128
        %3179 = vxpose.xlu0.b32.cont [11/16] 0.0, 128
        %3180 = vxpose.xlu0.b32.cont [12/16] 0.0, 128
        %3181 = vxpose.xlu0.b32.cont [13/16] 0.0, 128
        %3182 = vxpose.xlu0.b32.cont [14/16] 0.0, 128
        %3183 = vxpose.xlu0.b32.cont [15/16] 0.0, 128
        %3184 = vxpose.xlu0.b32.end [16/16] 0.0, 128
        %v3185 = vpop.trf.xlu0
        %v3186 = vpop.trf.xlu0
        %v3187 = vpop.trf.xlu0
        %v3188 = vpop.trf.xlu0
        %v3189 = vpop.trf.xlu0
        %v3190 = vpop.trf.xlu0
        %v3191 = vpop.trf.xlu0
        %v3192 = vpop.trf.xlu0
        %v3193 = vpop.trf.xlu0
        %v3194 = vpop.trf.xlu0
        %v3195 = vpop.trf.xlu0
        %v3196 = vpop.trf.xlu0
        %v3197 = vpop.trf.xlu0
        %v3198 = vpop.trf.xlu0
        %v3199 = vpop.trf.xlu0
        %v3200 = vpop.trf.xlu0
        %3201 = vxpose.xlu0.b32.start [1/16] %v2509, 128
        %3202 = vxpose.xlu0.b32.cont [2/16] %v2514, 128
        %3203 = vxpose.xlu0.b32.cont [3/16] 0.0, 128
        %3204 = vxpose.xlu0.b32.cont [4/16] 0.0, 128
        %3205 = vxpose.xlu0.b32.cont [5/16] 0.0, 128
        %3206 = vxpose.xlu0.b32.cont [6/16] 0.0, 128
        %3207 = vxpose.xlu0.b32.cont [7/16] 0.0, 128
        %3208 = vxpose.xlu0.b32.cont [8/16] 0.0, 128
        %3209 = vxpose.xlu0.b32.cont [9/16] 0.0, 128
        %3210 = vxpose.xlu0.b32.cont [10/16] 0.0, 128
        %3211 = vxpose.xlu0.b32.cont [11/16] 0.0, 128
        %3212 = vxpose.xlu0.b32.cont [12/16] 0.0, 128
        %3213 = vxpose.xlu0.b32.cont [13/16] 0.0, 128
        %3214 = vxpose.xlu0.b32.cont [14/16] 0.0, 128
        %3215 = vxpose.xlu0.b32.cont [15/16] 0.0, 128
        %3216 = vxpose.xlu0.b32.end [16/16] 0.0, 128
        %v3217 = vpop.trf.xlu0
        %v3218 = vpop.trf.xlu0
        %v3219 = vpop.trf.xlu0
        %v3220 = vpop.trf.xlu0
        %v3221 = vpop.trf.xlu0
        %v3222 = vpop.trf.xlu0
        %v3223 = vpop.trf.xlu0
        %v3224 = vpop.trf.xlu0
        %v3225 = vpop.trf.xlu0
        %v3226 = vpop.trf.xlu0
        %v3227 = vpop.trf.xlu0
        %v3228 = vpop.trf.xlu0
        %v3229 = vpop.trf.xlu0
        %v3230 = vpop.trf.xlu0
        %v3231 = vpop.trf.xlu0
        %v3232 = vpop.trf.xlu0
        %3233 = vxpose.xlu0.b32.start [1/16] %v2592, 128
        %3234 = vxpose.xlu0.b32.cont [2/16] %v2597, 128
        %3235 = vxpose.xlu0.b32.cont [3/16] 0.0, 128
        %3236 = vxpose.xlu0.b32.cont [4/16] 0.0, 128
        %3237 = vxpose.xlu0.b32.cont [5/16] 0.0, 128
        %3238 = vxpose.xlu0.b32.cont [6/16] 0.0, 128
        %3239 = vxpose.xlu0.b32.cont [7/16] 0.0, 128
        %3240 = vxpose.xlu0.b32.cont [8/16] 0.0, 128
        %3241 = vxpose.xlu0.b32.cont [9/16] 0.0, 128
        %3242 = vxpose.xlu0.b32.cont [10/16] 0.0, 128
        %3243 = vxpose.xlu0.b32.cont [11/16] 0.0, 128
        %3244 = vxpose.xlu0.b32.cont [12/16] 0.0, 128
        %3245 = vxpose.xlu0.b32.cont [13/16] 0.0, 128
        %3246 = vxpose.xlu0.b32.cont [14/16] 0.0, 128
        %3247 = vxpose.xlu0.b32.cont [15/16] 0.0, 128
        %3248 = vxpose.xlu0.b32.end [16/16] 0.0, 128
        %v3249 = vpop.trf.xlu0
        %v3250 = vpop.trf.xlu0
        %v3251 = vpop.trf.xlu0
        %v3252 = vpop.trf.xlu0
        %v3253 = vpop.trf.xlu0
        %v3254 = vpop.trf.xlu0
        %v3255 = vpop.trf.xlu0
        %v3256 = vpop.trf.xlu0
        %v3257 = vpop.trf.xlu0
        %v3258 = vpop.trf.xlu0
        %v3259 = vpop.trf.xlu0
        %v3260 = vpop.trf.xlu0
        %v3261 = vpop.trf.xlu0
        %v3262 = vpop.trf.xlu0
        %v3263 = vpop.trf.xlu0
        %v3264 = vpop.trf.xlu0
        %3265 = vxpose.xlu0.b32.start [1/16] %v2675, 128
        %3266 = vxpose.xlu0.b32.cont [2/16] %v2680, 128
        %3267 = vxpose.xlu0.b32.cont [3/16] 0.0, 128
        %3268 = vxpose.xlu0.b32.cont [4/16] 0.0, 128
        %3269 = vxpose.xlu0.b32.cont [5/16] 0.0, 128
        %3270 = vxpose.xlu0.b32.cont [6/16] 0.0, 128
        %3271 = vxpose.xlu0.b32.cont [7/16] 0.0, 128
        %3272 = vxpose.xlu0.b32.cont [8/16] 0.0, 128
        %3273 = vxpose.xlu0.b32.cont [9/16] 0.0, 128
        %3274 = vxpose.xlu0.b32.cont [10/16] 0.0, 128
        %3275 = vxpose.xlu0.b32.cont [11/16] 0.0, 128
        %3276 = vxpose.xlu0.b32.cont [12/16] 0.0, 128
        %3277 = vxpose.xlu0.b32.cont [13/16] 0.0, 128
        %3278 = vxpose.xlu0.b32.cont [14/16] 0.0, 128
        %3279 = vxpose.xlu0.b32.cont [15/16] 0.0, 128
        %3280 = vxpose.xlu0.b32.end [16/16] 0.0, 128
        %v3281 = vpop.trf.xlu0
        %v3282 = vpop.trf.xlu0
        %v3283 = vpop.trf.xlu0
        %v3284 = vpop.trf.xlu0
        %v3285 = vpop.trf.xlu0
        %v3286 = vpop.trf.xlu0
        %v3287 = vpop.trf.xlu0
        %v3288 = vpop.trf.xlu0
        %v3289 = vpop.trf.xlu0
        %v3290 = vpop.trf.xlu0
        %v3291 = vpop.trf.xlu0
        %v3292 = vpop.trf.xlu0
        %v3293 = vpop.trf.xlu0
        %v3294 = vpop.trf.xlu0
        %v3295 = vpop.trf.xlu0
        %v3296 = vpop.trf.xlu0
        %3297 = vxpose.xlu0.b32.start [1/16] %v2758, 128
        %3298 = vxpose.xlu0.b32.cont [2/16] %v2763, 128
        %3299 = vxpose.xlu0.b32.cont [3/16] 0.0, 128
        %3300 = vxpose.xlu0.b32.cont [4/16] 0.0, 128
        %3301 = vxpose.xlu0.b32.cont [5/16] 0.0, 128
        %3302 = vxpose.xlu0.b32.cont [6/16] 0.0, 128
        %3303 = vxpose.xlu0.b32.cont [7/16] 0.0, 128
        %3304 = vxpose.xlu0.b32.cont [8/16] 0.0, 128
        %3305 = vxpose.xlu0.b32.cont [9/16] 0.0, 128
        %3306 = vxpose.xlu0.b32.cont [10/16] 0.0, 128
        %3307 = vxpose.xlu0.b32.cont [11/16] 0.0, 128
        %3308 = vxpose.xlu0.b32.cont [12/16] 0.0, 128
        %3309 = vxpose.xlu0.b32.cont [13/16] 0.0, 128
        %3310 = vxpose.xlu0.b32.cont [14/16] 0.0, 128
        %3311 = vxpose.xlu0.b32.cont [15/16] 0.0, 128
        %3312 = vxpose.xlu0.b32.end [16/16] 0.0, 128
        %v3313 = vpop.trf.xlu0
        %v3314 = vpop.trf.xlu0
        %v3315 = vpop.trf.xlu0
        %v3316 = vpop.trf.xlu0
        %v3317 = vpop.trf.xlu0
        %v3318 = vpop.trf.xlu0
        %v3319 = vpop.trf.xlu0
        %v3320 = vpop.trf.xlu0
        %v3321 = vpop.trf.xlu0
        %v3322 = vpop.trf.xlu0
        %v3323 = vpop.trf.xlu0
        %v3324 = vpop.trf.xlu0
        %v3325 = vpop.trf.xlu0
        %v3326 = vpop.trf.xlu0
        %v3327 = vpop.trf.xlu0
        %v3328 = vpop.trf.xlu0
        %3329 = vxpose.xlu0.b32.start [1/16] %v2841, 128
        %3330 = vxpose.xlu0.b32.cont [2/16] %v2846, 128
        %3331 = vxpose.xlu0.b32.cont [3/16] 0.0, 128
        %3332 = vxpose.xlu0.b32.cont [4/16] 0.0, 128
        %3333 = vxpose.xlu0.b32.cont [5/16] 0.0, 128
        %3334 = vxpose.xlu0.b32.cont [6/16] 0.0, 128
        %3335 = vxpose.xlu0.b32.cont [7/16] 0.0, 128
        %3336 = vxpose.xlu0.b32.cont [8/16] 0.0, 128
        %3337 = vxpose.xlu0.b32.cont [9/16] 0.0, 128
        %3338 = vxpose.xlu0.b32.cont [10/16] 0.0, 128
        %3339 = vxpose.xlu0.b32.cont [11/16] 0.0, 128
        %3340 = vxpose.xlu0.b32.cont [12/16] 0.0, 128
        %3341 = vxpose.xlu0.b32.cont [13/16] 0.0, 128
        %3342 = vxpose.xlu0.b32.cont [14/16] 0.0, 128
        %3343 = vxpose.xlu0.b32.cont [15/16] 0.0, 128
        %3344 = vxpose.xlu0.b32.end [16/16] 0.0, 128
        %v3345 = vpop.trf.xlu0
        %v3346 = vpop.trf.xlu0
        %v3347 = vpop.trf.xlu0
        %v3348 = vpop.trf.xlu0
        %v3349 = vpop.trf.xlu0
        %v3350 = vpop.trf.xlu0
        %v3351 = vpop.trf.xlu0
        %v3352 = vpop.trf.xlu0
        %v3353 = vpop.trf.xlu0
        %v3354 = vpop.trf.xlu0
        %v3355 = vpop.trf.xlu0
        %v3356 = vpop.trf.xlu0
        %v3357 = vpop.trf.xlu0
        %v3358 = vpop.trf.xlu0
        %v3359 = vpop.trf.xlu0
        %v3360 = vpop.trf.xlu0
        %v3361 = vcombine.low %v2865, %v2929
        %v3363 = vunpack.c.l.s4 1983009808
        %v3364 = vunpack.c.0.s8 %v3363
        %v3365 = vlaneseq
        %v3366 = vshrl.u32 %v3365, 7
        %v3367 = vsub.s32 %v3364, %v3366
        %v3368 = vrot.slane %v3361, %v3367
        %v3369 = vcombine.low %v2897, %v2961
        %v3371 = vunpack.c.l.s4 1983009808
        %v3372 = vunpack.c.0.s8 %v3371
        %v3373 = vlaneseq
        %v3374 = vshrl.u32 %v3373, 7
        %v3375 = vsub.s32 %v3372, %v3374
        %v3376 = vrot.slane %v3369, %v3375
        %v3377 = vcombine.low %v2993, %v3057
        %v3379 = vunpack.c.l.s4 1983009808
        %v3380 = vunpack.c.0.s8 %v3379
        %v3381 = vlaneseq
        %v3382 = vshrl.u32 %v3381, 7
        %v3383 = vsub.s32 %v3380, %v3382
        %v3384 = vrot.slane %v3377, %v3383
        %v3385 = vcombine.low %v3025, %v3089
        %v3387 = vunpack.c.l.s4 1983009808
        %v3388 = vunpack.c.0.s8 %v3387
        %v3389 = vlaneseq
        %v3390 = vshrl.u32 %v3389, 7
        %v3391 = vsub.s32 %v3388, %v3390
        %v3392 = vrot.slane %v3385, %v3391
        %v3393 = vcombine.low %v3368, %v3376
        %v3394 = vcombine.high %v3368, %v3376
        %v3396 = vunpack.c.l.s4 1934713408
        %v3397 = vunpack.c.0.s8 %v3396
        %v3398 = vlaneseq
        %v3399 = vshrl.u32 %v3398, 7
        %v3400 = vsub.s32 %v3397, %v3399
        %v3401 = vrot.slane %v3393, %v3400
        %v3403 = vunpack.c.l.s4 1934713408
        %v3404 = vunpack.c.0.s8 %v3403
        %v3405 = vlaneseq
        %v3406 = vshrl.u32 %v3405, 7
        %v3407 = vsub.s32 %v3404, %v3406
        %v3408 = vrot.slane %v3394, %v3407
        %v3409 = vcombine.low %v3384, %v3392
        %v3410 = vcombine.high %v3384, %v3392
        %v3412 = vunpack.c.l.s4 1934713408
        %v3413 = vunpack.c.0.s8 %v3412
        %v3414 = vlaneseq
        %v3415 = vshrl.u32 %v3414, 7
        %v3416 = vsub.s32 %v3413, %v3415
        %v3417 = vrot.slane %v3409, %v3416
        %v3419 = vunpack.c.l.s4 1934713408
        %v3420 = vunpack.c.0.s8 %v3419
        %v3421 = vlaneseq
        %v3422 = vshrl.u32 %v3421, 7
        %v3423 = vsub.s32 %v3420, %v3422
        %v3424 = vrot.slane %v3410, %v3423
        %v3425 = vcombine.low %v3401, %v3417
        %v3426 = vcombine.high %v3401, %v3417
        %v3427 = vcombine.low %v3408, %v3424
        %v3428 = vcombine.high %v3408, %v3424
        %v3429 = vcombine.low %v3121, %v3185
        %v3431 = vunpack.c.l.s4 1983009808
        %v3432 = vunpack.c.0.s8 %v3431
        %v3433 = vlaneseq
        %v3434 = vshrl.u32 %v3433, 7
        %v3435 = vsub.s32 %v3432, %v3434
        %v3436 = vrot.slane %v3429, %v3435
        %v3437 = vcombine.low %v3153, %v3217
        %v3439 = vunpack.c.l.s4 1983009808
        %v3440 = vunpack.c.0.s8 %v3439
        %v3441 = vlaneseq
        %v3442 = vshrl.u32 %v3441, 7
        %v3443 = vsub.s32 %v3440, %v3442
        %v3444 = vrot.slane %v3437, %v3443
        %v3445 = vcombine.low %v3249, %v3313
        %v3447 = vunpack.c.l.s4 1983009808
        %v3448 = vunpack.c.0.s8 %v3447
        %v3449 = vlaneseq
        %v3450 = vshrl.u32 %v3449, 7
        %v3451 = vsub.s32 %v3448, %v3450
        %v3452 = vrot.slane %v3445, %v3451
        %v3453 = vcombine.low %v3281, %v3345
        %v3455 = vunpack.c.l.s4 1983009808
        %v3456 = vunpack.c.0.s8 %v3455
        %v3457 = vlaneseq
        %v3458 = vshrl.u32 %v3457, 7
        %v3459 = vsub.s32 %v3456, %v3458
        %v3460 = vrot.slane %v3453, %v3459
        %v3461 = vcombine.low %v3436, %v3444
        %v3462 = vcombine.high %v3436, %v3444
        %v3464 = vunpack.c.l.s4 1934713408
        %v3465 = vunpack.c.0.s8 %v3464
        %v3466 = vlaneseq
        %v3467 = vshrl.u32 %v3466, 7
        %v3468 = vsub.s32 %v3465, %v3467
        %v3469 = vrot.slane %v3461, %v3468
        %v3471 = vunpack.c.l.s4 1934713408
        %v3472 = vunpack.c.0.s8 %v3471
        %v3473 = vlaneseq
        %v3474 = vshrl.u32 %v3473, 7
        %v3475 = vsub.s32 %v3472, %v3474
        %v3476 = vrot.slane %v3462, %v3475
        %v3477 = vcombine.low %v3452, %v3460
        %v3478 = vcombine.high %v3452, %v3460
        %v3480 = vunpack.c.l.s4 1934713408
        %v3481 = vunpack.c.0.s8 %v3480
        %v3482 = vlaneseq
        %v3483 = vshrl.u32 %v3482, 7
        %v3484 = vsub.s32 %v3481, %v3483
        %v3485 = vrot.slane %v3477, %v3484
        %v3487 = vunpack.c.l.s4 1934713408
        %v3488 = vunpack.c.0.s8 %v3487
        %v3489 = vlaneseq
        %v3490 = vshrl.u32 %v3489, 7
        %v3491 = vsub.s32 %v3488, %v3490
        %v3492 = vrot.slane %v3478, %v3491
        %v3493 = vcombine.low %v3469, %v3485
        %v3494 = vcombine.high %v3469, %v3485
        %v3495 = vcombine.low %v3476, %v3492
        %v3496 = vcombine.high %v3476, %v3492
        %3497 = vxpose.xlu0.b32.start [1/16] %v1069, 128
        %3498 = vxpose.xlu0.b32.cont [2/16] %v1075, 128
        %3499 = vxpose.xlu0.b32.cont [3/16] 0.0, 128
        %3500 = vxpose.xlu0.b32.cont [4/16] 0.0, 128
        %3501 = vxpose.xlu0.b32.cont [5/16] 0.0, 128
        %3502 = vxpose.xlu0.b32.cont [6/16] 0.0, 128
        %3503 = vxpose.xlu0.b32.cont [7/16] 0.0, 128
        %3504 = vxpose.xlu0.b32.cont [8/16] 0.0, 128
        %3505 = vxpose.xlu0.b32.cont [9/16] 0.0, 128
        %3506 = vxpose.xlu0.b32.cont [10/16] 0.0, 128
        %3507 = vxpose.xlu0.b32.cont [11/16] 0.0, 128
        %3508 = vxpose.xlu0.b32.cont [12/16] 0.0, 128
        %3509 = vxpose.xlu0.b32.cont [13/16] 0.0, 128
        %3510 = vxpose.xlu0.b32.cont [14/16] 0.0, 128
        %3511 = vxpose.xlu0.b32.cont [15/16] 0.0, 128
        %3512 = vxpose.xlu0.b32.end [16/16] 0.0, 128
        %v3513 = vpop.trf.xlu0
        %v3514 = vpop.trf.xlu0
        %v3515 = vpop.trf.xlu0
        %v3516 = vpop.trf.xlu0
        %v3517 = vpop.trf.xlu0
        %v3518 = vpop.trf.xlu0
        %v3519 = vpop.trf.xlu0
        %v3520 = vpop.trf.xlu0
        %v3521 = vpop.trf.xlu0
        %v3522 = vpop.trf.xlu0
        %v3523 = vpop.trf.xlu0
        %v3524 = vpop.trf.xlu0
        %v3525 = vpop.trf.xlu0
        %v3526 = vpop.trf.xlu0
        %v3527 = vpop.trf.xlu0
        %v3528 = vpop.trf.xlu0
        %3529 = vxpose.xlu0.b32.start [1/16] %v1313, 128
        %3530 = vxpose.xlu0.b32.cont [2/16] %v1315, 128
        %3531 = vxpose.xlu0.b32.cont [3/16] 0.0, 128
        %3532 = vxpose.xlu0.b32.cont [4/16] 0.0, 128
        %3533 = vxpose.xlu0.b32.cont [5/16] 0.0, 128
        %3534 = vxpose.xlu0.b32.cont [6/16] 0.0, 128
        %3535 = vxpose.xlu0.b32.cont [7/16] 0.0, 128
        %3536 = vxpose.xlu0.b32.cont [8/16] 0.0, 128
        %3537 = vxpose.xlu0.b32.cont [9/16] 0.0, 128
        %3538 = vxpose.xlu0.b32.cont [10/16] 0.0, 128
        %3539 = vxpose.xlu0.b32.cont [11/16] 0.0, 128
        %3540 = vxpose.xlu0.b32.cont [12/16] 0.0, 128
        %3541 = vxpose.xlu0.b32.cont [13/16] 0.0, 128
        %3542 = vxpose.xlu0.b32.cont [14/16] 0.0, 128
        %3543 = vxpose.xlu0.b32.cont [15/16] 0.0, 128
        %3544 = vxpose.xlu0.b32.end [16/16] 0.0, 128
        %v3545 = vpop.trf.xlu0
        %v3546 = vpop.trf.xlu0
        %v3547 = vpop.trf.xlu0
        %v3548 = vpop.trf.xlu0
        %v3549 = vpop.trf.xlu0
        %v3550 = vpop.trf.xlu0
        %v3551 = vpop.trf.xlu0
        %v3552 = vpop.trf.xlu0
        %v3553 = vpop.trf.xlu0
        %v3554 = vpop.trf.xlu0
        %v3555 = vpop.trf.xlu0
        %v3556 = vpop.trf.xlu0
        %v3557 = vpop.trf.xlu0
        %v3558 = vpop.trf.xlu0
        %v3559 = vpop.trf.xlu0
        %v3560 = vpop.trf.xlu0
        %3561 = vxpose.xlu0.b32.start [1/16] %v1319, 128
        %3562 = vxpose.xlu0.b32.cont [2/16] %v1321, 128
        %3563 = vxpose.xlu0.b32.cont [3/16] 0.0, 128
        %3564 = vxpose.xlu0.b32.cont [4/16] 0.0, 128
        %3565 = vxpose.xlu0.b32.cont [5/16] 0.0, 128
        %3566 = vxpose.xlu0.b32.cont [6/16] 0.0, 128
        %3567 = vxpose.xlu0.b32.cont [7/16] 0.0, 128
        %3568 = vxpose.xlu0.b32.cont [8/16] 0.0, 128
        %3569 = vxpose.xlu0.b32.cont [9/16] 0.0, 128
        %3570 = vxpose.xlu0.b32.cont [10/16] 0.0, 128
        %3571 = vxpose.xlu0.b32.cont [11/16] 0.0, 128
        %3572 = vxpose.xlu0.b32.cont [12/16] 0.0, 128
        %3573 = vxpose.xlu0.b32.cont [13/16] 0.0, 128
        %3574 = vxpose.xlu0.b32.cont [14/16] 0.0, 128
        %3575 = vxpose.xlu0.b32.cont [15/16] 0.0, 128
        %3576 = vxpose.xlu0.b32.end [16/16] 0.0, 128
        %v3577 = vpop.trf.xlu0
        %v3578 = vpop.trf.xlu0
        %v3579 = vpop.trf.xlu0
        %v3580 = vpop.trf.xlu0
        %v3581 = vpop.trf.xlu0
        %v3582 = vpop.trf.xlu0
        %v3583 = vpop.trf.xlu0
        %v3584 = vpop.trf.xlu0
        %v3585 = vpop.trf.xlu0
        %v3586 = vpop.trf.xlu0
        %v3587 = vpop.trf.xlu0
        %v3588 = vpop.trf.xlu0
        %v3589 = vpop.trf.xlu0
        %v3590 = vpop.trf.xlu0
        %v3591 = vpop.trf.xlu0
        %v3592 = vpop.trf.xlu0
        %3593 = vxpose.xlu0.b32.start [1/16] %v1325, 128
        %3594 = vxpose.xlu0.b32.cont [2/16] %v1327, 128
        %3595 = vxpose.xlu0.b32.cont [3/16] 0.0, 128
        %3596 = vxpose.xlu0.b32.cont [4/16] 0.0, 128
        %3597 = vxpose.xlu0.b32.cont [5/16] 0.0, 128
        %3598 = vxpose.xlu0.b32.cont [6/16] 0.0, 128
        %3599 = vxpose.xlu0.b32.cont [7/16] 0.0, 128
        %3600 = vxpose.xlu0.b32.cont [8/16] 0.0, 128
        %3601 = vxpose.xlu0.b32.cont [9/16] 0.0, 128
        %3602 = vxpose.xlu0.b32.cont [10/16] 0.0, 128
        %3603 = vxpose.xlu0.b32.cont [11/16] 0.0, 128
        %3604 = vxpose.xlu0.b32.cont [12/16] 0.0, 128
        %3605 = vxpose.xlu0.b32.cont [13/16] 0.0, 128
        %3606 = vxpose.xlu0.b32.cont [14/16] 0.0, 128
        %3607 = vxpose.xlu0.b32.cont [15/16] 0.0, 128
        %3608 = vxpose.xlu0.b32.end [16/16] 0.0, 128
        %v3609 = vpop.trf.xlu0
        %v3610 = vpop.trf.xlu0
        %v3611 = vpop.trf.xlu0
        %v3612 = vpop.trf.xlu0
        %v3613 = vpop.trf.xlu0
        %v3614 = vpop.trf.xlu0
        %v3615 = vpop.trf.xlu0
        %v3616 = vpop.trf.xlu0
        %v3617 = vpop.trf.xlu0
        %v3618 = vpop.trf.xlu0
        %v3619 = vpop.trf.xlu0
        %v3620 = vpop.trf.xlu0
        %v3621 = vpop.trf.xlu0
        %v3622 = vpop.trf.xlu0
        %v3623 = vpop.trf.xlu0
        %v3624 = vpop.trf.xlu0
        %v3625 = vsel %vm1376, %v1152, 0
        %v3627 = vsel %vm1376, %v1153, 0
        %3629 = vmatprep.subr.mxu0 0.0
        %3630 = vmatpush1.msra.mxu0 %v3513
        %3631 = vmatprep.subr.mxu0 0.0
        %3632 = vmatpush1.msra.mxu0 %v3514
        %3633 = vmatprep.subr.mxu0 0.0
        %3634 = vmatpush1.msra.mxu0 %v3515
        %3635 = vmatprep.subr.mxu0 0.0
        %3636 = vmatpush1.msra.mxu0 %v3516
        %3637 = vmatprep.subr.mxu0 0.0
        %3638 = vmatpush1.msra.mxu0 0.0
        %3639 = vmatprep.subr.mxu0 0.0
        %3640 = vmatpush1.msra.mxu0 0.0
        %3641 = vmatprep.subr.mxu0 0.0
        %3642 = vmatpush1.msra.mxu0 0.0
        %3643 = vmatprep.subr.mxu0 0.0
        %3644 = vmatpush1.msra.mxu0 0.0
        %3645 = vmatprep.subr.mxu0 0.0
        %3646 = vmatpush1.msra.mxu0 0.0
        %3647 = vmatprep.subr.mxu0 0.0
        %3648 = vmatpush1.msra.mxu0 0.0
        %3649 = vmatprep.subr.mxu0 0.0
        %3650 = vmatpush1.msra.mxu0 0.0
        %3651 = vmatprep.subr.mxu0 0.0
        %3652 = vmatpush1.msra.mxu0 0.0
        %3653 = vmatprep.subr.mxu0 0.0
        %3654 = vmatpush1.msra.mxu0 0.0
        %3655 = vmatprep.subr.mxu0 0.0
        %3656 = vmatpush1.msra.mxu0 0.0
        %3657 = vmatprep.subr.mxu0 0.0
        %3658 = vmatpush1.msra.mxu0 0.0
        %3659 = vmatprep.subr.mxu0 0.0
        %3660 = vmatpush1.msra.mxu0 0.0
        %3661 = vmatprep.subr.mxu0 0.0
        %3662 = vmatpush1.msra.mxu0 0.0
        %3663 = vmatprep.subr.mxu0 0.0
        %3664 = vmatpush1.msra.mxu0 0.0
        %3665 = vmatprep.subr.mxu0 0.0
        %3666 = vmatpush1.msra.mxu0 0.0
        %3667 = vmatprep.subr.mxu0 0.0
        %3668 = vmatpush1.msra.mxu0 0.0
        %3669 = vmatprep.subr.mxu0 0.0
        %3670 = vmatpush1.msra.mxu0 0.0
        %3671 = vmatprep.subr.mxu0 0.0
        %3672 = vmatpush1.msra.mxu0 0.0
        %3673 = vmatprep.subr.mxu0 0.0
        %3674 = vmatpush1.msra.mxu0 0.0
        %3675 = vmatprep.subr.mxu0 0.0
        %3676 = vmatpush1.msra.mxu0 0.0
        %3677 = vmatprep.subr.mxu0 0.0
        %3678 = vmatpush1.msra.mxu0 0.0
        %3679 = vmatprep.subr.mxu0 0.0
        %3680 = vmatpush1.msra.mxu0 0.0
        %3681 = vmatprep.subr.mxu0 0.0
        %3682 = vmatpush1.msra.mxu0 0.0
        %3683 = vmatprep.subr.mxu0 0.0
        %3684 = vmatpush1.msra.mxu0 0.0
        %3685 = vmatprep.subr.mxu0 0.0
        %3686 = vmatpush1.msra.mxu0 0.0
        %3687 = vmatprep.subr.mxu0 0.0
        %3688 = vmatpush1.msra.mxu0 0.0
        %3689 = vmatprep.subr.mxu0 0.0
        %3690 = vmatpush1.msra.mxu0 0.0
        %3691 = vmatprep.subr.mxu0 0.0
        %3692 = vmatpush1.msra.mxu0 0.0
        %3693 = vmatprep.mubr.f32.mxu0 0.0
        %3694 = vmatmul.mubr.f32.gmra.mrb[0].mxu0 %v3625
        %v3695 = vpop.f32.mrb[0].mxu0
        %v3696 = vadd.f32 %v3425, %v3695
        %v3697 = vpop.f32.mrb[0].mxu0
        %3698 = vmatprep.mubr.f32.mxu0 0.0
        %3699 = vmatmul.mubr.f32.gmra.mrb[0].mxu0 %v3627
        %v3700 = vpop.f32.mrb[0].mxu0
        %v3701 = vadd.f32 %v3493, %v3700
        %v3702 = vpop.f32.mrb[0].mxu0
        %3703 = vdwg.mxu0
        %v3704 = vsel %vm1376, %v1157, 0
        %v3706 = vsel %vm1376, %v1159, 0
        %3708 = vmatprep.subr.mxu0 0.0
        %3709 = vmatpush1.msra.mxu0 %v3545
        %3710 = vmatprep.subr.mxu0 0.0
        %3711 = vmatpush1.msra.mxu0 %v3546
        %3712 = vmatprep.subr.mxu0 0.0
        %3713 = vmatpush1.msra.mxu0 %v3547
        %3714 = vmatprep.subr.mxu0 0.0
        %3715 = vmatpush1.msra.mxu0 %v3548
        %3716 = vmatprep.subr.mxu0 0.0
        %3717 = vmatpush1.msra.mxu0 0.0
        %3718 = vmatprep.subr.mxu0 0.0
        %3719 = vmatpush1.msra.mxu0 0.0
        %3720 = vmatprep.subr.mxu0 0.0
        %3721 = vmatpush1.msra.mxu0 0.0
        %3722 = vmatprep.subr.mxu0 0.0
        %3723 = vmatpush1.msra.mxu0 0.0
        %3724 = vmatprep.subr.mxu0 0.0
        %3725 = vmatpush1.msra.mxu0 0.0
        %3726 = vmatprep.subr.mxu0 0.0
        %3727 = vmatpush1.msra.mxu0 0.0
        %3728 = vmatprep.subr.mxu0 0.0
        %3729 = vmatpush1.msra.mxu0 0.0
        %3730 = vmatprep.subr.mxu0 0.0
        %3731 = vmatpush1.msra.mxu0 0.0
        %3732 = vmatprep.subr.mxu0 0.0
        %3733 = vmatpush1.msra.mxu0 0.0
        %3734 = vmatprep.subr.mxu0 0.0
        %3735 = vmatpush1.msra.mxu0 0.0
        %3736 = vmatprep.subr.mxu0 0.0
        %3737 = vmatpush1.msra.mxu0 0.0
        %3738 = vmatprep.subr.mxu0 0.0
        %3739 = vmatpush1.msra.mxu0 0.0
        %3740 = vmatprep.subr.mxu0 0.0
        %3741 = vmatpush1.msra.mxu0 0.0
        %3742 = vmatprep.subr.mxu0 0.0
        %3743 = vmatpush1.msra.mxu0 0.0
        %3744 = vmatprep.subr.mxu0 0.0
        %3745 = vmatpush1.msra.mxu0 0.0
        %3746 = vmatprep.subr.mxu0 0.0
        %3747 = vmatpush1.msra.mxu0 0.0
        %3748 = vmatprep.subr.mxu0 0.0
        %3749 = vmatpush1.msra.mxu0 0.0
        %3750 = vmatprep.subr.mxu0 0.0
        %3751 = vmatpush1.msra.mxu0 0.0
        %3752 = vmatprep.subr.mxu0 0.0
        %3753 = vmatpush1.msra.mxu0 0.0
        %3754 = vmatprep.subr.mxu0 0.0
        %3755 = vmatpush1.msra.mxu0 0.0
        %3756 = vmatprep.subr.mxu0 0.0
        %3757 = vmatpush1.msra.mxu0 0.0
        %3758 = vmatprep.subr.mxu0 0.0
        %3759 = vmatpush1.msra.mxu0 0.0
        %3760 = vmatprep.subr.mxu0 0.0
        %3761 = vmatpush1.msra.mxu0 0.0
        %3762 = vmatprep.subr.mxu0 0.0
        %3763 = vmatpush1.msra.mxu0 0.0
        %3764 = vmatprep.subr.mxu0 0.0
        %3765 = vmatpush1.msra.mxu0 0.0
        %3766 = vmatprep.subr.mxu0 0.0
        %3767 = vmatpush1.msra.mxu0 0.0
        %3768 = vmatprep.subr.mxu0 0.0
        %3769 = vmatpush1.msra.mxu0 0.0
        %3770 = vmatprep.subr.mxu0 0.0
        %3771 = vmatpush1.msra.mxu0 0.0
        %3772 = vmatprep.mubr.f32.mxu0 0.0
        %3773 = vmatmul.mubr.f32.gmra.mrb[0].mxu0 %v3704
        %v3774 = vpop.f32.mrb[0].mxu0
        %v3775 = vadd.f32 %v3426, %v3774
        %v3776 = vpop.f32.mrb[0].mxu0
        %3777 = vmatprep.mubr.f32.mxu0 0.0
        %3778 = vmatmul.mubr.f32.gmra.mrb[0].mxu0 %v3706
        %v3779 = vpop.f32.mrb[0].mxu0
        %v3780 = vadd.f32 %v3494, %v3779
        %v3781 = vpop.f32.mrb[0].mxu0
        %3782 = vdwg.mxu0
        %v3783 = vsel %vm1376, %v1163, 0
        %v3785 = vsel %vm1376, %v1165, 0
        %3787 = vmatprep.subr.mxu0 0.0
        %3788 = vmatpush1.msra.mxu0 %v3577
        %3789 = vmatprep.subr.mxu0 0.0
        %3790 = vmatpush1.msra.mxu0 %v3578
        %3791 = vmatprep.subr.mxu0 0.0
        %3792 = vmatpush1.msra.mxu0 %v3579
        %3793 = vmatprep.subr.mxu0 0.0
        %3794 = vmatpush1.msra.mxu0 %v3580
        %3795 = vmatprep.subr.mxu0 0.0
        %3796 = vmatpush1.msra.mxu0 0.0
        %3797 = vmatprep.subr.mxu0 0.0
        %3798 = vmatpush1.msra.mxu0 0.0
        %3799 = vmatprep.subr.mxu0 0.0
        %3800 = vmatpush1.msra.mxu0 0.0
        %3801 = vmatprep.subr.mxu0 0.0
        %3802 = vmatpush1.msra.mxu0 0.0
        %3803 = vmatprep.subr.mxu0 0.0
        %3804 = vmatpush1.msra.mxu0 0.0
        %3805 = vmatprep.subr.mxu0 0.0
        %3806 = vmatpush1.msra.mxu0 0.0
        %3807 = vmatprep.subr.mxu0 0.0
        %3808 = vmatpush1.msra.mxu0 0.0
        %3809 = vmatprep.subr.mxu0 0.0
        %3810 = vmatpush1.msra.mxu0 0.0
        %3811 = vmatprep.subr.mxu0 0.0
        %3812 = vmatpush1.msra.mxu0 0.0
        %3813 = vmatprep.subr.mxu0 0.0
        %3814 = vmatpush1.msra.mxu0 0.0
        %3815 = vmatprep.subr.mxu0 0.0
        %3816 = vmatpush1.msra.mxu0 0.0
        %3817 = vmatprep.subr.mxu0 0.0
        %3818 = vmatpush1.msra.mxu0 0.0
        %3819 = vmatprep.subr.mxu0 0.0
        %3820 = vmatpush1.msra.mxu0 0.0
        %3821 = vmatprep.subr.mxu0 0.0
        %3822 = vmatpush1.msra.mxu0 0.0
        %3823 = vmatprep.subr.mxu0 0.0
        %3824 = vmatpush1.msra.mxu0 0.0
        %3825 = vmatprep.subr.mxu0 0.0
        %3826 = vmatpush1.msra.mxu0 0.0
        %3827 = vmatprep.subr.mxu0 0.0
        %3828 = vmatpush1.msra.mxu0 0.0
        %3829 = vmatprep.subr.mxu0 0.0
        %3830 = vmatpush1.msra.mxu0 0.0
        %3831 = vmatprep.subr.mxu0 0.0
        %3832 = vmatpush1.msra.mxu0 0.0
        %3833 = vmatprep.subr.mxu0 0.0
        %3834 = vmatpush1.msra.mxu0 0.0
        %3835 = vmatprep.subr.mxu0 0.0
        %3836 = vmatpush1.msra.mxu0 0.0
        %3837 = vmatprep.subr.mxu0 0.0
        %3838 = vmatpush1.msra.mxu0 0.0
        %3839 = vmatprep.subr.mxu0 0.0
        %3840 = vmatpush1.msra.mxu0 0.0
        %3841 = vmatprep.subr.mxu0 0.0
        %3842 = vmatpush1.msra.mxu0 0.0
        %3843 = vmatprep.subr.mxu0 0.0
        %3844 = vmatpush1.msra.mxu0 0.0
        %3845 = vmatprep.subr.mxu0 0.0
        %3846 = vmatpush1.msra.mxu0 0.0
        %3847 = vmatprep.subr.mxu0 0.0
        %3848 = vmatpush1.msra.mxu0 0.0
        %3849 = vmatprep.subr.mxu0 0.0
        %3850 = vmatpush1.msra.mxu0 0.0
        %3851 = vmatprep.mubr.f32.mxu0 0.0
        %3852 = vmatmul.mubr.f32.gmra.mrb[0].mxu0 %v3783
        %v3853 = vpop.f32.mrb[0].mxu0
        %v3854 = vadd.f32 %v3427, %v3853
        %v3855 = vpop.f32.mrb[0].mxu0
        %3856 = vmatprep.mubr.f32.mxu0 0.0
        %3857 = vmatmul.mubr.f32.gmra.mrb[0].mxu0 %v3785
        %v3858 = vpop.f32.mrb[0].mxu0
        %v3859 = vadd.f32 %v3495, %v3858
        %v3860 = vpop.f32.mrb[0].mxu0
        %3861 = vdwg.mxu0
        %v3862 = vsel %vm1376, %v1169, 0
        %v3864 = vsel %vm1376, %v1171, 0
        %3866 = vmatprep.subr.mxu0 0.0
        %3867 = vmatpush1.msra.mxu0 %v3609
        %3868 = vmatprep.subr.mxu0 0.0
        %3869 = vmatpush1.msra.mxu0 %v3610
        %3870 = vmatprep.subr.mxu0 0.0
        %3871 = vmatpush1.msra.mxu0 %v3611
        %3872 = vmatprep.subr.mxu0 0.0
        %3873 = vmatpush1.msra.mxu0 %v3612
        %3874 = vmatprep.subr.mxu0 0.0
        %3875 = vmatpush1.msra.mxu0 0.0
        %3876 = vmatprep.subr.mxu0 0.0
        %3877 = vmatpush1.msra.mxu0 0.0
        %3878 = vmatprep.subr.mxu0 0.0
        %3879 = vmatpush1.msra.mxu0 0.0
        %3880 = vmatprep.subr.mxu0 0.0
        %3881 = vmatpush1.msra.mxu0 0.0
        %3882 = vmatprep.subr.mxu0 0.0
        %3883 = vmatpush1.msra.mxu0 0.0
        %3884 = vmatprep.subr.mxu0 0.0
        %3885 = vmatpush1.msra.mxu0 0.0
        %3886 = vmatprep.subr.mxu0 0.0
        %3887 = vmatpush1.msra.mxu0 0.0
        %3888 = vmatprep.subr.mxu0 0.0
        %3889 = vmatpush1.msra.mxu0 0.0
        %3890 = vmatprep.subr.mxu0 0.0
        %3891 = vmatpush1.msra.mxu0 0.0
        %3892 = vmatprep.subr.mxu0 0.0
        %3893 = vmatpush1.msra.mxu0 0.0
        %3894 = vmatprep.subr.mxu0 0.0
        %3895 = vmatpush1.msra.mxu0 0.0
        %3896 = vmatprep.subr.mxu0 0.0
        %3897 = vmatpush1.msra.mxu0 0.0
        %3898 = vmatprep.subr.mxu0 0.0
        %3899 = vmatpush1.msra.mxu0 0.0
        %3900 = vmatprep.subr.mxu0 0.0
        %3901 = vmatpush1.msra.mxu0 0.0
        %3902 = vmatprep.subr.mxu0 0.0
        %3903 = vmatpush1.msra.mxu0 0.0
        %3904 = vmatprep.subr.mxu0 0.0
        %3905 = vmatpush1.msra.mxu0 0.0
        %3906 = vmatprep.subr.mxu0 0.0
        %3907 = vmatpush1.msra.mxu0 0.0
        %3908 = vmatprep.subr.mxu0 0.0
        %3909 = vmatpush1.msra.mxu0 0.0
        %3910 = vmatprep.subr.mxu0 0.0
        %3911 = vmatpush1.msra.mxu0 0.0
        %3912 = vmatprep.subr.mxu0 0.0
        %3913 = vmatpush1.msra.mxu0 0.0
        %3914 = vmatprep.subr.mxu0 0.0
        %3915 = vmatpush1.msra.mxu0 0.0
        %3916 = vmatprep.subr.mxu0 0.0
        %3917 = vmatpush1.msra.mxu0 0.0
        %3918 = vmatprep.subr.mxu0 0.0
        %3919 = vmatpush1.msra.mxu0 0.0
        %3920 = vmatprep.subr.mxu0 0.0
        %3921 = vmatpush1.msra.mxu0 0.0
        %3922 = vmatprep.subr.mxu0 0.0
        %3923 = vmatpush1.msra.mxu0 0.0
        %3924 = vmatprep.subr.mxu0 0.0
        %3925 = vmatpush1.msra.mxu0 0.0
        %3926 = vmatprep.subr.mxu0 0.0
        %3927 = vmatpush1.msra.mxu0 0.0
        %3928 = vmatprep.subr.mxu0 0.0
        %3929 = vmatpush1.msra.mxu0 0.0
        %3930 = vmatprep.mubr.f32.mxu0 0.0
        %3931 = vmatmul.mubr.f32.gmra.mrb[0].mxu0 %v3862
        %v3932 = vpop.f32.mrb[0].mxu0
        %v3933 = vadd.f32 %v3428, %v3932
        %v3934 = vpop.f32.mrb[0].mxu0
        %3935 = vmatprep.mubr.f32.mxu0 0.0
        %3936 = vmatmul.mubr.f32.gmra.mrb[0].mxu0 %v3864
        %v3937 = vpop.f32.mrb[0].mxu0
        %v3938 = vadd.f32 %v3496, %v3937
        %v3939 = vpop.f32.mrb[0].mxu0
        %3940 = vdwg.mxu0
        %vm3941 = vcmask 130048
        %v3942 = vsel %vm3941, %v3696, -inf
        %3943 = vmax.xlane.f32.xlu0 %v3942
        %v3944 = vpop.xlane.xlu0 %3943
        %v3945 = vsel %vm3941, %v3701, -inf
        %3946 = vmax.xlane.f32.xlu0 %v3945
        %v3947 = vpop.xlane.xlu0 %3946
        %v3948 = vsel %vm3941, %v3775, -inf
        %3949 = vmax.xlane.f32.xlu0 %v3948
        %v3950 = vpop.xlane.xlu0 %3949
        %v3951 = vsel %vm3941, %v3780, -inf
        %3952 = vmax.xlane.f32.xlu0 %v3951
        %v3953 = vpop.xlane.xlu0 %3952
        %v3954 = vsel %vm3941, %v3854, -inf
        %3955 = vmax.xlane.f32.xlu0 %v3954
        %v3956 = vpop.xlane.xlu0 %3955
        %v3957 = vsel %vm3941, %v3859, -inf
        %3958 = vmax.xlane.f32.xlu0 %v3957
        %v3959 = vpop.xlane.xlu0 %3958
        %v3960 = vsel %vm3941, %v3933, -inf
        %3961 = vmax.xlane.f32.xlu0 %v3960
        %v3962 = vpop.xlane.xlu0 %3961
        %v3963 = vsel %vm3941, %v3938, -inf
        %3964 = vmax.xlane.f32.xlu0 %v3963
        %v3965 = vpop.xlane.xlu0 %3964
        %v3966 = vsub.f32 %v3696, %v3944
        %v3967 = vsub.f32 %v3701, %v3947
        %v3968 = vsub.f32 %v3775, %v3950
        %v3969 = vsub.f32 %v3780, %v3953
        %v3970 = vsub.f32 %v3854, %v3956
        %v3971 = vsub.f32 %v3859, %v3959
        %v3972 = vsub.f32 %v3933, %v3962
        %v3973 = vsub.f32 %v3938, %v3965
        %v3974 = vmul.f32 %v3966, 1.442695
        %v3975 = vpow.pop %v3974
        %v3976 = vmul.f32 %v3967, 1.442695
        %v3977 = vpow.pop %v3976
        %v3978 = vmul.f32 %v3968, 1.442695
        %v3979 = vpow.pop %v3978
        %v3980 = vmul.f32 %v3969, 1.442695
        %v3981 = vpow.pop %v3980
        %v3982 = vmul.f32 %v3970, 1.442695
        %v3983 = vpow.pop %v3982
        %v3984 = vmul.f32 %v3971, 1.442695
        %v3985 = vpow.pop %v3984
        %v3986 = vmul.f32 %v3972, 1.442695
        %v3987 = vpow.pop %v3986
        %v3988 = vmul.f32 %v3973, 1.442695
        %v3989 = vpow.pop %v3988
        %v3990 = vsel %vm3941, %v3975, 0.0
        %3991 = vadd.xlane.f32.xlu0 %v3990
        %v3992 = vpop.xlane.xlu0 %3991
        %v3993 = vsel %vm3941, %v3977, 0.0
        %3994 = vadd.xlane.f32.xlu0 %v3993
        %v3995 = vpop.xlane.xlu0 %3994
        %v3996 = vsel %vm3941, %v3979, 0.0
        %3997 = vadd.xlane.f32.xlu0 %v3996
        %v3998 = vpop.xlane.xlu0 %3997
        %v3999 = vsel %vm3941, %v3981, 0.0
        %4000 = vadd.xlane.f32.xlu0 %v3999
        %v4001 = vpop.xlane.xlu0 %4000
        %v4002 = vsel %vm3941, %v3983, 0.0
        %4003 = vadd.xlane.f32.xlu0 %v4002
        %v4004 = vpop.xlane.xlu0 %4003
        %v4005 = vsel %vm3941, %v3985, 0.0
        %4006 = vadd.xlane.f32.xlu0 %v4005
        %v4007 = vpop.xlane.xlu0 %4006
        %v4008 = vsel %vm3941, %v3987, 0.0
        %4009 = vadd.xlane.f32.xlu0 %v4008
        %v4010 = vpop.xlane.xlu0 %4009
        %v4011 = vsel %vm3941, %v3989, 0.0
        %4012 = vadd.xlane.f32.xlu0 %v4011
        %v4013 = vpop.xlane.xlu0 %4012
        %v4014 = vrcp.pop %v3992
        %v4015 = vrcp.pop %v3995
        %v4016 = vrcp.pop %v3998
        %v4017 = vrcp.pop %v4001
        %v4018 = vrcp.pop %v4004
        %v4019 = vrcp.pop %v4007
        %v4020 = vrcp.pop %v4010
        %v4021 = vrcp.pop %v4013
        %v4022 = vmul.f32 %v3975, %v4014
        %v4023 = vmul.f32 %v3977, %v4015
        %v4024 = vmul.f32 %v3979, %v4016
        %v4025 = vmul.f32 %v3981, %v4017
        %v4026 = vmul.f32 %v3983, %v4018
        %v4027 = vmul.f32 %v3985, %v4019
        %v4028 = vmul.f32 %v3987, %v4020
        %v4029 = vmul.f32 %v3989, %v4021
        %4030 = vxpose.xlu0.b32.start [1/16] %v1144, 128
        %4031 = vxpose.xlu0.b32.cont [2/16] %v1149, 128
        %4032 = vxpose.xlu0.b32.cont [3/16] 0.0, 128
        %4033 = vxpose.xlu0.b32.cont [4/16] 0.0, 128
        %4034 = vxpose.xlu0.b32.cont [5/16] 0.0, 128
        %4035 = vxpose.xlu0.b32.cont [6/16] 0.0, 128
        %4036 = vxpose.xlu0.b32.cont [7/16] 0.0, 128
        %4037 = vxpose.xlu0.b32.cont [8/16] 0.0, 128
        %4038 = vxpose.xlu0.b32.cont [9/16] 0.0, 128
        %4039 = vxpose.xlu0.b32.cont [10/16] 0.0, 128
        %4040 = vxpose.xlu0.b32.cont [11/16] 0.0, 128
        %4041 = vxpose.xlu0.b32.cont [12/16] 0.0, 128
        %4042 = vxpose.xlu0.b32.cont [13/16] 0.0, 128
        %4043 = vxpose.xlu0.b32.cont [14/16] 0.0, 128
        %4044 = vxpose.xlu0.b32.cont [15/16] 0.0, 128
        %4045 = vxpose.xlu0.b32.end [16/16] 0.0, 128
        %v4046 = vpop.trf.xlu0
        %v4047 = vpop.trf.xlu0
        %v4048 = vpop.trf.xlu0
        %v4049 = vpop.trf.xlu0
        %v4050 = vpop.trf.xlu0
        %v4051 = vpop.trf.xlu0
        %v4052 = vpop.trf.xlu0
        %v4053 = vpop.trf.xlu0
        %v4054 = vpop.trf.xlu0
        %v4055 = vpop.trf.xlu0
        %v4056 = vpop.trf.xlu0
        %v4057 = vpop.trf.xlu0
        %v4058 = vpop.trf.xlu0
        %v4059 = vpop.trf.xlu0
        %v4060 = vpop.trf.xlu0
        %v4061 = vpop.trf.xlu0
        %4062 = vxpose.xlu0.b32.start [1/16] %v1333, 128
        %4063 = vxpose.xlu0.b32.cont [2/16] %v1335, 128
        %4064 = vxpose.xlu0.b32.cont [3/16] 0.0, 128
        %4065 = vxpose.xlu0.b32.cont [4/16] 0.0, 128
        %4066 = vxpose.xlu0.b32.cont [5/16] 0.0, 128
        %4067 = vxpose.xlu0.b32.cont [6/16] 0.0, 128
        %4068 = vxpose.xlu0.b32.cont [7/16] 0.0, 128
        %4069 = vxpose.xlu0.b32.cont [8/16] 0.0, 128
        %4070 = vxpose.xlu0.b32.cont [9/16] 0.0, 128
        %4071 = vxpose.xlu0.b32.cont [10/16] 0.0, 128
        %4072 = vxpose.xlu0.b32.cont [11/16] 0.0, 128
        %4073 = vxpose.xlu0.b32.cont [12/16] 0.0, 128
        %4074 = vxpose.xlu0.b32.cont [13/16] 0.0, 128
        %4075 = vxpose.xlu0.b32.cont [14/16] 0.0, 128
        %4076 = vxpose.xlu0.b32.cont [15/16] 0.0, 128
        %4077 = vxpose.xlu0.b32.end [16/16] 0.0, 128
        %v4078 = vpop.trf.xlu0
        %v4079 = vpop.trf.xlu0
        %v4080 = vpop.trf.xlu0
        %v4081 = vpop.trf.xlu0
        %v4082 = vpop.trf.xlu0
        %v4083 = vpop.trf.xlu0
        %v4084 = vpop.trf.xlu0
        %v4085 = vpop.trf.xlu0
        %v4086 = vpop.trf.xlu0
        %v4087 = vpop.trf.xlu0
        %v4088 = vpop.trf.xlu0
        %v4089 = vpop.trf.xlu0
        %v4090 = vpop.trf.xlu0
        %v4091 = vpop.trf.xlu0
        %v4092 = vpop.trf.xlu0
        %v4093 = vpop.trf.xlu0
        %4094 = vxpose.xlu0.b32.start [1/16] %v1339, 128
        %4095 = vxpose.xlu0.b32.cont [2/16] %v1341, 128
        %4096 = vxpose.xlu0.b32.cont [3/16] 0.0, 128
        %4097 = vxpose.xlu0.b32.cont [4/16] 0.0, 128
        %4098 = vxpose.xlu0.b32.cont [5/16] 0.0, 128
        %4099 = vxpose.xlu0.b32.cont [6/16] 0.0, 128
        %4100 = vxpose.xlu0.b32.cont [7/16] 0.0, 128
        %4101 = vxpose.xlu0.b32.cont [8/16] 0.0, 128
        %4102 = vxpose.xlu0.b32.cont [9/16] 0.0, 128
        %4103 = vxpose.xlu0.b32.cont [10/16] 0.0, 128
        %4104 = vxpose.xlu0.b32.cont [11/16] 0.0, 128
        %4105 = vxpose.xlu0.b32.cont [12/16] 0.0, 128
        %4106 = vxpose.xlu0.b32.cont [13/16] 0.0, 128
        %4107 = vxpose.xlu0.b32.cont [14/16] 0.0, 128
        %4108 = vxpose.xlu0.b32.cont [15/16] 0.0, 128
        %4109 = vxpose.xlu0.b32.end [16/16] 0.0, 128
        %v4110 = vpop.trf.xlu0
        %v4111 = vpop.trf.xlu0
        %v4112 = vpop.trf.xlu0
        %v4113 = vpop.trf.xlu0
        %v4114 = vpop.trf.xlu0
        %v4115 = vpop.trf.xlu0
        %v4116 = vpop.trf.xlu0
        %v4117 = vpop.trf.xlu0
        %v4118 = vpop.trf.xlu0
        %v4119 = vpop.trf.xlu0
        %v4120 = vpop.trf.xlu0
        %v4121 = vpop.trf.xlu0
        %v4122 = vpop.trf.xlu0
        %v4123 = vpop.trf.xlu0
        %v4124 = vpop.trf.xlu0
        %v4125 = vpop.trf.xlu0
        %4126 = vxpose.xlu0.b32.start [1/16] %v1345, 128
        %4127 = vxpose.xlu0.b32.cont [2/16] %v1347, 128
        %4128 = vxpose.xlu0.b32.cont [3/16] 0.0, 128
        %4129 = vxpose.xlu0.b32.cont [4/16] 0.0, 128
        %4130 = vxpose.xlu0.b32.cont [5/16] 0.0, 128
        %4131 = vxpose.xlu0.b32.cont [6/16] 0.0, 128
        %4132 = vxpose.xlu0.b32.cont [7/16] 0.0, 128
        %4133 = vxpose.xlu0.b32.cont [8/16] 0.0, 128
        %4134 = vxpose.xlu0.b32.cont [9/16] 0.0, 128
        %4135 = vxpose.xlu0.b32.cont [10/16] 0.0, 128
        %4136 = vxpose.xlu0.b32.cont [11/16] 0.0, 128
        %4137 = vxpose.xlu0.b32.cont [12/16] 0.0, 128
        %4138 = vxpose.xlu0.b32.cont [13/16] 0.0, 128
        %4139 = vxpose.xlu0.b32.cont [14/16] 0.0, 128
        %4140 = vxpose.xlu0.b32.cont [15/16] 0.0, 128
        %4141 = vxpose.xlu0.b32.end [16/16] 0.0, 128
        %v4142 = vpop.trf.xlu0
        %v4143 = vpop.trf.xlu0
        %v4144 = vpop.trf.xlu0
        %v4145 = vpop.trf.xlu0
        %v4146 = vpop.trf.xlu0
        %v4147 = vpop.trf.xlu0
        %v4148 = vpop.trf.xlu0
        %v4149 = vpop.trf.xlu0
        %v4150 = vpop.trf.xlu0
        %v4151 = vpop.trf.xlu0
        %v4152 = vpop.trf.xlu0
        %v4153 = vpop.trf.xlu0
        %v4154 = vpop.trf.xlu0
        %v4155 = vpop.trf.xlu0
        %v4156 = vpop.trf.xlu0
        %v4157 = vpop.trf.xlu0
        %v4159 = vsel %vm3941, %v4046, 0
        %v4162 = vsel %vm3941, %v4047, 0
        %v4165 = vsel %vm3941, %v4048, 0
        %v4168 = vsel %vm3941, %v4049, 0
        %v4171 = vsel %vm3941, %v4022, 0
        %v4174 = vsel %vm3941, %v4023, 0
        %4176 = vmatprep.subr.mxu0 0.0
        %4177 = vmatpush1.xpose.msra.mxu0 %v4171
        %4178 = vmatprep.subr.mxu0 0.0
        %4179 = vmatpush1.xpose.msra.mxu0 %v4174
        %4180 = vmatprep.subr.mxu0 0.0
        %4181 = vmatpush1.xpose.msra.mxu0 0.0
        %4182 = vmatprep.subr.mxu0 0.0
        %4183 = vmatpush1.xpose.msra.mxu0 0.0
        %4184 = vmatprep.subr.mxu0 0.0
        %4185 = vmatpush1.xpose.msra.mxu0 0.0
        %4186 = vmatprep.subr.mxu0 0.0
        %4187 = vmatpush1.xpose.msra.mxu0 0.0
        %4188 = vmatprep.subr.mxu0 0.0
        %4189 = vmatpush1.xpose.msra.mxu0 0.0
        %4190 = vmatprep.subr.mxu0 0.0
        %4191 = vmatpush1.xpose.msra.mxu0 0.0
        %4192 = vmatprep.subr.mxu0 0.0
        %4193 = vmatpush1.xpose.msra.mxu0 0.0
        %4194 = vmatprep.subr.mxu0 0.0
        %4195 = vmatpush1.xpose.msra.mxu0 0.0
        %4196 = vmatprep.subr.mxu0 0.0
        %4197 = vmatpush1.xpose.msra.mxu0 0.0
        %4198 = vmatprep.subr.mxu0 0.0
        %4199 = vmatpush1.xpose.msra.mxu0 0.0
        %4200 = vmatprep.subr.mxu0 0.0
        %4201 = vmatpush1.xpose.msra.mxu0 0.0
        %4202 = vmatprep.subr.mxu0 0.0
        %4203 = vmatpush1.xpose.msra.mxu0 0.0
        %4204 = vmatprep.subr.mxu0 0.0
        %4205 = vmatpush1.xpose.msra.mxu0 0.0
        %4206 = vmatprep.subr.mxu0 0.0
        %4207 = vmatpush1.xpose.msra.mxu0 0.0
        %4208 = vmatprep.subr.mxu0 0.0
        %4209 = vmatpush1.xpose.msra.mxu0 0.0
        %4210 = vmatprep.subr.mxu0 0.0
        %4211 = vmatpush1.xpose.msra.mxu0 0.0
        %4212 = vmatprep.subr.mxu0 0.0
        %4213 = vmatpush1.xpose.msra.mxu0 0.0
        %4214 = vmatprep.subr.mxu0 0.0
        %4215 = vmatpush1.xpose.msra.mxu0 0.0
        %4216 = vmatprep.subr.mxu0 0.0
        %4217 = vmatpush1.xpose.msra.mxu0 0.0
        %4218 = vmatprep.subr.mxu0 0.0
        %4219 = vmatpush1.xpose.msra.mxu0 0.0
        %4220 = vmatprep.subr.mxu0 0.0
        %4221 = vmatpush1.xpose.msra.mxu0 0.0
        %4222 = vmatprep.subr.mxu0 0.0
        %4223 = vmatpush1.xpose.msra.mxu0 0.0
        %4224 = vmatprep.subr.mxu0 0.0
        %4225 = vmatpush1.xpose.msra.mxu0 0.0
        %4226 = vmatprep.subr.mxu0 0.0
        %4227 = vmatpush1.xpose.msra.mxu0 0.0
        %4228 = vmatprep.subr.mxu0 0.0
        %4229 = vmatpush1.xpose.msra.mxu0 0.0
        %4230 = vmatprep.subr.mxu0 0.0
        %4231 = vmatpush1.xpose.msra.mxu0 0.0
        %4232 = vmatprep.subr.mxu0 0.0
        %4233 = vmatpush1.xpose.msra.mxu0 0.0
        %4234 = vmatprep.subr.mxu0 0.0
        %4235 = vmatpush1.xpose.msra.mxu0 0.0
        %4236 = vmatprep.subr.mxu0 0.0
        %4237 = vmatpush1.xpose.msra.mxu0 0.0
        %4238 = vmatprep.subr.mxu0 0.0
        %4239 = vmatpush1.xpose.msra.mxu0 0.0
        %4240 = vmatprep.mubr.f32.mxu0 0.0
        %4241 = vmatmul.mubr.f32.gmra.mrb[0].mxu0 %v4159
        %v4242 = vpop.f32.mrb[0].mxu0
        %v4243 = vadd.f32 0.0, %v4242
        %v4244 = vpop.f32.mrb[0].mxu0
        %4245 = vmatprep.mubr.f32.mxu0 0.0
        %4246 = vmatmul.mubr.f32.gmra.mrb[0].mxu0 %v4162
        %v4247 = vpop.f32.mrb[0].mxu0
        %v4248 = vadd.f32 0.0, %v4247
        %v4249 = vpop.f32.mrb[0].mxu0
        %4250 = vmatprep.mubr.f32.mxu0 0.0
        %4251 = vmatmul.mubr.f32.gmra.mrb[0].mxu0 %v4165
        %v4252 = vpop.f32.mrb[0].mxu0
        %v4253 = vadd.f32 0.0, %v4252
        %v4254 = vpop.f32.mrb[0].mxu0
        %4255 = vmatprep.mubr.f32.mxu0 0.0
        %4256 = vmatmul.mubr.f32.gmra.mrb[0].mxu0 %v4168
        %v4257 = vpop.f32.mrb[0].mxu0
        %v4258 = vadd.f32 0.0, %v4257
        %v4259 = vpop.f32.mrb[0].mxu0
        %4260 = vdwg.mxu0
        %v4262 = vsel %vm3941, %v4078, 0
        %v4265 = vsel %vm3941, %v4079, 0
        %v4268 = vsel %vm3941, %v4080, 0
        %v4271 = vsel %vm3941, %v4081, 0
        %v4274 = vsel %vm3941, %v4024, 0
        %v4277 = vsel %vm3941, %v4025, 0
        %4279 = vmatprep.subr.mxu0 0.0
        %4280 = vmatpush1.xpose.msra.mxu0 %v4274
        %4281 = vmatprep.subr.mxu0 0.0
        %4282 = vmatpush1.xpose.msra.mxu0 %v4277
        %4283 = vmatprep.subr.mxu0 0.0
        %4284 = vmatpush1.xpose.msra.mxu0 0.0
        %4285 = vmatprep.subr.mxu0 0.0
        %4286 = vmatpush1.xpose.msra.mxu0 0.0
        %4287 = vmatprep.subr.mxu0 0.0
        %4288 = vmatpush1.xpose.msra.mxu0 0.0
        %4289 = vmatprep.subr.mxu0 0.0
        %4290 = vmatpush1.xpose.msra.mxu0 0.0
        %4291 = vmatprep.subr.mxu0 0.0
        %4292 = vmatpush1.xpose.msra.mxu0 0.0
        %4293 = vmatprep.subr.mxu0 0.0
        %4294 = vmatpush1.xpose.msra.mxu0 0.0
        %4295 = vmatprep.subr.mxu0 0.0
        %4296 = vmatpush1.xpose.msra.mxu0 0.0
        %4297 = vmatprep.subr.mxu0 0.0
        %4298 = vmatpush1.xpose.msra.mxu0 0.0
        %4299 = vmatprep.subr.mxu0 0.0
        %4300 = vmatpush1.xpose.msra.mxu0 0.0
        %4301 = vmatprep.subr.mxu0 0.0
        %4302 = vmatpush1.xpose.msra.mxu0 0.0
        %4303 = vmatprep.subr.mxu0 0.0
        %4304 = vmatpush1.xpose.msra.mxu0 0.0
        %4305 = vmatprep.subr.mxu0 0.0
        %4306 = vmatpush1.xpose.msra.mxu0 0.0
        %4307 = vmatprep.subr.mxu0 0.0
        %4308 = vmatpush1.xpose.msra.mxu0 0.0
        %4309 = vmatprep.subr.mxu0 0.0
        %4310 = vmatpush1.xpose.msra.mxu0 0.0
        %4311 = vmatprep.subr.mxu0 0.0
        %4312 = vmatpush1.xpose.msra.mxu0 0.0
        %4313 = vmatprep.subr.mxu0 0.0
        %4314 = vmatpush1.xpose.msra.mxu0 0.0
        %4315 = vmatprep.subr.mxu0 0.0
        %4316 = vmatpush1.xpose.msra.mxu0 0.0
        %4317 = vmatprep.subr.mxu0 0.0
        %4318 = vmatpush1.xpose.msra.mxu0 0.0
        %4319 = vmatprep.subr.mxu0 0.0
        %4320 = vmatpush1.xpose.msra.mxu0 0.0
        %4321 = vmatprep.subr.mxu0 0.0
        %4322 = vmatpush1.xpose.msra.mxu0 0.0
        %4323 = vmatprep.subr.mxu0 0.0
        %4324 = vmatpush1.xpose.msra.mxu0 0.0
        %4325 = vmatprep.subr.mxu0 0.0
        %4326 = vmatpush1.xpose.msra.mxu0 0.0
        %4327 = vmatprep.subr.mxu0 0.0
        %4328 = vmatpush1.xpose.msra.mxu0 0.0
        %4329 = vmatprep.subr.mxu0 0.0
        %4330 = vmatpush1.xpose.msra.mxu0 0.0
        %4331 = vmatprep.subr.mxu0 0.0
        %4332 = vmatpush1.xpose.msra.mxu0 0.0
        %4333 = vmatprep.subr.mxu0 0.0
        %4334 = vmatpush1.xpose.msra.mxu0 0.0
        %4335 = vmatprep.subr.mxu0 0.0
        %4336 = vmatpush1.xpose.msra.mxu0 0.0
        %4337 = vmatprep.subr.mxu0 0.0
        %4338 = vmatpush1.xpose.msra.mxu0 0.0
        %4339 = vmatprep.subr.mxu0 0.0
        %4340 = vmatpush1.xpose.msra.mxu0 0.0
        %4341 = vmatprep.subr.mxu0 0.0
        %4342 = vmatpush1.xpose.msra.mxu0 0.0
        %4343 = vmatprep.mubr.f32.mxu0 0.0
        %4344 = vmatmul.mubr.f32.gmra.mrb[0].mxu0 %v4262
        %v4345 = vpop.f32.mrb[0].mxu0
        %v4346 = vadd.f32 0.0, %v4345
        %v4347 = vpop.f32.mrb[0].mxu0
        %4348 = vmatprep.mubr.f32.mxu0 0.0
        %4349 = vmatmul.mubr.f32.gmra.mrb[0].mxu0 %v4265
        %v4350 = vpop.f32.mrb[0].mxu0
        %v4351 = vadd.f32 0.0, %v4350
        %v4352 = vpop.f32.mrb[0].mxu0
        %4353 = vmatprep.mubr.f32.mxu0 0.0
        %4354 = vmatmul.mubr.f32.gmra.mrb[0].mxu0 %v4268
        %v4355 = vpop.f32.mrb[0].mxu0
        %v4356 = vadd.f32 0.0, %v4355
        %v4357 = vpop.f32.mrb[0].mxu0
        %4358 = vmatprep.mubr.f32.mxu0 0.0
        %4359 = vmatmul.mubr.f32.gmra.mrb[0].mxu0 %v4271
        %v4360 = vpop.f32.mrb[0].mxu0
        %v4361 = vadd.f32 0.0, %v4360
        %v4362 = vpop.f32.mrb[0].mxu0
        %4363 = vdwg.mxu0
        %v4365 = vsel %vm3941, %v4110, 0
        %v4368 = vsel %vm3941, %v4111, 0
        %v4371 = vsel %vm3941, %v4112, 0
        %v4374 = vsel %vm3941, %v4113, 0
        %v4377 = vsel %vm3941, %v4026, 0
        %v4380 = vsel %vm3941, %v4027, 0
        %4382 = vmatprep.subr.mxu0 0.0
        %4383 = vmatpush1.xpose.msra.mxu0 %v4377
        %4384 = vmatprep.subr.mxu0 0.0
        %4385 = vmatpush1.xpose.msra.mxu0 %v4380
        %4386 = vmatprep.subr.mxu0 0.0
        %4387 = vmatpush1.xpose.msra.mxu0 0.0
        %4388 = vmatprep.subr.mxu0 0.0
        %4389 = vmatpush1.xpose.msra.mxu0 0.0
        %4390 = vmatprep.subr.mxu0 0.0
        %4391 = vmatpush1.xpose.msra.mxu0 0.0
        %4392 = vmatprep.subr.mxu0 0.0
        %4393 = vmatpush1.xpose.msra.mxu0 0.0
        %4394 = vmatprep.subr.mxu0 0.0
        %4395 = vmatpush1.xpose.msra.mxu0 0.0
        %4396 = vmatprep.subr.mxu0 0.0
        %4397 = vmatpush1.xpose.msra.mxu0 0.0
        %4398 = vmatprep.subr.mxu0 0.0
        %4399 = vmatpush1.xpose.msra.mxu0 0.0
        %4400 = vmatprep.subr.mxu0 0.0
        %4401 = vmatpush1.xpose.msra.mxu0 0.0
        %4402 = vmatprep.subr.mxu0 0.0
        %4403 = vmatpush1.xpose.msra.mxu0 0.0
        %4404 = vmatprep.subr.mxu0 0.0
        %4405 = vmatpush1.xpose.msra.mxu0 0.0
        %4406 = vmatprep.subr.mxu0 0.0
        %4407 = vmatpush1.xpose.msra.mxu0 0.0
        %4408 = vmatprep.subr.mxu0 0.0
        %4409 = vmatpush1.xpose.msra.mxu0 0.0
        %4410 = vmatprep.subr.mxu0 0.0
        %4411 = vmatpush1.xpose.msra.mxu0 0.0
        %4412 = vmatprep.subr.mxu0 0.0
        %4413 = vmatpush1.xpose.msra.mxu0 0.0
        %4414 = vmatprep.subr.mxu0 0.0
        %4415 = vmatpush1.xpose.msra.mxu0 0.0
        %4416 = vmatprep.subr.mxu0 0.0
        %4417 = vmatpush1.xpose.msra.mxu0 0.0
        %4418 = vmatprep.subr.mxu0 0.0
        %4419 = vmatpush1.xpose.msra.mxu0 0.0
        %4420 = vmatprep.subr.mxu0 0.0
        %4421 = vmatpush1.xpose.msra.mxu0 0.0
        %4422 = vmatprep.subr.mxu0 0.0
        %4423 = vmatpush1.xpose.msra.mxu0 0.0
        %4424 = vmatprep.subr.mxu0 0.0
        %4425 = vmatpush1.xpose.msra.mxu0 0.0
        %4426 = vmatprep.subr.mxu0 0.0
        %4427 = vmatpush1.xpose.msra.mxu0 0.0
        %4428 = vmatprep.subr.mxu0 0.0
        %4429 = vmatpush1.xpose.msra.mxu0 0.0
        %4430 = vmatprep.subr.mxu0 0.0
        %4431 = vmatpush1.xpose.msra.mxu0 0.0
        %4432 = vmatprep.subr.mxu0 0.0
        %4433 = vmatpush1.xpose.msra.mxu0 0.0
        %4434 = vmatprep.subr.mxu0 0.0
        %4435 = vmatpush1.xpose.msra.mxu0 0.0
        %4436 = vmatprep.subr.mxu0 0.0
        %4437 = vmatpush1.xpose.msra.mxu0 0.0
        %4438 = vmatprep.subr.mxu0 0.0
        %4439 = vmatpush1.xpose.msra.mxu0 0.0
        %4440 = vmatprep.subr.mxu0 0.0
        %4441 = vmatpush1.xpose.msra.mxu0 0.0
        %4442 = vmatprep.subr.mxu0 0.0
        %4443 = vmatpush1.xpose.msra.mxu0 0.0
        %4444 = vmatprep.subr.mxu0 0.0
        %4445 = vmatpush1.xpose.msra.mxu0 0.0
        %4446 = vmatprep.mubr.f32.mxu0 0.0
        %4447 = vmatmul.mubr.f32.gmra.mrb[0].mxu0 %v4365
        %v4448 = vpop.f32.mrb[0].mxu0
        %v4449 = vadd.f32 0.0, %v4448
        %v4450 = vpop.f32.mrb[0].mxu0
        %4451 = vmatprep.mubr.f32.mxu0 0.0
        %4452 = vmatmul.mubr.f32.gmra.mrb[0].mxu0 %v4368
        %v4453 = vpop.f32.mrb[0].mxu0
        %v4454 = vadd.f32 0.0, %v4453
        %v4455 = vpop.f32.mrb[0].mxu0
        %4456 = vmatprep.mubr.f32.mxu0 0.0
        %4457 = vmatmul.mubr.f32.gmra.mrb[0].mxu0 %v4371
        %v4458 = vpop.f32.mrb[0].mxu0
        %v4459 = vadd.f32 0.0, %v4458
        %v4460 = vpop.f32.mrb[0].mxu0
        %4461 = vmatprep.mubr.f32.mxu0 0.0
        %4462 = vmatmul.mubr.f32.gmra.mrb[0].mxu0 %v4374
        %v4463 = vpop.f32.mrb[0].mxu0
        %v4464 = vadd.f32 0.0, %v4463
        %v4465 = vpop.f32.mrb[0].mxu0
        %4466 = vdwg.mxu0
        %v4468 = vsel %vm3941, %v4142, 0
        %v4471 = vsel %vm3941, %v4143, 0
        %v4474 = vsel %vm3941, %v4144, 0
        %v4477 = vsel %vm3941, %v4145, 0
        %v4480 = vsel %vm3941, %v4028, 0
        %v4483 = vsel %vm3941, %v4029, 0
        %4485 = vmatprep.subr.mxu0 0.0
        %4486 = vmatpush1.xpose.msra.mxu0 %v4480
        %4487 = vmatprep.subr.mxu0 0.0
        %4488 = vmatpush1.xpose.msra.mxu0 %v4483
        %4489 = vmatprep.subr.mxu0 0.0
        %4490 = vmatpush1.xpose.msra.mxu0 0.0
        %4491 = vmatprep.subr.mxu0 0.0
        %4492 = vmatpush1.xpose.msra.mxu0 0.0
        %4493 = vmatprep.subr.mxu0 0.0
        %4494 = vmatpush1.xpose.msra.mxu0 0.0
        %4495 = vmatprep.subr.mxu0 0.0
        %4496 = vmatpush1.xpose.msra.mxu0 0.0
        %4497 = vmatprep.subr.mxu0 0.0
        %4498 = vmatpush1.xpose.msra.mxu0 0.0
        %4499 = vmatprep.subr.mxu0 0.0
        %4500 = vmatpush1.xpose.msra.mxu0 0.0
        %4501 = vmatprep.subr.mxu0 0.0
        %4502 = vmatpush1.xpose.msra.mxu0 0.0
        %4503 = vmatprep.subr.mxu0 0.0
        %4504 = vmatpush1.xpose.msra.mxu0 0.0
        %4505 = vmatprep.subr.mxu0 0.0
        %4506 = vmatpush1.xpose.msra.mxu0 0.0
        %4507 = vmatprep.subr.mxu0 0.0
        %4508 = vmatpush1.xpose.msra.mxu0 0.0
        %4509 = vmatprep.subr.mxu0 0.0
        %4510 = vmatpush1.xpose.msra.mxu0 0.0
        %4511 = vmatprep.subr.mxu0 0.0
        %4512 = vmatpush1.xpose.msra.mxu0 0.0
        %4513 = vmatprep.subr.mxu0 0.0
        %4514 = vmatpush1.xpose.msra.mxu0 0.0
        %4515 = vmatprep.subr.mxu0 0.0
        %4516 = vmatpush1.xpose.msra.mxu0 0.0
        %4517 = vmatprep.subr.mxu0 0.0
        %4518 = vmatpush1.xpose.msra.mxu0 0.0
        %4519 = vmatprep.subr.mxu0 0.0
        %4520 = vmatpush1.xpose.msra.mxu0 0.0
        %4521 = vmatprep.subr.mxu0 0.0
        %4522 = vmatpush1.xpose.msra.mxu0 0.0
        %4523 = vmatprep.subr.mxu0 0.0
        %4524 = vmatpush1.xpose.msra.mxu0 0.0
        %4525 = vmatprep.subr.mxu0 0.0
        %4526 = vmatpush1.xpose.msra.mxu0 0.0
        %4527 = vmatprep.subr.mxu0 0.0
        %4528 = vmatpush1.xpose.msra.mxu0 0.0
        %4529 = vmatprep.subr.mxu0 0.0
        %4530 = vmatpush1.xpose.msra.mxu0 0.0
        %4531 = vmatprep.subr.mxu0 0.0
        %4532 = vmatpush1.xpose.msra.mxu0 0.0
        %4533 = vmatprep.subr.mxu0 0.0
        %4534 = vmatpush1.xpose.msra.mxu0 0.0
        %4535 = vmatprep.subr.mxu0 0.0
        %4536 = vmatpush1.xpose.msra.mxu0 0.0
        %4537 = vmatprep.subr.mxu0 0.0
        %4538 = vmatpush1.xpose.msra.mxu0 0.0
        %4539 = vmatprep.subr.mxu0 0.0
        %4540 = vmatpush1.xpose.msra.mxu0 0.0
        %4541 = vmatprep.subr.mxu0 0.0
        %4542 = vmatpush1.xpose.msra.mxu0 0.0
        %4543 = vmatprep.subr.mxu0 0.0
        %4544 = vmatpush1.xpose.msra.mxu0 0.0
        %4545 = vmatprep.subr.mxu0 0.0
        %4546 = vmatpush1.xpose.msra.mxu0 0.0
        %4547 = vmatprep.subr.mxu0 0.0
        %4548 = vmatpush1.xpose.msra.mxu0 0.0
        %4549 = vmatprep.mubr.f32.mxu0 0.0
        %4550 = vmatmul.mubr.f32.gmra.mrb[0].mxu0 %v4468
        %v4551 = vpop.f32.mrb[0].mxu0
        %v4552 = vadd.f32 0.0, %v4551
        %v4553 = vpop.f32.mrb[0].mxu0
        %4554 = vmatprep.mubr.f32.mxu0 0.0
        %4555 = vmatmul.mubr.f32.gmra.mrb[0].mxu0 %v4471
        %v4556 = vpop.f32.mrb[0].mxu0
        %v4557 = vadd.f32 0.0, %v4556
        %v4558 = vpop.f32.mrb[0].mxu0
        %4559 = vmatprep.mubr.f32.mxu0 0.0
        %4560 = vmatmul.mubr.f32.gmra.mrb[0].mxu0 %v4474
        %v4561 = vpop.f32.mrb[0].mxu0
        %v4562 = vadd.f32 0.0, %v4561
        %v4563 = vpop.f32.mrb[0].mxu0
        %4564 = vmatprep.mubr.f32.mxu0 0.0
        %4565 = vmatmul.mubr.f32.gmra.mrb[0].mxu0 %v4477
        %v4566 = vpop.f32.mrb[0].mxu0
        %v4567 = vadd.f32 0.0, %v4566
        %v4568 = vpop.f32.mrb[0].mxu0
        %4569 = vdwg.mxu0
        %4570 = vxpose.xlu0.b32.start [1/16] %v4243, 128
        %4571 = vxpose.xlu0.b32.cont [2/16] %v4248, 128
        %4572 = vxpose.xlu0.b32.cont [3/16] %v4253, 128
        %4573 = vxpose.xlu0.b32.cont [4/16] %v4258, 128
        %4574 = vxpose.xlu0.b32.cont [5/16] 0.0, 128
        %4575 = vxpose.xlu0.b32.cont [6/16] 0.0, 128
        %4576 = vxpose.xlu0.b32.cont [7/16] 0.0, 128
        %4577 = vxpose.xlu0.b32.cont [8/16] 0.0, 128
        %4578 = vxpose.xlu0.b32.cont [9/16] 0.0, 128
        %4579 = vxpose.xlu0.b32.cont [10/16] 0.0, 128
        %4580 = vxpose.xlu0.b32.cont [11/16] 0.0, 128
        %4581 = vxpose.xlu0.b32.cont [12/16] 0.0, 128
        %4582 = vxpose.xlu0.b32.cont [13/16] 0.0, 128
        %4583 = vxpose.xlu0.b32.cont [14/16] 0.0, 128
        %4584 = vxpose.xlu0.b32.cont [15/16] 0.0, 128
        %4585 = vxpose.xlu0.b32.end [16/16] 0.0, 128
        %v4586 = vpop.trf.xlu0
        %v4587 = vpop.trf.xlu0
        %v4588 = vpop.trf.xlu0
        %v4589 = vpop.trf.xlu0
        %v4590 = vpop.trf.xlu0
        %v4591 = vpop.trf.xlu0
        %v4592 = vpop.trf.xlu0
        %v4593 = vpop.trf.xlu0
        %v4594 = vpop.trf.xlu0
        %v4595 = vpop.trf.xlu0
        %v4596 = vpop.trf.xlu0
        %v4597 = vpop.trf.xlu0
        %v4598 = vpop.trf.xlu0
        %v4599 = vpop.trf.xlu0
        %v4600 = vpop.trf.xlu0
        %v4601 = vpop.trf.xlu0
        %4602 = vxpose.xlu0.b32.start [1/16] %v4346, 128
        %4603 = vxpose.xlu0.b32.cont [2/16] %v4351, 128
        %4604 = vxpose.xlu0.b32.cont [3/16] %v4356, 128
        %4605 = vxpose.xlu0.b32.cont [4/16] %v4361, 128
        %4606 = vxpose.xlu0.b32.cont [5/16] 0.0, 128
        %4607 = vxpose.xlu0.b32.cont [6/16] 0.0, 128
        %4608 = vxpose.xlu0.b32.cont [7/16] 0.0, 128
        %4609 = vxpose.xlu0.b32.cont [8/16] 0.0, 128
        %4610 = vxpose.xlu0.b32.cont [9/16] 0.0, 128
        %4611 = vxpose.xlu0.b32.cont [10/16] 0.0, 128
        %4612 = vxpose.xlu0.b32.cont [11/16] 0.0, 128
        %4613 = vxpose.xlu0.b32.cont [12/16] 0.0, 128
        %4614 = vxpose.xlu0.b32.cont [13/16] 0.0, 128
        %4615 = vxpose.xlu0.b32.cont [14/16] 0.0, 128
        %4616 = vxpose.xlu0.b32.cont [15/16] 0.0, 128
        %4617 = vxpose.xlu0.b32.end [16/16] 0.0, 128
        %v4618 = vpop.trf.xlu0
        %v4619 = vpop.trf.xlu0
        %v4620 = vpop.trf.xlu0
        %v4621 = vpop.trf.xlu0
        %v4622 = vpop.trf.xlu0
        %v4623 = vpop.trf.xlu0
        %v4624 = vpop.trf.xlu0
        %v4625 = vpop.trf.xlu0
        %v4626 = vpop.trf.xlu0
        %v4627 = vpop.trf.xlu0
        %v4628 = vpop.trf.xlu0
        %v4629 = vpop.trf.xlu0
        %v4630 = vpop.trf.xlu0
        %v4631 = vpop.trf.xlu0
        %v4632 = vpop.trf.xlu0
        %v4633 = vpop.trf.xlu0
        %4634 = vxpose.xlu0.b32.start [1/16] %v4449, 128
        %4635 = vxpose.xlu0.b32.cont [2/16] %v4454, 128
        %4636 = vxpose.xlu0.b32.cont [3/16] %v4459, 128
        %4637 = vxpose.xlu0.b32.cont [4/16] %v4464, 128
        %4638 = vxpose.xlu0.b32.cont [5/16] 0.0, 128
        %4639 = vxpose.xlu0.b32.cont [6/16] 0.0, 128
        %4640 = vxpose.xlu0.b32.cont [7/16] 0.0, 128
        %4641 = vxpose.xlu0.b32.cont [8/16] 0.0, 128
        %4642 = vxpose.xlu0.b32.cont [9/16] 0.0, 128
        %4643 = vxpose.xlu0.b32.cont [10/16] 0.0, 128
        %4644 = vxpose.xlu0.b32.cont [11/16] 0.0, 128
        %4645 = vxpose.xlu0.b32.cont [12/16] 0.0, 128
        %4646 = vxpose.xlu0.b32.cont [13/16] 0.0, 128
        %4647 = vxpose.xlu0.b32.cont [14/16] 0.0, 128
        %4648 = vxpose.xlu0.b32.cont [15/16] 0.0, 128
        %4649 = vxpose.xlu0.b32.end [16/16] 0.0, 128
        %v4650 = vpop.trf.xlu0
        %v4651 = vpop.trf.xlu0
        %v4652 = vpop.trf.xlu0
        %v4653 = vpop.trf.xlu0
        %v4654 = vpop.trf.xlu0
        %v4655 = vpop.trf.xlu0
        %v4656 = vpop.trf.xlu0
        %v4657 = vpop.trf.xlu0
        %v4658 = vpop.trf.xlu0
        %v4659 = vpop.trf.xlu0
        %v4660 = vpop.trf.xlu0
        %v4661 = vpop.trf.xlu0
        %v4662 = vpop.trf.xlu0
        %v4663 = vpop.trf.xlu0
        %v4664 = vpop.trf.xlu0
        %v4665 = vpop.trf.xlu0
        %4666 = vxpose.xlu0.b32.start [1/16] %v4552, 128
        %4667 = vxpose.xlu0.b32.cont [2/16] %v4557, 128
        %4668 = vxpose.xlu0.b32.cont [3/16] %v4562, 128
        %4669 = vxpose.xlu0.b32.cont [4/16] %v4567, 128
        %4670 = vxpose.xlu0.b32.cont [5/16] 0.0, 128
        %4671 = vxpose.xlu0.b32.cont [6/16] 0.0, 128
        %4672 = vxpose.xlu0.b32.cont [7/16] 0.0, 128
        %4673 = vxpose.xlu0.b32.cont [8/16] 0.0, 128
        %4674 = vxpose.xlu0.b32.cont [9/16] 0.0, 128
        %4675 = vxpose.xlu0.b32.cont [10/16] 0.0, 128
        %4676 = vxpose.xlu0.b32.cont [11/16] 0.0, 128
        %4677 = vxpose.xlu0.b32.cont [12/16] 0.0, 128
        %4678 = vxpose.xlu0.b32.cont [13/16] 0.0, 128
        %4679 = vxpose.xlu0.b32.cont [14/16] 0.0, 128
        %4680 = vxpose.xlu0.b32.cont [15/16] 0.0, 128
        %4681 = vxpose.xlu0.b32.end [16/16] 0.0, 128
        %v4682 = vpop.trf.xlu0
        %v4683 = vpop.trf.xlu0
        %v4684 = vpop.trf.xlu0
        %v4685 = vpop.trf.xlu0
        %v4686 = vpop.trf.xlu0
        %v4687 = vpop.trf.xlu0
        %v4688 = vpop.trf.xlu0
        %v4689 = vpop.trf.xlu0
        %v4690 = vpop.trf.xlu0
        %v4691 = vpop.trf.xlu0
        %v4692 = vpop.trf.xlu0
        %v4693 = vpop.trf.xlu0
        %v4694 = vpop.trf.xlu0
        %v4695 = vpop.trf.xlu0
        %v4696 = vpop.trf.xlu0
        %v4697 = vpop.trf.xlu0
        %v4698 = vcombine.low %v4586, %v4650
        %v4699 = vcombine.high %v4586, %v4650
        %v4701 = vunpack.c.l.s4 1983009808
        %v4702 = vunpack.c.0.s8 %v4701
        %v4703 = vlaneseq
        %v4704 = vshrl.u32 %v4703, 7
        %v4705 = vsub.s32 %v4702, %v4704
        %v4706 = vrot.slane %v4698, %v4705
        %v4708 = vunpack.c.l.s4 1983009808
        %v4709 = vunpack.c.0.s8 %v4708
        %v4710 = vlaneseq
        %v4711 = vshrl.u32 %v4710, 7
        %v4712 = vsub.s32 %v4709, %v4711
        %v4713 = vrot.slane %v4699, %v4712
        %v4714 = vcombine.low %v4618, %v4682
        %v4715 = vcombine.high %v4618, %v4682
        %v4717 = vunpack.c.l.s4 1983009808
        %v4718 = vunpack.c.0.s8 %v4717
        %v4719 = vlaneseq
        %v4720 = vshrl.u32 %v4719, 7
        %v4721 = vsub.s32 %v4718, %v4720
        %v4722 = vrot.slane %v4714, %v4721
        %v4724 = vunpack.c.l.s4 1983009808
        %v4725 = vunpack.c.0.s8 %v4724
        %v4726 = vlaneseq
        %v4727 = vshrl.u32 %v4726, 7
        %v4728 = vsub.s32 %v4725, %v4727
        %v4729 = vrot.slane %v4715, %v4728
        %v4730 = vcombine.low %v4706, %v4722
        %v4731 = vcombine.high %v4706, %v4722
        %v4733 = vunpack.c.l.s4 1934713408
        %v4734 = vunpack.c.0.s8 %v4733
        %v4735 = vlaneseq
        %v4736 = vshrl.u32 %v4735, 7
        %v4737 = vsub.s32 %v4734, %v4736
        %v4738 = vrot.slane %v4730, %v4737
        %v4740 = vunpack.c.l.s4 1934713408
        %v4741 = vunpack.c.0.s8 %v4740
        %v4742 = vlaneseq
        %v4743 = vshrl.u32 %v4742, 7
        %v4744 = vsub.s32 %v4741, %v4743
        %v4745 = vrot.slane %v4731, %v4744
        %v4746 = vcombine.low %v4713, %v4729
        %v4747 = vcombine.high %v4713, %v4729
        %v4749 = vunpack.c.l.s4 1934713408
        %v4750 = vunpack.c.0.s8 %v4749
        %v4751 = vlaneseq
        %v4752 = vshrl.u32 %v4751, 7
        %v4753 = vsub.s32 %v4750, %v4752
        %v4754 = vrot.slane %v4746, %v4753
        %v4756 = vunpack.c.l.s4 1934713408
        %v4757 = vunpack.c.0.s8 %v4756
        %v4758 = vlaneseq
        %v4759 = vshrl.u32 %v4758, 7
        %v4760 = vsub.s32 %v4757, %v4759
        %v4761 = vrot.slane %v4747, %v4760
        %v4762 = vcombine.high %v4738, 0.0
        %v4763 = vcombine.high %v4745, 0.0
        %v4764 = vcombine.high %v4754, 0.0
        %v4765 = vcombine.high %v4761, 0.0
        %v4766 = vcombine.low %v4587, %v4651
        %v4767 = vcombine.high %v4587, %v4651
        %v4769 = vunpack.c.l.s4 1983009808
        %v4770 = vunpack.c.0.s8 %v4769
        %v4771 = vlaneseq
        %v4772 = vshrl.u32 %v4771, 7
        %v4773 = vsub.s32 %v4770, %v4772
        %v4774 = vrot.slane %v4766, %v4773
        %v4776 = vunpack.c.l.s4 1983009808
        %v4777 = vunpack.c.0.s8 %v4776
        %v4778 = vlaneseq
        %v4779 = vshrl.u32 %v4778, 7
        %v4780 = vsub.s32 %v4777, %v4779
        %v4781 = vrot.slane %v4767, %v4780
        %v4782 = vcombine.low %v4619, %v4683
        %v4783 = vcombine.high %v4619, %v4683
        %v4785 = vunpack.c.l.s4 1983009808
        %v4786 = vunpack.c.0.s8 %v4785
        %v4787 = vlaneseq
        %v4788 = vshrl.u32 %v4787, 7
        %v4789 = vsub.s32 %v4786, %v4788
        %v4790 = vrot.slane %v4782, %v4789
        %v4792 = vunpack.c.l.s4 1983009808
        %v4793 = vunpack.c.0.s8 %v4792
        %v4794 = vlaneseq
        %v4795 = vshrl.u32 %v4794, 7
        %v4796 = vsub.s32 %v4793, %v4795
        %v4797 = vrot.slane %v4783, %v4796
        %v4798 = vcombine.low %v4774, %v4790
        %v4799 = vcombine.high %v4774, %v4790
        %v4801 = vunpack.c.l.s4 1934713408
        %v4802 = vunpack.c.0.s8 %v4801
        %v4803 = vlaneseq
        %v4804 = vshrl.u32 %v4803, 7
        %v4805 = vsub.s32 %v4802, %v4804
        %v4806 = vrot.slane %v4798, %v4805
        %v4808 = vunpack.c.l.s4 1934713408
        %v4809 = vunpack.c.0.s8 %v4808
        %v4810 = vlaneseq
        %v4811 = vshrl.u32 %v4810, 7
        %v4812 = vsub.s32 %v4809, %v4811
        %v4813 = vrot.slane %v4799, %v4812
        %v4814 = vcombine.low %v4781, %v4797
        %v4815 = vcombine.high %v4781, %v4797
        %v4817 = vunpack.c.l.s4 1934713408
        %v4818 = vunpack.c.0.s8 %v4817
        %v4819 = vlaneseq
        %v4820 = vshrl.u32 %v4819, 7
        %v4821 = vsub.s32 %v4818, %v4820
        %v4822 = vrot.slane %v4814, %v4821
        %v4824 = vunpack.c.l.s4 1934713408
        %v4825 = vunpack.c.0.s8 %v4824
        %v4826 = vlaneseq
        %v4827 = vshrl.u32 %v4826, 7
        %v4828 = vsub.s32 %v4825, %v4827
        %v4829 = vrot.slane %v4815, %v4828
        %v4830 = vcombine.high %v4806, 0.0
        %v4831 = vcombine.high %v4813, 0.0
        %v4832 = vcombine.high %v4822, 0.0
        %v4833 = vcombine.high %v4829, 0.0
        %v4834 = vcombine.low %v4022, %v4026
        %v4835 = vcombine.high %v4022, %v4026
        %v4837 = vunpack.c.l.s4 1983009808
        %v4838 = vunpack.c.0.s8 %v4837
        %v4839 = vlaneseq
        %v4840 = vshrl.u32 %v4839, 7
        %v4841 = vsub.s32 %v4838, %v4840
        %v4842 = vrot.slane %v4834, %v4841
        %v4844 = vunpack.c.l.s4 1983009808
        %v4845 = vunpack.c.0.s8 %v4844
        %v4846 = vlaneseq
        %v4847 = vshrl.u32 %v4846, 7
        %v4848 = vsub.s32 %v4845, %v4847
        %v4849 = vrot.slane %v4835, %v4848
        %v4850 = vcombine.low %v4024, %v4028
        %v4851 = vcombine.high %v4024, %v4028
        %v4853 = vunpack.c.l.s4 1983009808
        %v4854 = vunpack.c.0.s8 %v4853
        %v4855 = vlaneseq
        %v4856 = vshrl.u32 %v4855, 7
        %v4857 = vsub.s32 %v4854, %v4856
        %v4858 = vrot.slane %v4850, %v4857
        %v4860 = vunpack.c.l.s4 1983009808
        %v4861 = vunpack.c.0.s8 %v4860
        %v4862 = vlaneseq
        %v4863 = vshrl.u32 %v4862, 7
        %v4864 = vsub.s32 %v4861, %v4863
        %v4865 = vrot.slane %v4851, %v4864
        %v4866 = vcombine.low %v4842, %v4858
        %v4867 = vcombine.high %v4842, %v4858
        %v4869 = vunpack.c.l.s4 1934713408
        %v4870 = vunpack.c.0.s8 %v4869
        %v4871 = vlaneseq
        %v4872 = vshrl.u32 %v4871, 7
        %v4873 = vsub.s32 %v4870, %v4872
        %v4874 = vrot.slane %v4866, %v4873
        %v4876 = vunpack.c.l.s4 1934713408
        %v4877 = vunpack.c.0.s8 %v4876
        %v4878 = vlaneseq
        %v4879 = vshrl.u32 %v4878, 7
        %v4880 = vsub.s32 %v4877, %v4879
        %v4881 = vrot.slane %v4867, %v4880
        %v4882 = vcombine.low %v4849, %v4865
        %v4883 = vcombine.high %v4849, %v4865
        %v4885 = vunpack.c.l.s4 1934713408
        %v4886 = vunpack.c.0.s8 %v4885
        %v4887 = vlaneseq
        %v4888 = vshrl.u32 %v4887, 7
        %v4889 = vsub.s32 %v4886, %v4888
        %v4890 = vrot.slane %v4882, %v4889
        %v4892 = vunpack.c.l.s4 1934713408
        %v4893 = vunpack.c.0.s8 %v4892
        %v4894 = vlaneseq
        %v4895 = vshrl.u32 %v4894, 7
        %v4896 = vsub.s32 %v4893, %v4895
        %v4897 = vrot.slane %v4883, %v4896
        %v4898 = vcombine.high %v4874, 0.0
        %v4899 = vcombine.high %v4881, 0.0
        %v4900 = vcombine.high %v4890, 0.0
        %v4901 = vcombine.high %v4897, 0.0
        %v4902 = vcombine.low %v4023, %v4027
        %v4903 = vcombine.high %v4023, %v4027
        %v4905 = vunpack.c.l.s4 1983009808
        %v4906 = vunpack.c.0.s8 %v4905
        %v4907 = vlaneseq
        %v4908 = vshrl.u32 %v4907, 7
        %v4909 = vsub.s32 %v4906, %v4908
        %v4910 = vrot.slane %v4902, %v4909
        %v4912 = vunpack.c.l.s4 1983009808
        %v4913 = vunpack.c.0.s8 %v4912
        %v4914 = vlaneseq
        %v4915 = vshrl.u32 %v4914, 7
        %v4916 = vsub.s32 %v4913, %v4915
        %v4917 = vrot.slane %v4903, %v4916
        %v4918 = vcombine.low %v4025, %v4029
        %v4919 = vcombine.high %v4025, %v4029
        %v4921 = vunpack.c.l.s4 1983009808
        %v4922 = vunpack.c.0.s8 %v4921
        %v4923 = vlaneseq
        %v4924 = vshrl.u32 %v4923, 7
        %v4925 = vsub.s32 %v4922, %v4924
        %v4926 = vrot.slane %v4918, %v4925
        %v4928 = vunpack.c.l.s4 1983009808
        %v4929 = vunpack.c.0.s8 %v4928
        %v4930 = vlaneseq
        %v4931 = vshrl.u32 %v4930, 7
        %v4932 = vsub.s32 %v4929, %v4931
        %v4933 = vrot.slane %v4919, %v4932
        %v4934 = vcombine.low %v4910, %v4926
        %v4935 = vcombine.high %v4910, %v4926
        %v4937 = vunpack.c.l.s4 1934713408
        %v4938 = vunpack.c.0.s8 %v4937
        %v4939 = vlaneseq
        %v4940 = vshrl.u32 %v4939, 7
        %v4941 = vsub.s32 %v4938, %v4940
        %v4942 = vrot.slane %v4934, %v4941
        %v4944 = vunpack.c.l.s4 1934713408
        %v4945 = vunpack.c.0.s8 %v4944
        %v4946 = vlaneseq
        %v4947 = vshrl.u32 %v4946, 7
        %v4948 = vsub.s32 %v4945, %v4947
        %v4949 = vrot.slane %v4935, %v4948
        %v4950 = vcombine.low %v4917, %v4933
        %v4951 = vcombine.high %v4917, %v4933
        %v4953 = vunpack.c.l.s4 1934713408
        %v4954 = vunpack.c.0.s8 %v4953
        %v4955 = vlaneseq
        %v4956 = vshrl.u32 %v4955, 7
        %v4957 = vsub.s32 %v4954, %v4956
        %v4958 = vrot.slane %v4950, %v4957
        %v4960 = vunpack.c.l.s4 1934713408
        %v4961 = vunpack.c.0.s8 %v4960
        %v4962 = vlaneseq
        %v4963 = vshrl.u32 %v4962, 7
        %v4964 = vsub.s32 %v4961, %v4963
        %v4965 = vrot.slane %v4951, %v4964
        %v4966 = vcombine.high %v4942, 0.0
        %v4967 = vcombine.high %v4949, 0.0
        %v4968 = vcombine.high %v4958, 0.0
        %v4969 = vcombine.high %v4965, 0.0
        %v4971 = vsel %vm3941, %v4874, 0
        %4973 = vmatprep.subr.mxu0 0.0
        %4974 = vmatpush1.msra.mxu0 %v862
        %4975 = vmatprep.subr.mxu0 0.0
        %4976 = vmatpush1.msra.mxu0 %v863
        %4977 = vmatprep.subr.mxu0 0.0
        %4978 = vmatpush1.msra.mxu0 0.0
        %4979 = vmatprep.subr.mxu0 0.0
        %4980 = vmatpush1.msra.mxu0 0.0
        %4981 = vmatprep.subr.mxu0 0.0
        %4982 = vmatpush1.msra.mxu0 0.0
        %4983 = vmatprep.subr.mxu0 0.0
        %4984 = vmatpush1.msra.mxu0 0.0
        %4985 = vmatprep.subr.mxu0 0.0
        %4986 = vmatpush1.msra.mxu0 0.0
        %4987 = vmatprep.subr.mxu0 0.0
        %4988 = vmatpush1.msra.mxu0 0.0
        %4989 = vmatprep.subr.mxu0 0.0
        %4990 = vmatpush1.msra.mxu0 0.0
        %4991 = vmatprep.subr.mxu0 0.0
        %4992 = vmatpush1.msra.mxu0 0.0
        %4993 = vmatprep.subr.mxu0 0.0
        %4994 = vmatpush1.msra.mxu0 0.0
        %4995 = vmatprep.subr.mxu0 0.0
        %4996 = vmatpush1.msra.mxu0 0.0
        %4997 = vmatprep.subr.mxu0 0.0
        %4998 = vmatpush1.msra.mxu0 0.0
        %4999 = vmatprep.subr.mxu0 0.0
        %5000 = vmatpush1.msra.mxu0 0.0
        %5001 = vmatprep.subr.mxu0 0.0
        %5002 = vmatpush1.msra.mxu0 0.0
        %5003 = vmatprep.subr.mxu0 0.0
        %5004 = vmatpush1.msra.mxu0 0.0
        %5005 = vmatprep.subr.mxu0 0.0
        %5006 = vmatpush1.msra.mxu0 0.0
        %5007 = vmatprep.subr.mxu0 0.0
        %5008 = vmatpush1.msra.mxu0 0.0
        %5009 = vmatprep.subr.mxu0 0.0
        %5010 = vmatpush1.msra.mxu0 0.0
        %5011 = vmatprep.subr.mxu0 0.0
        %5012 = vmatpush1.msra.mxu0 0.0
        %5013 = vmatprep.subr.mxu0 0.0
        %5014 = vmatpush1.msra.mxu0 0.0
        %5015 = vmatprep.subr.mxu0 0.0
        %5016 = vmatpush1.msra.mxu0 0.0
        %5017 = vmatprep.subr.mxu0 0.0
        %5018 = vmatpush1.msra.mxu0 0.0
        %5019 = vmatprep.subr.mxu0 0.0
        %5020 = vmatpush1.msra.mxu0 0.0
        %5021 = vmatprep.subr.mxu0 0.0
        %5022 = vmatpush1.msra.mxu0 0.0
        %5023 = vmatprep.subr.mxu0 0.0
        %5024 = vmatpush1.msra.mxu0 0.0
        %5025 = vmatprep.subr.mxu0 0.0
        %5026 = vmatpush1.msra.mxu0 0.0
        %5027 = vmatprep.subr.mxu0 0.0
        %5028 = vmatpush1.msra.mxu0 0.0
        %5029 = vmatprep.subr.mxu0 0.0
        %5030 = vmatpush1.msra.mxu0 0.0
        %5031 = vmatprep.subr.mxu0 0.0
        %5032 = vmatpush1.msra.mxu0 0.0
        %5033 = vmatprep.subr.mxu0 0.0
        %5034 = vmatpush1.msra.mxu0 0.0
        %5035 = vmatprep.subr.mxu0 0.0
        %5036 = vmatpush1.msra.mxu0 0.0
        %5037 = vmatprep.mubr.f32.mxu0 0.0
        %5038 = vmatmul.mubr.f32.gmra.mrb[0].mxu0 %v4971
        %v5039 = vpop.f32.mrb[0].mxu0
        %v5040 = vadd.f32 0.0, %v5039
        %v5041 = vpop.f32.mrb[0].mxu0
        %5042 = vdwg.mxu0
        %v5044 = vsel %vm3941, %v4898, 0
        %5046 = vmatprep.subr.mxu0 0.0
        %5047 = vmatpush1.msra.mxu0 %v864
        %5048 = vmatprep.subr.mxu0 0.0
        %5049 = vmatpush1.msra.mxu0 %v865
        %5050 = vmatprep.subr.mxu0 0.0
        %5051 = vmatpush1.msra.mxu0 0.0
        %5052 = vmatprep.subr.mxu0 0.0
        %5053 = vmatpush1.msra.mxu0 0.0
        %5054 = vmatprep.subr.mxu0 0.0
        %5055 = vmatpush1.msra.mxu0 0.0
        %5056 = vmatprep.subr.mxu0 0.0
        %5057 = vmatpush1.msra.mxu0 0.0
        %5058 = vmatprep.subr.mxu0 0.0
        %5059 = vmatpush1.msra.mxu0 0.0
        %5060 = vmatprep.subr.mxu0 0.0
        %5061 = vmatpush1.msra.mxu0 0.0
        %5062 = vmatprep.subr.mxu0 0.0
        %5063 = vmatpush1.msra.mxu0 0.0
        %5064 = vmatprep.subr.mxu0 0.0
        %5065 = vmatpush1.msra.mxu0 0.0
        %5066 = vmatprep.subr.mxu0 0.0
        %5067 = vmatpush1.msra.mxu0 0.0
        %5068 = vmatprep.subr.mxu0 0.0
        %5069 = vmatpush1.msra.mxu0 0.0
        %5070 = vmatprep.subr.mxu0 0.0
        %5071 = vmatpush1.msra.mxu0 0.0
        %5072 = vmatprep.subr.mxu0 0.0
        %5073 = vmatpush1.msra.mxu0 0.0
        %5074 = vmatprep.subr.mxu0 0.0
        %5075 = vmatpush1.msra.mxu0 0.0
        %5076 = vmatprep.subr.mxu0 0.0
        %5077 = vmatpush1.msra.mxu0 0.0
        %5078 = vmatprep.subr.mxu0 0.0
        %5079 = vmatpush1.msra.mxu0 0.0
        %5080 = vmatprep.subr.mxu0 0.0
        %5081 = vmatpush1.msra.mxu0 0.0
        %5082 = vmatprep.subr.mxu0 0.0
        %5083 = vmatpush1.msra.mxu0 0.0
        %5084 = vmatprep.subr.mxu0 0.0
        %5085 = vmatpush1.msra.mxu0 0.0
        %5086 = vmatprep.subr.mxu0 0.0
        %5087 = vmatpush1.msra.mxu0 0.0
        %5088 = vmatprep.subr.mxu0 0.0
        %5089 = vmatpush1.msra.mxu0 0.0
        %5090 = vmatprep.subr.mxu0 0.0
        %5091 = vmatpush1.msra.mxu0 0.0
        %5092 = vmatprep.subr.mxu0 0.0
        %5093 = vmatpush1.msra.mxu0 0.0
        %5094 = vmatprep.subr.mxu0 0.0
        %5095 = vmatpush1.msra.mxu0 0.0
        %5096 = vmatprep.subr.mxu0 0.0
        %5097 = vmatpush1.msra.mxu0 0.0
        %5098 = vmatprep.subr.mxu0 0.0
        %5099 = vmatpush1.msra.mxu0 0.0
        %5100 = vmatprep.subr.mxu0 0.0
        %5101 = vmatpush1.msra.mxu0 0.0
        %5102 = vmatprep.subr.mxu0 0.0
        %5103 = vmatpush1.msra.mxu0 0.0
        %5104 = vmatprep.subr.mxu0 0.0
        %5105 = vmatpush1.msra.mxu0 0.0
        %5106 = vmatprep.subr.mxu0 0.0
        %5107 = vmatpush1.msra.mxu0 0.0
        %5108 = vmatprep.subr.mxu0 0.0
        %5109 = vmatpush1.msra.mxu0 0.0
        %5110 = vmatprep.mubr.f32.mxu0 0.0
        %5111 = vmatmul.mubr.f32.gmra.mrb[0].mxu0 %v5044
        %v5112 = vpop.f32.mrb[0].mxu0
        %v5113 = vadd.f32 0.0, %v5112
        %v5114 = vpop.f32.mrb[0].mxu0
        %5115 = vdwg.mxu0
        %v5117 = vsel %vm3941, %v4881, 0
        %5119 = vmatprep.subr.mxu0 0.0
        %5120 = vmatpush1.msra.mxu0 %v866
        %5121 = vmatprep.subr.mxu0 0.0
        %5122 = vmatpush1.msra.mxu0 %v867
        %5123 = vmatprep.subr.mxu0 0.0
        %5124 = vmatpush1.msra.mxu0 0.0
        %5125 = vmatprep.subr.mxu0 0.0
        %5126 = vmatpush1.msra.mxu0 0.0
        %5127 = vmatprep.subr.mxu0 0.0
        %5128 = vmatpush1.msra.mxu0 0.0
        %5129 = vmatprep.subr.mxu0 0.0
        %5130 = vmatpush1.msra.mxu0 0.0
        %5131 = vmatprep.subr.mxu0 0.0
        %5132 = vmatpush1.msra.mxu0 0.0
        %5133 = vmatprep.subr.mxu0 0.0
        %5134 = vmatpush1.msra.mxu0 0.0
        %5135 = vmatprep.subr.mxu0 0.0
        %5136 = vmatpush1.msra.mxu0 0.0
        %5137 = vmatprep.subr.mxu0 0.0
        %5138 = vmatpush1.msra.mxu0 0.0
        %5139 = vmatprep.subr.mxu0 0.0
        %5140 = vmatpush1.msra.mxu0 0.0
        %5141 = vmatprep.subr.mxu0 0.0
        %5142 = vmatpush1.msra.mxu0 0.0
        %5143 = vmatprep.subr.mxu0 0.0
        %5144 = vmatpush1.msra.mxu0 0.0
        %5145 = vmatprep.subr.mxu0 0.0
        %5146 = vmatpush1.msra.mxu0 0.0
        %5147 = vmatprep.subr.mxu0 0.0
        %5148 = vmatpush1.msra.mxu0 0.0
        %5149 = vmatprep.subr.mxu0 0.0
        %5150 = vmatpush1.msra.mxu0 0.0
        %5151 = vmatprep.subr.mxu0 0.0
        %5152 = vmatpush1.msra.mxu0 0.0
        %5153 = vmatprep.subr.mxu0 0.0
        %5154 = vmatpush1.msra.mxu0 0.0
        %5155 = vmatprep.subr.mxu0 0.0
        %5156 = vmatpush1.msra.mxu0 0.0
        %5157 = vmatprep.subr.mxu0 0.0
        %5158 = vmatpush1.msra.mxu0 0.0
        %5159 = vmatprep.subr.mxu0 0.0
        %5160 = vmatpush1.msra.mxu0 0.0
        %5161 = vmatprep.subr.mxu0 0.0
        %5162 = vmatpush1.msra.mxu0 0.0
        %5163 = vmatprep.subr.mxu0 0.0
        %5164 = vmatpush1.msra.mxu0 0.0
        %5165 = vmatprep.subr.mxu0 0.0
        %5166 = vmatpush1.msra.mxu0 0.0
        %5167 = vmatprep.subr.mxu0 0.0
        %5168 = vmatpush1.msra.mxu0 0.0
        %5169 = vmatprep.subr.mxu0 0.0
        %5170 = vmatpush1.msra.mxu0 0.0
        %5171 = vmatprep.subr.mxu0 0.0
        %5172 = vmatpush1.msra.mxu0 0.0
        %5173 = vmatprep.subr.mxu0 0.0
        %5174 = vmatpush1.msra.mxu0 0.0
        %5175 = vmatprep.subr.mxu0 0.0
        %5176 = vmatpush1.msra.mxu0 0.0
        %5177 = vmatprep.subr.mxu0 0.0
        %5178 = vmatpush1.msra.mxu0 0.0
        %5179 = vmatprep.subr.mxu0 0.0
        %5180 = vmatpush1.msra.mxu0 0.0
        %5181 = vmatprep.subr.mxu0 0.0
        %5182 = vmatpush1.msra.mxu0 0.0
        %5183 = vmatprep.mubr.f32.mxu0 0.0
        %5184 = vmatmul.mubr.f32.gmra.mrb[0].mxu0 %v5117
        %v5185 = vpop.f32.mrb[0].mxu0
        %v5186 = vadd.f32 0.0, %v5185
        %v5187 = vpop.f32.mrb[0].mxu0
        %5188 = vdwg.mxu0
        %v5190 = vsel %vm3941, %v4899, 0
        %5192 = vmatprep.subr.mxu0 0.0
        %5193 = vmatpush1.msra.mxu0 %v868
        %5194 = vmatprep.subr.mxu0 0.0
        %5195 = vmatpush1.msra.mxu0 %v869
        %5196 = vmatprep.subr.mxu0 0.0
        %5197 = vmatpush1.msra.mxu0 0.0
        %5198 = vmatprep.subr.mxu0 0.0
        %5199 = vmatpush1.msra.mxu0 0.0
        %5200 = vmatprep.subr.mxu0 0.0
        %5201 = vmatpush1.msra.mxu0 0.0
        %5202 = vmatprep.subr.mxu0 0.0
        %5203 = vmatpush1.msra.mxu0 0.0
        %5204 = vmatprep.subr.mxu0 0.0
        %5205 = vmatpush1.msra.mxu0 0.0
        %5206 = vmatprep.subr.mxu0 0.0
        %5207 = vmatpush1.msra.mxu0 0.0
        %5208 = vmatprep.subr.mxu0 0.0
        %5209 = vmatpush1.msra.mxu0 0.0
        %5210 = vmatprep.subr.mxu0 0.0
        %5211 = vmatpush1.msra.mxu0 0.0
        %5212 = vmatprep.subr.mxu0 0.0
        %5213 = vmatpush1.msra.mxu0 0.0
        %5214 = vmatprep.subr.mxu0 0.0
        %5215 = vmatpush1.msra.mxu0 0.0
        %5216 = vmatprep.subr.mxu0 0.0
        %5217 = vmatpush1.msra.mxu0 0.0
        %5218 = vmatprep.subr.mxu0 0.0
        %5219 = vmatpush1.msra.mxu0 0.0
        %5220 = vmatprep.subr.mxu0 0.0
        %5221 = vmatpush1.msra.mxu0 0.0
        %5222 = vmatprep.subr.mxu0 0.0
        %5223 = vmatpush1.msra.mxu0 0.0
        %5224 = vmatprep.subr.mxu0 0.0
        %5225 = vmatpush1.msra.mxu0 0.0
        %5226 = vmatprep.subr.mxu0 0.0
        %5227 = vmatpush1.msra.mxu0 0.0
        %5228 = vmatprep.subr.mxu0 0.0
        %5229 = vmatpush1.msra.mxu0 0.0
        %5230 = vmatprep.subr.mxu0 0.0
        %5231 = vmatpush1.msra.mxu0 0.0
        %5232 = vmatprep.subr.mxu0 0.0
        %5233 = vmatpush1.msra.mxu0 0.0
        %5234 = vmatprep.subr.mxu0 0.0
        %5235 = vmatpush1.msra.mxu0 0.0
        %5236 = vmatprep.subr.mxu0 0.0
        %5237 = vmatpush1.msra.mxu0 0.0
        %5238 = vmatprep.subr.mxu0 0.0
        %5239 = vmatpush1.msra.mxu0 0.0
        %5240 = vmatprep.subr.mxu0 0.0
        %5241 = vmatpush1.msra.mxu0 0.0
        %5242 = vmatprep.subr.mxu0 0.0
        %5243 = vmatpush1.msra.mxu0 0.0
        %5244 = vmatprep.subr.mxu0 0.0
        %5245 = vmatpush1.msra.mxu0 0.0
        %5246 = vmatprep.subr.mxu0 0.0
        %5247 = vmatpush1.msra.mxu0 0.0
        %5248 = vmatprep.subr.mxu0 0.0
        %5249 = vmatpush1.msra.mxu0 0.0
        %5250 = vmatprep.subr.mxu0 0.0
        %5251 = vmatpush1.msra.mxu0 0.0
        %5252 = vmatprep.subr.mxu0 0.0
        %5253 = vmatpush1.msra.mxu0 0.0
        %5254 = vmatprep.subr.mxu0 0.0
        %5255 = vmatpush1.msra.mxu0 0.0
        %5256 = vmatprep.mubr.f32.mxu0 0.0
        %5257 = vmatmul.mubr.f32.gmra.mrb[0].mxu0 %v5190
        %v5258 = vpop.f32.mrb[0].mxu0
        %v5259 = vadd.f32 0.0, %v5258
        %v5260 = vpop.f32.mrb[0].mxu0
        %5261 = vdwg.mxu0
        %v5263 = vsel %vm3941, %v4890, 0
        %5265 = vmatprep.subr.mxu0 0.0
        %5266 = vmatpush1.msra.mxu0 %v870
        %5267 = vmatprep.subr.mxu0 0.0
        %5268 = vmatpush1.msra.mxu0 %v871
        %5269 = vmatprep.subr.mxu0 0.0
        %5270 = vmatpush1.msra.mxu0 0.0
        %5271 = vmatprep.subr.mxu0 0.0
        %5272 = vmatpush1.msra.mxu0 0.0
        %5273 = vmatprep.subr.mxu0 0.0
        %5274 = vmatpush1.msra.mxu0 0.0
        %5275 = vmatprep.subr.mxu0 0.0
        %5276 = vmatpush1.msra.mxu0 0.0
        %5277 = vmatprep.subr.mxu0 0.0
        %5278 = vmatpush1.msra.mxu0 0.0
        %5279 = vmatprep.subr.mxu0 0.0
        %5280 = vmatpush1.msra.mxu0 0.0
        %5281 = vmatprep.subr.mxu0 0.0
        %5282 = vmatpush1.msra.mxu0 0.0
        %5283 = vmatprep.subr.mxu0 0.0
        %5284 = vmatpush1.msra.mxu0 0.0
        %5285 = vmatprep.subr.mxu0 0.0
        %5286 = vmatpush1.msra.mxu0 0.0
        %5287 = vmatprep.subr.mxu0 0.0
        %5288 = vmatpush1.msra.mxu0 0.0
        %5289 = vmatprep.subr.mxu0 0.0
        %5290 = vmatpush1.msra.mxu0 0.0
        %5291 = vmatprep.subr.mxu0 0.0
        %5292 = vmatpush1.msra.mxu0 0.0
        %5293 = vmatprep.subr.mxu0 0.0
        %5294 = vmatpush1.msra.mxu0 0.0
        %5295 = vmatprep.subr.mxu0 0.0
        %5296 = vmatpush1.msra.mxu0 0.0
        %5297 = vmatprep.subr.mxu0 0.0
        %5298 = vmatpush1.msra.mxu0 0.0
        %5299 = vmatprep.subr.mxu0 0.0
        %5300 = vmatpush1.msra.mxu0 0.0
        %5301 = vmatprep.subr.mxu0 0.0
        %5302 = vmatpush1.msra.mxu0 0.0
        %5303 = vmatprep.subr.mxu0 0.0
        %5304 = vmatpush1.msra.mxu0 0.0
        %5305 = vmatprep.subr.mxu0 0.0
        %5306 = vmatpush1.msra.mxu0 0.0
        %5307 = vmatprep.subr.mxu0 0.0
        %5308 = vmatpush1.msra.mxu0 0.0
        %5309 = vmatprep.subr.mxu0 0.0
        %5310 = vmatpush1.msra.mxu0 0.0
        %5311 = vmatprep.subr.mxu0 0.0
        %5312 = vmatpush1.msra.mxu0 0.0
        %5313 = vmatprep.subr.mxu0 0.0
        %5314 = vmatpush1.msra.mxu0 0.0
        %5315 = vmatprep.subr.mxu0 0.0
        %5316 = vmatpush1.msra.mxu0 0.0
        %5317 = vmatprep.subr.mxu0 0.0
        %5318 = vmatpush1.msra.mxu0 0.0
        %5319 = vmatprep.subr.mxu0 0.0
        %5320 = vmatpush1.msra.mxu0 0.0
        %5321 = vmatprep.subr.mxu0 0.0
        %5322 = vmatpush1.msra.mxu0 0.0
        %5323 = vmatprep.subr.mxu0 0.0
        %5324 = vmatpush1.msra.mxu0 0.0
        %5325 = vmatprep.subr.mxu0 0.0
        %5326 = vmatpush1.msra.mxu0 0.0
        %5327 = vmatprep.subr.mxu0 0.0
        %5328 = vmatpush1.msra.mxu0 0.0
        %5329 = vmatprep.mubr.f32.mxu0 0.0
        %5330 = vmatmul.mubr.f32.gmra.mrb[0].mxu0 %v5263
        %v5331 = vpop.f32.mrb[0].mxu0
        %v5332 = vadd.f32 0.0, %v5331
        %v5333 = vpop.f32.mrb[0].mxu0
        %5334 = vdwg.mxu0
        %v5336 = vsel %vm3941, %v4900, 0
        %5338 = vmatprep.subr.mxu0 0.0
        %5339 = vmatpush1.msra.mxu0 %v872
        %5340 = vmatprep.subr.mxu0 0.0
        %5341 = vmatpush1.msra.mxu0 %v873
        %5342 = vmatprep.subr.mxu0 0.0
        %5343 = vmatpush1.msra.mxu0 0.0
        %5344 = vmatprep.subr.mxu0 0.0
        %5345 = vmatpush1.msra.mxu0 0.0
        %5346 = vmatprep.subr.mxu0 0.0
        %5347 = vmatpush1.msra.mxu0 0.0
        %5348 = vmatprep.subr.mxu0 0.0
        %5349 = vmatpush1.msra.mxu0 0.0
        %5350 = vmatprep.subr.mxu0 0.0
        %5351 = vmatpush1.msra.mxu0 0.0
        %5352 = vmatprep.subr.mxu0 0.0
        %5353 = vmatpush1.msra.mxu0 0.0
        %5354 = vmatprep.subr.mxu0 0.0
        %5355 = vmatpush1.msra.mxu0 0.0
        %5356 = vmatprep.subr.mxu0 0.0
        %5357 = vmatpush1.msra.mxu0 0.0
        %5358 = vmatprep.subr.mxu0 0.0
        %5359 = vmatpush1.msra.mxu0 0.0
        %5360 = vmatprep.subr.mxu0 0.0
        %5361 = vmatpush1.msra.mxu0 0.0
        %5362 = vmatprep.subr.mxu0 0.0
        %5363 = vmatpush1.msra.mxu0 0.0
        %5364 = vmatprep.subr.mxu0 0.0
        %5365 = vmatpush1.msra.mxu0 0.0
        %5366 = vmatprep.subr.mxu0 0.0
        %5367 = vmatpush1.msra.mxu0 0.0
        %5368 = vmatprep.subr.mxu0 0.0
        %5369 = vmatpush1.msra.mxu0 0.0
        %5370 = vmatprep.subr.mxu0 0.0
        %5371 = vmatpush1.msra.mxu0 0.0
        %5372 = vmatprep.subr.mxu0 0.0
        %5373 = vmatpush1.msra.mxu0 0.0
        %5374 = vmatprep.subr.mxu0 0.0
        %5375 = vmatpush1.msra.mxu0 0.0
        %5376 = vmatprep.subr.mxu0 0.0
        %5377 = vmatpush1.msra.mxu0 0.0
        %5378 = vmatprep.subr.mxu0 0.0
        %5379 = vmatpush1.msra.mxu0 0.0
        %5380 = vmatprep.subr.mxu0 0.0
        %5381 = vmatpush1.msra.mxu0 0.0
        %5382 = vmatprep.subr.mxu0 0.0
        %5383 = vmatpush1.msra.mxu0 0.0
        %5384 = vmatprep.subr.mxu0 0.0
        %5385 = vmatpush1.msra.mxu0 0.0
        %5386 = vmatprep.subr.mxu0 0.0
        %5387 = vmatpush1.msra.mxu0 0.0
        %5388 = vmatprep.subr.mxu0 0.0
        %5389 = vmatpush1.msra.mxu0 0.0
        %5390 = vmatprep.subr.mxu0 0.0
        %5391 = vmatpush1.msra.mxu0 0.0
        %5392 = vmatprep.subr.mxu0 0.0
        %5393 = vmatpush1.msra.mxu0 0.0
        %5394 = vmatprep.subr.mxu0 0.0
        %5395 = vmatpush1.msra.mxu0 0.0
        %5396 = vmatprep.subr.mxu0 0.0
        %5397 = vmatpush1.msra.mxu0 0.0
        %5398 = vmatprep.subr.mxu0 0.0
        %5399 = vmatpush1.msra.mxu0 0.0
        %5400 = vmatprep.subr.mxu0 0.0
        %5401 = vmatpush1.msra.mxu0 0.0
        %5402 = vmatprep.mubr.f32.mxu0 0.0
        %5403 = vmatmul.mubr.f32.gmra.mrb[0].mxu0 %v5336
        %v5404 = vpop.f32.mrb[0].mxu0
        %v5405 = vadd.f32 0.0, %v5404
        %v5406 = vpop.f32.mrb[0].mxu0
        %5407 = vdwg.mxu0
        %v5409 = vsel %vm3941, %v4897, 0
        %5411 = vmatprep.subr.mxu0 0.0
        %5412 = vmatpush1.msra.mxu0 %v874
        %5413 = vmatprep.subr.mxu0 0.0
        %5414 = vmatpush1.msra.mxu0 %v875
        %5415 = vmatprep.subr.mxu0 0.0
        %5416 = vmatpush1.msra.mxu0 0.0
        %5417 = vmatprep.subr.mxu0 0.0
        %5418 = vmatpush1.msra.mxu0 0.0
        %5419 = vmatprep.subr.mxu0 0.0
        %5420 = vmatpush1.msra.mxu0 0.0
        %5421 = vmatprep.subr.mxu0 0.0
        %5422 = vmatpush1.msra.mxu0 0.0
        %5423 = vmatprep.subr.mxu0 0.0
        %5424 = vmatpush1.msra.mxu0 0.0
        %5425 = vmatprep.subr.mxu0 0.0
        %5426 = vmatpush1.msra.mxu0 0.0
        %5427 = vmatprep.subr.mxu0 0.0
        %5428 = vmatpush1.msra.mxu0 0.0
        %5429 = vmatprep.subr.mxu0 0.0
        %5430 = vmatpush1.msra.mxu0 0.0
        %5431 = vmatprep.subr.mxu0 0.0
        %5432 = vmatpush1.msra.mxu0 0.0
        %5433 = vmatprep.subr.mxu0 0.0
        %5434 = vmatpush1.msra.mxu0 0.0
        %5435 = vmatprep.subr.mxu0 0.0
        %5436 = vmatpush1.msra.mxu0 0.0
        %5437 = vmatprep.subr.mxu0 0.0
        %5438 = vmatpush1.msra.mxu0 0.0
        %5439 = vmatprep.subr.mxu0 0.0
        %5440 = vmatpush1.msra.mxu0 0.0
        %5441 = vmatprep.subr.mxu0 0.0
        %5442 = vmatpush1.msra.mxu0 0.0
        %5443 = vmatprep.subr.mxu0 0.0
        %5444 = vmatpush1.msra.mxu0 0.0
        %5445 = vmatprep.subr.mxu0 0.0
        %5446 = vmatpush1.msra.mxu0 0.0
        %5447 = vmatprep.subr.mxu0 0.0
        %5448 = vmatpush1.msra.mxu0 0.0
        %5449 = vmatprep.subr.mxu0 0.0
        %5450 = vmatpush1.msra.mxu0 0.0
        %5451 = vmatprep.subr.mxu0 0.0
        %5452 = vmatpush1.msra.mxu0 0.0
        %5453 = vmatprep.subr.mxu0 0.0
        %5454 = vmatpush1.msra.mxu0 0.0
        %5455 = vmatprep.subr.mxu0 0.0
        %5456 = vmatpush1.msra.mxu0 0.0
        %5457 = vmatprep.subr.mxu0 0.0
        %5458 = vmatpush1.msra.mxu0 0.0
        %5459 = vmatprep.subr.mxu0 0.0
        %5460 = vmatpush1.msra.mxu0 0.0
        %5461 = vmatprep.subr.mxu0 0.0
        %5462 = vmatpush1.msra.mxu0 0.0
        %5463 = vmatprep.subr.mxu0 0.0
        %5464 = vmatpush1.msra.mxu0 0.0
        %5465 = vmatprep.subr.mxu0 0.0
        %5466 = vmatpush1.msra.mxu0 0.0
        %5467 = vmatprep.subr.mxu0 0.0
        %5468 = vmatpush1.msra.mxu0 0.0
        %5469 = vmatprep.subr.mxu0 0.0
        %5470 = vmatpush1.msra.mxu0 0.0
        %5471 = vmatprep.subr.mxu0 0.0
        %5472 = vmatpush1.msra.mxu0 0.0
        %5473 = vmatprep.subr.mxu0 0.0
        %5474 = vmatpush1.msra.mxu0 0.0
        %5475 = vmatprep.mubr.f32.mxu0 0.0
        %5476 = vmatmul.mubr.f32.gmra.mrb[0].mxu0 %v5409
        %v5477 = vpop.f32.mrb[0].mxu0
        %v5478 = vadd.f32 0.0, %v5477
        %v5479 = vpop.f32.mrb[0].mxu0
        %5480 = vdwg.mxu0
        %v5482 = vsel %vm3941, %v4901, 0
        %5484 = vmatprep.subr.mxu0 0.0
        %5485 = vmatpush1.msra.mxu0 %v876
        %5486 = vmatprep.subr.mxu0 0.0
        %5487 = vmatpush1.msra.mxu0 %v877
        %5488 = vmatprep.subr.mxu0 0.0
        %5489 = vmatpush1.msra.mxu0 0.0
        %5490 = vmatprep.subr.mxu0 0.0
        %5491 = vmatpush1.msra.mxu0 0.0
        %5492 = vmatprep.subr.mxu0 0.0
        %5493 = vmatpush1.msra.mxu0 0.0
        %5494 = vmatprep.subr.mxu0 0.0
        %5495 = vmatpush1.msra.mxu0 0.0
        %5496 = vmatprep.subr.mxu0 0.0
        %5497 = vmatpush1.msra.mxu0 0.0
        %5498 = vmatprep.subr.mxu0 0.0
        %5499 = vmatpush1.msra.mxu0 0.0
        %5500 = vmatprep.subr.mxu0 0.0
        %5501 = vmatpush1.msra.mxu0 0.0
        %5502 = vmatprep.subr.mxu0 0.0
        %5503 = vmatpush1.msra.mxu0 0.0
        %5504 = vmatprep.subr.mxu0 0.0
        %5505 = vmatpush1.msra.mxu0 0.0
        %5506 = vmatprep.subr.mxu0 0.0
        %5507 = vmatpush1.msra.mxu0 0.0
        %5508 = vmatprep.subr.mxu0 0.0
        %5509 = vmatpush1.msra.mxu0 0.0
        %5510 = vmatprep.subr.mxu0 0.0
        %5511 = vmatpush1.msra.mxu0 0.0
        %5512 = vmatprep.subr.mxu0 0.0
        %5513 = vmatpush1.msra.mxu0 0.0
        %5514 = vmatprep.subr.mxu0 0.0
        %5515 = vmatpush1.msra.mxu0 0.0
        %5516 = vmatprep.subr.mxu0 0.0
        %5517 = vmatpush1.msra.mxu0 0.0
        %5518 = vmatprep.subr.mxu0 0.0
        %5519 = vmatpush1.msra.mxu0 0.0
        %5520 = vmatprep.subr.mxu0 0.0
        %5521 = vmatpush1.msra.mxu0 0.0
        %5522 = vmatprep.subr.mxu0 0.0
        %5523 = vmatpush1.msra.mxu0 0.0
        %5524 = vmatprep.subr.mxu0 0.0
        %5525 = vmatpush1.msra.mxu0 0.0
        %5526 = vmatprep.subr.mxu0 0.0
        %5527 = vmatpush1.msra.mxu0 0.0
        %5528 = vmatprep.subr.mxu0 0.0
        %5529 = vmatpush1.msra.mxu0 0.0
        %5530 = vmatprep.subr.mxu0 0.0
        %5531 = vmatpush1.msra.mxu0 0.0
        %5532 = vmatprep.subr.mxu0 0.0
        %5533 = vmatpush1.msra.mxu0 0.0
        %5534 = vmatprep.subr.mxu0 0.0
        %5535 = vmatpush1.msra.mxu0 0.0
        %5536 = vmatprep.subr.mxu0 0.0
        %5537 = vmatpush1.msra.mxu0 0.0
        %5538 = vmatprep.subr.mxu0 0.0
        %5539 = vmatpush1.msra.mxu0 0.0
        %5540 = vmatprep.subr.mxu0 0.0
        %5541 = vmatpush1.msra.mxu0 0.0
        %5542 = vmatprep.subr.mxu0 0.0
        %5543 = vmatpush1.msra.mxu0 0.0
        %5544 = vmatprep.subr.mxu0 0.0
        %5545 = vmatpush1.msra.mxu0 0.0
        %5546 = vmatprep.subr.mxu0 0.0
        %5547 = vmatpush1.msra.mxu0 0.0
        %5548 = vmatprep.mubr.f32.mxu0 0.0
        %5549 = vmatmul.mubr.f32.gmra.mrb[0].mxu0 %v5482
        %v5550 = vpop.f32.mrb[0].mxu0
        %v5551 = vadd.f32 0.0, %v5550
        %v5552 = vpop.f32.mrb[0].mxu0
        %5553 = vdwg.mxu0
        %v5555 = vsel %vm3941, %v4942, 0
        %5557 = vmatprep.subr.mxu0 0.0
        %5558 = vmatpush1.msra.mxu0 %v878
        %5559 = vmatprep.subr.mxu0 0.0
        %5560 = vmatpush1.msra.mxu0 %v879
        %5561 = vmatprep.subr.mxu0 0.0
        %5562 = vmatpush1.msra.mxu0 0.0
        %5563 = vmatprep.subr.mxu0 0.0
        %5564 = vmatpush1.msra.mxu0 0.0
        %5565 = vmatprep.subr.mxu0 0.0
        %5566 = vmatpush1.msra.mxu0 0.0
        %5567 = vmatprep.subr.mxu0 0.0
        %5568 = vmatpush1.msra.mxu0 0.0
        %5569 = vmatprep.subr.mxu0 0.0
        %5570 = vmatpush1.msra.mxu0 0.0
        %5571 = vmatprep.subr.mxu0 0.0
        %5572 = vmatpush1.msra.mxu0 0.0
        %5573 = vmatprep.subr.mxu0 0.0
        %5574 = vmatpush1.msra.mxu0 0.0
        %5575 = vmatprep.subr.mxu0 0.0
        %5576 = vmatpush1.msra.mxu0 0.0
        %5577 = vmatprep.subr.mxu0 0.0
        %5578 = vmatpush1.msra.mxu0 0.0
        %5579 = vmatprep.subr.mxu0 0.0
        %5580 = vmatpush1.msra.mxu0 0.0
        %5581 = vmatprep.subr.mxu0 0.0
        %5582 = vmatpush1.msra.mxu0 0.0
        %5583 = vmatprep.subr.mxu0 0.0
        %5584 = vmatpush1.msra.mxu0 0.0
        %5585 = vmatprep.subr.mxu0 0.0
        %5586 = vmatpush1.msra.mxu0 0.0
        %5587 = vmatprep.subr.mxu0 0.0
        %5588 = vmatpush1.msra.mxu0 0.0
        %5589 = vmatprep.subr.mxu0 0.0
        %5590 = vmatpush1.msra.mxu0 0.0
        %5591 = vmatprep.subr.mxu0 0.0
        %5592 = vmatpush1.msra.mxu0 0.0
        %5593 = vmatprep.subr.mxu0 0.0
        %5594 = vmatpush1.msra.mxu0 0.0
        %5595 = vmatprep.subr.mxu0 0.0
        %5596 = vmatpush1.msra.mxu0 0.0
        %5597 = vmatprep.subr.mxu0 0.0
        %5598 = vmatpush1.msra.mxu0 0.0
        %5599 = vmatprep.subr.mxu0 0.0
        %5600 = vmatpush1.msra.mxu0 0.0
        %5601 = vmatprep.subr.mxu0 0.0
        %5602 = vmatpush1.msra.mxu0 0.0
        %5603 = vmatprep.subr.mxu0 0.0
        %5604 = vmatpush1.msra.mxu0 0.0
        %5605 = vmatprep.subr.mxu0 0.0
        %5606 = vmatpush1.msra.mxu0 0.0
        %5607 = vmatprep.subr.mxu0 0.0
        %5608 = vmatpush1.msra.mxu0 0.0
        %5609 = vmatprep.subr.mxu0 0.0
        %5610 = vmatpush1.msra.mxu0 0.0
        %5611 = vmatprep.subr.mxu0 0.0
        %5612 = vmatpush1.msra.mxu0 0.0
        %5613 = vmatprep.subr.mxu0 0.0
        %5614 = vmatpush1.msra.mxu0 0.0
        %5615 = vmatprep.subr.mxu0 0.0
        %5616 = vmatpush1.msra.mxu0 0.0
        %5617 = vmatprep.subr.mxu0 0.0
        %5618 = vmatpush1.msra.mxu0 0.0
        %5619 = vmatprep.subr.mxu0 0.0
        %5620 = vmatpush1.msra.mxu0 0.0
        %5621 = vmatprep.mubr.f32.mxu0 0.0
        %5622 = vmatmul.mubr.f32.gmra.mrb[0].mxu0 %v5555
        %v5623 = vpop.f32.mrb[0].mxu0
        %v5624 = vadd.f32 0.0, %v5623
        %v5625 = vpop.f32.mrb[0].mxu0
        %5626 = vdwg.mxu0
        %v5628 = vsel %vm3941, %v4966, 0
        %5630 = vmatprep.subr.mxu0 0.0
        %5631 = vmatpush1.msra.mxu0 %v880
        %5632 = vmatprep.subr.mxu0 0.0
        %5633 = vmatpush1.msra.mxu0 %v881
        %5634 = vmatprep.subr.mxu0 0.0
        %5635 = vmatpush1.msra.mxu0 0.0
        %5636 = vmatprep.subr.mxu0 0.0
        %5637 = vmatpush1.msra.mxu0 0.0
        %5638 = vmatprep.subr.mxu0 0.0
        %5639 = vmatpush1.msra.mxu0 0.0
        %5640 = vmatprep.subr.mxu0 0.0
        %5641 = vmatpush1.msra.mxu0 0.0
        %5642 = vmatprep.subr.mxu0 0.0
        %5643 = vmatpush1.msra.mxu0 0.0
        %5644 = vmatprep.subr.mxu0 0.0
        %5645 = vmatpush1.msra.mxu0 0.0
        %5646 = vmatprep.subr.mxu0 0.0
        %5647 = vmatpush1.msra.mxu0 0.0
        %5648 = vmatprep.subr.mxu0 0.0
        %5649 = vmatpush1.msra.mxu0 0.0
        %5650 = vmatprep.subr.mxu0 0.0
        %5651 = vmatpush1.msra.mxu0 0.0
        %5652 = vmatprep.subr.mxu0 0.0
        %5653 = vmatpush1.msra.mxu0 0.0
        %5654 = vmatprep.subr.mxu0 0.0
        %5655 = vmatpush1.msra.mxu0 0.0
        %5656 = vmatprep.subr.mxu0 0.0
        %5657 = vmatpush1.msra.mxu0 0.0
        %5658 = vmatprep.subr.mxu0 0.0
        %5659 = vmatpush1.msra.mxu0 0.0
        %5660 = vmatprep.subr.mxu0 0.0
        %5661 = vmatpush1.msra.mxu0 0.0
        %5662 = vmatprep.subr.mxu0 0.0
        %5663 = vmatpush1.msra.mxu0 0.0
        %5664 = vmatprep.subr.mxu0 0.0
        %5665 = vmatpush1.msra.mxu0 0.0
        %5666 = vmatprep.subr.mxu0 0.0
        %5667 = vmatpush1.msra.mxu0 0.0
        %5668 = vmatprep.subr.mxu0 0.0
        %5669 = vmatpush1.msra.mxu0 0.0
        %5670 = vmatprep.subr.mxu0 0.0
        %5671 = vmatpush1.msra.mxu0 0.0
        %5672 = vmatprep.subr.mxu0 0.0
        %5673 = vmatpush1.msra.mxu0 0.0
        %5674 = vmatprep.subr.mxu0 0.0
        %5675 = vmatpush1.msra.mxu0 0.0
        %5676 = vmatprep.subr.mxu0 0.0
        %5677 = vmatpush1.msra.mxu0 0.0
        %5678 = vmatprep.subr.mxu0 0.0
        %5679 = vmatpush1.msra.mxu0 0.0
        %5680 = vmatprep.subr.mxu0 0.0
        %5681 = vmatpush1.msra.mxu0 0.0
        %5682 = vmatprep.subr.mxu0 0.0
        %5683 = vmatpush1.msra.mxu0 0.0
        %5684 = vmatprep.subr.mxu0 0.0
        %5685 = vmatpush1.msra.mxu0 0.0
        %5686 = vmatprep.subr.mxu0 0.0
        %5687 = vmatpush1.msra.mxu0 0.0
        %5688 = vmatprep.subr.mxu0 0.0
        %5689 = vmatpush1.msra.mxu0 0.0
        %5690 = vmatprep.subr.mxu0 0.0
        %5691 = vmatpush1.msra.mxu0 0.0
        %5692 = vmatprep.subr.mxu0 0.0
        %5693 = vmatpush1.msra.mxu0 0.0
        %5694 = vmatprep.mubr.f32.mxu0 0.0
        %5695 = vmatmul.mubr.f32.gmra.mrb[0].mxu0 %v5628
        %v5696 = vpop.f32.mrb[0].mxu0
        %v5697 = vadd.f32 0.0, %v5696
        %v5698 = vpop.f32.mrb[0].mxu0
        %5699 = vdwg.mxu0
        %v5701 = vsel %vm3941, %v4949, 0
        %5703 = vmatprep.subr.mxu0 0.0
        %5704 = vmatpush1.msra.mxu0 %v882
        %5705 = vmatprep.subr.mxu0 0.0
        %5706 = vmatpush1.msra.mxu0 %v883
        %5707 = vmatprep.subr.mxu0 0.0
        %5708 = vmatpush1.msra.mxu0 0.0
        %5709 = vmatprep.subr.mxu0 0.0
        %5710 = vmatpush1.msra.mxu0 0.0
        %5711 = vmatprep.subr.mxu0 0.0
        %5712 = vmatpush1.msra.mxu0 0.0
        %5713 = vmatprep.subr.mxu0 0.0
        %5714 = vmatpush1.msra.mxu0 0.0
        %5715 = vmatprep.subr.mxu0 0.0
        %5716 = vmatpush1.msra.mxu0 0.0
        %5717 = vmatprep.subr.mxu0 0.0
        %5718 = vmatpush1.msra.mxu0 0.0
        %5719 = vmatprep.subr.mxu0 0.0
        %5720 = vmatpush1.msra.mxu0 0.0
        %5721 = vmatprep.subr.mxu0 0.0
        %5722 = vmatpush1.msra.mxu0 0.0
        %5723 = vmatprep.subr.mxu0 0.0
        %5724 = vmatpush1.msra.mxu0 0.0
        %5725 = vmatprep.subr.mxu0 0.0
        %5726 = vmatpush1.msra.mxu0 0.0
        %5727 = vmatprep.subr.mxu0 0.0
        %5728 = vmatpush1.msra.mxu0 0.0
        %5729 = vmatprep.subr.mxu0 0.0
        %5730 = vmatpush1.msra.mxu0 0.0
        %5731 = vmatprep.subr.mxu0 0.0
        %5732 = vmatpush1.msra.mxu0 0.0
        %5733 = vmatprep.subr.mxu0 0.0
        %5734 = vmatpush1.msra.mxu0 0.0
        %5735 = vmatprep.subr.mxu0 0.0
        %5736 = vmatpush1.msra.mxu0 0.0
        %5737 = vmatprep.subr.mxu0 0.0
        %5738 = vmatpush1.msra.mxu0 0.0
        %5739 = vmatprep.subr.mxu0 0.0
        %5740 = vmatpush1.msra.mxu0 0.0
        %5741 = vmatprep.subr.mxu0 0.0
        %5742 = vmatpush1.msra.mxu0 0.0
        %5743 = vmatprep.subr.mxu0 0.0
        %5744 = vmatpush1.msra.mxu0 0.0
        %5745 = vmatprep.subr.mxu0 0.0
        %5746 = vmatpush1.msra.mxu0 0.0
        %5747 = vmatprep.subr.mxu0 0.0
        %5748 = vmatpush1.msra.mxu0 0.0
        %5749 = vmatprep.subr.mxu0 0.0
        %5750 = vmatpush1.msra.mxu0 0.0
        %5751 = vmatprep.subr.mxu0 0.0
        %5752 = vmatpush1.msra.mxu0 0.0
        %5753 = vmatprep.subr.mxu0 0.0
        %5754 = vmatpush1.msra.mxu0 0.0
        %5755 = vmatprep.subr.mxu0 0.0
        %5756 = vmatpush1.msra.mxu0 0.0
        %5757 = vmatprep.subr.mxu0 0.0
        %5758 = vmatpush1.msra.mxu0 0.0
        %5759 = vmatprep.subr.mxu0 0.0
        %5760 = vmatpush1.msra.mxu0 0.0
        %5761 = vmatprep.subr.mxu0 0.0
        %5762 = vmatpush1.msra.mxu0 0.0
        %5763 = vmatprep.subr.mxu0 0.0
        %5764 = vmatpush1.msra.mxu0 0.0
        %5765 = vmatprep.subr.mxu0 0.0
        %5766 = vmatpush1.msra.mxu0 0.0
        %5767 = vmatprep.mubr.f32.mxu0 0.0
        %5768 = vmatmul.mubr.f32.gmra.mrb[0].mxu0 %v5701
        %v5769 = vpop.f32.mrb[0].mxu0
        %v5770 = vadd.f32 0.0, %v5769
        %v5771 = vpop.f32.mrb[0].mxu0
        %5772 = vdwg.mxu0
        %v5774 = vsel %vm3941, %v4967, 0
        %5776 = vmatprep.subr.mxu0 0.0
        %5777 = vmatpush1.msra.mxu0 %v884
        %5778 = vmatprep.subr.mxu0 0.0
        %5779 = vmatpush1.msra.mxu0 %v885
        %5780 = vmatprep.subr.mxu0 0.0
        %5781 = vmatpush1.msra.mxu0 0.0
        %5782 = vmatprep.subr.mxu0 0.0
        %5783 = vmatpush1.msra.mxu0 0.0
        %5784 = vmatprep.subr.mxu0 0.0
        %5785 = vmatpush1.msra.mxu0 0.0
        %5786 = vmatprep.subr.mxu0 0.0
        %5787 = vmatpush1.msra.mxu0 0.0
        %5788 = vmatprep.subr.mxu0 0.0
        %5789 = vmatpush1.msra.mxu0 0.0
        %5790 = vmatprep.subr.mxu0 0.0
        %5791 = vmatpush1.msra.mxu0 0.0
        %5792 = vmatprep.subr.mxu0 0.0
        %5793 = vmatpush1.msra.mxu0 0.0
        %5794 = vmatprep.subr.mxu0 0.0
        %5795 = vmatpush1.msra.mxu0 0.0
        %5796 = vmatprep.subr.mxu0 0.0
        %5797 = vmatpush1.msra.mxu0 0.0
        %5798 = vmatprep.subr.mxu0 0.0
        %5799 = vmatpush1.msra.mxu0 0.0
        %5800 = vmatprep.subr.mxu0 0.0
        %5801 = vmatpush1.msra.mxu0 0.0
        %5802 = vmatprep.subr.mxu0 0.0
        %5803 = vmatpush1.msra.mxu0 0.0
        %5804 = vmatprep.subr.mxu0 0.0
        %5805 = vmatpush1.msra.mxu0 0.0
        %5806 = vmatprep.subr.mxu0 0.0
        %5807 = vmatpush1.msra.mxu0 0.0
        %5808 = vmatprep.subr.mxu0 0.0
        %5809 = vmatpush1.msra.mxu0 0.0
        %5810 = vmatprep.subr.mxu0 0.0
        %5811 = vmatpush1.msra.mxu0 0.0
        %5812 = vmatprep.subr.mxu0 0.0
        %5813 = vmatpush1.msra.mxu0 0.0
        %5814 = vmatprep.subr.mxu0 0.0
        %5815 = vmatpush1.msra.mxu0 0.0
        %5816 = vmatprep.subr.mxu0 0.0
        %5817 = vmatpush1.msra.mxu0 0.0
        %5818 = vmatprep.subr.mxu0 0.0
        %5819 = vmatpush1.msra.mxu0 0.0
        %5820 = vmatprep.subr.mxu0 0.0
        %5821 = vmatpush1.msra.mxu0 0.0
        %5822 = vmatprep.subr.mxu0 0.0
        %5823 = vmatpush1.msra.mxu0 0.0
        %5824 = vmatprep.subr.mxu0 0.0
        %5825 = vmatpush1.msra.mxu0 0.0
        %5826 = vmatprep.subr.mxu0 0.0
        %5827 = vmatpush1.msra.mxu0 0.0
        %5828 = vmatprep.subr.mxu0 0.0
        %5829 = vmatpush1.msra.mxu0 0.0
        %5830 = vmatprep.subr.mxu0 0.0
        %5831 = vmatpush1.msra.mxu0 0.0
        %5832 = vmatprep.subr.mxu0 0.0
        %5833 = vmatpush1.msra.mxu0 0.0
        %5834 = vmatprep.subr.mxu0 0.0
        %5835 = vmatpush1.msra.mxu0 0.0
        %5836 = vmatprep.subr.mxu0 0.0
        %5837 = vmatpush1.msra.mxu0 0.0
        %5838 = vmatprep.subr.mxu0 0.0
        %5839 = vmatpush1.msra.mxu0 0.0
        %5840 = vmatprep.mubr.f32.mxu0 0.0
        %5841 = vmatmul.mubr.f32.gmra.mrb[0].mxu0 %v5774
        %v5842 = vpop.f32.mrb[0].mxu0
        %v5843 = vadd.f32 0.0, %v5842
        %v5844 = vpop.f32.mrb[0].mxu0
        %5845 = vdwg.mxu0
        %v5847 = vsel %vm3941, %v4958, 0
        %5849 = vmatprep.subr.mxu0 0.0
        %5850 = vmatpush1.msra.mxu0 %v886
        %5851 = vmatprep.subr.mxu0 0.0
        %5852 = vmatpush1.msra.mxu0 %v887
        %5853 = vmatprep.subr.mxu0 0.0
        %5854 = vmatpush1.msra.mxu0 0.0
        %5855 = vmatprep.subr.mxu0 0.0
        %5856 = vmatpush1.msra.mxu0 0.0
        %5857 = vmatprep.subr.mxu0 0.0
        %5858 = vmatpush1.msra.mxu0 0.0
        %5859 = vmatprep.subr.mxu0 0.0
        %5860 = vmatpush1.msra.mxu0 0.0
        %5861 = vmatprep.subr.mxu0 0.0
        %5862 = vmatpush1.msra.mxu0 0.0
        %5863 = vmatprep.subr.mxu0 0.0
        %5864 = vmatpush1.msra.mxu0 0.0
        %5865 = vmatprep.subr.mxu0 0.0
        %5866 = vmatpush1.msra.mxu0 0.0
        %5867 = vmatprep.subr.mxu0 0.0
        %5868 = vmatpush1.msra.mxu0 0.0
        %5869 = vmatprep.subr.mxu0 0.0
        %5870 = vmatpush1.msra.mxu0 0.0
        %5871 = vmatprep.subr.mxu0 0.0
        %5872 = vmatpush1.msra.mxu0 0.0
        %5873 = vmatprep.subr.mxu0 0.0
        %5874 = vmatpush1.msra.mxu0 0.0
        %5875 = vmatprep.subr.mxu0 0.0
        %5876 = vmatpush1.msra.mxu0 0.0
        %5877 = vmatprep.subr.mxu0 0.0
        %5878 = vmatpush1.msra.mxu0 0.0
        %5879 = vmatprep.subr.mxu0 0.0
        %5880 = vmatpush1.msra.mxu0 0.0
        %5881 = vmatprep.subr.mxu0 0.0
        %5882 = vmatpush1.msra.mxu0 0.0
        %5883 = vmatprep.subr.mxu0 0.0
        %5884 = vmatpush1.msra.mxu0 0.0
        %5885 = vmatprep.subr.mxu0 0.0
        %5886 = vmatpush1.msra.mxu0 0.0
        %5887 = vmatprep.subr.mxu0 0.0
        %5888 = vmatpush1.msra.mxu0 0.0
        %5889 = vmatprep.subr.mxu0 0.0
        %5890 = vmatpush1.msra.mxu0 0.0
        %5891 = vmatprep.subr.mxu0 0.0
        %5892 = vmatpush1.msra.mxu0 0.0
        %5893 = vmatprep.subr.mxu0 0.0
        %5894 = vmatpush1.msra.mxu0 0.0
        %5895 = vmatprep.subr.mxu0 0.0
        %5896 = vmatpush1.msra.mxu0 0.0
        %5897 = vmatprep.subr.mxu0 0.0
        %5898 = vmatpush1.msra.mxu0 0.0
        %5899 = vmatprep.subr.mxu0 0.0
        %5900 = vmatpush1.msra.mxu0 0.0
        %5901 = vmatprep.subr.mxu0 0.0
        %5902 = vmatpush1.msra.mxu0 0.0
        %5903 = vmatprep.subr.mxu0 0.0
        %5904 = vmatpush1.msra.mxu0 0.0
        %5905 = vmatprep.subr.mxu0 0.0
        %5906 = vmatpush1.msra.mxu0 0.0
        %5907 = vmatprep.subr.mxu0 0.0
        %5908 = vmatpush1.msra.mxu0 0.0
        %5909 = vmatprep.subr.mxu0 0.0
        %5910 = vmatpush1.msra.mxu0 0.0
        %5911 = vmatprep.subr.mxu0 0.0
        %5912 = vmatpush1.msra.mxu0 0.0
        %5913 = vmatprep.mubr.f32.mxu0 0.0
        %5914 = vmatmul.mubr.f32.gmra.mrb[0].mxu0 %v5847
        %v5915 = vpop.f32.mrb[0].mxu0
        %v5916 = vadd.f32 0.0, %v5915
        %v5917 = vpop.f32.mrb[0].mxu0
        %5918 = vdwg.mxu0
        %v5920 = vsel %vm3941, %v4968, 0
        %5922 = vmatprep.subr.mxu0 0.0
        %5923 = vmatpush1.msra.mxu0 %v888
        %5924 = vmatprep.subr.mxu0 0.0
        %5925 = vmatpush1.msra.mxu0 %v889
        %5926 = vmatprep.subr.mxu0 0.0
        %5927 = vmatpush1.msra.mxu0 0.0
        %5928 = vmatprep.subr.mxu0 0.0
        %5929 = vmatpush1.msra.mxu0 0.0
        %5930 = vmatprep.subr.mxu0 0.0
        %5931 = vmatpush1.msra.mxu0 0.0
        %5932 = vmatprep.subr.mxu0 0.0
        %5933 = vmatpush1.msra.mxu0 0.0
        %5934 = vmatprep.subr.mxu0 0.0
        %5935 = vmatpush1.msra.mxu0 0.0
        %5936 = vmatprep.subr.mxu0 0.0
        %5937 = vmatpush1.msra.mxu0 0.0
        %5938 = vmatprep.subr.mxu0 0.0
        %5939 = vmatpush1.msra.mxu0 0.0
        %5940 = vmatprep.subr.mxu0 0.0
        %5941 = vmatpush1.msra.mxu0 0.0
        %5942 = vmatprep.subr.mxu0 0.0
        %5943 = vmatpush1.msra.mxu0 0.0
        %5944 = vmatprep.subr.mxu0 0.0
        %5945 = vmatpush1.msra.mxu0 0.0
        %5946 = vmatprep.subr.mxu0 0.0
        %5947 = vmatpush1.msra.mxu0 0.0
        %5948 = vmatprep.subr.mxu0 0.0
        %5949 = vmatpush1.msra.mxu0 0.0
        %5950 = vmatprep.subr.mxu0 0.0
        %5951 = vmatpush1.msra.mxu0 0.0
        %5952 = vmatprep.subr.mxu0 0.0
        %5953 = vmatpush1.msra.mxu0 0.0
        %5954 = vmatprep.subr.mxu0 0.0
        %5955 = vmatpush1.msra.mxu0 0.0
        %5956 = vmatprep.subr.mxu0 0.0
        %5957 = vmatpush1.msra.mxu0 0.0
        %5958 = vmatprep.subr.mxu0 0.0
        %5959 = vmatpush1.msra.mxu0 0.0
        %5960 = vmatprep.subr.mxu0 0.0
        %5961 = vmatpush1.msra.mxu0 0.0
        %5962 = vmatprep.subr.mxu0 0.0
        %5963 = vmatpush1.msra.mxu0 0.0
        %5964 = vmatprep.subr.mxu0 0.0
        %5965 = vmatpush1.msra.mxu0 0.0
        %5966 = vmatprep.subr.mxu0 0.0
        %5967 = vmatpush1.msra.mxu0 0.0
        %5968 = vmatprep.subr.mxu0 0.0
        %5969 = vmatpush1.msra.mxu0 0.0
        %5970 = vmatprep.subr.mxu0 0.0
        %5971 = vmatpush1.msra.mxu0 0.0
        %5972 = vmatprep.subr.mxu0 0.0
        %5973 = vmatpush1.msra.mxu0 0.0
        %5974 = vmatprep.subr.mxu0 0.0
        %5975 = vmatpush1.msra.mxu0 0.0
        %5976 = vmatprep.subr.mxu0 0.0
        %5977 = vmatpush1.msra.mxu0 0.0
        %5978 = vmatprep.subr.mxu0 0.0
        %5979 = vmatpush1.msra.mxu0 0.0
        %5980 = vmatprep.subr.mxu0 0.0
        %5981 = vmatpush1.msra.mxu0 0.0
        %5982 = vmatprep.subr.mxu0 0.0
        %5983 = vmatpush1.msra.mxu0 0.0
        %5984 = vmatprep.subr.mxu0 0.0
        %5985 = vmatpush1.msra.mxu0 0.0
        %5986 = vmatprep.mubr.f32.mxu0 0.0
        %5987 = vmatmul.mubr.f32.gmra.mrb[0].mxu0 %v5920
        %v5988 = vpop.f32.mrb[0].mxu0
        %v5989 = vadd.f32 0.0, %v5988
        %v5990 = vpop.f32.mrb[0].mxu0
        %5991 = vdwg.mxu0
        %v5993 = vsel %vm3941, %v4965, 0
        %5995 = vmatprep.subr.mxu0 0.0
        %5996 = vmatpush1.msra.mxu0 %v890
        %5997 = vmatprep.subr.mxu0 0.0
        %5998 = vmatpush1.msra.mxu0 %v891
        %5999 = vmatprep.subr.mxu0 0.0
        %6000 = vmatpush1.msra.mxu0 0.0
        %6001 = vmatprep.subr.mxu0 0.0
        %6002 = vmatpush1.msra.mxu0 0.0
        %6003 = vmatprep.subr.mxu0 0.0
        %6004 = vmatpush1.msra.mxu0 0.0
        %6005 = vmatprep.subr.mxu0 0.0
        %6006 = vmatpush1.msra.mxu0 0.0
        %6007 = vmatprep.subr.mxu0 0.0
        %6008 = vmatpush1.msra.mxu0 0.0
        %6009 = vmatprep.subr.mxu0 0.0
        %6010 = vmatpush1.msra.mxu0 0.0
        %6011 = vmatprep.subr.mxu0 0.0
        %6012 = vmatpush1.msra.mxu0 0.0
        %6013 = vmatprep.subr.mxu0 0.0
        %6014 = vmatpush1.msra.mxu0 0.0
        %6015 = vmatprep.subr.mxu0 0.0
        %6016 = vmatpush1.msra.mxu0 0.0
        %6017 = vmatprep.subr.mxu0 0.0
        %6018 = vmatpush1.msra.mxu0 0.0
        %6019 = vmatprep.subr.mxu0 0.0
        %6020 = vmatpush1.msra.mxu0 0.0
        %6021 = vmatprep.subr.mxu0 0.0
        %6022 = vmatpush1.msra.mxu0 0.0
        %6023 = vmatprep.subr.mxu0 0.0
        %6024 = vmatpush1.msra.mxu0 0.0
        %6025 = vmatprep.subr.mxu0 0.0
        %6026 = vmatpush1.msra.mxu0 0.0
        %6027 = vmatprep.subr.mxu0 0.0
        %6028 = vmatpush1.msra.mxu0 0.0
        %6029 = vmatprep.subr.mxu0 0.0
        %6030 = vmatpush1.msra.mxu0 0.0
        %6031 = vmatprep.subr.mxu0 0.0
        %6032 = vmatpush1.msra.mxu0 0.0
        %6033 = vmatprep.subr.mxu0 0.0
        %6034 = vmatpush1.msra.mxu0 0.0
        %6035 = vmatprep.subr.mxu0 0.0
        %6036 = vmatpush1.msra.mxu0 0.0
        %6037 = vmatprep.subr.mxu0 0.0
        %6038 = vmatpush1.msra.mxu0 0.0
        %6039 = vmatprep.subr.mxu0 0.0
        %6040 = vmatpush1.msra.mxu0 0.0
        %6041 = vmatprep.subr.mxu0 0.0
        %6042 = vmatpush1.msra.mxu0 0.0
        %6043 = vmatprep.subr.mxu0 0.0
        %6044 = vmatpush1.msra.mxu0 0.0
        %6045 = vmatprep.subr.mxu0 0.0
        %6046 = vmatpush1.msra.mxu0 0.0
        %6047 = vmatprep.subr.mxu0 0.0
        %6048 = vmatpush1.msra.mxu0 0.0
        %6049 = vmatprep.subr.mxu0 0.0
        %6050 = vmatpush1.msra.mxu0 0.0
        %6051 = vmatprep.subr.mxu0 0.0
        %6052 = vmatpush1.msra.mxu0 0.0
        %6053 = vmatprep.subr.mxu0 0.0
        %6054 = vmatpush1.msra.mxu0 0.0
        %6055 = vmatprep.subr.mxu0 0.0
        %6056 = vmatpush1.msra.mxu0 0.0
        %6057 = vmatprep.subr.mxu0 0.0
        %6058 = vmatpush1.msra.mxu0 0.0
        %6059 = vmatprep.mubr.f32.mxu0 0.0
        %6060 = vmatmul.mubr.f32.gmra.mrb[0].mxu0 %v5993
        %v6061 = vpop.f32.mrb[0].mxu0
        %v6062 = vadd.f32 0.0, %v6061
        %v6063 = vpop.f32.mrb[0].mxu0
        %6064 = vdwg.mxu0
        %v6066 = vsel %vm3941, %v4969, 0
        %6068 = vmatprep.subr.mxu0 0.0
        %6069 = vmatpush1.msra.mxu0 %v892
        %6070 = vmatprep.subr.mxu0 0.0
        %6071 = vmatpush1.msra.mxu0 %v893
        %6072 = vmatprep.subr.mxu0 0.0
        %6073 = vmatpush1.msra.mxu0 0.0
        %6074 = vmatprep.subr.mxu0 0.0
        %6075 = vmatpush1.msra.mxu0 0.0
        %6076 = vmatprep.subr.mxu0 0.0
        %6077 = vmatpush1.msra.mxu0 0.0
        %6078 = vmatprep.subr.mxu0 0.0
        %6079 = vmatpush1.msra.mxu0 0.0
        %6080 = vmatprep.subr.mxu0 0.0
        %6081 = vmatpush1.msra.mxu0 0.0
        %6082 = vmatprep.subr.mxu0 0.0
        %6083 = vmatpush1.msra.mxu0 0.0
        %6084 = vmatprep.subr.mxu0 0.0
        %6085 = vmatpush1.msra.mxu0 0.0
        %6086 = vmatprep.subr.mxu0 0.0
        %6087 = vmatpush1.msra.mxu0 0.0
        %6088 = vmatprep.subr.mxu0 0.0
        %6089 = vmatpush1.msra.mxu0 0.0
        %6090 = vmatprep.subr.mxu0 0.0
        %6091 = vmatpush1.msra.mxu0 0.0
        %6092 = vmatprep.subr.mxu0 0.0
        %6093 = vmatpush1.msra.mxu0 0.0
        %6094 = vmatprep.subr.mxu0 0.0
        %6095 = vmatpush1.msra.mxu0 0.0
        %6096 = vmatprep.subr.mxu0 0.0
        %6097 = vmatpush1.msra.mxu0 0.0
        %6098 = vmatprep.subr.mxu0 0.0
        %6099 = vmatpush1.msra.mxu0 0.0
        %6100 = vmatprep.subr.mxu0 0.0
        %6101 = vmatpush1.msra.mxu0 0.0
        %6102 = vmatprep.subr.mxu0 0.0
        %6103 = vmatpush1.msra.mxu0 0.0
        %6104 = vmatprep.subr.mxu0 0.0
        %6105 = vmatpush1.msra.mxu0 0.0
        %6106 = vmatprep.subr.mxu0 0.0
        %6107 = vmatpush1.msra.mxu0 0.0
        %6108 = vmatprep.subr.mxu0 0.0
        %6109 = vmatpush1.msra.mxu0 0.0
        %6110 = vmatprep.subr.mxu0 0.0
        %6111 = vmatpush1.msra.mxu0 0.0
        %6112 = vmatprep.subr.mxu0 0.0
        %6113 = vmatpush1.msra.mxu0 0.0
        %6114 = vmatprep.subr.mxu0 0.0
        %6115 = vmatpush1.msra.mxu0 0.0
        %6116 = vmatprep.subr.mxu0 0.0
        %6117 = vmatpush1.msra.mxu0 0.0
        %6118 = vmatprep.subr.mxu0 0.0
        %6119 = vmatpush1.msra.mxu0 0.0
        %6120 = vmatprep.subr.mxu0 0.0
        %6121 = vmatpush1.msra.mxu0 0.0
        %6122 = vmatprep.subr.mxu0 0.0
        %6123 = vmatpush1.msra.mxu0 0.0
        %6124 = vmatprep.subr.mxu0 0.0
        %6125 = vmatpush1.msra.mxu0 0.0
        %6126 = vmatprep.subr.mxu0 0.0
        %6127 = vmatpush1.msra.mxu0 0.0
        %6128 = vmatprep.subr.mxu0 0.0
        %6129 = vmatpush1.msra.mxu0 0.0
        %6130 = vmatprep.subr.mxu0 0.0
        %6131 = vmatpush1.msra.mxu0 0.0
        %6132 = vmatprep.mubr.f32.mxu0 0.0
        %6133 = vmatmul.mubr.f32.gmra.mrb[0].mxu0 %v6066
        %v6134 = vpop.f32.mrb[0].mxu0
        %v6135 = vadd.f32 0.0, %v6134
        %v6136 = vpop.f32.mrb[0].mxu0
        %6137 = vdwg.mxu0
        %v6138 = vld [vmem:[%s820] sm:$0xff]
        %v6139 = vld [vmem:[%s820 + $0x8] sm:$0x3]
        %v6156 = vcombine.low %v5040, %v5113
        %v6157 = vcombine.low %v5186, %v5259
        %v6158 = vcombine.low %v5332, %v5405
        %v6159 = vcombine.low %v5478, %v5551
        %v6160 = vcombine.low %v5624, %v5697
        %v6161 = vcombine.low %v5770, %v5843
        %v6162 = vcombine.low %v5916, %v5989
        %v6163 = vcombine.low %v6062, %v6135
        %v6164 = vsel %vm1520, %v6156, 0
        %v6166 = vsel %vm1520, %v6157, 0
        %v6168 = vsel %vm1520, %v6158, 0
        %v6170 = vsel %vm1520, %v6159, 0
        %v6172 = vsel %vm1520, %v6160, 0
        %v6174 = vsel %vm1520, %v6161, 0
        %v6176 = vsel %vm1520, %v6162, 0
        %v6178 = vsel %vm1520, %v6163, 0
        %vm6180 = vcmask 1041408
        %v6182 = vsel %vm6180, %v6139, 0
        %6184 = vmatprep.subr.mxu0 0.0
        %6185 = vmatpush1.msra.mxu0 %v6138
        %6186 = vmatprep.subr.mxu0 0.0
        %6187 = vmatpush1.msra.mxu0 %v6182
        %6188 = vmatprep.subr.mxu0 0.0
        %6189 = vmatpush1.msra.mxu0 0.0
        %6190 = vmatprep.subr.mxu0 0.0
        %6191 = vmatpush1.msra.mxu0 0.0
        %6192 = vmatprep.subr.mxu0 0.0
        %6193 = vmatpush1.msra.mxu0 0.0
        %6194 = vmatprep.subr.mxu0 0.0
        %6195 = vmatpush1.msra.mxu0 0.0
        %6196 = vmatprep.subr.mxu0 0.0
        %6197 = vmatpush1.msra.mxu0 0.0
        %6198 = vmatprep.subr.mxu0 0.0
        %6199 = vmatpush1.msra.mxu0 0.0
        %6200 = vmatprep.subr.mxu0 0.0
        %6201 = vmatpush1.msra.mxu0 0.0
        %6202 = vmatprep.subr.mxu0 0.0
        %6203 = vmatpush1.msra.mxu0 0.0
        %6204 = vmatprep.subr.mxu0 0.0
        %6205 = vmatpush1.msra.mxu0 0.0
        %6206 = vmatprep.subr.mxu0 0.0
        %6207 = vmatpush1.msra.mxu0 0.0
        %6208 = vmatprep.subr.mxu0 0.0
        %6209 = vmatpush1.msra.mxu0 0.0
        %6210 = vmatprep.subr.mxu0 0.0
        %6211 = vmatpush1.msra.mxu0 0.0
        %6212 = vmatprep.subr.mxu0 0.0
        %6213 = vmatpush1.msra.mxu0 0.0
        %6214 = vmatprep.subr.mxu0 0.0
        %6215 = vmatpush1.msra.mxu0 0.0
        %6216 = vmatprep.subr.mxu0 0.0
        %6217 = vmatpush1.msra.mxu0 0.0
        %6218 = vmatprep.subr.mxu0 0.0
        %6219 = vmatpush1.msra.mxu0 0.0
        %6220 = vmatprep.subr.mxu0 0.0
        %6221 = vmatpush1.msra.mxu0 0.0
        %6222 = vmatprep.subr.mxu0 0.0
        %6223 = vmatpush1.msra.mxu0 0.0
        %6224 = vmatprep.subr.mxu0 0.0
        %6225 = vmatpush1.msra.mxu0 0.0
        %6226 = vmatprep.subr.mxu0 0.0
        %6227 = vmatpush1.msra.mxu0 0.0
        %6228 = vmatprep.subr.mxu0 0.0
        %6229 = vmatpush1.msra.mxu0 0.0
        %6230 = vmatprep.subr.mxu0 0.0
        %6231 = vmatpush1.msra.mxu0 0.0
        %6232 = vmatprep.subr.mxu0 0.0
        %6233 = vmatpush1.msra.mxu0 0.0
        %6234 = vmatprep.subr.mxu0 0.0
        %6235 = vmatpush1.msra.mxu0 0.0
        %6236 = vmatprep.subr.mxu0 0.0
        %6237 = vmatpush1.msra.mxu0 0.0
        %6238 = vmatprep.subr.mxu0 0.0
        %6239 = vmatpush1.msra.mxu0 0.0
        %6240 = vmatprep.subr.mxu0 0.0
        %6241 = vmatpush1.msra.mxu0 0.0
        %6242 = vmatprep.subr.mxu0 0.0
        %6243 = vmatpush1.msra.mxu0 0.0
        %6244 = vmatprep.subr.mxu0 0.0
        %6245 = vmatpush1.msra.mxu0 0.0
        %6246 = vmatprep.subr.mxu0 0.0
        %6247 = vmatpush1.msra.mxu0 0.0
        %6248 = vmatprep.mubr.f32.mxu0 0.0
        %6249 = vmatmul.mubr.f32.gmra.mrb[0].mxu0 %v6164
        %v6250 = vpop.f32.mrb[0].mxu0
        %v6251 = vadd.f32 0.0, %v6250
        %v6252 = vpop.f32.mrb[0].mxu0
        %6253 = vmatprep.mubr.f32.mxu0 0.0
        %6254 = vmatmul.mubr.f32.gmra.mrb[0].mxu0 %v6166
        %v6255 = vpop.f32.mrb[0].mxu0
        %v6256 = vadd.f32 0.0, %v6255
        %v6257 = vpop.f32.mrb[0].mxu0
        %6258 = vmatprep.mubr.f32.mxu0 0.0
        %6259 = vmatmul.mubr.f32.gmra.mrb[0].mxu0 %v6168
        %v6260 = vpop.f32.mrb[0].mxu0
        %v6261 = vadd.f32 0.0, %v6260
        %v6262 = vpop.f32.mrb[0].mxu0
        %6263 = vmatprep.mubr.f32.mxu0 0.0
        %6264 = vmatmul.mubr.f32.gmra.mrb[0].mxu0 %v6170
        %v6265 = vpop.f32.mrb[0].mxu0
        %v6266 = vadd.f32 0.0, %v6265
        %v6267 = vpop.f32.mrb[0].mxu0
        %6268 = vmatprep.mubr.f32.mxu0 0.0
        %6269 = vmatmul.mubr.f32.gmra.mrb[0].mxu0 %v6172
        %v6270 = vpop.f32.mrb[0].mxu0
        %v6271 = vadd.f32 0.0, %v6270
        %v6272 = vpop.f32.mrb[0].mxu0
        %6273 = vmatprep.mubr.f32.mxu0 0.0
        %6274 = vmatmul.mubr.f32.gmra.mrb[0].mxu0 %v6174
        %v6275 = vpop.f32.mrb[0].mxu0
        %v6276 = vadd.f32 0.0, %v6275
        %v6277 = vpop.f32.mrb[0].mxu0
        %6278 = vmatprep.mubr.f32.mxu0 0.0
        %6279 = vmatmul.mubr.f32.gmra.mrb[0].mxu0 %v6176
        %v6280 = vpop.f32.mrb[0].mxu0
        %v6281 = vadd.f32 0.0, %v6280
        %v6282 = vpop.f32.mrb[0].mxu0
        %6283 = vmatprep.mubr.f32.mxu0 0.0
        %6284 = vmatmul.mubr.f32.gmra.mrb[0].mxu0 %v6178
        %v6285 = vpop.f32.mrb[0].mxu0
        %v6286 = vadd.f32 0.0, %v6285
        %v6287 = vpop.f32.mrb[0].mxu0
        %6288 = vdwg.mxu0
        %v6297 = vcombine.high %v6251, %v6251
        %v6298 = vcombine.high %v6256, %v6256
        %v6299 = vcombine.high %v6261, %v6261
        %v6300 = vcombine.high %v6266, %v6266
        %v6301 = vcombine.high %v6271, %v6271
        %v6302 = vcombine.high %v6276, %v6276
        %v6303 = vcombine.high %v6281, %v6281
        %v6304 = vcombine.high %v6286, %v6286
        %v6313 = vadd.f32 %v4738, %v6251
        %v6314 = vadd.f32 %v4762, %v6297
        %v6315 = vadd.f32 %v4745, %v6256
        %v6316 = vadd.f32 %v4763, %v6298
        %v6317 = vadd.f32 %v4754, %v6261
        %v6318 = vadd.f32 %v4764, %v6299
        %v6319 = vadd.f32 %v4761, %v6266
        %v6320 = vadd.f32 %v4765, %v6300
        %v6321 = vadd.f32 %v4806, %v6271
        %v6322 = vadd.f32 %v4830, %v6301
        %v6323 = vadd.f32 %v4813, %v6276
        %v6324 = vadd.f32 %v4831, %v6302
        %v6325 = vadd.f32 %v4822, %v6281
        %v6326 = vadd.f32 %v4832, %v6303
        %v6327 = vadd.f32 %v4829, %v6286
        %v6328 = vadd.f32 %v4833, %v6304
        %v6329 = vcombine.low %v6313, %v6315
        %v6331 = vunpack.c.l.s4 1983009808
        %v6332 = vunpack.c.0.s8 %v6331
        %v6333 = vlaneseq
        %v6334 = vshrl.u32 %v6333, 7
        %v6335 = vsub.s32 %v6332, %v6334
        %v6336 = vrot.slane %v6329, %v6335
        %v6337 = vcombine.low %v6314, %v6316
        %v6339 = vunpack.c.l.s4 1983009808
        %v6340 = vunpack.c.0.s8 %v6339
        %v6341 = vlaneseq
        %v6342 = vshrl.u32 %v6341, 7
        %v6343 = vsub.s32 %v6340, %v6342
        %v6344 = vrot.slane %v6337, %v6343
        %v6345 = vcombine.low %v6317, %v6319
        %v6347 = vunpack.c.l.s4 1983009808
        %v6348 = vunpack.c.0.s8 %v6347
        %v6349 = vlaneseq
        %v6350 = vshrl.u32 %v6349, 7
        %v6351 = vsub.s32 %v6348, %v6350
        %v6352 = vrot.slane %v6345, %v6351
        %v6353 = vcombine.low %v6318, %v6320
        %v6355 = vunpack.c.l.s4 1983009808
        %v6356 = vunpack.c.0.s8 %v6355
        %v6357 = vlaneseq
        %v6358 = vshrl.u32 %v6357, 7
        %v6359 = vsub.s32 %v6356, %v6358
        %v6360 = vrot.slane %v6353, %v6359
        %v6361 = vcombine.low %v6336, %v6344
        %v6362 = vcombine.high %v6336, %v6344
        %v6364 = vunpack.c.l.s4 1934713408
        %v6365 = vunpack.c.0.s8 %v6364
        %v6366 = vlaneseq
        %v6367 = vshrl.u32 %v6366, 7
        %v6368 = vsub.s32 %v6365, %v6367
        %v6369 = vrot.slane %v6361, %v6368
        %v6371 = vunpack.c.l.s4 1934713408
        %v6372 = vunpack.c.0.s8 %v6371
        %v6373 = vlaneseq
        %v6374 = vshrl.u32 %v6373, 7
        %v6375 = vsub.s32 %v6372, %v6374
        %v6376 = vrot.slane %v6362, %v6375
        %v6377 = vcombine.low %v6352, %v6360
        %v6378 = vcombine.high %v6352, %v6360
        %v6380 = vunpack.c.l.s4 1934713408
        %v6381 = vunpack.c.0.s8 %v6380
        %v6382 = vlaneseq
        %v6383 = vshrl.u32 %v6382, 7
        %v6384 = vsub.s32 %v6381, %v6383
        %v6385 = vrot.slane %v6377, %v6384
        %v6387 = vunpack.c.l.s4 1934713408
        %v6388 = vunpack.c.0.s8 %v6387
        %v6389 = vlaneseq
        %v6390 = vshrl.u32 %v6389, 7
        %v6391 = vsub.s32 %v6388, %v6390
        %v6392 = vrot.slane %v6378, %v6391
        %v6393 = vcombine.low %v6369, %v6385
        %v6394 = vcombine.high %v6369, %v6385
        %v6395 = vcombine.low %v6376, %v6392
        %v6396 = vcombine.high %v6376, %v6392
        %v6397 = vcombine.low %v6321, %v6323
        %v6399 = vunpack.c.l.s4 1983009808
        %v6400 = vunpack.c.0.s8 %v6399
        %v6401 = vlaneseq
        %v6402 = vshrl.u32 %v6401, 7
        %v6403 = vsub.s32 %v6400, %v6402
        %v6404 = vrot.slane %v6397, %v6403
        %v6405 = vcombine.low %v6322, %v6324
        %v6407 = vunpack.c.l.s4 1983009808
        %v6408 = vunpack.c.0.s8 %v6407
        %v6409 = vlaneseq
        %v6410 = vshrl.u32 %v6409, 7
        %v6411 = vsub.s32 %v6408, %v6410
        %v6412 = vrot.slane %v6405, %v6411
        %v6413 = vcombine.low %v6325, %v6327
        %v6415 = vunpack.c.l.s4 1983009808
        %v6416 = vunpack.c.0.s8 %v6415
        %v6417 = vlaneseq
        %v6418 = vshrl.u32 %v6417, 7
        %v6419 = vsub.s32 %v6416, %v6418
        %v6420 = vrot.slane %v6413, %v6419
        %v6421 = vcombine.low %v6326, %v6328
        %v6423 = vunpack.c.l.s4 1983009808
        %v6424 = vunpack.c.0.s8 %v6423
        %v6425 = vlaneseq
        %v6426 = vshrl.u32 %v6425, 7
        %v6427 = vsub.s32 %v6424, %v6426
        %v6428 = vrot.slane %v6421, %v6427
        %v6429 = vcombine.low %v6404, %v6412
        %v6430 = vcombine.high %v6404, %v6412
        %v6432 = vunpack.c.l.s4 1934713408
        %v6433 = vunpack.c.0.s8 %v6432
        %v6434 = vlaneseq
        %v6435 = vshrl.u32 %v6434, 7
        %v6436 = vsub.s32 %v6433, %v6435
        %v6437 = vrot.slane %v6429, %v6436
        %v6439 = vunpack.c.l.s4 1934713408
        %v6440 = vunpack.c.0.s8 %v6439
        %v6441 = vlaneseq
        %v6442 = vshrl.u32 %v6441, 7
        %v6443 = vsub.s32 %v6440, %v6442
        %v6444 = vrot.slane %v6430, %v6443
        %v6445 = vcombine.low %v6420, %v6428
        %v6446 = vcombine.high %v6420, %v6428
        %v6448 = vunpack.c.l.s4 1934713408
        %v6449 = vunpack.c.0.s8 %v6448
        %v6450 = vlaneseq
        %v6451 = vshrl.u32 %v6450, 7
        %v6452 = vsub.s32 %v6449, %v6451
        %v6453 = vrot.slane %v6445, %v6452
        %v6455 = vunpack.c.l.s4 1934713408
        %v6456 = vunpack.c.0.s8 %v6455
        %v6457 = vlaneseq
        %v6458 = vshrl.u32 %v6457, 7
        %v6459 = vsub.s32 %v6456, %v6458
        %v6460 = vrot.slane %v6446, %v6459
        %v6461 = vcombine.low %v6437, %v6453
        %v6462 = vcombine.high %v6437, %v6453
        %v6463 = vcombine.low %v6444, %v6460
        %v6464 = vcombine.high %v6444, %v6460
        %6467 = vrot.lane.b32.xlu0 %v6394, 32
        %v6468 = vpop.permute.xlu0 %6467
        %6469 = vrot.lane.b32.xlu0 %v6462, 32
        %v6470 = vpop.permute.xlu0 %6469
        %6475 = vrot.lane.b32.xlu0 %v6395, 64
        %v6476 = vpop.permute.xlu0 %6475
        %6477 = vrot.lane.b32.xlu0 %v6463, 64
        %v6478 = vpop.permute.xlu0 %6477
        %6483 = vrot.lane.b32.xlu0 %v6396, 96
        %v6484 = vpop.permute.xlu0 %6483
        %6485 = vrot.lane.b32.xlu0 %v6464, 96
        %v6486 = vpop.permute.xlu0 %6485
        %v6489 = vsel %vm1376, %v6393, %v6468
        %v6490 = vsel %vm1376, %v6461, %v6470
        %vm6491 = vcmask 523264
        %v6492 = vsel %vm6491, %v6489, %v6476
        %v6493 = vsel %vm6491, %v6490, %v6478
        %vm6494 = vcmask 785408
        %v6495 = vsel %vm6494, %v6492, %v6484
        %v6496 = vsel %vm6494, %v6493, %v6486
        %v6497 = vld [vmem:[%s703] sm:$0xff]
        %v6498 = vld [vmem:[%s703 + $0x8] sm:$0xff]
        %v6499 = vld [vmem:[%s703 + $0x10] sm:$0xff]
        %v6500 = vld [vmem:[%s703 + $0x18] sm:$0xff]
        %v6501 = vld [vmem:[%s703 + $0x20] sm:$0xff]
        %v6502 = vld [vmem:[%s703 + $0x28] sm:$0xff]
        %v6503 = vld [vmem:[%s703 + $0x30] sm:$0xff]
        %v6504 = vld [vmem:[%s703 + $0x38] sm:$0xff]
        %v6505 = vld [vmem:[%s703 + $0x40] sm:$0xff]
        %v6506 = vld [vmem:[%s703 + $0x48] sm:$0xff]
        %v6507 = vld [vmem:[%s703 + $0x50] sm:$0xff]
        %v6508 = vld [vmem:[%s703 + $0x58] sm:$0xff]
        %v6509 = vld [vmem:[%s703 + $0x60] sm:$0xff]
        %v6510 = vld [vmem:[%s703 + $0x68] sm:$0xff]
        %v6511 = vld [vmem:[%s703 + $0x70] sm:$0xff]
        %v6512 = vld [vmem:[%s703 + $0x78] sm:$0xff]
        %v6513 = vld [vmem:[%s833] sm:$0x1]
        %v6515 = vlaneseq
        %v6516 = vshrl.u32 %v6515, 7
        %v6517 = vsub.s32 0, %v6516
        %v6518 = vrot.slane %v6513, %v6517
        %6520 = vmatprep.subr.mxu0 0.0
        %6521 = vmatpush1.msra.mxu0 %v6497
        %6522 = vmatprep.subr.mxu0 0.0
        %6523 = vmatpush1.msra.mxu0 %v6498
        %6524 = vmatprep.subr.mxu0 0.0
        %6525 = vmatpush1.msra.mxu0 %v6499
        %6526 = vmatprep.subr.mxu0 0.0
        %6527 = vmatpush1.msra.mxu0 %v6500
        %6528 = vmatprep.subr.mxu0 0.0
        %6529 = vmatpush1.msra.mxu0 %v6501
        %6530 = vmatprep.subr.mxu0 0.0
        %6531 = vmatpush1.msra.mxu0 %v6502
        %6532 = vmatprep.subr.mxu0 0.0
        %6533 = vmatpush1.msra.mxu0 %v6503
        %6534 = vmatprep.subr.mxu0 0.0
        %6535 = vmatpush1.msra.mxu0 %v6504
        %6536 = vmatprep.subr.mxu0 0.0
        %6537 = vmatpush1.msra.mxu0 %v6505
        %6538 = vmatprep.subr.mxu0 0.0
        %6539 = vmatpush1.msra.mxu0 %v6506
        %6540 = vmatprep.subr.mxu0 0.0
        %6541 = vmatpush1.msra.mxu0 %v6507
        %6542 = vmatprep.subr.mxu0 0.0
        %6543 = vmatpush1.msra.mxu0 %v6508
        %6544 = vmatprep.subr.mxu0 0.0
        %6545 = vmatpush1.msra.mxu0 %v6509
        %6546 = vmatprep.subr.mxu0 0.0
        %6547 = vmatpush1.msra.mxu0 %v6510
        %6548 = vmatprep.subr.mxu0 0.0
        %6549 = vmatpush1.msra.mxu0 %v6511
        %6550 = vmatprep.subr.mxu0 0.0
        %6551 = vmatpush1.msra.mxu0 %v6512
        %6552 = vmatprep.subr.mxu0 0.0
        %6553 = vmatpush1.msra.mxu0 0.0
        %6554 = vmatprep.subr.mxu0 0.0
        %6555 = vmatpush1.msra.mxu0 0.0
        %6556 = vmatprep.subr.mxu0 0.0
        %6557 = vmatpush1.msra.mxu0 0.0
        %6558 = vmatprep.subr.mxu0 0.0
        %6559 = vmatpush1.msra.mxu0 0.0
        %6560 = vmatprep.subr.mxu0 0.0
        %6561 = vmatpush1.msra.mxu0 0.0
        %6562 = vmatprep.subr.mxu0 0.0
        %6563 = vmatpush1.msra.mxu0 0.0
        %6564 = vmatprep.subr.mxu0 0.0
        %6565 = vmatpush1.msra.mxu0 0.0
        %6566 = vmatprep.subr.mxu0 0.0
        %6567 = vmatpush1.msra.mxu0 0.0
        %6568 = vmatprep.subr.mxu0 0.0
        %6569 = vmatpush1.msra.mxu0 0.0
        %6570 = vmatprep.subr.mxu0 0.0
        %6571 = vmatpush1.msra.mxu0 0.0
        %6572 = vmatprep.subr.mxu0 0.0
        %6573 = vmatpush1.msra.mxu0 0.0
        %6574 = vmatprep.subr.mxu0 0.0
        %6575 = vmatpush1.msra.mxu0 0.0
        %6576 = vmatprep.subr.mxu0 0.0
        %6577 = vmatpush1.msra.mxu0 0.0
        %6578 = vmatprep.subr.mxu0 0.0
        %6579 = vmatpush1.msra.mxu0 0.0
        %6580 = vmatprep.subr.mxu0 0.0
        %6581 = vmatpush1.msra.mxu0 0.0
        %6582 = vmatprep.subr.mxu0 0.0
        %6583 = vmatpush1.msra.mxu0 0.0
        %6584 = vmatprep.mubr.f32.mxu0 0.0
        %6585 = vmatmul.mubr.f32.gmra.mrb[0].mxu0 %v6495
        %v6586 = vpop.f32.mrb[0].mxu0
        %v6587 = vadd.f32 %v6518, %v6586
        %v6588 = vpop.f32.mrb[0].mxu0
        %6589 = vmatprep.mubr.f32.mxu0 0.0
        %6590 = vmatmul.mubr.f32.gmra.mrb[0].mxu0 %v6496
        %v6591 = vpop.f32.mrb[0].mxu0
        %v6592 = vadd.f32 %v6518, %v6591
        %v6593 = vpop.f32.mrb[0].mxu0
        %6594 = vdwg.mxu0
        %v6595 = vadd.f32 %v860, %v6587
        %v6596 = vadd.f32 %v861, %v6592
        %v6597 = vld [vmem:[%s836] sm:$0x1]
        %v6598 = vld [vmem:[%s839] sm:$0x1]
        %6599 = vadd.xlane.f32.xlu0 %v6595
        %v6600 = vpop.xlane.xlu0 %6599
        %6601 = vadd.xlane.f32.xlu0 %v6596
        %v6602 = vpop.xlane.xlu0 %6601
        %v6603 = vmul.f32 %v6600, %v900
        %v6604 = vmul.f32 %v6602, %v900
        %v6605 = vsub.f32 %v6595, %v6603
        %v6606 = vsub.f32 %v6596, %v6604
        %v6607 = vmul.f32 %v6605, %v6605
        %v6608 = vmul.f32 %v6606, %v6606
        %6609 = vadd.xlane.f32.xlu0 %v6607
        %v6610 = vpop.xlane.xlu0 %6609
        %6611 = vadd.xlane.f32.xlu0 %v6608
        %v6612 = vpop.xlane.xlu0 %6611
        %v6613 = vmul.f32 %v6610, %v900
        %v6614 = vmul.f32 %v6612, %v900
        %v6615 = vadd.f32 %v6613, 1e-05
        %v6616 = vadd.f32 %v6614, 1e-05
        %v6617 = vrsqrt.pop %v6615
        %v6618 = vrsqrt.pop %v6616
        %v6619 = vmul.f32 %v6605, %v6617
        %v6620 = vmul.f32 %v6606, %v6618
        %v6622 = vlaneseq
        %v6623 = vshrl.u32 %v6622, 7
        %v6624 = vsub.s32 0, %v6623
        %v6625 = vrot.slane %v6597, %v6624
        %v6627 = vmul.f32 %v6619, %v6625
        %v6628 = vmul.f32 %v6620, %v6625
        %v6630 = vlaneseq
        %v6631 = vshrl.u32 %v6630, 7
        %v6632 = vsub.s32 0, %v6631
        %v6633 = vrot.slane %v6598, %v6632
        %v6635 = vadd.f32 %v6627, %v6633
        %v6636 = vadd.f32 %v6628, %v6633
        %v6637 = vld [vmem:[%s844] sm:$0xff]
        %v6638 = vld [vmem:[%s844 + $0x8] sm:$0xff]
        %v6639 = vld [vmem:[%s844 + $0x10] sm:$0xff]
        %v6640 = vld [vmem:[%s844 + $0x18] sm:$0xff]
        %v6641 = vld [vmem:[%s844 + $0x20] sm:$0xff]
        %v6642 = vld [vmem:[%s844 + $0x28] sm:$0xff]
        %v6643 = vld [vmem:[%s844 + $0x30] sm:$0xff]
        %v6644 = vld [vmem:[%s844 + $0x38] sm:$0xff]
        %v6645 = vld [vmem:[%s844 + $0x40] sm:$0xff]
        %v6646 = vld [vmem:[%s844 + $0x48] sm:$0xff]
        %v6647 = vld [vmem:[%s844 + $0x50] sm:$0xff]
        %v6648 = vld [vmem:[%s844 + $0x58] sm:$0xff]
        %v6649 = vld [vmem:[%s844 + $0x60] sm:$0xff]
        %v6650 = vld [vmem:[%s844 + $0x68] sm:$0xff]
        %v6651 = vld [vmem:[%s844 + $0x70] sm:$0xff]
        %v6652 = vld [vmem:[%s844 + $0x78] sm:$0xff]
        %v6653 = vld [vmem:[%s844 + $0x80] sm:$0xff]
        %v6654 = vld [vmem:[%s844 + $0x88] sm:$0xff]
        %v6655 = vld [vmem:[%s844 + $0x90] sm:$0xff]
        %v6656 = vld [vmem:[%s844 + $0x98] sm:$0xff]
        %v6657 = vld [vmem:[%s844 + $0xa0] sm:$0xff]
        %v6658 = vld [vmem:[%s844 + $0xa8] sm:$0xff]
        %v6659 = vld [vmem:[%s844 + $0xb0] sm:$0xff]
        %v6660 = vld [vmem:[%s844 + $0xb8] sm:$0xff]
        %v6661 = vld [vmem:[%s844 + $0xc0] sm:$0xff]
        %v6662 = vld [vmem:[%s844 + $0xc8] sm:$0xff]
        %v6663 = vld [vmem:[%s844 + $0xd0] sm:$0xff]
        %v6664 = vld [vmem:[%s844 + $0xd8] sm:$0xff]
        %v6665 = vld [vmem:[%s844 + $0xe0] sm:$0xff]
        %v6666 = vld [vmem:[%s844 + $0xe8] sm:$0xff]
        %v6667 = vld [vmem:[%s844 + $0xf0] sm:$0xff]
        %v6668 = vld [vmem:[%s844 + $0xf8] sm:$0xff]
        %v6669 = vld [vmem:[%s848] sm:$0x3]
        %v6671 = vlaneseq
        %v6672 = vshrl.u32 %v6671, 7
        %v6673 = vsub.s32 0, %v6672
        %v6674 = vrot.slane %v6669, %v6673
        %v6675 = vlaneseq
        %v6676 = vshrl.u32 %v6675, 7
        %v6677 = vsub.s32 1, %v6676
        %v6678 = vrot.slane %v6669, %v6677
        %6681 = vmatprep.subr.mxu0 %v6638
        %6682 = vmatpush1.msra.mxu0 %v6637
        %6683 = vmatprep.subr.mxu0 %v6640
        %6684 = vmatpush1.msra.mxu0 %v6639
        %6685 = vmatprep.subr.mxu0 %v6642
        %6686 = vmatpush1.msra.mxu0 %v6641
        %6687 = vmatprep.subr.mxu0 %v6644
        %6688 = vmatpush1.msra.mxu0 %v6643
        %6689 = vmatprep.subr.mxu0 %v6646
        %6690 = vmatpush1.msra.mxu0 %v6645
        %6691 = vmatprep.subr.mxu0 %v6648
        %6692 = vmatpush1.msra.mxu0 %v6647
        %6693 = vmatprep.subr.mxu0 %v6650
        %6694 = vmatpush1.msra.mxu0 %v6649
        %6695 = vmatprep.subr.mxu0 %v6652
        %6696 = vmatpush1.msra.mxu0 %v6651
        %6697 = vmatprep.subr.mxu0 %v6654
        %6698 = vmatpush1.msra.mxu0 %v6653
        %6699 = vmatprep.subr.mxu0 %v6656
        %6700 = vmatpush1.msra.mxu0 %v6655
        %6701 = vmatprep.subr.mxu0 %v6658
        %6702 = vmatpush1.msra.mxu0 %v6657
        %6703 = vmatprep.subr.mxu0 %v6660
        %6704 = vmatpush1.msra.mxu0 %v6659
        %6705 = vmatprep.subr.mxu0 %v6662
        %6706 = vmatpush1.msra.mxu0 %v6661
        %6707 = vmatprep.subr.mxu0 %v6664
        %6708 = vmatpush1.msra.mxu0 %v6663
        %6709 = vmatprep.subr.mxu0 %v6666
        %6710 = vmatpush1.msra.mxu0 %v6665
        %6711 = vmatprep.subr.mxu0 %v6668
        %6712 = vmatpush1.msra.mxu0 %v6667
        %6713 = vmatprep.subr.mxu0 0.0
        %6714 = vmatpush1.msra.mxu0 0.0
        %6715 = vmatprep.subr.mxu0 0.0
        %6716 = vmatpush1.msra.mxu0 0.0
        %6717 = vmatprep.subr.mxu0 0.0
        %6718 = vmatpush1.msra.mxu0 0.0
        %6719 = vmatprep.subr.mxu0 0.0
        %6720 = vmatpush1.msra.mxu0 0.0
        %6721 = vmatprep.subr.mxu0 0.0
        %6722 = vmatpush1.msra.mxu0 0.0
        %6723 = vmatprep.subr.mxu0 0.0
        %6724 = vmatpush1.msra.mxu0 0.0
        %6725 = vmatprep.subr.mxu0 0.0
        %6726 = vmatpush1.msra.mxu0 0.0
        %6727 = vmatprep.subr.mxu0 0.0
        %6728 = vmatpush1.msra.mxu0 0.0
        %6729 = vmatprep.subr.mxu0 0.0
        %6730 = vmatpush1.msra.mxu0 0.0
        %6731 = vmatprep.subr.mxu0 0.0
        %6732 = vmatpush1.msra.mxu0 0.0
        %6733 = vmatprep.subr.mxu0 0.0
        %6734 = vmatpush1.msra.mxu0 0.0
        %6735 = vmatprep.subr.mxu0 0.0
        %6736 = vmatpush1.msra.mxu0 0.0
        %6737 = vmatprep.subr.mxu0 0.0
        %6738 = vmatpush1.msra.mxu0 0.0
        %6739 = vmatprep.subr.mxu0 0.0
        %6740 = vmatpush1.msra.mxu0 0.0
        %6741 = vmatprep.subr.mxu0 0.0
        %6742 = vmatpush1.msra.mxu0 0.0
        %6743 = vmatprep.subr.mxu0 0.0
        %6744 = vmatpush1.msra.mxu0 0.0
        %6745 = vmatprep.mubr.f32.mxu0 0.0
        %6746 = vmatmul.mubr.f32.gmra.mrb[0].mxu0 %v6635
        %v6747 = vpop.f32.mrb[0].mxu0
        %v6748 = vadd.f32 %v6674, %v6747
        %v6749 = vpop.f32.mrb[0].mxu0
        %v6750 = vadd.f32 %v6678, %v6749
        %6751 = vmatprep.mubr.f32.mxu0 0.0
        %6752 = vmatmul.mubr.f32.gmra.mrb[0].mxu0 %v6636
        %v6753 = vpop.f32.mrb[0].mxu0
        %v6754 = vadd.f32 %v6674, %v6753
        %v6755 = vpop.f32.mrb[0].mxu0
        %v6756 = vadd.f32 %v6678, %v6755
        %6757 = vdwg.mxu0
        %v6758 = vmax.f32 %v6748, 0.0
        %v6759 = vmax.f32 %v6750, 0.0
        %v6760 = vmax.f32 %v6754, 0.0
        %v6761 = vmax.f32 %v6756, 0.0
        %v6762 = vld [vmem:[%s712] sm:$0xff]
        %v6763 = vld [vmem:[%s712 + $0x8] sm:$0xff]
        %v6764 = vld [vmem:[%s712 + $0x10] sm:$0xff]
        %v6765 = vld [vmem:[%s712 + $0x18] sm:$0xff]
        %v6766 = vld [vmem:[%s712 + $0x20] sm:$0xff]
        %v6767 = vld [vmem:[%s712 + $0x28] sm:$0xff]
        %v6768 = vld [vmem:[%s712 + $0x30] sm:$0xff]
        %v6769 = vld [vmem:[%s712 + $0x38] sm:$0xff]
        %v6770 = vld [vmem:[%s712 + $0x40] sm:$0xff]
        %v6771 = vld [vmem:[%s712 + $0x48] sm:$0xff]
        %v6772 = vld [vmem:[%s712 + $0x50] sm:$0xff]
        %v6773 = vld [vmem:[%s712 + $0x58] sm:$0xff]
        %v6774 = vld [vmem:[%s712 + $0x60] sm:$0xff]
        %v6775 = vld [vmem:[%s712 + $0x68] sm:$0xff]
        %v6776 = vld [vmem:[%s712 + $0x70] sm:$0xff]
        %v6777 = vld [vmem:[%s712 + $0x78] sm:$0xff]
        %v6778 = vld [vmem:[%s712 + $0x80] sm:$0xff]
        %v6779 = vld [vmem:[%s712 + $0x88] sm:$0xff]
        %v6780 = vld [vmem:[%s712 + $0x90] sm:$0xff]
        %v6781 = vld [vmem:[%s712 + $0x98] sm:$0xff]
        %v6782 = vld [vmem:[%s712 + $0xa0] sm:$0xff]
        %v6783 = vld [vmem:[%s712 + $0xa8] sm:$0xff]
        %v6784 = vld [vmem:[%s712 + $0xb0] sm:$0xff]
        %v6785 = vld [vmem:[%s712 + $0xb8] sm:$0xff]
        %v6786 = vld [vmem:[%s712 + $0xc0] sm:$0xff]
        %v6787 = vld [vmem:[%s712 + $0xc8] sm:$0xff]
        %v6788 = vld [vmem:[%s712 + $0xd0] sm:$0xff]
        %v6789 = vld [vmem:[%s712 + $0xd8] sm:$0xff]
        %v6790 = vld [vmem:[%s712 + $0xe0] sm:$0xff]
        %v6791 = vld [vmem:[%s712 + $0xe8] sm:$0xff]
        %v6792 = vld [vmem:[%s712 + $0xf0] sm:$0xff]
        %v6793 = vld [vmem:[%s712 + $0xf8] sm:$0xff]
        %v6794 = vld [vmem:[%s851] sm:$0x1]
        %v6796 = vlaneseq
        %v6797 = vshrl.u32 %v6796, 7
        %v6798 = vsub.s32 0, %v6797
        %v6799 = vrot.slane %v6794, %v6798
        %6801 = vmatprep.subr.mxu0 0.0
        %6802 = vmatpush1.msra.mxu0 %v6762
        %6803 = vmatprep.subr.mxu0 0.0
        %6804 = vmatpush1.msra.mxu0 %v6763
        %6805 = vmatprep.subr.mxu0 0.0
        %6806 = vmatpush1.msra.mxu0 %v6764
        %6807 = vmatprep.subr.mxu0 0.0
        %6808 = vmatpush1.msra.mxu0 %v6765
        %6809 = vmatprep.subr.mxu0 0.0
        %6810 = vmatpush1.msra.mxu0 %v6766
        %6811 = vmatprep.subr.mxu0 0.0
        %6812 = vmatpush1.msra.mxu0 %v6767
        %6813 = vmatprep.subr.mxu0 0.0
        %6814 = vmatpush1.msra.mxu0 %v6768
        %6815 = vmatprep.subr.mxu0 0.0
        %6816 = vmatpush1.msra.mxu0 %v6769
        %6817 = vmatprep.subr.mxu0 0.0
        %6818 = vmatpush1.msra.mxu0 %v6770
        %6819 = vmatprep.subr.mxu0 0.0
        %6820 = vmatpush1.msra.mxu0 %v6771
        %6821 = vmatprep.subr.mxu0 0.0
        %6822 = vmatpush1.msra.mxu0 %v6772
        %6823 = vmatprep.subr.mxu0 0.0
        %6824 = vmatpush1.msra.mxu0 %v6773
        %6825 = vmatprep.subr.mxu0 0.0
        %6826 = vmatpush1.msra.mxu0 %v6774
        %6827 = vmatprep.subr.mxu0 0.0
        %6828 = vmatpush1.msra.mxu0 %v6775
        %6829 = vmatprep.subr.mxu0 0.0
        %6830 = vmatpush1.msra.mxu0 %v6776
        %6831 = vmatprep.subr.mxu0 0.0
        %6832 = vmatpush1.msra.mxu0 %v6777
        %6833 = vmatprep.subr.mxu0 0.0
        %6834 = vmatpush1.msra.mxu0 %v6778
        %6835 = vmatprep.subr.mxu0 0.0
        %6836 = vmatpush1.msra.mxu0 %v6779
        %6837 = vmatprep.subr.mxu0 0.0
        %6838 = vmatpush1.msra.mxu0 %v6780
        %6839 = vmatprep.subr.mxu0 0.0
        %6840 = vmatpush1.msra.mxu0 %v6781
        %6841 = vmatprep.subr.mxu0 0.0
        %6842 = vmatpush1.msra.mxu0 %v6782
        %6843 = vmatprep.subr.mxu0 0.0
        %6844 = vmatpush1.msra.mxu0 %v6783
        %6845 = vmatprep.subr.mxu0 0.0
        %6846 = vmatpush1.msra.mxu0 %v6784
        %6847 = vmatprep.subr.mxu0 0.0
        %6848 = vmatpush1.msra.mxu0 %v6785
        %6849 = vmatprep.subr.mxu0 0.0
        %6850 = vmatpush1.msra.mxu0 %v6786
        %6851 = vmatprep.subr.mxu0 0.0
        %6852 = vmatpush1.msra.mxu0 %v6787
        %6853 = vmatprep.subr.mxu0 0.0
        %6854 = vmatpush1.msra.mxu0 %v6788
        %6855 = vmatprep.subr.mxu0 0.0
        %6856 = vmatpush1.msra.mxu0 %v6789
        %6857 = vmatprep.subr.mxu0 0.0
        %6858 = vmatpush1.msra.mxu0 %v6790
        %6859 = vmatprep.subr.mxu0 0.0
        %6860 = vmatpush1.msra.mxu0 %v6791
        %6861 = vmatprep.subr.mxu0 0.0
        %6862 = vmatpush1.msra.mxu0 %v6792
        %6863 = vmatprep.subr.mxu0 0.0
        %6864 = vmatpush1.msra.mxu0 %v6793
        %6865 = vmatprep.mubr.f32.mxu0 %v6759
        %6866 = vmatmul.mubr.f32.gmra.mrb[0].mxu0 %v6758
        %v6867 = vpop.f32.mrb[0].mxu0
        %v6868 = vadd.f32 %v6799, %v6867
        %v6869 = vpop.f32.mrb[0].mxu0
        %6870 = vmatprep.mubr.f32.mxu0 %v6761
        %6871 = vmatmul.mubr.f32.gmra.mrb[0].mxu0 %v6760
        %v6872 = vpop.f32.mrb[0].mxu0
        %v6873 = vadd.f32 %v6799, %v6872
        %v6874 = vpop.f32.mrb[0].mxu0
        %6875 = vdwg.mxu0
        %v6876 = vadd.f32 %v6595, %v6868
        %v6877 = vadd.f32 %v6596, %v6873
        %6878 = vst [vmem:[#allocation2] sm:$0xff] %v6876
        %6879 = vst [vmem:[#allocation2 + $0x8] sm:$0xff] %v6877
        %p6880 = scmp.eq.s32.totalorder %s37, 1
        // Predicated region
        $region113: #{tpu_custom_call.1} parent=91 // pred_check
          %p6881 = pneg %p6880
        $region114: #{tpu_custom_call.1} parent=91 // pred_check_branch
          %6883 = sbr.rel (%p6881) target = $region116
        $region115: #{tpu_custom_call.1} parent=91 // pred_region
          %v6884 = vld [vmem:[%s16] sm:$0x1]
          %v6885 = vld [vmem:[%s17] sm:$0x1]
          %6886 = vadd.xlane.f32.xlu0 %v6876
          %v6887 = vpop.xlane.xlu0 %6886
          %6888 = vadd.xlane.f32.xlu0 %v6877
          %v6889 = vpop.xlane.xlu0 %6888
          %v6890 = vmul.f32 %v6887, %v900
          %v6891 = vmul.f32 %v6889, %v900
          %v6892 = vsub.f32 %v6876, %v6890
          %v6893 = vsub.f32 %v6877, %v6891
          %v6894 = vmul.f32 %v6892, %v6892
          %v6895 = vmul.f32 %v6893, %v6893
          %6896 = vadd.xlane.f32.xlu0 %v6894
          %v6897 = vpop.xlane.xlu0 %6896
          %6898 = vadd.xlane.f32.xlu0 %v6895
          %v6899 = vpop.xlane.xlu0 %6898
          %v6900 = vmul.f32 %v6897, %v900
          %v6901 = vmul.f32 %v6899, %v900
          %v6902 = vadd.f32 %v6900, 1e-05
          %v6903 = vadd.f32 %v6901, 1e-05
          %v6904 = vrsqrt.pop %v6902
          %v6905 = vrsqrt.pop %v6903
          %v6906 = vmul.f32 %v6892, %v6904
          %v6907 = vmul.f32 %v6893, %v6905
          %v6909 = vlaneseq
          %v6910 = vshrl.u32 %v6909, 7
          %v6911 = vsub.s32 0, %v6910
          %v6912 = vrot.slane %v6884, %v6911
          %v6914 = vmul.f32 %v6906, %v6912
          %v6915 = vmul.f32 %v6907, %v6912
          %v6917 = vlaneseq
          %v6918 = vshrl.u32 %v6917, 7
          %v6919 = vsub.s32 0, %v6918
          %v6920 = vrot.slane %v6885, %v6919
          %v6922 = vadd.f32 %v6914, %v6920
          %v6923 = vadd.f32 %v6915, %v6920
          %6924 = vst [vmem:[#allocation11] sm:$0xff] %v6922
          %6925 = vst [vmem:[#allocation11 + $0x8] sm:$0xff] %v6923
        $region116: #{tpu_custom_call.1} parent=91 // pred_fallthru
          _
        // Predicated region
        $region117: #{tpu_custom_call.1} parent=91 // pred_check
          %p6926 = pneg %p498
        $region118: #{tpu_custom_call.1} parent=91 // pred_check_branch
          %6928 = sbr.rel (%p6926) target = $region120
        $region119: #{tpu_custom_call.1} parent=91 // pred_region
          %s6930 = ssub.s32 256, 256
          %6931 = vsyncadd [#allocation5], %s6930
          %s6932 = sshll.u32 [#allocation11], 4
          %s6933 = int_to_ptr.vmem [resolvable:$true] %s6932
          %6938 = dma.vmem_to_hbm [thread:$0]  %s6933, 256, %s18, [#allocation5], 128, 128, 8
        $region120: #{tpu_custom_call.1} parent=91 // pred_fallthru
          _
        // Predicated region
        $region121: #{tpu_custom_call.1} parent=91 // pred_check
          %p6939 = pneg %p498
        $region122: #{tpu_custom_call.1} parent=91 // pred_check_branch
          %6941 = sbr.rel (%p6939) target = $region124
        $region123: #{tpu_custom_call.1} parent=91 // pred_region
          %6942 = dma.done [#allocation5], 256
        $region124: #{tpu_custom_call.1} parent=91 // pred_fallthru
          _
      $region92: #{tpu_custom_call.1} parent=5 // pred_fallthru
        _
      %p6943 = scmp.le.s32.totalorder 2, %s32
      // Predicated region
      $region125: #{tpu_custom_call.1} parent=5 // pred_check
        %p6944 = pneg %p6943
      $region126: #{tpu_custom_call.1} parent=5 // pred_check_branch
        %6946 = sbr.rel (%p6944) target = $region128
      $region127: #{tpu_custom_call.1} parent=5 // pred_region
        %s6947 = ssub.s32 %s32, 2
      $region128: #{tpu_custom_call.1} parent=5 // pred_fallthru
        _
    $region6: #{tpu_custom_call.1} parent=1 // loop_footer
      %s36 = sadd.s32 1, %s32
    $region7: #{tpu_custom_call.1} parent=1 // loop_footer_branch
      %31 = sbr.rel target = $region3
    $region8: #{tpu_custom_call.1} parent=1 // loop_exit
      _
    %6948 = vsyncpa [#allocation4], 1
    %s6949 = scalar_lea.sflag [#allocation4], 1
    %6950 = vsyncpa %s6949, 1
    %6951 = vsyncpa [#allocation7], 1
    %s6952 = scalar_lea.sflag [#allocation7], 1
    %6953 = vsyncpa %s6952, 1
    %6954 = vsyncpa [#allocation10], 1
    %s6955 = scalar_lea.sflag [#allocation10], 1
    %6956 = vsyncpa %s6955, 1
    %6957 = vsyncpa [#allocation5], 1
    %s6958 = scalar_lea.sflag [#allocation5], 1
    %6959 = vsyncpa %s6958, 1

</llo_original>
